<compile_context>
chip_gen: v7x
topology: tpu7x:2x2x1
jax: 0.10.0
libtpu: 0.0.40
codegen_flags: <defaults>
</compile_context>

<pallas_src>
from functools import partial

import numpy as np
import jax
import jax.numpy as jnp
from jax import lax
from jax.experimental import pallas as pl
from jax.experimental.pallas import tpu as pltpu


# ---------------------------------------------------------------------------
# Host-side (glue) builders for the separable resize matrices (float64).
# ---------------------------------------------------------------------------
def _adaptive_avg_pool_matrix(in_size: int, out_size: int) -> np.ndarray:
    """PyTorch adaptive_avg_pool: M[i, j] = 1/(end_i-start_i) on the window."""
    i = np.arange(out_size)
    start = (i * in_size) // out_size
    end = ((i + 1) * in_size + out_size - 1) // out_size  # ceil
    j = np.arange(in_size)
    mask = (j[None, :] >= start[:, None]) & (j[None, :] < end[:, None])
    counts = (end - start).astype(np.float64)
    return mask.astype(np.float64) / counts[:, None]


def _bilinear_matrix(in_size: int, out_size: int) -> np.ndarray:
    """Linear interpolation weights, align_corners=True (as in ModBlock)."""
    if out_size == 1:
        src = np.zeros((1,), np.float64)
    else:
        src = np.arange(out_size) * (in_size - 1) / (out_size - 1)
    lo = np.clip(np.floor(src).astype(np.int64), 0, in_size - 1)
    hi = np.clip(lo + 1, 0, in_size - 1)
    frac = src - np.floor(src)
    M = np.zeros((out_size, in_size), np.float64)
    M[np.arange(out_size), lo] += 1.0 - frac
    M[np.arange(out_size), hi] += frac
    return M


def _cubic_weight(t: np.ndarray, a: float = -0.75) -> np.ndarray:
    at = np.abs(t)
    w1 = ((a + 2.0) * at - (a + 3.0)) * at * at + 1.0
    w2 = (((at - 5.0) * at + 8.0) * at - 4.0) * a
    return np.where(at <= 1.0, w1, np.where(at < 2.0, w2, 0.0))


def _bicubic_matrix(in_size: int, out_size: int) -> np.ndarray:
    """Cubic-convolution weights (a=-0.75), align_corners=True, clamped borders."""
    if out_size == 1:
        src = np.zeros((1,), np.float64)
    else:
        src = np.arange(out_size) * (in_size - 1) / (out_size - 1)
    f = np.floor(src)
    frac = src - f
    M = np.zeros((out_size, in_size), np.float64)
    for k in range(-1, 3):
        idx = np.clip(f.astype(np.int64) + k, 0, in_size - 1)
        np.add.at(M, (np.arange(out_size), idx), _cubic_weight(frac - k))
    return M


def _resize_matrices(H, W, OH, OW, resize_type):
    if resize_type == "AdaptiveAvgPool2d":
        return _adaptive_avg_pool_matrix(H, OH), _adaptive_avg_pool_matrix(W, OW)
    if resize_type == "UpsampleBilinear":
        return _bilinear_matrix(H, OH), _bilinear_matrix(W, OW)
    if resize_type == "UpsampleBicubic":
        return _bicubic_matrix(H, OH), _bicubic_matrix(W, OW)
    # PyTorch's AdaptiveUpsample silently no-ops for unknown modes; be explicit.
    raise ValueError(f"Unsupported resize_type: {resize_type}")


# ---------------------------------------------------------------------------
# Fused ModBlock kernel: B samples per grid step, channel-first block layout
# (C, B, HW) -> lane-dense output slab (C_out, B*Q).
# ---------------------------------------------------------------------------
def _modblock_kernel(x_ref, gamma_ref, beta_ref, wcomb_ref, w_up_ref,
                     w_mod_ref, b_mod_ref, scales_ref, o_ref, *,
                     norm_type, eps, mxu_dtype, q_is_one):
    _, C, B, HW = x_ref.shape
    x = x_ref[0].astype(jnp.float32)                       # (C, B, HW)

    # --- norm (one-pass mean / E[x^2]) --------------------------------------
    if norm_type == "ChannelNorm":
        mean = jnp.mean(x, axis=0, keepdims=True)          # (1, B, HW)
        ex2 = jnp.mean(x * x, axis=0, keepdims=True)
        xn = (x - mean) * lax.rsqrt((ex2 - mean * mean) + eps)
        xn = xn * gamma_ref[...] + beta_ref[...]           # (C,1,1) broadcast
    else:  # AdaptiveFullstackNorm: per-sample stats over the whole (C, HW) slab
        mean = jnp.mean(jnp.mean(x, axis=2, keepdims=True), axis=0, keepdims=True)
        ex2 = jnp.mean(jnp.mean(x * x, axis=2, keepdims=True), axis=0,
                       keepdims=True)
        xn = (x - mean) * lax.rsqrt((ex2 - mean * mean) + eps)

    # --- squash (tanh) -------------------------------------------------------
    t = jnp.tanh(xn)                                       # (C, B, HW) f32
    t2 = t.reshape(C * B, HW)

    # --- spatial resize -------------------------------------------------------
    if q_is_one:
        # target 1x1: weighted lane reduction instead of a 1-lane MXU mat-vec.
        r = jnp.sum(t2 * wcomb_ref[...], axis=-1, keepdims=True)       # (C*B, 1)
    else:
        r = jnp.dot(t2.astype(mxu_dtype), wcomb_ref[...],
                    preferred_element_type=jnp.float32)                # (C*B, Q)

    Q = r.shape[-1]
    # Channel-first, lane-packed: column index = b*Q + q.
    r = r.reshape(C, B * Q).astype(mxu_dtype)

    # --- UpsampleBlock conv1x1 (no bias) --------------------------------------
    u = jnp.dot(w_up_ref[...], r, preferred_element_type=jnp.float32)  # (C, B*Q)

    # --- asymmetric scaling of negative / positive values ---------------------
    neg_s = scales_ref[0]
    pos_s = scales_ref[1]
    z = u * jnp.where(u < 0, neg_s, pos_s)

    # --- modulation conv1x1 (+ bias) -------------------------------------------
    y = jnp.dot(w_mod_ref[...], z.astype(mxu_dtype),
                preferred_element_type=jnp.float32)                    # (Cout, B*Q)
    y = y + b_mod_ref[...]
    o_ref[0] = y.astype(o_ref.dtype)


_MXU_ROWS_TARGET = 256  # v6e/v7x MXU height; v5e's 4x128^2 MXU just does 2 passes.


def _vmem_capacity_bytes() -> int:
    try:
        return int(pltpu.get_tpu_info().vmem_capacity_bytes)
    except Exception:
        return 64 * 1024 * 1024  # conservative: v7x per-TensorCore VMEM


def mod_block_forward(x, target_size, params, *, resize_type="UpsampleBilinear",
                      norm_type="ChannelNorm", eps=1e-5,
                      mxu_dtype=jnp.bfloat16):
    """x: (N, C, H, W). params: gamma, beta, w_up, w_mod, b_mod, neg_scale, pos_scale."""
    if norm_type not in ("ChannelNorm", "AdaptiveFullstackNorm"):
        raise ValueError(f"Unknown norm_type: {norm_type}")

    N, C, H, W = x.shape
    out_hw = ((target_size, target_size) if isinstance(target_size, int)
              else tuple(target_size))
    Mh, Mw = _resize_matrices(H, W, out_hw[0], out_hw[1], resize_type)
    OH, OW = Mh.shape[0], Mw.shape[0]
    HW, Q = H * W, OH * OW
    q_is_one = (Q == 1)

    w_mod = jnp.asarray(params["w_mod"], mxu_dtype)
    C_out = w_mod.shape[0]
    w_mod = w_mod.reshape(C_out, C)
    w_up = jnp.asarray(params["w_up"], mxu_dtype).reshape(C, C)

    in_item = jnp.dtype(x.dtype).itemsize
    mxu_item = jnp.dtype(mxu_dtype).itemsize
    vmem_cap = _vmem_capacity_bytes()

    # Combined resize weight: resized_flat = t_flat @ kron(Mh, Mw).T.
    if q_is_one:
        wcomb = jnp.asarray(np.kron(Mh, Mw), jnp.float32)   # (1, HW), VPU row
        wcomb_bytes = HW * 4
        wcomb_block = (1, HW)
    else:
        wcomb = jnp.asarray(np.kron(Mh, Mw).T, mxu_dtype)   # (HW, Q)
        wcomb_bytes = HW * Q * mxu_item
        wcomb_block = (HW, Q)
    if wcomb_bytes > vmem_cap // 4:
        # TODO(synk): separable resize (Mh GEMM then Mw GEMM on the (C,H,W)
        # view) for very large spatial sizes where the kron weight no longer
        # fits VMEM (needed sooner on v7x's 64 MiB than on v5e/v6e's 128 MiB).
        raise NotImplementedError(
            f"kron resize weight too large for VMEM ({wcomb_bytes} B, "
            f"capacity {vmem_cap} B)")

    # --- per-grid-step sample batch B ---------------------------------------
    per_b = (2 * C * HW * in_item           # x block (double buffered)
             + 2 * C_out * Q * in_item      # out block (double buffered)
             + 4 * C * HW * 4               # f32 working set: x, xn, t, t2
             + 4 * max(C, C_out) * Q * 4)   # f32 working set: r, u, z, y
    fixed = (wcomb_bytes + (C * C + C_out * C) * mxu_item
             + (3 * C + C_out + 2) * 4 + (2 << 20))
    b_vmem = max(1, (int(0.6 * vmem_cap) - fixed) // per_b)
    b_rows = max(1, _MXU_ROWS_TARGET // C)          # fill the MXU's M dimension
    b_mega = max(1, N // 2) if N > 1 else 1         # keep >= 2 grid steps (v7x)
    b_cap = min(b_vmem, b_rows, b_mega, N)
    B = max(d for d in range(1, b_cap + 1) if N % d == 0)
    NB = N // B

    needed = fixed + B * per_b + (8 << 20)          # + compiler-scratch headroom
    if needed > vmem_cap:
        raise ValueError("VMEM plan exceeds this chip's capacity")
    vmem_limit = int(min(vmem_cap, max(needed, 32 << 20)))

    # --- operands ------------------------------------------------------------
    # Channel-first per-block packing (NB, C, B, HW): the kernel runs plain 2-D
    # GEMMs and stores a lane-dense (C_out, B*Q) slab; layout plumbing (the
    # transposes below) stays in the wrapper. Input keeps its native dtype.
    x_cf = jnp.transpose(x.reshape(NB, B, C, HW), (0, 2, 1, 3))
    gamma = jnp.asarray(params["gamma"], jnp.float32).reshape(C, 1, 1)
    beta = jnp.asarray(params["beta"], jnp.float32).reshape(C, 1, 1)
    b_mod = jnp.asarray(params["b_mod"], jnp.float32).reshape(C_out, 1)
    neg = jnp.asarray(params["neg_scale"], jnp.float32).reshape(())
    pos = jnp.asarray(params["pos_scale"], jnp.float32).reshape(())
    scales = jnp.stack([neg, pos])                   # (2,) -> SMEM

    kernel = partial(_modblock_kernel, norm_type=norm_type, eps=float(eps),
                     mxu_dtype=mxu_dtype, q_is_one=q_is_one)

    const2 = lambda n: (0, 0)
    const3 = lambda n: (0, 0, 0)

    def _run(single_buffer_weights: bool):
        # Grid-invariant operands don't need double buffering; halving their
        # VMEM footprint frees room for a bigger sample block.
        mode = ({"pipeline_mode": pl.Buffered(1)} if single_buffer_weights
                else {})
        in_specs = [
            pl.BlockSpec((1, C, B, HW), lambda n: (n, 0, 0, 0)),     # x block
            pl.BlockSpec((C, 1, 1), const3, **mode),                  # gamma
            pl.BlockSpec((C, 1, 1), const3, **mode),                  # beta
            pl.BlockSpec(wcomb_block, const2, **mode),                # resize W
            pl.BlockSpec((C, C), const2, **mode),                     # w_up
            pl.BlockSpec((C_out, C), const2, **mode),                 # w_mod
            pl.BlockSpec((C_out, 1), const2, **mode),                 # b_mod
            pl.BlockSpec(memory_space=pltpu.MemorySpace.SMEM),        # scales
        ]
        return pl.pallas_call(
            kernel,
            out_shape=jax.ShapeDtypeStruct((NB, C_out, B * Q), x.dtype),
            grid_spec=pltpu.PrefetchScalarGridSpec(
                num_scalar_prefetch=0,
                grid=(NB,),
                in_specs=in_specs,
                out_specs=pl.BlockSpec((1, C_out, B * Q), lambda n: (n, 0, 0)),
            ),
            compiler_params=pltpu.CompilerParams(
                dimension_semantics=("parallel",),   # megacore sharding on v7x
                vmem_limit_bytes=vmem_limit,
            ),
        )(x_cf, gamma, beta, wcomb, w_up, w_mod, b_mod, scales)

    try:
        out = _run(True)
    except Exception:
        # Fallback if this Pallas build rejects pl.Buffered(1); default double
        # buffering only costs one extra copy of each grid-invariant weight.
        out = _run(False)

    out = out.reshape(NB, C_out, B, Q).transpose(0, 2, 1, 3)
    out = out.reshape(N, C_out, OH, OW)
    if isinstance(target_size, int) and target_size == 1:
        out = out.reshape(N, C_out)                  # ModBlock squeezes at size 1
    return out


# ---------------------------------------------------------------------------
# Pure numpy (float64) reference of the ModBlock forward, for verification.
# ---------------------------------------------------------------------------
def _ref_mod_block(x, target_size, params, resize_type, norm_type, eps=1e-5):
    x = np.asarray(x, np.float64)
    N, C, H, W = x.shape
    gamma = np.asarray(params["gamma"], np.float64)
    beta = np.asarray(params["beta"], np.float64)
    w_up = np.asarray(params["w_up"], np.float64).reshape(C, C)
    w_mod = np.asarray(params["w_mod"], np.float64)
    C_out = w_mod.shape[0]
    w_mod = w_mod.reshape(C_out, C)
    b_mod = np.asarray(params["b_mod"], np.float64).reshape(C_out)
    ns = float(params["neg_scale"])
    ps = float(params["pos_scale"])

    if norm_type == "ChannelNorm":
        mean = x.mean(axis=1, keepdims=True)
        var = ((x - mean) ** 2).mean(axis=1, keepdims=True)
        xn = (x - mean) / np.sqrt(var + eps)
        xn = xn * gamma[None, :, None, None] + beta[None, :, None, None]
    else:  # AdaptiveFullstackNorm
        xf = x.reshape(N, -1)
        mean = xf.mean(axis=1, keepdims=True)
        var = ((xf - mean) ** 2).mean(axis=1, keepdims=True)
        xn = ((xf - mean) / np.sqrt(var + eps)).reshape(x.shape)
    t = np.tanh(xn)

    out_hw = ((target_size, target_size) if isinstance(target_size, int)
              else tuple(target_size))
    Mh, Mw = _resize_matrices(H, W, out_hw[0], out_hw[1], resize_type)
    r = np.einsum("oh,nchw,pw->ncop", Mh, t, Mw)            # separable resize
    r = np.einsum("dc,ncop->ndop", w_up, r)                  # conv1x1 no bias
    z = r * np.where(r < 0, ns, ps)                          # asymmetric scaling
    y = np.einsum("dc,ncop->ndop", w_mod, z) + b_mod[None, :, None, None]
    if isinstance(target_size, int) and target_size == 1:
        y = y[:, :, 0, 0]
    return y


if __name__ == "__main__":
    key = jax.random.PRNGKey(0)
    ks = jax.random.split(key, 6)
    N, C_in, C_out, H, W = 8, 4, 8, 16, 16

    x = jax.random.normal(ks[0], (N, C_in, H, W), dtype=jnp.float32)
    params = {
        "gamma": 1.0 + 0.1 * jax.random.normal(ks[1], (C_in,), jnp.float32),
        "beta": 0.1 * jax.random.normal(ks[2], (C_in,), jnp.float32),
        "w_up": jax.random.normal(ks[3], (C_in, C_in), jnp.float32) / np.sqrt(C_in),
        "neg_scale": jnp.float32(0.75),
        "pos_scale": jnp.float32(1.25),
        "w_mod": jax.random.normal(ks[4], (C_out, C_in), jnp.float32) / np.sqrt(C_in),
        "b_mod": 0.1 * jax.random.normal(ks[5], (C_out,), jnp.float32),
    }

    # 1) f32 MXU path (exactness check): ChannelNorm + bilinear 16x16 -> 32x32.
    tgt = (32, 32)
    y_ref = _ref_mod_block(x, tgt, params, "UpsampleBilinear", "ChannelNorm")
    y = jax.block_until_ready(
        mod_block_forward(x, tgt, params, resize_type="UpsampleBilinear",
                          norm_type="ChannelNorm", mxu_dtype=jnp.float32))
    assert y.shape == (N, C_out, 32, 32)
    np.testing.assert_allclose(np.asarray(y), y_ref, rtol=1e-4, atol=1e-4)

    # 2) Default bf16 MXU-operand path, same config (f32 accumulation; looser
    #    tolerance because the weights/activations feeding the MXU are bf16).
    yb = jax.block_until_ready(
        mod_block_forward(x, tgt, params, resize_type="UpsampleBilinear",
                          norm_type="ChannelNorm"))
    np.testing.assert_allclose(np.asarray(yb), y_ref, rtol=5e-2, atol=5e-2)

    # 3) AdaptiveAvgPool2d downsample (non-divisible 7x5) + AdaptiveFullstackNorm.
    y2 = jax.block_until_ready(
        mod_block_forward(x, (7, 5), params, resize_type="AdaptiveAvgPool2d",
                          norm_type="AdaptiveFullstackNorm"))
    y2_ref = _ref_mod_block(x, (7, 5), params, "AdaptiveAvgPool2d",
                            "AdaptiveFullstackNorm")
    np.testing.assert_allclose(np.asarray(y2), y2_ref, rtol=5e-2, atol=5e-2)

    # 4) Bicubic with target_size == 1 (lane-reduction resize + squeeze path).
    y3 = jax.block_until_ready(
        mod_block_forward(x, 1, params, resize_type="UpsampleBicubic",
                          norm_type="ChannelNorm"))
    assert y3.shape == (N, C_out)
    y3_ref = _ref_mod_block(x, 1, params, "UpsampleBicubic", "ChannelNorm")
    np.testing.assert_allclose(np.asarray(y3), y3_ref, rtol=5e-2, atol=5e-2)

    print("KERNEL_OK")
</pallas_src>

<mosaic_0001>
module attributes {stable_mosaic.version = 11 : i64} {
  func.func @_modblock_kernel(%arg0: i32, %arg1: memref<1x4x4x256xf32, #tpu.memory_space<vmem>>, %arg2: memref<4x1x1xf32, #tpu.memory_space<vmem>>, %arg3: memref<4x1x1xf32, #tpu.memory_space<vmem>>, %arg4: memref<256x1024xf32, #tpu.memory_space<vmem>>, %arg5: memref<4x4xf32, #tpu.memory_space<vmem>>, %arg6: memref<8x4xf32, #tpu.memory_space<vmem>>, %arg7: memref<8x1xf32, #tpu.memory_space<vmem>>, %arg8: memref<2xf32, #tpu.memory_space<smem>>, %arg9: memref<1x8x4096xf32, #tpu.memory_space<vmem>>) attributes {dimension_semantics = [#tpu.dimension_semantics<parallel>], iteration_bounds = array<i64: 2>, scalar_prefetch = 0 : i64, scratch_operands = 0 : i64, tpu.core_type = #tpu.core_type<tc>, window_params = [{transform_indices = @transform_0, window_bounds = array<i64: 1, 4, 4, 256>}, {pipeline_mode = #tpu.pipeline_mode<synchronous>, transform_indices = @transform_1, window_bounds = array<i64: 4, 1, 1>}, {pipeline_mode = #tpu.pipeline_mode<synchronous>, transform_indices = @transform_2, window_bounds = array<i64: 4, 1, 1>}, {pipeline_mode = #tpu.pipeline_mode<synchronous>, transform_indices = @transform_3, window_bounds = array<i64: 256, 1024>}, {pipeline_mode = #tpu.pipeline_mode<synchronous>, transform_indices = @transform_4, window_bounds = array<i64: 4, 4>}, {pipeline_mode = #tpu.pipeline_mode<synchronous>, transform_indices = @transform_5, window_bounds = array<i64: 8, 4>}, {pipeline_mode = #tpu.pipeline_mode<synchronous>, transform_indices = @transform_6, window_bounds = array<i64: 8, 1>}, {transform_indices = @transform_7, window_bounds = array<i64: 2>}, {transform_indices = @transform_8, window_bounds = array<i64: 1, 8, 4096>}]} {
    %c0 = arith.constant 0 : index
    %c0_0 = arith.constant 0 : index
    %c0_1 = arith.constant 0 : index
    %c0_2 = arith.constant 0 : index
    %0 = vector.load %arg1[%c0, %c0_0, %c0_1, %c0_2] : memref<1x4x4x256xf32, #tpu.memory_space<vmem>>, vector<1x4x4x256xf32>
    %1 = vector.shape_cast %0 : vector<1x4x4x256xf32> to vector<4x4x256xf32>
    %cst = arith.constant dense<0.000000e+00> : vector<4x256xf32>
    %2 = vector.multi_reduction <add>, %1, %cst [0] : vector<4x4x256xf32> to vector<4x256xf32>
    %3 = vector.shape_cast %2 : vector<4x256xf32> to vector<1x4x256xf32>
    %cst_3 = arith.constant 4.000000e+00 : f32
    %4 = vector.broadcast %cst_3 : f32 to vector<1x4x256xf32>
    %5 = arith.divf %3, %4 : vector<1x4x256xf32>
    %6 = arith.mulf %1, %1 : vector<4x4x256xf32>
    %cst_4 = arith.constant dense<0.000000e+00> : vector<4x256xf32>
    %7 = vector.multi_reduction <add>, %6, %cst_4 [0] : vector<4x4x256xf32> to vector<4x256xf32>
    %8 = vector.shape_cast %7 : vector<4x256xf32> to vector<1x4x256xf32>
    %cst_5 = arith.constant 4.000000e+00 : f32
    %9 = vector.broadcast %cst_5 : f32 to vector<1x4x256xf32>
    %10 = arith.divf %8, %9 : vector<1x4x256xf32>
    %11 = vector.broadcast %5 : vector<1x4x256xf32> to vector<4x4x256xf32>
    %12 = arith.subf %1, %11 : vector<4x4x256xf32>
    %13 = arith.mulf %5, %5 : vector<1x4x256xf32>
    %14 = arith.subf %10, %13 : vector<1x4x256xf32>
    %cst_6 = arith.constant 9.99999974E-6 : f32
    %15 = vector.broadcast %cst_6 : f32 to vector<1x4x256xf32>
    %16 = arith.addf %14, %15 : vector<1x4x256xf32>
    %17 = math.rsqrt %16 : vector<1x4x256xf32>
    %18 = vector.broadcast %17 : vector<1x4x256xf32> to vector<4x4x256xf32>
    %19 = arith.mulf %12, %18 : vector<4x4x256xf32>
    %c0_7 = arith.constant 0 : index
    %c0_8 = arith.constant 0 : index
    %c0_9 = arith.constant 0 : index
    %20 = vector.load %arg2[%c0_7, %c0_8, %c0_9] : memref<4x1x1xf32, #tpu.memory_space<vmem>>, vector<4x1x1xf32>
    %21 = vector.broadcast %20 : vector<4x1x1xf32> to vector<4x4x256xf32>
    %22 = arith.mulf %19, %21 : vector<4x4x256xf32>
    %c0_10 = arith.constant 0 : index
    %c0_11 = arith.constant 0 : index
    %c0_12 = arith.constant 0 : index
    %23 = vector.load %arg3[%c0_10, %c0_11, %c0_12] : memref<4x1x1xf32, #tpu.memory_space<vmem>>, vector<4x1x1xf32>
    %24 = vector.broadcast %23 : vector<4x1x1xf32> to vector<4x4x256xf32>
    %25 = arith.addf %22, %24 : vector<4x4x256xf32>
    %26 = math.tanh %25 : vector<4x4x256xf32>
    %27 = vector.shape_cast %26 : vector<4x4x256xf32> to vector<16x256xf32>
    %c0_13 = arith.constant 0 : index
    %c0_14 = arith.constant 0 : index
    %28 = vector.load %arg4[%c0_13, %c0_14] : memref<256x1024xf32, #tpu.memory_space<vmem>>, vector<256x1024xf32>
    %cst_15 = arith.constant dense<0.000000e+00> : vector<16x1024xf32>
    %29 = tpu.matmul %27, %28, %cst_15 {dimension_numbers = #tpu.dot_dimension_numbers<[1], [0], [0], [1], [0, 0, 1, 1], [], []>} : vector<16x256xf32>, vector<256x1024xf32>, vector<16x1024xf32> -> vector<16x1024xf32>
    %30 = vector.shape_cast %29 : vector<16x1024xf32> to vector<4x4096xf32>
    %c0_16 = arith.constant 0 : index
    %c0_17 = arith.constant 0 : index
    %31 = vector.load %arg5[%c0_16, %c0_17] : memref<4x4xf32, #tpu.memory_space<vmem>>, vector<4x4xf32>
    %cst_18 = arith.constant dense<0.000000e+00> : vector<4x4096xf32>
    %32 = tpu.matmul %31, %30, %cst_18 {dimension_numbers = #tpu.dot_dimension_numbers<[1], [0], [0], [1], [0, 0, 1, 1], [], []>} : vector<4x4xf32>, vector<4x4096xf32>, vector<4x4096xf32> -> vector<4x4096xf32>
    %c0_19 = arith.constant 0 : index
    %33 = memref.load %arg8[%c0_19] : memref<2xf32, #tpu.memory_space<smem>>
    %c1 = arith.constant 1 : index
    %34 = memref.load %arg8[%c1] : memref<2xf32, #tpu.memory_space<smem>>
    %cst_20 = arith.constant 0.000000e+00 : f32
    %35 = vector.broadcast %cst_20 : f32 to vector<4x4096xf32>
    %36 = arith.cmpf olt, %32, %35 : vector<4x4096xf32>
    %37 = vector.broadcast %33 : f32 to vector<4x4096xf32>
    %38 = vector.broadcast %34 : f32 to vector<4x4096xf32>
    %39 = arith.select %36, %37, %38 : vector<4x4096xi1>, vector<4x4096xf32>
    %40 = arith.mulf %32, %39 : vector<4x4096xf32>
    %c0_21 = arith.constant 0 : index
    %c0_22 = arith.constant 0 : index
    %41 = vector.load %arg6[%c0_21, %c0_22] : memref<8x4xf32, #tpu.memory_space<vmem>>, vector<8x4xf32>
    %cst_23 = arith.constant dense<0.000000e+00> : vector<8x4096xf32>
    %42 = tpu.matmul %41, %40, %cst_23 {dimension_numbers = #tpu.dot_dimension_numbers<[1], [0], [0], [1], [0, 0, 1, 1], [], []>} : vector<8x4xf32>, vector<4x4096xf32>, vector<8x4096xf32> -> vector<8x4096xf32>
    %c0_24 = arith.constant 0 : index
    %c0_25 = arith.constant 0 : index
    %43 = vector.load %arg7[%c0_24, %c0_25] : memref<8x1xf32, #tpu.memory_space<vmem>>, vector<8x1xf32>
    %44 = vector.broadcast %43 : vector<8x1xf32> to vector<8x4096xf32>
    %45 = arith.addf %42, %44 : vector<8x4096xf32>
    %c0_26 = arith.constant 0 : index
    %c0_27 = arith.constant 0 : index
    %c0_28 = arith.constant 0 : index
    %46 = vector.load %arg9[%c0_26, %c0_27, %c0_28] : memref<1x8x4096xf32, #tpu.memory_space<vmem>>, vector<1x8x4096xf32>
    %47 = vector.shape_cast %46 : vector<1x8x4096xf32> to vector<8x4096xf32>
    %48 = vector.shape_cast %45 : vector<8x4096xf32> to vector<1x8x4096xf32>
    tpu.vector_store %arg9[%c0_26, %c0_27, %c0_28], %48 {strides = array<i32>} : memref<1x8x4096xf32, #tpu.memory_space<vmem>>, vector<1x8x4096xf32>,
    return
  }
  func.func @transform_0(%arg0: i32) -> (i32, i32, i32, i32) {
    %c0_i32 = arith.constant 0 : i32
    %c0_i32_0 = arith.constant 0 : i32
    %c0_i32_1 = arith.constant 0 : i32
    %c0_i32_2 = arith.constant 0 : i32
    return %arg0, %c0_i32, %c0_i32_0, %c0_i32_1 : i32, i32, i32, i32
  }
  func.func @transform_1(%arg0: i32) -> (i32, i32, i32) {
    %c0_i32 = arith.constant 0 : i32
    %c0_i32_0 = arith.constant 0 : i32
    %c0_i32_1 = arith.constant 0 : i32
    %c0_i32_2 = arith.constant 0 : i32
    return %c0_i32, %c0_i32_0, %c0_i32_1 : i32, i32, i32
  }
  func.func @transform_2(%arg0: i32) -> (i32, i32, i32) {
    %c0_i32 = arith.constant 0 : i32
    %c0_i32_0 = arith.constant 0 : i32
    %c0_i32_1 = arith.constant 0 : i32
    %c0_i32_2 = arith.constant 0 : i32
    return %c0_i32, %c0_i32_0, %c0_i32_1 : i32, i32, i32
  }
  func.func @transform_3(%arg0: i32) -> (i32, i32) {
    %c0_i32 = arith.constant 0 : i32
    %c0_i32_0 = arith.constant 0 : i32
    %c0_i32_1 = arith.constant 0 : i32
    return %c0_i32, %c0_i32_0 : i32, i32
  }
  func.func @transform_4(%arg0: i32) -> (i32, i32) {
    %c0_i32 = arith.constant 0 : i32
    %c0_i32_0 = arith.constant 0 : i32
    %c0_i32_1 = arith.constant 0 : i32
    return %c0_i32, %c0_i32_0 : i32, i32
  }
  func.func @transform_5(%arg0: i32) -> (i32, i32) {
    %c0_i32 = arith.constant 0 : i32
    %c0_i32_0 = arith.constant 0 : i32
    %c0_i32_1 = arith.constant 0 : i32
    return %c0_i32, %c0_i32_0 : i32, i32
  }
  func.func @transform_6(%arg0: i32) -> (i32, i32) {
    %c0_i32 = arith.constant 0 : i32
    %c0_i32_0 = arith.constant 0 : i32
    %c0_i32_1 = arith.constant 0 : i32
    return %c0_i32, %c0_i32_0 : i32, i32
  }
  func.func @transform_7(%arg0: i32) -> i32 {
    %c0_i32 = arith.constant 0 : i32
    %c0_i32_0 = arith.constant 0 : i32
    return %c0_i32 : i32
  }
  func.func @transform_8(%arg0: i32) -> (i32, i32, i32) {
    %c0_i32 = arith.constant 0 : i32
    %c0_i32_0 = arith.constant 0 : i32
    %c0_i32_1 = arith.constant 0 : i32
    return %arg0, %c0_i32, %c0_i32_0 : i32, i32, i32
  }
}

module attributes {stable_mosaic.version = 11 : i64} {
  func.func @_modblock_kernel(%arg0: i32, %arg1: memref<1x4x4x256xf32, #tpu.memory_space<vmem>>, %arg2: memref<4x1x1xf32, #tpu.memory_space<vmem>>, %arg3: memref<4x1x1xf32, #tpu.memory_space<vmem>>, %arg4: memref<256x1024xf32, #tpu.memory_space<vmem>>, %arg5: memref<4x4xf32, #tpu.memory_space<vmem>>, %arg6: memref<8x4xf32, #tpu.memory_space<vmem>>, %arg7: memref<8x1xf32, #tpu.memory_space<vmem>>, %arg8: memref<2xf32, #tpu.memory_space<smem>>, %arg9: memref<1x8x4096xf32, #tpu.memory_space<vmem>>) attributes {dimension_semantics = [#tpu.dimension_semantics<parallel>], iteration_bounds = array<i64: 2>, scalar_prefetch = 0 : i64, scratch_operands = 0 : i64, tpu.core_type = #tpu.core_type<tc>, window_params = [{transform_indices = @transform_0, window_bounds = array<i64: 1, 4, 4, 256>}, {pipeline_mode = #tpu.pipeline_mode<synchronous>, transform_indices = @transform_1, window_bounds = array<i64: 4, 1, 1>}, {pipeline_mode = #tpu.pipeline_mode<synchronous>, transform_indices = @transform_2, window_bounds = array<i64: 4, 1, 1>}, {pipeline_mode = #tpu.pipeline_mode<synchronous>, transform_indices = @transform_3, window_bounds = array<i64: 256, 1024>}, {pipeline_mode = #tpu.pipeline_mode<synchronous>, transform_indices = @transform_4, window_bounds = array<i64: 4, 4>}, {pipeline_mode = #tpu.pipeline_mode<synchronous>, transform_indices = @transform_5, window_bounds = array<i64: 8, 4>}, {pipeline_mode = #tpu.pipeline_mode<synchronous>, transform_indices = @transform_6, window_bounds = array<i64: 8, 1>}, {transform_indices = @transform_7, window_bounds = array<i64: 2>}, {transform_indices = @transform_8, window_bounds = array<i64: 1, 8, 4096>}]} {
    %c0 = arith.constant 0 : index
    %c0_0 = arith.constant 0 : index
    %c0_1 = arith.constant 0 : index
    %c0_2 = arith.constant 0 : index
    %0 = vector.load %arg1[%c0, %c0_0, %c0_1, %c0_2] : memref<1x4x4x256xf32, #tpu.memory_space<vmem>>, vector<1x4x4x256xf32>
    %1 = vector.shape_cast %0 : vector<1x4x4x256xf32> to vector<4x4x256xf32>
    %cst = arith.constant dense<0.000000e+00> : vector<4x256xf32>
    %2 = vector.multi_reduction <add>, %1, %cst [0] : vector<4x4x256xf32> to vector<4x256xf32>
    %3 = vector.shape_cast %2 : vector<4x256xf32> to vector<1x4x256xf32>
    %cst_3 = arith.constant 4.000000e+00 : f32
    %4 = vector.broadcast %cst_3 : f32 to vector<1x4x256xf32>
    %5 = arith.divf %3, %4 : vector<1x4x256xf32>
    %6 = arith.mulf %1, %1 : vector<4x4x256xf32>
    %cst_4 = arith.constant dense<0.000000e+00> : vector<4x256xf32>
    %7 = vector.multi_reduction <add>, %6, %cst_4 [0] : vector<4x4x256xf32> to vector<4x256xf32>
    %8 = vector.shape_cast %7 : vector<4x256xf32> to vector<1x4x256xf32>
    %cst_5 = arith.constant 4.000000e+00 : f32
    %9 = vector.broadcast %cst_5 : f32 to vector<1x4x256xf32>
    %10 = arith.divf %8, %9 : vector<1x4x256xf32>
    %11 = vector.broadcast %5 : vector<1x4x256xf32> to vector<4x4x256xf32>
    %12 = arith.subf %1, %11 : vector<4x4x256xf32>
    %13 = arith.mulf %5, %5 : vector<1x4x256xf32>
    %14 = arith.subf %10, %13 : vector<1x4x256xf32>
    %cst_6 = arith.constant 9.99999974E-6 : f32
    %15 = vector.broadcast %cst_6 : f32 to vector<1x4x256xf32>
    %16 = arith.addf %14, %15 : vector<1x4x256xf32>
    %17 = math.rsqrt %16 : vector<1x4x256xf32>
    %18 = vector.broadcast %17 : vector<1x4x256xf32> to vector<4x4x256xf32>
    %19 = arith.mulf %12, %18 : vector<4x4x256xf32>
    %c0_7 = arith.constant 0 : index
    %c0_8 = arith.constant 0 : index
    %c0_9 = arith.constant 0 : index
    %20 = vector.load %arg2[%c0_7, %c0_8, %c0_9] : memref<4x1x1xf32, #tpu.memory_space<vmem>>, vector<4x1x1xf32>
    %21 = vector.broadcast %20 : vector<4x1x1xf32> to vector<4x4x256xf32>
    %22 = arith.mulf %19, %21 : vector<4x4x256xf32>
    %c0_10 = arith.constant 0 : index
    %c0_11 = arith.constant 0 : index
    %c0_12 = arith.constant 0 : index
    %23 = vector.load %arg3[%c0_10, %c0_11, %c0_12] : memref<4x1x1xf32, #tpu.memory_space<vmem>>, vector<4x1x1xf32>
    %24 = vector.broadcast %23 : vector<4x1x1xf32> to vector<4x4x256xf32>
    %25 = arith.addf %22, %24 : vector<4x4x256xf32>
    %26 = math.tanh %25 : vector<4x4x256xf32>
    %27 = vector.shape_cast %26 : vector<4x4x256xf32> to vector<16x256xf32>
    %c0_13 = arith.constant 0 : index
    %c0_14 = arith.constant 0 : index
    %28 = vector.load %arg4[%c0_13, %c0_14] : memref<256x1024xf32, #tpu.memory_space<vmem>>, vector<256x1024xf32>
    %cst_15 = arith.constant dense<0.000000e+00> : vector<16x1024xf32>
    %29 = tpu.matmul %27, %28, %cst_15 {dimension_numbers = #tpu.dot_dimension_numbers<[1], [0], [0], [1], [0, 0, 1, 1], [], []>} : vector<16x256xf32>, vector<256x1024xf32>, vector<16x1024xf32> -> vector<16x1024xf32>
    %30 = vector.shape_cast %29 : vector<16x1024xf32> to vector<4x4096xf32>
    %c0_16 = arith.constant 0 : index
    %c0_17 = arith.constant 0 : index
    %31 = vector.load %arg5[%c0_16, %c0_17] : memref<4x4xf32, #tpu.memory_space<vmem>>, vector<4x4xf32>
    %cst_18 = arith.constant dense<0.000000e+00> : vector<4x4096xf32>
    %32 = tpu.matmul %31, %30, %cst_18 {dimension_numbers = #tpu.dot_dimension_numbers<[1], [0], [0], [1], [0, 0, 1, 1], [], []>} : vector<4x4xf32>, vector<4x4096xf32>, vector<4x4096xf32> -> vector<4x4096xf32>
    %c0_19 = arith.constant 0 : index
    %33 = memref.load %arg8[%c0_19] : memref<2xf32, #tpu.memory_space<smem>>
    %c1 = arith.constant 1 : index
    %34 = memref.load %arg8[%c1] : memref<2xf32, #tpu.memory_space<smem>>
    %cst_20 = arith.constant 0.000000e+00 : f32
    %35 = vector.broadcast %cst_20 : f32 to vector<4x4096xf32>
    %36 = arith.cmpf olt, %32, %35 : vector<4x4096xf32>
    %37 = vector.broadcast %33 : f32 to vector<4x4096xf32>
    %38 = vector.broadcast %34 : f32 to vector<4x4096xf32>
    %39 = arith.select %36, %37, %38 : vector<4x4096xi1>, vector<4x4096xf32>
    %40 = arith.mulf %32, %39 : vector<4x4096xf32>
    %c0_21 = arith.constant 0 : index
    %c0_22 = arith.constant 0 : index
    %41 = vector.load %arg6[%c0_21, %c0_22] : memref<8x4xf32, #tpu.memory_space<vmem>>, vector<8x4xf32>
    %cst_23 = arith.constant dense<0.000000e+00> : vector<8x4096xf32>
    %42 = tpu.matmul %41, %40, %cst_23 {dimension_numbers = #tpu.dot_dimension_numbers<[1], [0], [0], [1], [0, 0, 1, 1], [], []>} : vector<8x4xf32>, vector<4x4096xf32>, vector<8x4096xf32> -> vector<8x4096xf32>
    %c0_24 = arith.constant 0 : index
    %c0_25 = arith.constant 0 : index
    %43 = vector.load %arg7[%c0_24, %c0_25] : memref<8x1xf32, #tpu.memory_space<vmem>>, vector<8x1xf32>
    %44 = vector.broadcast %43 : vector<8x1xf32> to vector<8x4096xf32>
    %45 = arith.addf %42, %44 : vector<8x4096xf32>
    %c0_26 = arith.constant 0 : index
    %c0_27 = arith.constant 0 : index
    %c0_28 = arith.constant 0 : index
    %46 = vector.load %arg9[%c0_26, %c0_27, %c0_28] : memref<1x8x4096xf32, #tpu.memory_space<vmem>>, vector<1x8x4096xf32>
    %47 = vector.shape_cast %46 : vector<1x8x4096xf32> to vector<8x4096xf32>
    %48 = vector.shape_cast %45 : vector<8x4096xf32> to vector<1x8x4096xf32>
    tpu.vector_store %arg9[%c0_26, %c0_27, %c0_28], %48 {strides = array<i32>} : memref<1x8x4096xf32, #tpu.memory_space<vmem>>, vector<1x8x4096xf32>,
    return
  }
  func.func @transform_0(%arg0: i32) -> (i32, i32, i32, i32) {
    %c0_i32 = arith.constant 0 : i32
    %c0_i32_0 = arith.constant 0 : i32
    %c0_i32_1 = arith.constant 0 : i32
    %c0_i32_2 = arith.constant 0 : i32
    return %arg0, %c0_i32, %c0_i32_0, %c0_i32_1 : i32, i32, i32, i32
  }
  func.func @transform_1(%arg0: i32) -> (i32, i32, i32) {
    %c0_i32 = arith.constant 0 : i32
    %c0_i32_0 = arith.constant 0 : i32
    %c0_i32_1 = arith.constant 0 : i32
    %c0_i32_2 = arith.constant 0 : i32
    return %c0_i32, %c0_i32_0, %c0_i32_1 : i32, i32, i32
  }
  func.func @transform_2(%arg0: i32) -> (i32, i32, i32) {
    %c0_i32 = arith.constant 0 : i32
    %c0_i32_0 = arith.constant 0 : i32
    %c0_i32_1 = arith.constant 0 : i32
    %c0_i32_2 = arith.constant 0 : i32
    return %c0_i32, %c0_i32_0, %c0_i32_1 : i32, i32, i32
  }
  func.func @transform_3(%arg0: i32) -> (i32, i32) {
    %c0_i32 = arith.constant 0 : i32
    %c0_i32_0 = arith.constant 0 : i32
    %c0_i32_1 = arith.constant 0 : i32
    return %c0_i32, %c0_i32_0 : i32, i32
  }
  func.func @transform_4(%arg0: i32) -> (i32, i32) {
    %c0_i32 = arith.constant 0 : i32
    %c0_i32_0 = arith.constant 0 : i32
    %c0_i32_1 = arith.constant 0 : i32
    return %c0_i32, %c0_i32_0 : i32, i32
  }
  func.func @transform_5(%arg0: i32) -> (i32, i32) {
    %c0_i32 = arith.constant 0 : i32
    %c0_i32_0 = arith.constant 0 : i32
    %c0_i32_1 = arith.constant 0 : i32
    return %c0_i32, %c0_i32_0 : i32, i32
  }
  func.func @transform_6(%arg0: i32) -> (i32, i32) {
    %c0_i32 = arith.constant 0 : i32
    %c0_i32_0 = arith.constant 0 : i32
    %c0_i32_1 = arith.constant 0 : i32
    return %c0_i32, %c0_i32_0 : i32, i32
  }
  func.func @transform_7(%arg0: i32) -> i32 {
    %c0_i32 = arith.constant 0 : i32
    %c0_i32_0 = arith.constant 0 : i32
    return %c0_i32 : i32
  }
  func.func @transform_8(%arg0: i32) -> (i32, i32, i32) {
    %c0_i32 = arith.constant 0 : i32
    %c0_i32_0 = arith.constant 0 : i32
    %c0_i32_1 = arith.constant 0 : i32
    return %arg0, %c0_i32, %c0_i32_0 : i32, i32, i32
  }
}

</mosaic_0001>

<llo_original>
// kernel: tpu_custom_call.1
$region0: #{tpu_custom_call.1}
  #allocation0 [shape = 'u32[]', space=smem, size = 0x4, offset = 0x4, fixed_abs, tag = 'smem constant byte address 0x4 - core index']
  #allocation1 [shape = 'u32[144,128]{1,0:T(1,128)}', space=vmem, size = 0x12000, scoped, tag = 'internal scratch']
  %s0 = inlined_call_operand.hbm [shape: f32[2,4,4,256], index: 0, kind: input, shape index: {}]
  %s1 = inlined_call_operand.vmem [shape: f32[4,1,1], index: 1, kind: input, shape index: {}]
  %s2 = inlined_call_operand.vmem [shape: f32[4,1,1], index: 2, kind: input, shape index: {}]
  %s3 = inlined_call_operand.hbm [shape: f32[256,1024], index: 3, kind: input, shape index: {}]
  %s4 = inlined_call_operand.vmem [shape: f32[4,4], index: 4, kind: input, shape index: {}]
  %s5 = inlined_call_operand.vmem [shape: f32[8,4], index: 5, kind: input, shape index: {}]
  %s6 = inlined_call_operand.vmem [shape: f32[8,1], index: 6, kind: input, shape index: {}]
  %s7 = inlined_call_operand.vmem [shape: f32[2], index: 7, kind: input, shape index: {}]
  %s8 = inlined_call_operand.hbm [shape: f32[2,8,4096], index: 8, kind: output, shape index: {}]
  %s9 = sld [smem:[#allocation0]]
  $region77: #{tpu_custom_call.1} parent=0
    _
  %s11 = ssub.s32 1, %s9
  %s12 = scalar_select 0, %s11, %s9
  $region1: #{tpu_custom_call.1} parent=0
    #allocation2 [shape = 'u8[32768]{0}', space=vmem, size = 0x8000, scoped, tag = 'input window, operand 0']
    #allocation3 [shape = 's32[2]{0}', space=sflag, size = 0x8, scoped, tag = 'scoped memory for tpu_custom_call.1']
    #allocation4 [shape = 's32[2]{0}', space=sflag, size = 0x8, scoped, tag = 'scoped memory for tpu_custom_call.1']
    #allocation5 [shape = 's32[2]{0}', space=sflag, size = 0x8, scoped, tag = 'scoped memory for tpu_custom_call.1']
    #allocation6 [shape = 'u8[1048576]{0}', space=vmem, size = 0x100000, scoped, tag = 'input window, operand 3, single buffered']
    #allocation7 [shape = 's32[1]{0}', space=sflag, size = 0x4, scoped, tag = 'scoped memory for tpu_custom_call.1']
    #allocation8 [shape = 'u8[512]{0}', space=smem, size = 0x200, scoped, tag = 'input window, operand 7, single buffered']
    #allocation9 [shape = 'u8[262144]{0}', space=vmem, size = 0x40000, scoped, tag = 'output window, operand 0']
    %13 = vsyncpa [#allocation3], 0
    %s14 = scalar_lea.sflag [#allocation3], 1
    %15 = vsyncpa %s14, 0
    %16 = vsyncpa [#allocation7], 0
    %17 = vsyncpa [#allocation5], 0
    %18 = vsyncpa [#allocation4], 0
    %s19 = scalar_lea.sflag [#allocation4], 1
    %20 = vsyncpa %s19, 0
    loop: start=0, step=1, limit=4
    $region2: #{tpu_custom_call.1} parent=1 // loop_pre_header
      _
    $region3: #{tpu_custom_call.1} parent=1 // loop_header
      %s22 = sphi 0, %s26
      %p23 = scmp.ge.s32.totalorder %s22, 4
      %s32 = sphi 0, %s34
      %s35 = sphi 0, %s32
      %s36 = sphi 0, %s35
      %s52 = sphi 0, %s36
      %s56 = sphi 0, %s56
      %s58 = sphi 0, %s56
      %s59 = sphi 0, %s58
      %s73 = sphi 0, %s59
      %s77 = sphi 0, %s77
      %s79 = sphi 0, %s77
      %s80 = sphi 0, %s79
      %s94 = sphi 0, %s80
      %s98 = sphi 0, %s98
      %s100 = sphi 0, %s98
      %s101 = sphi 0, %s100
      %s115 = sphi 0, %s101
      %s119 = sphi 0, %s119
      %s121 = sphi 0, %s119
      %s122 = sphi 0, %s121
      %s136 = sphi 0, %s122
      %s140 = sphi 0, %s140
      %s142 = sphi 0, %s140
      %s143 = sphi 0, %s142
      %s157 = sphi 0, %s143
      %s161 = sphi 0, %s161
      %s163 = sphi 0, %s161
      %s164 = sphi 0, %s163
      %s178 = sphi 0, %s164
      %s182 = sphi 0, %s182
      %s184 = sphi 0, %s182
      %s185 = sphi 0, %s184
      %s199 = sphi 0, %s185
      %s205 = sphi 0, %s207
      %s208 = sphi 0, %s205
      %s209 = sphi 0, %s208
      %s225 = sphi 0, %s209
    $region4: #{tpu_custom_call.1} parent=1 // loop_header_branch
      %25 = sbr.rel (%p23) target = $region8
    $region5: #{tpu_custom_call.1} parent=1 // loop_body
      %s27 = ssub.s32 %s22, 1
      %s28 = ssub.s32 %s22, 2
      %s29 = sadd.s32 %s22, 1
      %s30 = ssub.s32 %s22, %s29
      %p31 = scmp.eq.s32.totalorder %s30, 0
      %s33 = sadd.s32 %s32, 1
      %s34 = scalar_select %p31, %s32, %s33
      %p37 = pneg %p31
      %p38 = scmp.eq.s32.totalorder %s22, 1
      %p39 = por %p37, %p38
      %p40 = scmp.ne.s32.totalorder %s32, %s35
      %p41 = scmp.eq.s32.totalorder %s22, 0
      %p42 = por %p40, %p41
      %p43 = scmp.ne.s32.totalorder %s32, %s35
      %p44 = scmp.eq.s32.totalorder %s27, 1
      %p45 = por %p43, %p44
      %p46 = scmp.ne.s32.totalorder %s35, %s36
      %p47 = scmp.eq.s32.totalorder %s27, 0
      %p48 = por %p46, %p47
      %p49 = scmp.ne.s32.totalorder %s35, %s36
      %p50 = scmp.eq.s32.totalorder %s28, 1
      %p51 = por %p49, %p50
      %p53 = scmp.ne.s32.totalorder %s36, %s52
      %p54 = scmp.eq.s32.totalorder %s28, 0
      %p55 = por %p53, %p54
      %s57 = sadd.s32 %s56, 1
      %p60 = scmp.eq.s32.totalorder %s22, 1
      %p61 = scmp.ne.s32.totalorder %s56, %s58
      %p62 = scmp.eq.s32.totalorder %s22, 0
      %p63 = por %p61, %p62
      %p64 = scmp.ne.s32.totalorder %s56, %s58
      %p65 = scmp.eq.s32.totalorder %s27, 1
      %p66 = por %p64, %p65
      %p67 = scmp.ne.s32.totalorder %s58, %s59
      %p68 = scmp.eq.s32.totalorder %s27, 0
      %p69 = por %p67, %p68
      %p70 = scmp.ne.s32.totalorder %s58, %s59
      %p71 = scmp.eq.s32.totalorder %s28, 1
      %p72 = por %p70, %p71
      %p74 = scmp.ne.s32.totalorder %s59, %s73
      %p75 = scmp.eq.s32.totalorder %s28, 0
      %p76 = por %p74, %p75
      %s78 = sadd.s32 %s77, 1
      %p81 = scmp.eq.s32.totalorder %s22, 1
      %p82 = scmp.ne.s32.totalorder %s77, %s79
      %p83 = scmp.eq.s32.totalorder %s22, 0
      %p84 = por %p82, %p83
      %p85 = scmp.ne.s32.totalorder %s77, %s79
      %p86 = scmp.eq.s32.totalorder %s27, 1
      %p87 = por %p85, %p86
      %p88 = scmp.ne.s32.totalorder %s79, %s80
      %p89 = scmp.eq.s32.totalorder %s27, 0
      %p90 = por %p88, %p89
      %p91 = scmp.ne.s32.totalorder %s79, %s80
      %p92 = scmp.eq.s32.totalorder %s28, 1
      %p93 = por %p91, %p92
      %p95 = scmp.ne.s32.totalorder %s80, %s94
      %p96 = scmp.eq.s32.totalorder %s28, 0
      %p97 = por %p95, %p96
      %s99 = sadd.s32 %s98, 1
      %p102 = scmp.eq.s32.totalorder %s22, 1
      %p103 = scmp.ne.s32.totalorder %s98, %s100
      %p104 = scmp.eq.s32.totalorder %s22, 0
      %p105 = por %p103, %p104
      %p106 = scmp.ne.s32.totalorder %s98, %s100
      %p107 = scmp.eq.s32.totalorder %s27, 1
      %p108 = por %p106, %p107
      %p109 = scmp.ne.s32.totalorder %s100, %s101
      %p110 = scmp.eq.s32.totalorder %s27, 0
      %p111 = por %p109, %p110
      %p112 = scmp.ne.s32.totalorder %s100, %s101
      %p113 = scmp.eq.s32.totalorder %s28, 1
      %p114 = por %p112, %p113
      %p116 = scmp.ne.s32.totalorder %s101, %s115
      %p117 = scmp.eq.s32.totalorder %s28, 0
      %p118 = por %p116, %p117
      %s120 = sadd.s32 %s119, 1
      %p123 = scmp.eq.s32.totalorder %s22, 1
      %p124 = scmp.ne.s32.totalorder %s119, %s121
      %p125 = scmp.eq.s32.totalorder %s22, 0
      %p126 = por %p124, %p125
      %p127 = scmp.ne.s32.totalorder %s119, %s121
      %p128 = scmp.eq.s32.totalorder %s27, 1
      %p129 = por %p127, %p128
      %p130 = scmp.ne.s32.totalorder %s121, %s122
      %p131 = scmp.eq.s32.totalorder %s27, 0
      %p132 = por %p130, %p131
      %p133 = scmp.ne.s32.totalorder %s121, %s122
      %p134 = scmp.eq.s32.totalorder %s28, 1
      %p135 = por %p133, %p134
      %p137 = scmp.ne.s32.totalorder %s122, %s136
      %p138 = scmp.eq.s32.totalorder %s28, 0
      %p139 = por %p137, %p138
      %s141 = sadd.s32 %s140, 1
      %p144 = scmp.eq.s32.totalorder %s22, 1
      %p145 = scmp.ne.s32.totalorder %s140, %s142
      %p146 = scmp.eq.s32.totalorder %s22, 0
      %p147 = por %p145, %p146
      %p148 = scmp.ne.s32.totalorder %s140, %s142
      %p149 = scmp.eq.s32.totalorder %s27, 1
      %p150 = por %p148, %p149
      %p151 = scmp.ne.s32.totalorder %s142, %s143
      %p152 = scmp.eq.s32.totalorder %s27, 0
      %p153 = por %p151, %p152
      %p154 = scmp.ne.s32.totalorder %s142, %s143
      %p155 = scmp.eq.s32.totalorder %s28, 1
      %p156 = por %p154, %p155
      %p158 = scmp.ne.s32.totalorder %s143, %s157
      %p159 = scmp.eq.s32.totalorder %s28, 0
      %p160 = por %p158, %p159
      %s162 = sadd.s32 %s161, 1
      %p165 = scmp.eq.s32.totalorder %s22, 1
      %p166 = scmp.ne.s32.totalorder %s161, %s163
      %p167 = scmp.eq.s32.totalorder %s22, 0
      %p168 = por %p166, %p167
      %p169 = scmp.ne.s32.totalorder %s161, %s163
      %p170 = scmp.eq.s32.totalorder %s27, 1
      %p171 = por %p169, %p170
      %p172 = scmp.ne.s32.totalorder %s163, %s164
      %p173 = scmp.eq.s32.totalorder %s27, 0
      %p174 = por %p172, %p173
      %p175 = scmp.ne.s32.totalorder %s163, %s164
      %p176 = scmp.eq.s32.totalorder %s28, 1
      %p177 = por %p175, %p176
      %p179 = scmp.ne.s32.totalorder %s164, %s178
      %p180 = scmp.eq.s32.totalorder %s28, 0
      %p181 = por %p179, %p180
      %s183 = sadd.s32 %s182, 1
      %p186 = scmp.eq.s32.totalorder %s22, 1
      %p187 = scmp.ne.s32.totalorder %s182, %s184
      %p188 = scmp.eq.s32.totalorder %s22, 0
      %p189 = por %p187, %p188
      %p190 = scmp.ne.s32.totalorder %s182, %s184
      %p191 = scmp.eq.s32.totalorder %s27, 1
      %p192 = por %p190, %p191
      %p193 = scmp.ne.s32.totalorder %s184, %s185
      %p194 = scmp.eq.s32.totalorder %s27, 0
      %p195 = por %p193, %p194
      %p196 = scmp.ne.s32.totalorder %s184, %s185
      %p197 = scmp.eq.s32.totalorder %s28, 1
      %p198 = por %p196, %p197
      %p200 = scmp.ne.s32.totalorder %s185, %s199
      %p201 = scmp.eq.s32.totalorder %s28, 0
      %p202 = por %p200, %p201
      %s203 = ssub.s32 %s22, %s29
      %p204 = scmp.eq.s32.totalorder %s203, 0
      %s206 = sadd.s32 %s205, 1
      %s207 = scalar_select %p204, %s205, %s206
      %p210 = pneg %p204
      %p211 = scmp.eq.s32.totalorder %s22, 1
      %p212 = por %p210, %p211
      %p213 = scmp.ne.s32.totalorder %s205, %s208
      %p214 = scmp.eq.s32.totalorder %s22, 0
      %p215 = por %p213, %p214
      %p216 = scmp.ne.s32.totalorder %s205, %s208
      %p217 = scmp.eq.s32.totalorder %s27, 1
      %p218 = por %p216, %p217
      %p219 = scmp.ne.s32.totalorder %s208, %s209
      %p220 = scmp.eq.s32.totalorder %s27, 0
      %p221 = por %p219, %p220
      %p222 = scmp.ne.s32.totalorder %s208, %s209
      %p223 = scmp.eq.s32.totalorder %s28, 1
      %p224 = por %p222, %p223
      %p226 = scmp.ne.s32.totalorder %s209, %s225
      %p227 = scmp.eq.s32.totalorder %s28, 0
      %p228 = por %p226, %p227
      %p229 = scmp.le.s32.totalorder 1, %s22
      %p230 = scmp.lt.s32.totalorder %s22, 3
      %p231 = pnand %p229, %p230
      %p232 = pneg %p231
      // Predicated region
      $region9: #{tpu_custom_call.1} parent=5 // pred_check
        _
      $region10: #{tpu_custom_call.1} parent=5 // pred_check_branch
        %234 = sbr.rel (%p231) target = $region12
      $region11: #{tpu_custom_call.1} parent=5 // pred_region
        %s235 = ssub.s32 %s22, 1
        // Predicated region
        $region13: #{tpu_custom_call.1} parent=11 // pred_check
          %p236 = pneg %p69
        $region14: #{tpu_custom_call.1} parent=11 // pred_check_branch
          %238 = sbr.rel (%p236) target = $region16
        $region15: #{tpu_custom_call.1} parent=11 // pred_region
          _
        $region16: #{tpu_custom_call.1} parent=11 // pred_fallthru
          _
        // Predicated region
        $region17: #{tpu_custom_call.1} parent=11 // pred_check
          %p239 = pneg %p90
        $region18: #{tpu_custom_call.1} parent=11 // pred_check_branch
          %241 = sbr.rel (%p239) target = $region20
        $region19: #{tpu_custom_call.1} parent=11 // pred_region
          _
        $region20: #{tpu_custom_call.1} parent=11 // pred_fallthru
          _
        // Predicated region
        $region21: #{tpu_custom_call.1} parent=11 // pred_check
          %p242 = pneg %p111
        $region22: #{tpu_custom_call.1} parent=11 // pred_check_branch
          %244 = sbr.rel (%p242) target = $region24
        $region23: #{tpu_custom_call.1} parent=11 // pred_region
          %s246 = ssub.s32 32768, 32768
          %247 = vsyncadd [#allocation7], %s246
          %s248 = sshll.u32 [#allocation6], 4
          %s249 = int_to_ptr.vmem [resolvable:$true] %s248
          %254 = dma.hbm_to_vmem [thread:$0]  %s3, 32768, %s249, [#allocation7], 1024, 1024, 64
        $region24: #{tpu_custom_call.1} parent=11 // pred_fallthru
          _
        // Predicated region
        $region25: #{tpu_custom_call.1} parent=11 // pred_check
          %p255 = pneg %p132
        $region26: #{tpu_custom_call.1} parent=11 // pred_check_branch
          %257 = sbr.rel (%p255) target = $region28
        $region27: #{tpu_custom_call.1} parent=11 // pred_region
          _
        $region28: #{tpu_custom_call.1} parent=11 // pred_fallthru
          _
        // Predicated region
        $region29: #{tpu_custom_call.1} parent=11 // pred_check
          %p258 = pneg %p153
        $region30: #{tpu_custom_call.1} parent=11 // pred_check_branch
          %260 = sbr.rel (%p258) target = $region32
        $region31: #{tpu_custom_call.1} parent=11 // pred_region
          _
        $region32: #{tpu_custom_call.1} parent=11 // pred_fallthru
          _
        // Predicated region
        $region33: #{tpu_custom_call.1} parent=11 // pred_check
          %p261 = pneg %p174
        $region34: #{tpu_custom_call.1} parent=11 // pred_check_branch
          %263 = sbr.rel (%p261) target = $region36
        $region35: #{tpu_custom_call.1} parent=11 // pred_region
          _
        $region36: #{tpu_custom_call.1} parent=11 // pred_fallthru
          _
        // Predicated region
        $region37: #{tpu_custom_call.1} parent=11 // pred_check
          %p264 = pneg %p195
        $region38: #{tpu_custom_call.1} parent=11 // pred_check_branch
          %266 = sbr.rel (%p264) target = $region40
        $region39: #{tpu_custom_call.1} parent=11 // pred_region
          %s268 = ssub.s32 16, 16
          %269 = vsyncadd [#allocation5], %s268
          %s271 = sshll.u32 %s7, 4
          %s272 = int_to_ptr.vmem [resolvable:$true] %s271
          %274 = dma.vmem_to_smem %s272, 16, [#allocation8], [#allocation5]
        $region40: #{tpu_custom_call.1} parent=11 // pred_fallthru
          _
      $region12: #{tpu_custom_call.1} parent=5 // pred_fallthru
        _
      %p275 = scmp.lt.s32.totalorder %s22, 2
      // Predicated region
      $region41: #{tpu_custom_call.1} parent=5 // pred_check
        %p276 = pneg %p275
      $region42: #{tpu_custom_call.1} parent=5 // pred_check_branch
        %278 = sbr.rel (%p276) target = $region44
      $region43: #{tpu_custom_call.1} parent=5 // pred_region
        // Predicated region
        $region45: #{tpu_custom_call.1} parent=43 // pred_check
          %p279 = pneg %p42
        $region46: #{tpu_custom_call.1} parent=43 // pred_check_branch
          %281 = sbr.rel (%p279) target = $region48
        $region47: #{tpu_custom_call.1} parent=43 // pred_region
          %s282 = sand.u32 %s32, 1
          %s283 = scalar_lea.sflag [#allocation3], %s282
          %s284 = sand.u32 %s32, 1
          %s285 = smul.addr %s284, 32
          %s286 = scalar_lea.vmem [#allocation2], %s285
          %s288 = ssub.s32 512, 512
          %289 = vsyncadd %s283, %s288
          %s290 = smul.addr %s22, 8
          %s291 = smul.addr %s290, 64
          %s292 = scalar_lea.hbm %s0, %s291
          %s293 = sshll.u32 %s286, 4
          %s294 = int_to_ptr.vmem [resolvable:$true] %s293
          %299 = dma.hbm_to_vmem [thread:$0]  %s292, 512, %s294, %s283, 128, 128, 8
        $region48: #{tpu_custom_call.1} parent=43 // pred_fallthru
          _
      $region44: #{tpu_custom_call.1} parent=5 // pred_fallthru
        _
      %p300 = scmp.le.s32.totalorder 1, %s22
      %p301 = scmp.lt.s32.totalorder %s22, 3
      %p302 = pnand %p300, %p301
      %p303 = pneg %p302
      // Predicated region
      $region49: #{tpu_custom_call.1} parent=5 // pred_check
        _
      $region50: #{tpu_custom_call.1} parent=5 // pred_check_branch
        %305 = sbr.rel (%p302) target = $region52
      $region51: #{tpu_custom_call.1} parent=5 // pred_region
        %s306 = ssub.s32 %s22, 1
        %s307 = sand.u32 %s35, 1
        %s308 = scalar_lea.sflag [#allocation3], %s307
        %s309 = sand.u32 %s35, 1
        %s310 = smul.addr %s309, 32
        %s311 = scalar_lea.vmem [#allocation2], %s310
        // Predicated region
        $region53: #{tpu_custom_call.1} parent=51 // pred_check
          %p312 = pneg %p48
        $region54: #{tpu_custom_call.1} parent=51 // pred_check_branch
          %314 = sbr.rel (%p312) target = $region56
        $region55: #{tpu_custom_call.1} parent=51 // pred_region
          %315 = dma.done %s308, 512
        $region56: #{tpu_custom_call.1} parent=51 // pred_fallthru
          _
        // Predicated region
        $region57: #{tpu_custom_call.1} parent=51 // pred_check
          %p316 = pneg %p111
        $region58: #{tpu_custom_call.1} parent=51 // pred_check_branch
          %318 = sbr.rel (%p316) target = $region60
        $region59: #{tpu_custom_call.1} parent=51 // pred_region
          %319 = dma.done [#allocation7], 32768
        $region60: #{tpu_custom_call.1} parent=51 // pred_fallthru
          _
        // Predicated region
        $region61: #{tpu_custom_call.1} parent=51 // pred_check
          %p320 = pneg %p195
        $region62: #{tpu_custom_call.1} parent=51 // pred_check_branch
          %322 = sbr.rel (%p320) target = $region64
        $region63: #{tpu_custom_call.1} parent=51 // pred_region
          %323 = dma.done [#allocation5], 16
        $region64: #{tpu_custom_call.1} parent=51 // pred_fallthru
          _
        %324 = sfence
        %s325 = sand.u32 %s35, 1
        %s326 = scalar_lea.sflag [#allocation3], %s325
        %s327 = sand.u32 %s35, 1
        %s328 = smul.addr %s327, 32
        %s329 = scalar_lea.vmem [#allocation2], %s328
        %p330 = pneg %p48
        %p331 = pneg %p45
        %p332 = pneg %p69
        %p333 = pneg %p66
        %p334 = pneg %p90
        %p335 = pneg %p87
        %p336 = pneg %p111
        %p337 = pneg %p108
        %p338 = pneg %p132
        %p339 = pneg %p129
        %p340 = pneg %p153
        %p341 = pneg %p150
        %p342 = pneg %p174
        %p343 = pneg %p171
        %p344 = pneg %p195
        %p345 = pneg %p192
        %p346 = pneg %p221
        %p347 = pneg %p218
        %s348 = sand.u32 %s208, 1
        %s349 = scalar_lea.sflag [#allocation4], %s348
        %s350 = sand.u32 %s208, 1
        %s351 = smul.addr %s350, 256
        %s352 = scalar_lea.vmem [#allocation9], %s351
        %v353 = vld [vmem:[%s311] sm:$0xff]
        %v354 = vld [vmem:[%s311 + $0x8] sm:$0xff]
        %v355 = vld [vmem:[%s311 + $0x10] sm:$0xff]
        %v356 = vld [vmem:[%s311 + $0x18] sm:$0xff]
        %v361 = vcombine.high %v353, %v353
        %v362 = vcombine.high %v354, %v354
        %v363 = vcombine.high %v355, %v355
        %v364 = vcombine.high %v356, %v356
        %vm369 = vcmask 1043456
        %v370 = vsel %vm369, %v353, 0.0
        %v371 = vsel %vm369, %v354, 0.0
        %v372 = vadd.f32 %v370, %v371
        %v373 = vsel %vm369, %v355, 0.0
        %v374 = vadd.f32 %v372, %v373
        %v375 = vsel %vm369, %v356, 0.0
        %v376 = vadd.f32 %v374, %v375
        %v377 = vsel %vm369, %v361, 0.0
        %v378 = vsel %vm369, %v362, 0.0
        %v379 = vadd.f32 %v377, %v378
        %v380 = vsel %vm369, %v363, 0.0
        %v381 = vadd.f32 %v379, %v380
        %v382 = vsel %vm369, %v364, 0.0
        %v383 = vadd.f32 %v381, %v382
        %v384 = vrcp.pop 4.0
        %v385 = vmul.f32 %v376, %v384
        %v386 = vmul.f32 %v383, %v384
        %v387 = vmul.f32 %v353, %v353
        %v388 = vmul.f32 %v354, %v354
        %v389 = vmul.f32 %v355, %v355
        %v390 = vmul.f32 %v356, %v356
        %v395 = vcombine.high %v387, %v387
        %v396 = vcombine.high %v388, %v388
        %v397 = vcombine.high %v389, %v389
        %v398 = vcombine.high %v390, %v390
        %v403 = vsel %vm369, %v387, 0.0
        %v404 = vsel %vm369, %v388, 0.0
        %v405 = vadd.f32 %v403, %v404
        %v406 = vsel %vm369, %v389, 0.0
        %v407 = vadd.f32 %v405, %v406
        %v408 = vsel %vm369, %v390, 0.0
        %v409 = vadd.f32 %v407, %v408
        %v410 = vsel %vm369, %v395, 0.0
        %v411 = vsel %vm369, %v396, 0.0
        %v412 = vadd.f32 %v410, %v411
        %v413 = vsel %vm369, %v397, 0.0
        %v414 = vadd.f32 %v412, %v413
        %v415 = vsel %vm369, %v398, 0.0
        %v416 = vadd.f32 %v414, %v415
        %v417 = vmul.f32 %v409, %v384
        %v418 = vmul.f32 %v416, %v384
        %v421 = vcombine.low %v385, %v386
        %v423 = vsub.f32 %v353, %v421
        %v424 = vsub.f32 %v354, %v421
        %v425 = vsub.f32 %v355, %v421
        %v426 = vsub.f32 %v356, %v421
        %v427 = vmul.f32 %v385, %v385
        %v428 = vmul.f32 %v386, %v386
        %v429 = vsub.f32 %v417, %v427
        %v430 = vsub.f32 %v418, %v428
        %v431 = vadd.f32 %v429, 1e-05
        %v432 = vadd.f32 %v430, 1e-05
        %v433 = vrsqrt.pop %v431
        %v434 = vrsqrt.pop %v432
        %v437 = vcombine.low %v433, %v434
        %v439 = vmul.f32 %v423, %v437
        %v440 = vmul.f32 %v424, %v437
        %v441 = vmul.f32 %v425, %v437
        %v442 = vmul.f32 %v426, %v437
        %v443 = vld [vmem:[%s1] sm:$0x1]
        %v444 = vld [vmem:[%s1 + $0x1] sm:$0x1]
        %v445 = vld [vmem:[%s1 + $0x2] sm:$0x1]
        %v446 = vld [vmem:[%s1 + $0x3] sm:$0x1]
        %v451 = vlaneseq
        %v452 = vshrl.u32 %v451, 7
        %v453 = vsub.s32 0, %v452
        %v454 = vrot.slane %v443, %v453
        %v455 = vlaneseq
        %v456 = vshrl.u32 %v455, 7
        %v457 = vsub.s32 0, %v456
        %v458 = vrot.slane %v444, %v457
        %v459 = vlaneseq
        %v460 = vshrl.u32 %v459, 7
        %v461 = vsub.s32 0, %v460
        %v462 = vrot.slane %v445, %v461
        %v463 = vlaneseq
        %v464 = vshrl.u32 %v463, 7
        %v465 = vsub.s32 0, %v464
        %v466 = vrot.slane %v446, %v465
        %467 = vset.pattern.permute.xlu0 0
        %468 = vperm.xlu0 %467, %v454
        %v469 = vpop.permute.xlu0 %468
        %471 = vset.pattern.permute.xlu0 0
        %472 = vperm.xlu0 %471, %v458
        %v473 = vpop.permute.xlu0 %472
        %475 = vset.pattern.permute.xlu0 0
        %476 = vperm.xlu0 %475, %v462
        %v477 = vpop.permute.xlu0 %476
        %479 = vset.pattern.permute.xlu0 0
        %480 = vperm.xlu0 %479, %v466
        %v481 = vpop.permute.xlu0 %480
        %v483 = vmul.f32 %v439, %v469
        %v484 = vmul.f32 %v440, %v473
        %v485 = vmul.f32 %v441, %v477
        %v486 = vmul.f32 %v442, %v481
        %v487 = vld [vmem:[%s2] sm:$0x1]
        %v488 = vld [vmem:[%s2 + $0x1] sm:$0x1]
        %v489 = vld [vmem:[%s2 + $0x2] sm:$0x1]
        %v490 = vld [vmem:[%s2 + $0x3] sm:$0x1]
        %v495 = vlaneseq
        %v496 = vshrl.u32 %v495, 7
        %v497 = vsub.s32 0, %v496
        %v498 = vrot.slane %v487, %v497
        %v499 = vlaneseq
        %v500 = vshrl.u32 %v499, 7
        %v501 = vsub.s32 0, %v500
        %v502 = vrot.slane %v488, %v501
        %v503 = vlaneseq
        %v504 = vshrl.u32 %v503, 7
        %v505 = vsub.s32 0, %v504
        %v506 = vrot.slane %v489, %v505
        %v507 = vlaneseq
        %v508 = vshrl.u32 %v507, 7
        %v509 = vsub.s32 0, %v508
        %v510 = vrot.slane %v490, %v509
        %511 = vset.pattern.permute.xlu0 0
        %512 = vperm.xlu0 %511, %v498
        %v513 = vpop.permute.xlu0 %512
        %515 = vset.pattern.permute.xlu0 0
        %516 = vperm.xlu0 %515, %v502
        %v517 = vpop.permute.xlu0 %516
        %519 = vset.pattern.permute.xlu0 0
        %520 = vperm.xlu0 %519, %v506
        %v521 = vpop.permute.xlu0 %520
        %523 = vset.pattern.permute.xlu0 0
        %524 = vperm.xlu0 %523, %v510
        %v525 = vpop.permute.xlu0 %524
        %v527 = vadd.f32 %v483, %v513
        %v528 = vadd.f32 %v484, %v517
        %v529 = vadd.f32 %v485, %v521
        %v530 = vadd.f32 %v486, %v525
        %v531 = vtanh.pop %v527
        %v532 = vtanh.pop %v528
        %v533 = vtanh.pop %v529
        %v534 = vtanh.pop %v530
        %v535 = vld [vmem:[#allocation6] sm:$0xff]
        %v536 = vld [vmem:[#allocation6 + $0x8] sm:$0xff]
        %v537 = vld [vmem:[#allocation6 + $0x10] sm:$0xff]
        %v538 = vld [vmem:[#allocation6 + $0x18] sm:$0xff]
        %v539 = vld [vmem:[#allocation6 + $0x20] sm:$0xff]
        %v540 = vld [vmem:[#allocation6 + $0x28] sm:$0xff]
        %v541 = vld [vmem:[#allocation6 + $0x30] sm:$0xff]
        %v542 = vld [vmem:[#allocation6 + $0x38] sm:$0xff]
        %v543 = vld [vmem:[#allocation6 + $0x40] sm:$0xff]
        %v544 = vld [vmem:[#allocation6 + $0x48] sm:$0xff]
        %v545 = vld [vmem:[#allocation6 + $0x50] sm:$0xff]
        %v546 = vld [vmem:[#allocation6 + $0x58] sm:$0xff]
        %v547 = vld [vmem:[#allocation6 + $0x60] sm:$0xff]
        %v548 = vld [vmem:[#allocation6 + $0x68] sm:$0xff]
        %v549 = vld [vmem:[#allocation6 + $0x70] sm:$0xff]
        %v550 = vld [vmem:[#allocation6 + $0x78] sm:$0xff]
        %v551 = vld [vmem:[#allocation6 + $0x80] sm:$0xff]
        %v552 = vld [vmem:[#allocation6 + $0x88] sm:$0xff]
        %v553 = vld [vmem:[#allocation6 + $0x90] sm:$0xff]
        %v554 = vld [vmem:[#allocation6 + $0x98] sm:$0xff]
        %v555 = vld [vmem:[#allocation6 + $0xa0] sm:$0xff]
        %v556 = vld [vmem:[#allocation6 + $0xa8] sm:$0xff]
        %v557 = vld [vmem:[#allocation6 + $0xb0] sm:$0xff]
        %v558 = vld [vmem:[#allocation6 + $0xb8] sm:$0xff]
        %v559 = vld [vmem:[#allocation6 + $0xc0] sm:$0xff]
        %v560 = vld [vmem:[#allocation6 + $0xc8] sm:$0xff]
        %v561 = vld [vmem:[#allocation6 + $0xd0] sm:$0xff]
        %v562 = vld [vmem:[#allocation6 + $0xd8] sm:$0xff]
        %v563 = vld [vmem:[#allocation6 + $0xe0] sm:$0xff]
        %v564 = vld [vmem:[#allocation6 + $0xe8] sm:$0xff]
        %v565 = vld [vmem:[#allocation6 + $0xf0] sm:$0xff]
        %v566 = vld [vmem:[#allocation6 + $0xf8] sm:$0xff]
        %v567 = vld [vmem:[#allocation6 + $0x100] sm:$0xff]
        %v568 = vld [vmem:[#allocation6 + $0x108] sm:$0xff]
        %v569 = vld [vmem:[#allocation6 + $0x110] sm:$0xff]
        %v570 = vld [vmem:[#allocation6 + $0x118] sm:$0xff]
        %v571 = vld [vmem:[#allocation6 + $0x120] sm:$0xff]
        %v572 = vld [vmem:[#allocation6 + $0x128] sm:$0xff]
        %v573 = vld [vmem:[#allocation6 + $0x130] sm:$0xff]
        %v574 = vld [vmem:[#allocation6 + $0x138] sm:$0xff]
        %v575 = vld [vmem:[#allocation6 + $0x140] sm:$0xff]
        %v576 = vld [vmem:[#allocation6 + $0x148] sm:$0xff]
        %v577 = vld [vmem:[#allocation6 + $0x150] sm:$0xff]
        %v578 = vld [vmem:[#allocation6 + $0x158] sm:$0xff]
        %v579 = vld [vmem:[#allocation6 + $0x160] sm:$0xff]
        %v580 = vld [vmem:[#allocation6 + $0x168] sm:$0xff]
        %v581 = vld [vmem:[#allocation6 + $0x170] sm:$0xff]
        %v582 = vld [vmem:[#allocation6 + $0x178] sm:$0xff]
        %v583 = vld [vmem:[#allocation6 + $0x180] sm:$0xff]
        %v584 = vld [vmem:[#allocation6 + $0x188] sm:$0xff]
        %v585 = vld [vmem:[#allocation6 + $0x190] sm:$0xff]
        %v586 = vld [vmem:[#allocation6 + $0x198] sm:$0xff]
        %v587 = vld [vmem:[#allocation6 + $0x1a0] sm:$0xff]
        %v588 = vld [vmem:[#allocation6 + $0x1a8] sm:$0xff]
        %v589 = vld [vmem:[#allocation6 + $0x1b0] sm:$0xff]
        %v590 = vld [vmem:[#allocation6 + $0x1b8] sm:$0xff]
        %v591 = vld [vmem:[#allocation6 + $0x1c0] sm:$0xff]
        %v592 = vld [vmem:[#allocation6 + $0x1c8] sm:$0xff]
        %v593 = vld [vmem:[#allocation6 + $0x1d0] sm:$0xff]
        %v594 = vld [vmem:[#allocation6 + $0x1d8] sm:$0xff]
        %v595 = vld [vmem:[#allocation6 + $0x1e0] sm:$0xff]
        %v596 = vld [vmem:[#allocation6 + $0x1e8] sm:$0xff]
        %v597 = vld [vmem:[#allocation6 + $0x1f0] sm:$0xff]
        %v598 = vld [vmem:[#allocation6 + $0x1f8] sm:$0xff]
        %v599 = vld [vmem:[#allocation6 + $0x200] sm:$0xff]
        %v600 = vld [vmem:[#allocation6 + $0x208] sm:$0xff]
        %v601 = vld [vmem:[#allocation6 + $0x210] sm:$0xff]
        %v602 = vld [vmem:[#allocation6 + $0x218] sm:$0xff]
        %v603 = vld [vmem:[#allocation6 + $0x220] sm:$0xff]
        %v604 = vld [vmem:[#allocation6 + $0x228] sm:$0xff]
        %v605 = vld [vmem:[#allocation6 + $0x230] sm:$0xff]
        %v606 = vld [vmem:[#allocation6 + $0x238] sm:$0xff]
        %v607 = vld [vmem:[#allocation6 + $0x240] sm:$0xff]
        %v608 = vld [vmem:[#allocation6 + $0x248] sm:$0xff]
        %v609 = vld [vmem:[#allocation6 + $0x250] sm:$0xff]
        %v610 = vld [vmem:[#allocation6 + $0x258] sm:$0xff]
        %v611 = vld [vmem:[#allocation6 + $0x260] sm:$0xff]
        %v612 = vld [vmem:[#allocation6 + $0x268] sm:$0xff]
        %v613 = vld [vmem:[#allocation6 + $0x270] sm:$0xff]
        %v614 = vld [vmem:[#allocation6 + $0x278] sm:$0xff]
        %v615 = vld [vmem:[#allocation6 + $0x280] sm:$0xff]
        %v616 = vld [vmem:[#allocation6 + $0x288] sm:$0xff]
        %v617 = vld [vmem:[#allocation6 + $0x290] sm:$0xff]
        %v618 = vld [vmem:[#allocation6 + $0x298] sm:$0xff]
        %v619 = vld [vmem:[#allocation6 + $0x2a0] sm:$0xff]
        %v620 = vld [vmem:[#allocation6 + $0x2a8] sm:$0xff]
        %v621 = vld [vmem:[#allocation6 + $0x2b0] sm:$0xff]
        %v622 = vld [vmem:[#allocation6 + $0x2b8] sm:$0xff]
        %v623 = vld [vmem:[#allocation6 + $0x2c0] sm:$0xff]
        %v624 = vld [vmem:[#allocation6 + $0x2c8] sm:$0xff]
        %v625 = vld [vmem:[#allocation6 + $0x2d0] sm:$0xff]
        %v626 = vld [vmem:[#allocation6 + $0x2d8] sm:$0xff]
        %v627 = vld [vmem:[#allocation6 + $0x2e0] sm:$0xff]
        %v628 = vld [vmem:[#allocation6 + $0x2e8] sm:$0xff]
        %v629 = vld [vmem:[#allocation6 + $0x2f0] sm:$0xff]
        %v630 = vld [vmem:[#allocation6 + $0x2f8] sm:$0xff]
        %v631 = vld [vmem:[#allocation6 + $0x300] sm:$0xff]
        %v632 = vld [vmem:[#allocation6 + $0x308] sm:$0xff]
        %v633 = vld [vmem:[#allocation6 + $0x310] sm:$0xff]
        %v634 = vld [vmem:[#allocation6 + $0x318] sm:$0xff]
        %v635 = vld [vmem:[#allocation6 + $0x320] sm:$0xff]
        %v636 = vld [vmem:[#allocation6 + $0x328] sm:$0xff]
        %v637 = vld [vmem:[#allocation6 + $0x330] sm:$0xff]
        %v638 = vld [vmem:[#allocation6 + $0x338] sm:$0xff]
        %v639 = vld [vmem:[#allocation6 + $0x340] sm:$0xff]
        %v640 = vld [vmem:[#allocation6 + $0x348] sm:$0xff]
        %v641 = vld [vmem:[#allocation6 + $0x350] sm:$0xff]
        %v642 = vld [vmem:[#allocation6 + $0x358] sm:$0xff]
        %v643 = vld [vmem:[#allocation6 + $0x360] sm:$0xff]
        %v644 = vld [vmem:[#allocation6 + $0x368] sm:$0xff]
        %v645 = vld [vmem:[#allocation6 + $0x370] sm:$0xff]
        %v646 = vld [vmem:[#allocation6 + $0x378] sm:$0xff]
        %v647 = vld [vmem:[#allocation6 + $0x380] sm:$0xff]
        %v648 = vld [vmem:[#allocation6 + $0x388] sm:$0xff]
        %v649 = vld [vmem:[#allocation6 + $0x390] sm:$0xff]
        %v650 = vld [vmem:[#allocation6 + $0x398] sm:$0xff]
        %v651 = vld [vmem:[#allocation6 + $0x3a0] sm:$0xff]
        %v652 = vld [vmem:[#allocation6 + $0x3a8] sm:$0xff]
        %v653 = vld [vmem:[#allocation6 + $0x3b0] sm:$0xff]
        %v654 = vld [vmem:[#allocation6 + $0x3b8] sm:$0xff]
        %v655 = vld [vmem:[#allocation6 + $0x3c0] sm:$0xff]
        %v656 = vld [vmem:[#allocation6 + $0x3c8] sm:$0xff]
        %v657 = vld [vmem:[#allocation6 + $0x3d0] sm:$0xff]
        %v658 = vld [vmem:[#allocation6 + $0x3d8] sm:$0xff]
        %v659 = vld [vmem:[#allocation6 + $0x3e0] sm:$0xff]
        %v660 = vld [vmem:[#allocation6 + $0x3e8] sm:$0xff]
        %v661 = vld [vmem:[#allocation6 + $0x3f0] sm:$0xff]
        %v662 = vld [vmem:[#allocation6 + $0x3f8] sm:$0xff]
        %v663 = vld [vmem:[#allocation6 + $0x400] sm:$0xff]
        %v664 = vld [vmem:[#allocation6 + $0x408] sm:$0xff]
        %v665 = vld [vmem:[#allocation6 + $0x410] sm:$0xff]
        %v666 = vld [vmem:[#allocation6 + $0x418] sm:$0xff]
        %v667 = vld [vmem:[#allocation6 + $0x420] sm:$0xff]
        %v668 = vld [vmem:[#allocation6 + $0x428] sm:$0xff]
        %v669 = vld [vmem:[#allocation6 + $0x430] sm:$0xff]
        %v670 = vld [vmem:[#allocation6 + $0x438] sm:$0xff]
        %v671 = vld [vmem:[#allocation6 + $0x440] sm:$0xff]
        %v672 = vld [vmem:[#allocation6 + $0x448] sm:$0xff]
        %v673 = vld [vmem:[#allocation6 + $0x450] sm:$0xff]
        %v674 = vld [vmem:[#allocation6 + $0x458] sm:$0xff]
        %v675 = vld [vmem:[#allocation6 + $0x460] sm:$0xff]
        %v676 = vld [vmem:[#allocation6 + $0x468] sm:$0xff]
        %v677 = vld [vmem:[#allocation6 + $0x470] sm:$0xff]
        %v678 = vld [vmem:[#allocation6 + $0x478] sm:$0xff]
        %v679 = vld [vmem:[#allocation6 + $0x480] sm:$0xff]
        %v680 = vld [vmem:[#allocation6 + $0x488] sm:$0xff]
        %v681 = vld [vmem:[#allocation6 + $0x490] sm:$0xff]
        %v682 = vld [vmem:[#allocation6 + $0x498] sm:$0xff]
        %v683 = vld [vmem:[#allocation6 + $0x4a0] sm:$0xff]
        %v684 = vld [vmem:[#allocation6 + $0x4a8] sm:$0xff]
        %v685 = vld [vmem:[#allocation6 + $0x4b0] sm:$0xff]
        %v686 = vld [vmem:[#allocation6 + $0x4b8] sm:$0xff]
        %v687 = vld [vmem:[#allocation6 + $0x4c0] sm:$0xff]
        %v688 = vld [vmem:[#allocation6 + $0x4c8] sm:$0xff]
        %v689 = vld [vmem:[#allocation6 + $0x4d0] sm:$0xff]
        %v690 = vld [vmem:[#allocation6 + $0x4d8] sm:$0xff]
        %v691 = vld [vmem:[#allocation6 + $0x4e0] sm:$0xff]
        %v692 = vld [vmem:[#allocation6 + $0x4e8] sm:$0xff]
        %v693 = vld [vmem:[#allocation6 + $0x4f0] sm:$0xff]
        %v694 = vld [vmem:[#allocation6 + $0x4f8] sm:$0xff]
        %v695 = vld [vmem:[#allocation6 + $0x500] sm:$0xff]
        %v696 = vld [vmem:[#allocation6 + $0x508] sm:$0xff]
        %v697 = vld [vmem:[#allocation6 + $0x510] sm:$0xff]
        %v698 = vld [vmem:[#allocation6 + $0x518] sm:$0xff]
        %v699 = vld [vmem:[#allocation6 + $0x520] sm:$0xff]
        %v700 = vld [vmem:[#allocation6 + $0x528] sm:$0xff]
        %v701 = vld [vmem:[#allocation6 + $0x530] sm:$0xff]
        %v702 = vld [vmem:[#allocation6 + $0x538] sm:$0xff]
        %v703 = vld [vmem:[#allocation6 + $0x540] sm:$0xff]
        %v704 = vld [vmem:[#allocation6 + $0x548] sm:$0xff]
        %v705 = vld [vmem:[#allocation6 + $0x550] sm:$0xff]
        %v706 = vld [vmem:[#allocation6 + $0x558] sm:$0xff]
        %v707 = vld [vmem:[#allocation6 + $0x560] sm:$0xff]
        %v708 = vld [vmem:[#allocation6 + $0x568] sm:$0xff]
        %v709 = vld [vmem:[#allocation6 + $0x570] sm:$0xff]
        %v710 = vld [vmem:[#allocation6 + $0x578] sm:$0xff]
        %v711 = vld [vmem:[#allocation6 + $0x580] sm:$0xff]
        %v712 = vld [vmem:[#allocation6 + $0x588] sm:$0xff]
        %v713 = vld [vmem:[#allocation6 + $0x590] sm:$0xff]
        %v714 = vld [vmem:[#allocation6 + $0x598] sm:$0xff]
        %v715 = vld [vmem:[#allocation6 + $0x5a0] sm:$0xff]
        %v716 = vld [vmem:[#allocation6 + $0x5a8] sm:$0xff]
        %v717 = vld [vmem:[#allocation6 + $0x5b0] sm:$0xff]
        %v718 = vld [vmem:[#allocation6 + $0x5b8] sm:$0xff]
        %v719 = vld [vmem:[#allocation6 + $0x5c0] sm:$0xff]
        %v720 = vld [vmem:[#allocation6 + $0x5c8] sm:$0xff]
        %v721 = vld [vmem:[#allocation6 + $0x5d0] sm:$0xff]
        %v722 = vld [vmem:[#allocation6 + $0x5d8] sm:$0xff]
        %v723 = vld [vmem:[#allocation6 + $0x5e0] sm:$0xff]
        %v724 = vld [vmem:[#allocation6 + $0x5e8] sm:$0xff]
        %v725 = vld [vmem:[#allocation6 + $0x5f0] sm:$0xff]
        %v726 = vld [vmem:[#allocation6 + $0x5f8] sm:$0xff]
        %v727 = vld [vmem:[#allocation6 + $0x600] sm:$0xff]
        %v728 = vld [vmem:[#allocation6 + $0x608] sm:$0xff]
        %v729 = vld [vmem:[#allocation6 + $0x610] sm:$0xff]
        %v730 = vld [vmem:[#allocation6 + $0x618] sm:$0xff]
        %v731 = vld [vmem:[#allocation6 + $0x620] sm:$0xff]
        %v732 = vld [vmem:[#allocation6 + $0x628] sm:$0xff]
        %v733 = vld [vmem:[#allocation6 + $0x630] sm:$0xff]
        %v734 = vld [vmem:[#allocation6 + $0x638] sm:$0xff]
        %v735 = vld [vmem:[#allocation6 + $0x640] sm:$0xff]
        %v736 = vld [vmem:[#allocation6 + $0x648] sm:$0xff]
        %v737 = vld [vmem:[#allocation6 + $0x650] sm:$0xff]
        %v738 = vld [vmem:[#allocation6 + $0x658] sm:$0xff]
        %v739 = vld [vmem:[#allocation6 + $0x660] sm:$0xff]
        %v740 = vld [vmem:[#allocation6 + $0x668] sm:$0xff]
        %v741 = vld [vmem:[#allocation6 + $0x670] sm:$0xff]
        %v742 = vld [vmem:[#allocation6 + $0x678] sm:$0xff]
        %v743 = vld [vmem:[#allocation6 + $0x680] sm:$0xff]
        %v744 = vld [vmem:[#allocation6 + $0x688] sm:$0xff]
        %v745 = vld [vmem:[#allocation6 + $0x690] sm:$0xff]
        %v746 = vld [vmem:[#allocation6 + $0x698] sm:$0xff]
        %v747 = vld [vmem:[#allocation6 + $0x6a0] sm:$0xff]
        %v748 = vld [vmem:[#allocation6 + $0x6a8] sm:$0xff]
        %v749 = vld [vmem:[#allocation6 + $0x6b0] sm:$0xff]
        %v750 = vld [vmem:[#allocation6 + $0x6b8] sm:$0xff]
        %v751 = vld [vmem:[#allocation6 + $0x6c0] sm:$0xff]
        %v752 = vld [vmem:[#allocation6 + $0x6c8] sm:$0xff]
        %v753 = vld [vmem:[#allocation6 + $0x6d0] sm:$0xff]
        %v754 = vld [vmem:[#allocation6 + $0x6d8] sm:$0xff]
        %v755 = vld [vmem:[#allocation6 + $0x6e0] sm:$0xff]
        %v756 = vld [vmem:[#allocation6 + $0x6e8] sm:$0xff]
        %v757 = vld [vmem:[#allocation6 + $0x6f0] sm:$0xff]
        %v758 = vld [vmem:[#allocation6 + $0x6f8] sm:$0xff]
        %v759 = vld [vmem:[#allocation6 + $0x700] sm:$0xff]
        %v760 = vld [vmem:[#allocation6 + $0x708] sm:$0xff]
        %v761 = vld [vmem:[#allocation6 + $0x710] sm:$0xff]
        %v762 = vld [vmem:[#allocation6 + $0x718] sm:$0xff]
        %v763 = vld [vmem:[#allocation6 + $0x720] sm:$0xff]
        %v764 = vld [vmem:[#allocation6 + $0x728] sm:$0xff]
        %v765 = vld [vmem:[#allocation6 + $0x730] sm:$0xff]
        %v766 = vld [vmem:[#allocation6 + $0x738] sm:$0xff]
        %v767 = vld [vmem:[#allocation6 + $0x740] sm:$0xff]
        %v768 = vld [vmem:[#allocation6 + $0x748] sm:$0xff]
        %v769 = vld [vmem:[#allocation6 + $0x750] sm:$0xff]
        %v770 = vld [vmem:[#allocation6 + $0x758] sm:$0xff]
        %v771 = vld [vmem:[#allocation6 + $0x760] sm:$0xff]
        %v772 = vld [vmem:[#allocation6 + $0x768] sm:$0xff]
        %v773 = vld [vmem:[#allocation6 + $0x770] sm:$0xff]
        %v774 = vld [vmem:[#allocation6 + $0x778] sm:$0xff]
        %v775 = vld [vmem:[#allocation6 + $0x780] sm:$0xff]
        %v776 = vld [vmem:[#allocation6 + $0x788] sm:$0xff]
        %v777 = vld [vmem:[#allocation6 + $0x790] sm:$0xff]
        %v778 = vld [vmem:[#allocation6 + $0x798] sm:$0xff]
        %v779 = vld [vmem:[#allocation6 + $0x7a0] sm:$0xff]
        %v780 = vld [vmem:[#allocation6 + $0x7a8] sm:$0xff]
        %v781 = vld [vmem:[#allocation6 + $0x7b0] sm:$0xff]
        %v782 = vld [vmem:[#allocation6 + $0x7b8] sm:$0xff]
        %v783 = vld [vmem:[#allocation6 + $0x7c0] sm:$0xff]
        %v784 = vld [vmem:[#allocation6 + $0x7c8] sm:$0xff]
        %v785 = vld [vmem:[#allocation6 + $0x7d0] sm:$0xff]
        %v786 = vld [vmem:[#allocation6 + $0x7d8] sm:$0xff]
        %v787 = vld [vmem:[#allocation6 + $0x7e0] sm:$0xff]
        %v788 = vld [vmem:[#allocation6 + $0x7e8] sm:$0xff]
        %v789 = vld [vmem:[#allocation6 + $0x7f0] sm:$0xff]
        %v790 = vld [vmem:[#allocation6 + $0x7f8] sm:$0xff]
        %v795 = vcombine.low %v531, %v532
        %v796 = vcombine.high %v531, %v532
        %v797 = vcombine.low %v533, %v534
        %v798 = vcombine.high %v533, %v534
        %803 = vmatprep.subr.mxu0 %v536
        %804 = vmatpush1.msra.mxu0 %v535
        %805 = vmatprep.subr.mxu0 %v544
        %806 = vmatpush1.msra.mxu0 %v543
        %807 = vmatprep.subr.mxu0 %v552
        %808 = vmatpush1.msra.mxu0 %v551
        %809 = vmatprep.subr.mxu0 %v560
        %810 = vmatpush1.msra.mxu0 %v559
        %811 = vmatprep.subr.mxu0 %v568
        %812 = vmatpush1.msra.mxu0 %v567
        %813 = vmatprep.subr.mxu0 %v576
        %814 = vmatpush1.msra.mxu0 %v575
        %815 = vmatprep.subr.mxu0 %v584
        %816 = vmatpush1.msra.mxu0 %v583
        %817 = vmatprep.subr.mxu0 %v592
        %818 = vmatpush1.msra.mxu0 %v591
        %819 = vmatprep.subr.mxu0 %v600
        %820 = vmatpush1.msra.mxu0 %v599
        %821 = vmatprep.subr.mxu0 %v608
        %822 = vmatpush1.msra.mxu0 %v607
        %823 = vmatprep.subr.mxu0 %v616
        %824 = vmatpush1.msra.mxu0 %v615
        %825 = vmatprep.subr.mxu0 %v624
        %826 = vmatpush1.msra.mxu0 %v623
        %827 = vmatprep.subr.mxu0 %v632
        %828 = vmatpush1.msra.mxu0 %v631
        %829 = vmatprep.subr.mxu0 %v640
        %830 = vmatpush1.msra.mxu0 %v639
        %831 = vmatprep.subr.mxu0 %v648
        %832 = vmatpush1.msra.mxu0 %v647
        %833 = vmatprep.subr.mxu0 %v656
        %834 = vmatpush1.msra.mxu0 %v655
        %835 = vmatprep.subr.mxu0 %v664
        %836 = vmatpush1.msra.mxu0 %v663
        %837 = vmatprep.subr.mxu0 %v672
        %838 = vmatpush1.msra.mxu0 %v671
        %839 = vmatprep.subr.mxu0 %v680
        %840 = vmatpush1.msra.mxu0 %v679
        %841 = vmatprep.subr.mxu0 %v688
        %842 = vmatpush1.msra.mxu0 %v687
        %843 = vmatprep.subr.mxu0 %v696
        %844 = vmatpush1.msra.mxu0 %v695
        %845 = vmatprep.subr.mxu0 %v704
        %846 = vmatpush1.msra.mxu0 %v703
        %847 = vmatprep.subr.mxu0 %v712
        %848 = vmatpush1.msra.mxu0 %v711
        %849 = vmatprep.subr.mxu0 %v720
        %850 = vmatpush1.msra.mxu0 %v719
        %851 = vmatprep.subr.mxu0 %v728
        %852 = vmatpush1.msra.mxu0 %v727
        %853 = vmatprep.subr.mxu0 %v736
        %854 = vmatpush1.msra.mxu0 %v735
        %855 = vmatprep.subr.mxu0 %v744
        %856 = vmatpush1.msra.mxu0 %v743
        %857 = vmatprep.subr.mxu0 %v752
        %858 = vmatpush1.msra.mxu0 %v751
        %859 = vmatprep.subr.mxu0 %v760
        %860 = vmatpush1.msra.mxu0 %v759
        %861 = vmatprep.subr.mxu0 %v768
        %862 = vmatpush1.msra.mxu0 %v767
        %863 = vmatprep.subr.mxu0 %v776
        %864 = vmatpush1.msra.mxu0 %v775
        %865 = vmatprep.subr.mxu0 %v784
        %866 = vmatpush1.msra.mxu0 %v783
        %867 = vmatprep.mubr.f32.mxu0 %v796
        %868 = vmatmul.mubr.f32.gmra.mrb[0].mxu0 %v795
        %v869 = vpop.f32.mrb[0].mxu0
        %v870 = vadd.f32 0.0, %v869
        %v871 = vpop.f32.mrb[0].mxu0
        %v872 = vadd.f32 0.0, %v871
        %873 = vmatprep.mubr.f32.mxu0 %v798
        %874 = vmatmul.mubr.f32.gmra.mrb[0].mxu0 %v797
        %v875 = vpop.f32.mrb[0].mxu0
        %v876 = vadd.f32 0.0, %v875
        %v877 = vpop.f32.mrb[0].mxu0
        %v878 = vadd.f32 0.0, %v877
        %879 = vdwg.mxu0
        %880 = vmatprep.subr.mxu0 %v538
        %881 = vmatpush1.msra.mxu0 %v537
        %882 = vmatprep.subr.mxu0 %v546
        %883 = vmatpush1.msra.mxu0 %v545
        %884 = vmatprep.subr.mxu0 %v554
        %885 = vmatpush1.msra.mxu0 %v553
        %886 = vmatprep.subr.mxu0 %v562
        %887 = vmatpush1.msra.mxu0 %v561
        %888 = vmatprep.subr.mxu0 %v570
        %889 = vmatpush1.msra.mxu0 %v569
        %890 = vmatprep.subr.mxu0 %v578
        %891 = vmatpush1.msra.mxu0 %v577
        %892 = vmatprep.subr.mxu0 %v586
        %893 = vmatpush1.msra.mxu0 %v585
        %894 = vmatprep.subr.mxu0 %v594
        %895 = vmatpush1.msra.mxu0 %v593
        %896 = vmatprep.subr.mxu0 %v602
        %897 = vmatpush1.msra.mxu0 %v601
        %898 = vmatprep.subr.mxu0 %v610
        %899 = vmatpush1.msra.mxu0 %v609
        %900 = vmatprep.subr.mxu0 %v618
        %901 = vmatpush1.msra.mxu0 %v617
        %902 = vmatprep.subr.mxu0 %v626
        %903 = vmatpush1.msra.mxu0 %v625
        %904 = vmatprep.subr.mxu0 %v634
        %905 = vmatpush1.msra.mxu0 %v633
        %906 = vmatprep.subr.mxu0 %v642
        %907 = vmatpush1.msra.mxu0 %v641
        %908 = vmatprep.subr.mxu0 %v650
        %909 = vmatpush1.msra.mxu0 %v649
        %910 = vmatprep.subr.mxu0 %v658
        %911 = vmatpush1.msra.mxu0 %v657
        %912 = vmatprep.subr.mxu0 %v666
        %913 = vmatpush1.msra.mxu0 %v665
        %914 = vmatprep.subr.mxu0 %v674
        %915 = vmatpush1.msra.mxu0 %v673
        %916 = vmatprep.subr.mxu0 %v682
        %917 = vmatpush1.msra.mxu0 %v681
        %918 = vmatprep.subr.mxu0 %v690
        %919 = vmatpush1.msra.mxu0 %v689
        %920 = vmatprep.subr.mxu0 %v698
        %921 = vmatpush1.msra.mxu0 %v697
        %922 = vmatprep.subr.mxu0 %v706
        %923 = vmatpush1.msra.mxu0 %v705
        %924 = vmatprep.subr.mxu0 %v714
        %925 = vmatpush1.msra.mxu0 %v713
        %926 = vmatprep.subr.mxu0 %v722
        %927 = vmatpush1.msra.mxu0 %v721
        %928 = vmatprep.subr.mxu0 %v730
        %929 = vmatpush1.msra.mxu0 %v729
        %930 = vmatprep.subr.mxu0 %v738
        %931 = vmatpush1.msra.mxu0 %v737
        %932 = vmatprep.subr.mxu0 %v746
        %933 = vmatpush1.msra.mxu0 %v745
        %934 = vmatprep.subr.mxu0 %v754
        %935 = vmatpush1.msra.mxu0 %v753
        %936 = vmatprep.subr.mxu0 %v762
        %937 = vmatpush1.msra.mxu0 %v761
        %938 = vmatprep.subr.mxu0 %v770
        %939 = vmatpush1.msra.mxu0 %v769
        %940 = vmatprep.subr.mxu0 %v778
        %941 = vmatpush1.msra.mxu0 %v777
        %942 = vmatprep.subr.mxu0 %v786
        %943 = vmatpush1.msra.mxu0 %v785
        %944 = vmatprep.mubr.f32.mxu0 %v796
        %945 = vmatmul.mubr.f32.gmra.mrb[0].mxu0 %v795
        %v946 = vpop.f32.mrb[0].mxu0
        %v947 = vadd.f32 0.0, %v946
        %v948 = vpop.f32.mrb[0].mxu0
        %v949 = vadd.f32 0.0, %v948
        %950 = vmatprep.mubr.f32.mxu0 %v798
        %951 = vmatmul.mubr.f32.gmra.mrb[0].mxu0 %v797
        %v952 = vpop.f32.mrb[0].mxu0
        %v953 = vadd.f32 0.0, %v952
        %v954 = vpop.f32.mrb[0].mxu0
        %v955 = vadd.f32 0.0, %v954
        %956 = vdwg.mxu0
        %957 = vmatprep.subr.mxu0 %v540
        %958 = vmatpush1.msra.mxu0 %v539
        %959 = vmatprep.subr.mxu0 %v548
        %960 = vmatpush1.msra.mxu0 %v547
        %961 = vmatprep.subr.mxu0 %v556
        %962 = vmatpush1.msra.mxu0 %v555
        %963 = vmatprep.subr.mxu0 %v564
        %964 = vmatpush1.msra.mxu0 %v563
        %965 = vmatprep.subr.mxu0 %v572
        %966 = vmatpush1.msra.mxu0 %v571
        %967 = vmatprep.subr.mxu0 %v580
        %968 = vmatpush1.msra.mxu0 %v579
        %969 = vmatprep.subr.mxu0 %v588
        %970 = vmatpush1.msra.mxu0 %v587
        %971 = vmatprep.subr.mxu0 %v596
        %972 = vmatpush1.msra.mxu0 %v595
        %973 = vmatprep.subr.mxu0 %v604
        %974 = vmatpush1.msra.mxu0 %v603
        %975 = vmatprep.subr.mxu0 %v612
        %976 = vmatpush1.msra.mxu0 %v611
        %977 = vmatprep.subr.mxu0 %v620
        %978 = vmatpush1.msra.mxu0 %v619
        %979 = vmatprep.subr.mxu0 %v628
        %980 = vmatpush1.msra.mxu0 %v627
        %981 = vmatprep.subr.mxu0 %v636
        %982 = vmatpush1.msra.mxu0 %v635
        %983 = vmatprep.subr.mxu0 %v644
        %984 = vmatpush1.msra.mxu0 %v643
        %985 = vmatprep.subr.mxu0 %v652
        %986 = vmatpush1.msra.mxu0 %v651
        %987 = vmatprep.subr.mxu0 %v660
        %988 = vmatpush1.msra.mxu0 %v659
        %989 = vmatprep.subr.mxu0 %v668
        %990 = vmatpush1.msra.mxu0 %v667
        %991 = vmatprep.subr.mxu0 %v676
        %992 = vmatpush1.msra.mxu0 %v675
        %993 = vmatprep.subr.mxu0 %v684
        %994 = vmatpush1.msra.mxu0 %v683
        %995 = vmatprep.subr.mxu0 %v692
        %996 = vmatpush1.msra.mxu0 %v691
        %997 = vmatprep.subr.mxu0 %v700
        %998 = vmatpush1.msra.mxu0 %v699
        %999 = vmatprep.subr.mxu0 %v708
        %1000 = vmatpush1.msra.mxu0 %v707
        %1001 = vmatprep.subr.mxu0 %v716
        %1002 = vmatpush1.msra.mxu0 %v715
        %1003 = vmatprep.subr.mxu0 %v724
        %1004 = vmatpush1.msra.mxu0 %v723
        %1005 = vmatprep.subr.mxu0 %v732
        %1006 = vmatpush1.msra.mxu0 %v731
        %1007 = vmatprep.subr.mxu0 %v740
        %1008 = vmatpush1.msra.mxu0 %v739
        %1009 = vmatprep.subr.mxu0 %v748
        %1010 = vmatpush1.msra.mxu0 %v747
        %1011 = vmatprep.subr.mxu0 %v756
        %1012 = vmatpush1.msra.mxu0 %v755
        %1013 = vmatprep.subr.mxu0 %v764
        %1014 = vmatpush1.msra.mxu0 %v763
        %1015 = vmatprep.subr.mxu0 %v772
        %1016 = vmatpush1.msra.mxu0 %v771
        %1017 = vmatprep.subr.mxu0 %v780
        %1018 = vmatpush1.msra.mxu0 %v779
        %1019 = vmatprep.subr.mxu0 %v788
        %1020 = vmatpush1.msra.mxu0 %v787
        %1021 = vmatprep.mubr.f32.mxu0 %v796
        %1022 = vmatmul.mubr.f32.gmra.mrb[0].mxu0 %v795
        %v1023 = vpop.f32.mrb[0].mxu0
        %v1024 = vadd.f32 0.0, %v1023
        %v1025 = vpop.f32.mrb[0].mxu0
        %v1026 = vadd.f32 0.0, %v1025
        %1027 = vmatprep.mubr.f32.mxu0 %v798
        %1028 = vmatmul.mubr.f32.gmra.mrb[0].mxu0 %v797
        %v1029 = vpop.f32.mrb[0].mxu0
        %v1030 = vadd.f32 0.0, %v1029
        %v1031 = vpop.f32.mrb[0].mxu0
        %v1032 = vadd.f32 0.0, %v1031
        %1033 = vdwg.mxu0
        %1034 = vmatprep.subr.mxu0 %v542
        %1035 = vmatpush1.msra.mxu0 %v541
        %1036 = vmatprep.subr.mxu0 %v550
        %1037 = vmatpush1.msra.mxu0 %v549
        %1038 = vmatprep.subr.mxu0 %v558
        %1039 = vmatpush1.msra.mxu0 %v557
        %1040 = vmatprep.subr.mxu0 %v566
        %1041 = vmatpush1.msra.mxu0 %v565
        %1042 = vmatprep.subr.mxu0 %v574
        %1043 = vmatpush1.msra.mxu0 %v573
        %1044 = vmatprep.subr.mxu0 %v582
        %1045 = vmatpush1.msra.mxu0 %v581
        %1046 = vmatprep.subr.mxu0 %v590
        %1047 = vmatpush1.msra.mxu0 %v589
        %1048 = vmatprep.subr.mxu0 %v598
        %1049 = vmatpush1.msra.mxu0 %v597
        %1050 = vmatprep.subr.mxu0 %v606
        %1051 = vmatpush1.msra.mxu0 %v605
        %1052 = vmatprep.subr.mxu0 %v614
        %1053 = vmatpush1.msra.mxu0 %v613
        %1054 = vmatprep.subr.mxu0 %v622
        %1055 = vmatpush1.msra.mxu0 %v621
        %1056 = vmatprep.subr.mxu0 %v630
        %1057 = vmatpush1.msra.mxu0 %v629
        %1058 = vmatprep.subr.mxu0 %v638
        %1059 = vmatpush1.msra.mxu0 %v637
        %1060 = vmatprep.subr.mxu0 %v646
        %1061 = vmatpush1.msra.mxu0 %v645
        %1062 = vmatprep.subr.mxu0 %v654
        %1063 = vmatpush1.msra.mxu0 %v653
        %1064 = vmatprep.subr.mxu0 %v662
        %1065 = vmatpush1.msra.mxu0 %v661
        %1066 = vmatprep.subr.mxu0 %v670
        %1067 = vmatpush1.msra.mxu0 %v669
        %1068 = vmatprep.subr.mxu0 %v678
        %1069 = vmatpush1.msra.mxu0 %v677
        %1070 = vmatprep.subr.mxu0 %v686
        %1071 = vmatpush1.msra.mxu0 %v685
        %1072 = vmatprep.subr.mxu0 %v694
        %1073 = vmatpush1.msra.mxu0 %v693
        %1074 = vmatprep.subr.mxu0 %v702
        %1075 = vmatpush1.msra.mxu0 %v701
        %1076 = vmatprep.subr.mxu0 %v710
        %1077 = vmatpush1.msra.mxu0 %v709
        %1078 = vmatprep.subr.mxu0 %v718
        %1079 = vmatpush1.msra.mxu0 %v717
        %1080 = vmatprep.subr.mxu0 %v726
        %1081 = vmatpush1.msra.mxu0 %v725
        %1082 = vmatprep.subr.mxu0 %v734
        %1083 = vmatpush1.msra.mxu0 %v733
        %1084 = vmatprep.subr.mxu0 %v742
        %1085 = vmatpush1.msra.mxu0 %v741
        %1086 = vmatprep.subr.mxu0 %v750
        %1087 = vmatpush1.msra.mxu0 %v749
        %1088 = vmatprep.subr.mxu0 %v758
        %1089 = vmatpush1.msra.mxu0 %v757
        %1090 = vmatprep.subr.mxu0 %v766
        %1091 = vmatpush1.msra.mxu0 %v765
        %1092 = vmatprep.subr.mxu0 %v774
        %1093 = vmatpush1.msra.mxu0 %v773
        %1094 = vmatprep.subr.mxu0 %v782
        %1095 = vmatpush1.msra.mxu0 %v781
        %1096 = vmatprep.subr.mxu0 %v790
        %1097 = vmatpush1.msra.mxu0 %v789
        %1098 = vmatprep.mubr.f32.mxu0 %v796
        %1099 = vmatmul.mubr.f32.gmra.mrb[0].mxu0 %v795
        %v1100 = vpop.f32.mrb[0].mxu0
        %v1101 = vadd.f32 0.0, %v1100
        %v1102 = vpop.f32.mrb[0].mxu0
        %v1103 = vadd.f32 0.0, %v1102
        %1104 = vmatprep.mubr.f32.mxu0 %v798
        %1105 = vmatmul.mubr.f32.gmra.mrb[0].mxu0 %v797
        %v1106 = vpop.f32.mrb[0].mxu0
        %v1107 = vadd.f32 0.0, %v1106
        %v1108 = vpop.f32.mrb[0].mxu0
        %v1109 = vadd.f32 0.0, %v1108
        %1110 = vdwg.mxu0
        %v1127 = vcombine.low %v870, %v872
        %v1128 = vcombine.high %v870, %v872
        %v1129 = vcombine.low %v947, %v949
        %v1130 = vcombine.high %v947, %v949
        %v1131 = vcombine.low %v1024, %v1026
        %v1132 = vcombine.high %v1024, %v1026
        %v1133 = vcombine.low %v1101, %v1103
        %v1134 = vcombine.high %v1101, %v1103
        %v1136 = vunpack.c.l.s4 1966171168
        %v1137 = vunpack.c.0.s8 %v1136
        %v1138 = vlaneseq
        %v1139 = vshrl.u32 %v1138, 7
        %v1140 = vsub.s32 %v1137, %v1139
        %v1141 = vrot.slane %v1127, %v1140
        %v1143 = vunpack.c.l.s4 1966171168
        %v1144 = vunpack.c.0.s8 %v1143
        %v1145 = vlaneseq
        %v1146 = vshrl.u32 %v1145, 7
        %v1147 = vsub.s32 %v1144, %v1146
        %v1148 = vrot.slane %v1128, %v1147
        %v1150 = vunpack.c.l.s4 1966171168
        %v1151 = vunpack.c.0.s8 %v1150
        %v1152 = vlaneseq
        %v1153 = vshrl.u32 %v1152, 7
        %v1154 = vsub.s32 %v1151, %v1153
        %v1155 = vrot.slane %v1129, %v1154
        %v1157 = vunpack.c.l.s4 1966171168
        %v1158 = vunpack.c.0.s8 %v1157
        %v1159 = vlaneseq
        %v1160 = vshrl.u32 %v1159, 7
        %v1161 = vsub.s32 %v1158, %v1160
        %v1162 = vrot.slane %v1130, %v1161
        %v1164 = vunpack.c.l.s4 1966171168
        %v1165 = vunpack.c.0.s8 %v1164
        %v1166 = vlaneseq
        %v1167 = vshrl.u32 %v1166, 7
        %v1168 = vsub.s32 %v1165, %v1167
        %v1169 = vrot.slane %v1131, %v1168
        %v1171 = vunpack.c.l.s4 1966171168
        %v1172 = vunpack.c.0.s8 %v1171
        %v1173 = vlaneseq
        %v1174 = vshrl.u32 %v1173, 7
        %v1175 = vsub.s32 %v1172, %v1174
        %v1176 = vrot.slane %v1132, %v1175
        %v1178 = vunpack.c.l.s4 1966171168
        %v1179 = vunpack.c.0.s8 %v1178
        %v1180 = vlaneseq
        %v1181 = vshrl.u32 %v1180, 7
        %v1182 = vsub.s32 %v1179, %v1181
        %v1183 = vrot.slane %v1133, %v1182
        %v1185 = vunpack.c.l.s4 1966171168
        %v1186 = vunpack.c.0.s8 %v1185
        %v1187 = vlaneseq
        %v1188 = vshrl.u32 %v1187, 7
        %v1189 = vsub.s32 %v1186, %v1188
        %v1190 = vrot.slane %v1134, %v1189
        %v1191 = vcombine.low %v1141, %v1155
        %v1192 = vcombine.high %v1141, %v1155
        %v1193 = vcombine.low %v1148, %v1162
        %v1194 = vcombine.high %v1148, %v1162
        %v1195 = vcombine.low %v1169, %v1183
        %v1196 = vcombine.high %v1169, %v1183
        %v1197 = vcombine.low %v1176, %v1190
        %v1198 = vcombine.high %v1176, %v1190
        %v1200 = vunpack.c.l.s4 1966171168
        %v1201 = vunpack.c.0.s8 %v1200
        %v1202 = vlaneseq
        %v1203 = vshrl.u32 %v1202, 7
        %v1204 = vsub.s32 %v1201, %v1203
        %v1205 = vrot.slane %v1191, %v1204
        %v1207 = vunpack.c.l.s4 1966171168
        %v1208 = vunpack.c.0.s8 %v1207
        %v1209 = vlaneseq
        %v1210 = vshrl.u32 %v1209, 7
        %v1211 = vsub.s32 %v1208, %v1210
        %v1212 = vrot.slane %v1193, %v1211
        %v1214 = vunpack.c.l.s4 1966171168
        %v1215 = vunpack.c.0.s8 %v1214
        %v1216 = vlaneseq
        %v1217 = vshrl.u32 %v1216, 7
        %v1218 = vsub.s32 %v1215, %v1217
        %v1219 = vrot.slane %v1192, %v1218
        %v1221 = vunpack.c.l.s4 1966171168
        %v1222 = vunpack.c.0.s8 %v1221
        %v1223 = vlaneseq
        %v1224 = vshrl.u32 %v1223, 7
        %v1225 = vsub.s32 %v1222, %v1224
        %v1226 = vrot.slane %v1194, %v1225
        %v1228 = vunpack.c.l.s4 1966171168
        %v1229 = vunpack.c.0.s8 %v1228
        %v1230 = vlaneseq
        %v1231 = vshrl.u32 %v1230, 7
        %v1232 = vsub.s32 %v1229, %v1231
        %v1233 = vrot.slane %v1195, %v1232
        %v1235 = vunpack.c.l.s4 1966171168
        %v1236 = vunpack.c.0.s8 %v1235
        %v1237 = vlaneseq
        %v1238 = vshrl.u32 %v1237, 7
        %v1239 = vsub.s32 %v1236, %v1238
        %v1240 = vrot.slane %v1197, %v1239
        %v1242 = vunpack.c.l.s4 1966171168
        %v1243 = vunpack.c.0.s8 %v1242
        %v1244 = vlaneseq
        %v1245 = vshrl.u32 %v1244, 7
        %v1246 = vsub.s32 %v1243, %v1245
        %v1247 = vrot.slane %v1196, %v1246
        %v1249 = vunpack.c.l.s4 1966171168
        %v1250 = vunpack.c.0.s8 %v1249
        %v1251 = vlaneseq
        %v1252 = vshrl.u32 %v1251, 7
        %v1253 = vsub.s32 %v1250, %v1252
        %v1254 = vrot.slane %v1198, %v1253
        %v1255 = vcombine.low %v1205, %v1233
        %v1256 = vcombine.high %v1205, %v1233
        %v1257 = vcombine.low %v1212, %v1240
        %v1258 = vcombine.high %v1212, %v1240
        %v1259 = vcombine.low %v1219, %v1247
        %v1260 = vcombine.high %v1219, %v1247
        %v1261 = vcombine.low %v1226, %v1254
        %v1262 = vcombine.high %v1226, %v1254
        %v1263 = vcombine.low %v876, %v878
        %v1264 = vcombine.high %v876, %v878
        %v1265 = vcombine.low %v953, %v955
        %v1266 = vcombine.high %v953, %v955
        %v1267 = vcombine.low %v1030, %v1032
        %v1268 = vcombine.high %v1030, %v1032
        %v1269 = vcombine.low %v1107, %v1109
        %v1270 = vcombine.high %v1107, %v1109
        %v1272 = vunpack.c.l.s4 1966171168
        %v1273 = vunpack.c.0.s8 %v1272
        %v1274 = vlaneseq
        %v1275 = vshrl.u32 %v1274, 7
        %v1276 = vsub.s32 %v1273, %v1275
        %v1277 = vrot.slane %v1263, %v1276
        %v1279 = vunpack.c.l.s4 1966171168
        %v1280 = vunpack.c.0.s8 %v1279
        %v1281 = vlaneseq
        %v1282 = vshrl.u32 %v1281, 7
        %v1283 = vsub.s32 %v1280, %v1282
        %v1284 = vrot.slane %v1264, %v1283
        %v1286 = vunpack.c.l.s4 1966171168
        %v1287 = vunpack.c.0.s8 %v1286
        %v1288 = vlaneseq
        %v1289 = vshrl.u32 %v1288, 7
        %v1290 = vsub.s32 %v1287, %v1289
        %v1291 = vrot.slane %v1265, %v1290
        %v1293 = vunpack.c.l.s4 1966171168
        %v1294 = vunpack.c.0.s8 %v1293
        %v1295 = vlaneseq
        %v1296 = vshrl.u32 %v1295, 7
        %v1297 = vsub.s32 %v1294, %v1296
        %v1298 = vrot.slane %v1266, %v1297
        %v1300 = vunpack.c.l.s4 1966171168
        %v1301 = vunpack.c.0.s8 %v1300
        %v1302 = vlaneseq
        %v1303 = vshrl.u32 %v1302, 7
        %v1304 = vsub.s32 %v1301, %v1303
        %v1305 = vrot.slane %v1267, %v1304
        %v1307 = vunpack.c.l.s4 1966171168
        %v1308 = vunpack.c.0.s8 %v1307
        %v1309 = vlaneseq
        %v1310 = vshrl.u32 %v1309, 7
        %v1311 = vsub.s32 %v1308, %v1310
        %v1312 = vrot.slane %v1268, %v1311
        %v1314 = vunpack.c.l.s4 1966171168
        %v1315 = vunpack.c.0.s8 %v1314
        %v1316 = vlaneseq
        %v1317 = vshrl.u32 %v1316, 7
        %v1318 = vsub.s32 %v1315, %v1317
        %v1319 = vrot.slane %v1269, %v1318
        %v1321 = vunpack.c.l.s4 1966171168
        %v1322 = vunpack.c.0.s8 %v1321
        %v1323 = vlaneseq
        %v1324 = vshrl.u32 %v1323, 7
        %v1325 = vsub.s32 %v1322, %v1324
        %v1326 = vrot.slane %v1270, %v1325
        %v1327 = vcombine.low %v1277, %v1291
        %v1328 = vcombine.high %v1277, %v1291
        %v1329 = vcombine.low %v1284, %v1298
        %v1330 = vcombine.high %v1284, %v1298
        %v1331 = vcombine.low %v1305, %v1319
        %v1332 = vcombine.high %v1305, %v1319
        %v1333 = vcombine.low %v1312, %v1326
        %v1334 = vcombine.high %v1312, %v1326
        %v1336 = vunpack.c.l.s4 1966171168
        %v1337 = vunpack.c.0.s8 %v1336
        %v1338 = vlaneseq
        %v1339 = vshrl.u32 %v1338, 7
        %v1340 = vsub.s32 %v1337, %v1339
        %v1341 = vrot.slane %v1327, %v1340
        %v1343 = vunpack.c.l.s4 1966171168
        %v1344 = vunpack.c.0.s8 %v1343
        %v1345 = vlaneseq
        %v1346 = vshrl.u32 %v1345, 7
        %v1347 = vsub.s32 %v1344, %v1346
        %v1348 = vrot.slane %v1329, %v1347
        %v1350 = vunpack.c.l.s4 1966171168
        %v1351 = vunpack.c.0.s8 %v1350
        %v1352 = vlaneseq
        %v1353 = vshrl.u32 %v1352, 7
        %v1354 = vsub.s32 %v1351, %v1353
        %v1355 = vrot.slane %v1328, %v1354
        %v1357 = vunpack.c.l.s4 1966171168
        %v1358 = vunpack.c.0.s8 %v1357
        %v1359 = vlaneseq
        %v1360 = vshrl.u32 %v1359, 7
        %v1361 = vsub.s32 %v1358, %v1360
        %v1362 = vrot.slane %v1330, %v1361
        %v1364 = vunpack.c.l.s4 1966171168
        %v1365 = vunpack.c.0.s8 %v1364
        %v1366 = vlaneseq
        %v1367 = vshrl.u32 %v1366, 7
        %v1368 = vsub.s32 %v1365, %v1367
        %v1369 = vrot.slane %v1331, %v1368
        %v1371 = vunpack.c.l.s4 1966171168
        %v1372 = vunpack.c.0.s8 %v1371
        %v1373 = vlaneseq
        %v1374 = vshrl.u32 %v1373, 7
        %v1375 = vsub.s32 %v1372, %v1374
        %v1376 = vrot.slane %v1333, %v1375
        %v1378 = vunpack.c.l.s4 1966171168
        %v1379 = vunpack.c.0.s8 %v1378
        %v1380 = vlaneseq
        %v1381 = vshrl.u32 %v1380, 7
        %v1382 = vsub.s32 %v1379, %v1381
        %v1383 = vrot.slane %v1332, %v1382
        %v1385 = vunpack.c.l.s4 1966171168
        %v1386 = vunpack.c.0.s8 %v1385
        %v1387 = vlaneseq
        %v1388 = vshrl.u32 %v1387, 7
        %v1389 = vsub.s32 %v1386, %v1388
        %v1390 = vrot.slane %v1334, %v1389
        %v1391 = vcombine.low %v1341, %v1369
        %v1392 = vcombine.high %v1341, %v1369
        %v1393 = vcombine.low %v1348, %v1376
        %v1394 = vcombine.high %v1348, %v1376
        %v1395 = vcombine.low %v1355, %v1383
        %v1396 = vcombine.high %v1355, %v1383
        %v1397 = vcombine.low %v1362, %v1390
        %v1398 = vcombine.high %v1362, %v1390
        %v1399 = vld [vmem:[%s4] sm:$0xf]
        %v1400 = vcombine.low %v1255, %v1257
        %v1401 = vcombine.high %v1255, %v1257
        %v1402 = vcombine.low %v1391, %v1393
        %v1403 = vcombine.high %v1391, %v1393
        %v1405 = vunpack.c.l.s4 1966171168
        %v1406 = vunpack.c.0.s8 %v1405
        %v1407 = vlaneseq
        %v1408 = vshrl.u32 %v1407, 7
        %v1409 = vsub.s32 %v1406, %v1408
        %v1410 = vrot.slane %v1400, %v1409
        %v1412 = vunpack.c.l.s4 1966171168
        %v1413 = vunpack.c.0.s8 %v1412
        %v1414 = vlaneseq
        %v1415 = vshrl.u32 %v1414, 7
        %v1416 = vsub.s32 %v1413, %v1415
        %v1417 = vrot.slane %v1401, %v1416
        %v1419 = vunpack.c.l.s4 1966171168
        %v1420 = vunpack.c.0.s8 %v1419
        %v1421 = vlaneseq
        %v1422 = vshrl.u32 %v1421, 7
        %v1423 = vsub.s32 %v1420, %v1422
        %v1424 = vrot.slane %v1402, %v1423
        %v1426 = vunpack.c.l.s4 1966171168
        %v1427 = vunpack.c.0.s8 %v1426
        %v1428 = vlaneseq
        %v1429 = vshrl.u32 %v1428, 7
        %v1430 = vsub.s32 %v1427, %v1429
        %v1431 = vrot.slane %v1403, %v1430
        %v1432 = vcombine.low %v1410, %v1424
        %v1433 = vcombine.high %v1410, %v1424
        %v1434 = vcombine.low %v1417, %v1431
        %v1435 = vcombine.high %v1417, %v1431
        %v1437 = vunpack.c.l.s4 1966171168
        %v1438 = vunpack.c.0.s8 %v1437
        %v1439 = vlaneseq
        %v1440 = vshrl.u32 %v1439, 7
        %v1441 = vsub.s32 %v1438, %v1440
        %v1442 = vrot.slane %v1432, %v1441
        %v1444 = vunpack.c.l.s4 1966171168
        %v1445 = vunpack.c.0.s8 %v1444
        %v1446 = vlaneseq
        %v1447 = vshrl.u32 %v1446, 7
        %v1448 = vsub.s32 %v1445, %v1447
        %v1449 = vrot.slane %v1434, %v1448
        %v1451 = vunpack.c.l.s4 1966171168
        %v1452 = vunpack.c.0.s8 %v1451
        %v1453 = vlaneseq
        %v1454 = vshrl.u32 %v1453, 7
        %v1455 = vsub.s32 %v1452, %v1454
        %v1456 = vrot.slane %v1433, %v1455
        %v1458 = vunpack.c.l.s4 1966171168
        %v1459 = vunpack.c.0.s8 %v1458
        %v1460 = vlaneseq
        %v1461 = vshrl.u32 %v1460, 7
        %v1462 = vsub.s32 %v1459, %v1461
        %v1463 = vrot.slane %v1435, %v1462
        %v1464 = vcombine.high %v1442, %v1442
        %v1465 = vcombine.high %v1449, %v1449
        %v1466 = vcombine.high %v1456, %v1456
        %v1467 = vcombine.high %v1463, %v1463
        %v1468 = vcombine.low %v1259, %v1261
        %v1469 = vcombine.high %v1259, %v1261
        %v1470 = vcombine.low %v1395, %v1397
        %v1471 = vcombine.high %v1395, %v1397
        %v1473 = vunpack.c.l.s4 1966171168
        %v1474 = vunpack.c.0.s8 %v1473
        %v1475 = vlaneseq
        %v1476 = vshrl.u32 %v1475, 7
        %v1477 = vsub.s32 %v1474, %v1476
        %v1478 = vrot.slane %v1468, %v1477
        %v1480 = vunpack.c.l.s4 1966171168
        %v1481 = vunpack.c.0.s8 %v1480
        %v1482 = vlaneseq
        %v1483 = vshrl.u32 %v1482, 7
        %v1484 = vsub.s32 %v1481, %v1483
        %v1485 = vrot.slane %v1469, %v1484
        %v1487 = vunpack.c.l.s4 1966171168
        %v1488 = vunpack.c.0.s8 %v1487
        %v1489 = vlaneseq
        %v1490 = vshrl.u32 %v1489, 7
        %v1491 = vsub.s32 %v1488, %v1490
        %v1492 = vrot.slane %v1470, %v1491
        %v1494 = vunpack.c.l.s4 1966171168
        %v1495 = vunpack.c.0.s8 %v1494
        %v1496 = vlaneseq
        %v1497 = vshrl.u32 %v1496, 7
        %v1498 = vsub.s32 %v1495, %v1497
        %v1499 = vrot.slane %v1471, %v1498
        %v1500 = vcombine.low %v1478, %v1492
        %v1501 = vcombine.high %v1478, %v1492
        %v1502 = vcombine.low %v1485, %v1499
        %v1503 = vcombine.high %v1485, %v1499
        %v1505 = vunpack.c.l.s4 1966171168
        %v1506 = vunpack.c.0.s8 %v1505
        %v1507 = vlaneseq
        %v1508 = vshrl.u32 %v1507, 7
        %v1509 = vsub.s32 %v1506, %v1508
        %v1510 = vrot.slane %v1500, %v1509
        %v1512 = vunpack.c.l.s4 1966171168
        %v1513 = vunpack.c.0.s8 %v1512
        %v1514 = vlaneseq
        %v1515 = vshrl.u32 %v1514, 7
        %v1516 = vsub.s32 %v1513, %v1515
        %v1517 = vrot.slane %v1502, %v1516
        %v1519 = vunpack.c.l.s4 1966171168
        %v1520 = vunpack.c.0.s8 %v1519
        %v1521 = vlaneseq
        %v1522 = vshrl.u32 %v1521, 7
        %v1523 = vsub.s32 %v1520, %v1522
        %v1524 = vrot.slane %v1501, %v1523
        %v1526 = vunpack.c.l.s4 1966171168
        %v1527 = vunpack.c.0.s8 %v1526
        %v1528 = vlaneseq
        %v1529 = vshrl.u32 %v1528, 7
        %v1530 = vsub.s32 %v1527, %v1529
        %v1531 = vrot.slane %v1503, %v1530
        %v1532 = vcombine.high %v1510, %v1510
        %v1533 = vcombine.high %v1517, %v1517
        %v1534 = vcombine.high %v1524, %v1524
        %v1535 = vcombine.high %v1531, %v1531
        %v1536 = vcombine.low %v1256, %v1258
        %v1537 = vcombine.high %v1256, %v1258
        %v1538 = vcombine.low %v1392, %v1394
        %v1539 = vcombine.high %v1392, %v1394
        %v1541 = vunpack.c.l.s4 1966171168
        %v1542 = vunpack.c.0.s8 %v1541
        %v1543 = vlaneseq
        %v1544 = vshrl.u32 %v1543, 7
        %v1545 = vsub.s32 %v1542, %v1544
        %v1546 = vrot.slane %v1536, %v1545
        %v1548 = vunpack.c.l.s4 1966171168
        %v1549 = vunpack.c.0.s8 %v1548
        %v1550 = vlaneseq
        %v1551 = vshrl.u32 %v1550, 7
        %v1552 = vsub.s32 %v1549, %v1551
        %v1553 = vrot.slane %v1537, %v1552
        %v1555 = vunpack.c.l.s4 1966171168
        %v1556 = vunpack.c.0.s8 %v1555
        %v1557 = vlaneseq
        %v1558 = vshrl.u32 %v1557, 7
        %v1559 = vsub.s32 %v1556, %v1558
        %v1560 = vrot.slane %v1538, %v1559
        %v1562 = vunpack.c.l.s4 1966171168
        %v1563 = vunpack.c.0.s8 %v1562
        %v1564 = vlaneseq
        %v1565 = vshrl.u32 %v1564, 7
        %v1566 = vsub.s32 %v1563, %v1565
        %v1567 = vrot.slane %v1539, %v1566
        %v1568 = vcombine.low %v1546, %v1560
        %v1569 = vcombine.high %v1546, %v1560
        %v1570 = vcombine.low %v1553, %v1567
        %v1571 = vcombine.high %v1553, %v1567
        %v1573 = vunpack.c.l.s4 1966171168
        %v1574 = vunpack.c.0.s8 %v1573
        %v1575 = vlaneseq
        %v1576 = vshrl.u32 %v1575, 7
        %v1577 = vsub.s32 %v1574, %v1576
        %v1578 = vrot.slane %v1568, %v1577
        %v1580 = vunpack.c.l.s4 1966171168
        %v1581 = vunpack.c.0.s8 %v1580
        %v1582 = vlaneseq
        %v1583 = vshrl.u32 %v1582, 7
        %v1584 = vsub.s32 %v1581, %v1583
        %v1585 = vrot.slane %v1570, %v1584
        %v1587 = vunpack.c.l.s4 1966171168
        %v1588 = vunpack.c.0.s8 %v1587
        %v1589 = vlaneseq
        %v1590 = vshrl.u32 %v1589, 7
        %v1591 = vsub.s32 %v1588, %v1590
        %v1592 = vrot.slane %v1569, %v1591
        %v1594 = vunpack.c.l.s4 1966171168
        %v1595 = vunpack.c.0.s8 %v1594
        %v1596 = vlaneseq
        %v1597 = vshrl.u32 %v1596, 7
        %v1598 = vsub.s32 %v1595, %v1597
        %v1599 = vrot.slane %v1571, %v1598
        %v1600 = vcombine.high %v1578, %v1578
        %v1601 = vcombine.high %v1585, %v1585
        %v1602 = vcombine.high %v1592, %v1592
        %v1603 = vcombine.high %v1599, %v1599
        %v1604 = vcombine.low %v1260, %v1262
        %v1605 = vcombine.high %v1260, %v1262
        %v1606 = vcombine.low %v1396, %v1398
        %v1607 = vcombine.high %v1396, %v1398
        %v1609 = vunpack.c.l.s4 1966171168
        %v1610 = vunpack.c.0.s8 %v1609
        %v1611 = vlaneseq
        %v1612 = vshrl.u32 %v1611, 7
        %v1613 = vsub.s32 %v1610, %v1612
        %v1614 = vrot.slane %v1604, %v1613
        %v1616 = vunpack.c.l.s4 1966171168
        %v1617 = vunpack.c.0.s8 %v1616
        %v1618 = vlaneseq
        %v1619 = vshrl.u32 %v1618, 7
        %v1620 = vsub.s32 %v1617, %v1619
        %v1621 = vrot.slane %v1605, %v1620
        %v1623 = vunpack.c.l.s4 1966171168
        %v1624 = vunpack.c.0.s8 %v1623
        %v1625 = vlaneseq
        %v1626 = vshrl.u32 %v1625, 7
        %v1627 = vsub.s32 %v1624, %v1626
        %v1628 = vrot.slane %v1606, %v1627
        %v1630 = vunpack.c.l.s4 1966171168
        %v1631 = vunpack.c.0.s8 %v1630
        %v1632 = vlaneseq
        %v1633 = vshrl.u32 %v1632, 7
        %v1634 = vsub.s32 %v1631, %v1633
        %v1635 = vrot.slane %v1607, %v1634
        %v1636 = vcombine.low %v1614, %v1628
        %v1637 = vcombine.high %v1614, %v1628
        %v1638 = vcombine.low %v1621, %v1635
        %v1639 = vcombine.high %v1621, %v1635
        %v1641 = vunpack.c.l.s4 1966171168
        %v1642 = vunpack.c.0.s8 %v1641
        %v1643 = vlaneseq
        %v1644 = vshrl.u32 %v1643, 7
        %v1645 = vsub.s32 %v1642, %v1644
        %v1646 = vrot.slane %v1636, %v1645
        %v1648 = vunpack.c.l.s4 1966171168
        %v1649 = vunpack.c.0.s8 %v1648
        %v1650 = vlaneseq
        %v1651 = vshrl.u32 %v1650, 7
        %v1652 = vsub.s32 %v1649, %v1651
        %v1653 = vrot.slane %v1638, %v1652
        %v1655 = vunpack.c.l.s4 1966171168
        %v1656 = vunpack.c.0.s8 %v1655
        %v1657 = vlaneseq
        %v1658 = vshrl.u32 %v1657, 7
        %v1659 = vsub.s32 %v1656, %v1658
        %v1660 = vrot.slane %v1637, %v1659
        %v1662 = vunpack.c.l.s4 1966171168
        %v1663 = vunpack.c.0.s8 %v1662
        %v1664 = vlaneseq
        %v1665 = vshrl.u32 %v1664, 7
        %v1666 = vsub.s32 %v1663, %v1665
        %v1667 = vrot.slane %v1639, %v1666
        %v1668 = vcombine.high %v1646, %v1646
        %v1669 = vcombine.high %v1653, %v1653
        %v1670 = vcombine.high %v1660, %v1660
        %v1671 = vcombine.high %v1667, %v1667
        %vm1672 = vcmask 31744
        %v1674 = vsel %vm1672, %v1399, 0
        %v1676 = vsel %vm369, %v1442, 0
        %v1678 = vsel %vm369, %v1456, 0
        %v1680 = vsel %vm369, %v1464, 0
        %v1682 = vsel %vm369, %v1466, 0
        %v1684 = vsel %vm369, %v1449, 0
        %v1686 = vsel %vm369, %v1463, 0
        %v1688 = vsel %vm369, %v1465, 0
        %v1690 = vsel %vm369, %v1467, 0
        %v1692 = vsel %vm369, %v1510, 0
        %v1694 = vsel %vm369, %v1524, 0
        %v1696 = vsel %vm369, %v1532, 0
        %v1698 = vsel %vm369, %v1534, 0
        %v1700 = vsel %vm369, %v1517, 0
        %v1702 = vsel %vm369, %v1531, 0
        %v1704 = vsel %vm369, %v1533, 0
        %v1706 = vsel %vm369, %v1535, 0
        %v1708 = vsel %vm369, %v1578, 0
        %v1710 = vsel %vm369, %v1592, 0
        %v1712 = vsel %vm369, %v1600, 0
        %v1714 = vsel %vm369, %v1602, 0
        %v1716 = vsel %vm369, %v1585, 0
        %v1718 = vsel %vm369, %v1599, 0
        %v1720 = vsel %vm369, %v1601, 0
        %v1722 = vsel %vm369, %v1603, 0
        %v1724 = vsel %vm369, %v1646, 0
        %v1726 = vsel %vm369, %v1660, 0
        %v1728 = vsel %vm369, %v1668, 0
        %v1730 = vsel %vm369, %v1670, 0
        %v1732 = vsel %vm369, %v1653, 0
        %v1734 = vsel %vm369, %v1667, 0
        %v1736 = vsel %vm369, %v1669, 0
        %v1738 = vsel %vm369, %v1671, 0
        %1740 = vmatprep.subr.mxu0 %v1678
        %1741 = vmatpush1.msra.mxu0 %v1676
        %1742 = vmatprep.subr.mxu0 0.0
        %1743 = vmatpush1.msra.mxu0 0.0
        %1744 = vmatprep.subr.mxu0 0.0
        %1745 = vmatpush1.msra.mxu0 0.0
        %1746 = vmatprep.subr.mxu0 0.0
        %1747 = vmatpush1.msra.mxu0 0.0
        %1748 = vmatprep.subr.mxu0 0.0
        %1749 = vmatpush1.msra.mxu0 0.0
        %1750 = vmatprep.subr.mxu0 0.0
        %1751 = vmatpush1.msra.mxu0 0.0
        %1752 = vmatprep.subr.mxu0 0.0
        %1753 = vmatpush1.msra.mxu0 0.0
        %1754 = vmatprep.subr.mxu0 0.0
        %1755 = vmatpush1.msra.mxu0 0.0
        %1756 = vmatprep.subr.mxu0 0.0
        %1757 = vmatpush1.msra.mxu0 0.0
        %1758 = vmatprep.subr.mxu0 0.0
        %1759 = vmatpush1.msra.mxu0 0.0
        %1760 = vmatprep.subr.mxu0 0.0
        %1761 = vmatpush1.msra.mxu0 0.0
        %1762 = vmatprep.subr.mxu0 0.0
        %1763 = vmatpush1.msra.mxu0 0.0
        %1764 = vmatprep.subr.mxu0 0.0
        %1765 = vmatpush1.msra.mxu0 0.0
        %1766 = vmatprep.subr.mxu0 0.0
        %1767 = vmatpush1.msra.mxu0 0.0
        %1768 = vmatprep.subr.mxu0 0.0
        %1769 = vmatpush1.msra.mxu0 0.0
        %1770 = vmatprep.subr.mxu0 0.0
        %1771 = vmatpush1.msra.mxu0 0.0
        %1772 = vmatprep.subr.mxu0 0.0
        %1773 = vmatpush1.msra.mxu0 0.0
        %1774 = vmatprep.subr.mxu0 0.0
        %1775 = vmatpush1.msra.mxu0 0.0
        %1776 = vmatprep.subr.mxu0 0.0
        %1777 = vmatpush1.msra.mxu0 0.0
        %1778 = vmatprep.subr.mxu0 0.0
        %1779 = vmatpush1.msra.mxu0 0.0
        %1780 = vmatprep.subr.mxu0 0.0
        %1781 = vmatpush1.msra.mxu0 0.0
        %1782 = vmatprep.subr.mxu0 0.0
        %1783 = vmatpush1.msra.mxu0 0.0
        %1784 = vmatprep.subr.mxu0 0.0
        %1785 = vmatpush1.msra.mxu0 0.0
        %1786 = vmatprep.subr.mxu0 0.0
        %1787 = vmatpush1.msra.mxu0 0.0
        %1788 = vmatprep.subr.mxu0 0.0
        %1789 = vmatpush1.msra.mxu0 0.0
        %1790 = vmatprep.subr.mxu0 0.0
        %1791 = vmatpush1.msra.mxu0 0.0
        %1792 = vmatprep.subr.mxu0 0.0
        %1793 = vmatpush1.msra.mxu0 0.0
        %1794 = vmatprep.subr.mxu0 0.0
        %1795 = vmatpush1.msra.mxu0 0.0
        %1796 = vmatprep.subr.mxu0 0.0
        %1797 = vmatpush1.msra.mxu0 0.0
        %1798 = vmatprep.subr.mxu0 0.0
        %1799 = vmatpush1.msra.mxu0 0.0
        %1800 = vmatprep.subr.mxu0 0.0
        %1801 = vmatpush1.msra.mxu0 0.0
        %1802 = vmatprep.subr.mxu0 0.0
        %1803 = vmatpush1.msra.mxu0 0.0
        %1804 = vmatprep.mubr.f32.mxu0 0.0
        %1805 = vmatmul.mubr.f32.gmra.mrb[0].mxu0 %v1674
        %v1806 = vpop.f32.mrb[0].mxu0
        %v1807 = vadd.f32 0.0, %v1806
        %v1808 = vpop.f32.mrb[0].mxu0
        %v1809 = vadd.f32 0.0, %v1808
        %1810 = vdwg.mxu0
        %1811 = vmatprep.subr.mxu0 %v1682
        %1812 = vmatpush1.msra.mxu0 %v1680
        %1813 = vmatprep.subr.mxu0 0.0
        %1814 = vmatpush1.msra.mxu0 0.0
        %1815 = vmatprep.subr.mxu0 0.0
        %1816 = vmatpush1.msra.mxu0 0.0
        %1817 = vmatprep.subr.mxu0 0.0
        %1818 = vmatpush1.msra.mxu0 0.0
        %1819 = vmatprep.subr.mxu0 0.0
        %1820 = vmatpush1.msra.mxu0 0.0
        %1821 = vmatprep.subr.mxu0 0.0
        %1822 = vmatpush1.msra.mxu0 0.0
        %1823 = vmatprep.subr.mxu0 0.0
        %1824 = vmatpush1.msra.mxu0 0.0
        %1825 = vmatprep.subr.mxu0 0.0
        %1826 = vmatpush1.msra.mxu0 0.0
        %1827 = vmatprep.subr.mxu0 0.0
        %1828 = vmatpush1.msra.mxu0 0.0
        %1829 = vmatprep.subr.mxu0 0.0
        %1830 = vmatpush1.msra.mxu0 0.0
        %1831 = vmatprep.subr.mxu0 0.0
        %1832 = vmatpush1.msra.mxu0 0.0
        %1833 = vmatprep.subr.mxu0 0.0
        %1834 = vmatpush1.msra.mxu0 0.0
        %1835 = vmatprep.subr.mxu0 0.0
        %1836 = vmatpush1.msra.mxu0 0.0
        %1837 = vmatprep.subr.mxu0 0.0
        %1838 = vmatpush1.msra.mxu0 0.0
        %1839 = vmatprep.subr.mxu0 0.0
        %1840 = vmatpush1.msra.mxu0 0.0
        %1841 = vmatprep.subr.mxu0 0.0
        %1842 = vmatpush1.msra.mxu0 0.0
        %1843 = vmatprep.subr.mxu0 0.0
        %1844 = vmatpush1.msra.mxu0 0.0
        %1845 = vmatprep.subr.mxu0 0.0
        %1846 = vmatpush1.msra.mxu0 0.0
        %1847 = vmatprep.subr.mxu0 0.0
        %1848 = vmatpush1.msra.mxu0 0.0
        %1849 = vmatprep.subr.mxu0 0.0
        %1850 = vmatpush1.msra.mxu0 0.0
        %1851 = vmatprep.subr.mxu0 0.0
        %1852 = vmatpush1.msra.mxu0 0.0
        %1853 = vmatprep.subr.mxu0 0.0
        %1854 = vmatpush1.msra.mxu0 0.0
        %1855 = vmatprep.subr.mxu0 0.0
        %1856 = vmatpush1.msra.mxu0 0.0
        %1857 = vmatprep.subr.mxu0 0.0
        %1858 = vmatpush1.msra.mxu0 0.0
        %1859 = vmatprep.subr.mxu0 0.0
        %1860 = vmatpush1.msra.mxu0 0.0
        %1861 = vmatprep.subr.mxu0 0.0
        %1862 = vmatpush1.msra.mxu0 0.0
        %1863 = vmatprep.subr.mxu0 0.0
        %1864 = vmatpush1.msra.mxu0 0.0
        %1865 = vmatprep.subr.mxu0 0.0
        %1866 = vmatpush1.msra.mxu0 0.0
        %1867 = vmatprep.subr.mxu0 0.0
        %1868 = vmatpush1.msra.mxu0 0.0
        %1869 = vmatprep.subr.mxu0 0.0
        %1870 = vmatpush1.msra.mxu0 0.0
        %1871 = vmatprep.subr.mxu0 0.0
        %1872 = vmatpush1.msra.mxu0 0.0
        %1873 = vmatprep.subr.mxu0 0.0
        %1874 = vmatpush1.msra.mxu0 0.0
        %1875 = vmatprep.mubr.f32.mxu0 0.0
        %1876 = vmatmul.mubr.f32.gmra.mrb[0].mxu0 %v1674
        %v1877 = vpop.f32.mrb[0].mxu0
        %v1878 = vadd.f32 0.0, %v1877
        %v1879 = vpop.f32.mrb[0].mxu0
        %v1880 = vadd.f32 0.0, %v1879
        %1881 = vdwg.mxu0
        %1882 = vmatprep.subr.mxu0 %v1686
        %1883 = vmatpush1.msra.mxu0 %v1684
        %1884 = vmatprep.subr.mxu0 0.0
        %1885 = vmatpush1.msra.mxu0 0.0
        %1886 = vmatprep.subr.mxu0 0.0
        %1887 = vmatpush1.msra.mxu0 0.0
        %1888 = vmatprep.subr.mxu0 0.0
        %1889 = vmatpush1.msra.mxu0 0.0
        %1890 = vmatprep.subr.mxu0 0.0
        %1891 = vmatpush1.msra.mxu0 0.0
        %1892 = vmatprep.subr.mxu0 0.0
        %1893 = vmatpush1.msra.mxu0 0.0
        %1894 = vmatprep.subr.mxu0 0.0
        %1895 = vmatpush1.msra.mxu0 0.0
        %1896 = vmatprep.subr.mxu0 0.0
        %1897 = vmatpush1.msra.mxu0 0.0
        %1898 = vmatprep.subr.mxu0 0.0
        %1899 = vmatpush1.msra.mxu0 0.0
        %1900 = vmatprep.subr.mxu0 0.0
        %1901 = vmatpush1.msra.mxu0 0.0
        %1902 = vmatprep.subr.mxu0 0.0
        %1903 = vmatpush1.msra.mxu0 0.0
        %1904 = vmatprep.subr.mxu0 0.0
        %1905 = vmatpush1.msra.mxu0 0.0
        %1906 = vmatprep.subr.mxu0 0.0
        %1907 = vmatpush1.msra.mxu0 0.0
        %1908 = vmatprep.subr.mxu0 0.0
        %1909 = vmatpush1.msra.mxu0 0.0
        %1910 = vmatprep.subr.mxu0 0.0
        %1911 = vmatpush1.msra.mxu0 0.0
        %1912 = vmatprep.subr.mxu0 0.0
        %1913 = vmatpush1.msra.mxu0 0.0
        %1914 = vmatprep.subr.mxu0 0.0
        %1915 = vmatpush1.msra.mxu0 0.0
        %1916 = vmatprep.subr.mxu0 0.0
        %1917 = vmatpush1.msra.mxu0 0.0
        %1918 = vmatprep.subr.mxu0 0.0
        %1919 = vmatpush1.msra.mxu0 0.0
        %1920 = vmatprep.subr.mxu0 0.0
        %1921 = vmatpush1.msra.mxu0 0.0
        %1922 = vmatprep.subr.mxu0 0.0
        %1923 = vmatpush1.msra.mxu0 0.0
        %1924 = vmatprep.subr.mxu0 0.0
        %1925 = vmatpush1.msra.mxu0 0.0
        %1926 = vmatprep.subr.mxu0 0.0
        %1927 = vmatpush1.msra.mxu0 0.0
        %1928 = vmatprep.subr.mxu0 0.0
        %1929 = vmatpush1.msra.mxu0 0.0
        %1930 = vmatprep.subr.mxu0 0.0
        %1931 = vmatpush1.msra.mxu0 0.0
        %1932 = vmatprep.subr.mxu0 0.0
        %1933 = vmatpush1.msra.mxu0 0.0
        %1934 = vmatprep.subr.mxu0 0.0
        %1935 = vmatpush1.msra.mxu0 0.0
        %1936 = vmatprep.subr.mxu0 0.0
        %1937 = vmatpush1.msra.mxu0 0.0
        %1938 = vmatprep.subr.mxu0 0.0
        %1939 = vmatpush1.msra.mxu0 0.0
        %1940 = vmatprep.subr.mxu0 0.0
        %1941 = vmatpush1.msra.mxu0 0.0
        %1942 = vmatprep.subr.mxu0 0.0
        %1943 = vmatpush1.msra.mxu0 0.0
        %1944 = vmatprep.subr.mxu0 0.0
        %1945 = vmatpush1.msra.mxu0 0.0
        %1946 = vmatprep.mubr.f32.mxu0 0.0
        %1947 = vmatmul.mubr.f32.gmra.mrb[0].mxu0 %v1674
        %v1948 = vpop.f32.mrb[0].mxu0
        %v1949 = vadd.f32 0.0, %v1948
        %v1950 = vpop.f32.mrb[0].mxu0
        %v1951 = vadd.f32 0.0, %v1950
        %1952 = vdwg.mxu0
        %1953 = vmatprep.subr.mxu0 %v1690
        %1954 = vmatpush1.msra.mxu0 %v1688
        %1955 = vmatprep.subr.mxu0 0.0
        %1956 = vmatpush1.msra.mxu0 0.0
        %1957 = vmatprep.subr.mxu0 0.0
        %1958 = vmatpush1.msra.mxu0 0.0
        %1959 = vmatprep.subr.mxu0 0.0
        %1960 = vmatpush1.msra.mxu0 0.0
        %1961 = vmatprep.subr.mxu0 0.0
        %1962 = vmatpush1.msra.mxu0 0.0
        %1963 = vmatprep.subr.mxu0 0.0
        %1964 = vmatpush1.msra.mxu0 0.0
        %1965 = vmatprep.subr.mxu0 0.0
        %1966 = vmatpush1.msra.mxu0 0.0
        %1967 = vmatprep.subr.mxu0 0.0
        %1968 = vmatpush1.msra.mxu0 0.0
        %1969 = vmatprep.subr.mxu0 0.0
        %1970 = vmatpush1.msra.mxu0 0.0
        %1971 = vmatprep.subr.mxu0 0.0
        %1972 = vmatpush1.msra.mxu0 0.0
        %1973 = vmatprep.subr.mxu0 0.0
        %1974 = vmatpush1.msra.mxu0 0.0
        %1975 = vmatprep.subr.mxu0 0.0
        %1976 = vmatpush1.msra.mxu0 0.0
        %1977 = vmatprep.subr.mxu0 0.0
        %1978 = vmatpush1.msra.mxu0 0.0
        %1979 = vmatprep.subr.mxu0 0.0
        %1980 = vmatpush1.msra.mxu0 0.0
        %1981 = vmatprep.subr.mxu0 0.0
        %1982 = vmatpush1.msra.mxu0 0.0
        %1983 = vmatprep.subr.mxu0 0.0
        %1984 = vmatpush1.msra.mxu0 0.0
        %1985 = vmatprep.subr.mxu0 0.0
        %1986 = vmatpush1.msra.mxu0 0.0
        %1987 = vmatprep.subr.mxu0 0.0
        %1988 = vmatpush1.msra.mxu0 0.0
        %1989 = vmatprep.subr.mxu0 0.0
        %1990 = vmatpush1.msra.mxu0 0.0
        %1991 = vmatprep.subr.mxu0 0.0
        %1992 = vmatpush1.msra.mxu0 0.0
        %1993 = vmatprep.subr.mxu0 0.0
        %1994 = vmatpush1.msra.mxu0 0.0
        %1995 = vmatprep.subr.mxu0 0.0
        %1996 = vmatpush1.msra.mxu0 0.0
        %1997 = vmatprep.subr.mxu0 0.0
        %1998 = vmatpush1.msra.mxu0 0.0
        %1999 = vmatprep.subr.mxu0 0.0
        %2000 = vmatpush1.msra.mxu0 0.0
        %2001 = vmatprep.subr.mxu0 0.0
        %2002 = vmatpush1.msra.mxu0 0.0
        %2003 = vmatprep.subr.mxu0 0.0
        %2004 = vmatpush1.msra.mxu0 0.0
        %2005 = vmatprep.subr.mxu0 0.0
        %2006 = vmatpush1.msra.mxu0 0.0
        %2007 = vmatprep.subr.mxu0 0.0
        %2008 = vmatpush1.msra.mxu0 0.0
        %2009 = vmatprep.subr.mxu0 0.0
        %2010 = vmatpush1.msra.mxu0 0.0
        %2011 = vmatprep.subr.mxu0 0.0
        %2012 = vmatpush1.msra.mxu0 0.0
        %2013 = vmatprep.subr.mxu0 0.0
        %2014 = vmatpush1.msra.mxu0 0.0
        %2015 = vmatprep.subr.mxu0 0.0
        %2016 = vmatpush1.msra.mxu0 0.0
        %2017 = vmatprep.mubr.f32.mxu0 0.0
        %2018 = vmatmul.mubr.f32.gmra.mrb[0].mxu0 %v1674
        %v2019 = vpop.f32.mrb[0].mxu0
        %v2020 = vadd.f32 0.0, %v2019
        %v2021 = vpop.f32.mrb[0].mxu0
        %v2022 = vadd.f32 0.0, %v2021
        %2023 = vdwg.mxu0
        %2024 = vmatprep.subr.mxu0 %v1694
        %2025 = vmatpush1.msra.mxu0 %v1692
        %2026 = vmatprep.subr.mxu0 0.0
        %2027 = vmatpush1.msra.mxu0 0.0
        %2028 = vmatprep.subr.mxu0 0.0
        %2029 = vmatpush1.msra.mxu0 0.0
        %2030 = vmatprep.subr.mxu0 0.0
        %2031 = vmatpush1.msra.mxu0 0.0
        %2032 = vmatprep.subr.mxu0 0.0
        %2033 = vmatpush1.msra.mxu0 0.0
        %2034 = vmatprep.subr.mxu0 0.0
        %2035 = vmatpush1.msra.mxu0 0.0
        %2036 = vmatprep.subr.mxu0 0.0
        %2037 = vmatpush1.msra.mxu0 0.0
        %2038 = vmatprep.subr.mxu0 0.0
        %2039 = vmatpush1.msra.mxu0 0.0
        %2040 = vmatprep.subr.mxu0 0.0
        %2041 = vmatpush1.msra.mxu0 0.0
        %2042 = vmatprep.subr.mxu0 0.0
        %2043 = vmatpush1.msra.mxu0 0.0
        %2044 = vmatprep.subr.mxu0 0.0
        %2045 = vmatpush1.msra.mxu0 0.0
        %2046 = vmatprep.subr.mxu0 0.0
        %2047 = vmatpush1.msra.mxu0 0.0
        %2048 = vmatprep.subr.mxu0 0.0
        %2049 = vmatpush1.msra.mxu0 0.0
        %2050 = vmatprep.subr.mxu0 0.0
        %2051 = vmatpush1.msra.mxu0 0.0
        %2052 = vmatprep.subr.mxu0 0.0
        %2053 = vmatpush1.msra.mxu0 0.0
        %2054 = vmatprep.subr.mxu0 0.0
        %2055 = vmatpush1.msra.mxu0 0.0
        %2056 = vmatprep.subr.mxu0 0.0
        %2057 = vmatpush1.msra.mxu0 0.0
        %2058 = vmatprep.subr.mxu0 0.0
        %2059 = vmatpush1.msra.mxu0 0.0
        %2060 = vmatprep.subr.mxu0 0.0
        %2061 = vmatpush1.msra.mxu0 0.0
        %2062 = vmatprep.subr.mxu0 0.0
        %2063 = vmatpush1.msra.mxu0 0.0
        %2064 = vmatprep.subr.mxu0 0.0
        %2065 = vmatpush1.msra.mxu0 0.0
        %2066 = vmatprep.subr.mxu0 0.0
        %2067 = vmatpush1.msra.mxu0 0.0
        %2068 = vmatprep.subr.mxu0 0.0
        %2069 = vmatpush1.msra.mxu0 0.0
        %2070 = vmatprep.subr.mxu0 0.0
        %2071 = vmatpush1.msra.mxu0 0.0
        %2072 = vmatprep.subr.mxu0 0.0
        %2073 = vmatpush1.msra.mxu0 0.0
        %2074 = vmatprep.subr.mxu0 0.0
        %2075 = vmatpush1.msra.mxu0 0.0
        %2076 = vmatprep.subr.mxu0 0.0
        %2077 = vmatpush1.msra.mxu0 0.0
        %2078 = vmatprep.subr.mxu0 0.0
        %2079 = vmatpush1.msra.mxu0 0.0
        %2080 = vmatprep.subr.mxu0 0.0
        %2081 = vmatpush1.msra.mxu0 0.0
        %2082 = vmatprep.subr.mxu0 0.0
        %2083 = vmatpush1.msra.mxu0 0.0
        %2084 = vmatprep.subr.mxu0 0.0
        %2085 = vmatpush1.msra.mxu0 0.0
        %2086 = vmatprep.subr.mxu0 0.0
        %2087 = vmatpush1.msra.mxu0 0.0
        %2088 = vmatprep.mubr.f32.mxu0 0.0
        %2089 = vmatmul.mubr.f32.gmra.mrb[0].mxu0 %v1674
        %v2090 = vpop.f32.mrb[0].mxu0
        %v2091 = vadd.f32 0.0, %v2090
        %v2092 = vpop.f32.mrb[0].mxu0
        %v2093 = vadd.f32 0.0, %v2092
        %2094 = vdwg.mxu0
        %2095 = vmatprep.subr.mxu0 %v1698
        %2096 = vmatpush1.msra.mxu0 %v1696
        %2097 = vmatprep.subr.mxu0 0.0
        %2098 = vmatpush1.msra.mxu0 0.0
        %2099 = vmatprep.subr.mxu0 0.0
        %2100 = vmatpush1.msra.mxu0 0.0
        %2101 = vmatprep.subr.mxu0 0.0
        %2102 = vmatpush1.msra.mxu0 0.0
        %2103 = vmatprep.subr.mxu0 0.0
        %2104 = vmatpush1.msra.mxu0 0.0
        %2105 = vmatprep.subr.mxu0 0.0
        %2106 = vmatpush1.msra.mxu0 0.0
        %2107 = vmatprep.subr.mxu0 0.0
        %2108 = vmatpush1.msra.mxu0 0.0
        %2109 = vmatprep.subr.mxu0 0.0
        %2110 = vmatpush1.msra.mxu0 0.0
        %2111 = vmatprep.subr.mxu0 0.0
        %2112 = vmatpush1.msra.mxu0 0.0
        %2113 = vmatprep.subr.mxu0 0.0
        %2114 = vmatpush1.msra.mxu0 0.0
        %2115 = vmatprep.subr.mxu0 0.0
        %2116 = vmatpush1.msra.mxu0 0.0
        %2117 = vmatprep.subr.mxu0 0.0
        %2118 = vmatpush1.msra.mxu0 0.0
        %2119 = vmatprep.subr.mxu0 0.0
        %2120 = vmatpush1.msra.mxu0 0.0
        %2121 = vmatprep.subr.mxu0 0.0
        %2122 = vmatpush1.msra.mxu0 0.0
        %2123 = vmatprep.subr.mxu0 0.0
        %2124 = vmatpush1.msra.mxu0 0.0
        %2125 = vmatprep.subr.mxu0 0.0
        %2126 = vmatpush1.msra.mxu0 0.0
        %2127 = vmatprep.subr.mxu0 0.0
        %2128 = vmatpush1.msra.mxu0 0.0
        %2129 = vmatprep.subr.mxu0 0.0
        %2130 = vmatpush1.msra.mxu0 0.0
        %2131 = vmatprep.subr.mxu0 0.0
        %2132 = vmatpush1.msra.mxu0 0.0
        %2133 = vmatprep.subr.mxu0 0.0
        %2134 = vmatpush1.msra.mxu0 0.0
        %2135 = vmatprep.subr.mxu0 0.0
        %2136 = vmatpush1.msra.mxu0 0.0
        %2137 = vmatprep.subr.mxu0 0.0
        %2138 = vmatpush1.msra.mxu0 0.0
        %2139 = vmatprep.subr.mxu0 0.0
        %2140 = vmatpush1.msra.mxu0 0.0
        %2141 = vmatprep.subr.mxu0 0.0
        %2142 = vmatpush1.msra.mxu0 0.0
        %2143 = vmatprep.subr.mxu0 0.0
        %2144 = vmatpush1.msra.mxu0 0.0
        %2145 = vmatprep.subr.mxu0 0.0
        %2146 = vmatpush1.msra.mxu0 0.0
        %2147 = vmatprep.subr.mxu0 0.0
        %2148 = vmatpush1.msra.mxu0 0.0
        %2149 = vmatprep.subr.mxu0 0.0
        %2150 = vmatpush1.msra.mxu0 0.0
        %2151 = vmatprep.subr.mxu0 0.0
        %2152 = vmatpush1.msra.mxu0 0.0
        %2153 = vmatprep.subr.mxu0 0.0
        %2154 = vmatpush1.msra.mxu0 0.0
        %2155 = vmatprep.subr.mxu0 0.0
        %2156 = vmatpush1.msra.mxu0 0.0
        %2157 = vmatprep.subr.mxu0 0.0
        %2158 = vmatpush1.msra.mxu0 0.0
        %2159 = vmatprep.mubr.f32.mxu0 0.0
        %2160 = vmatmul.mubr.f32.gmra.mrb[0].mxu0 %v1674
        %v2161 = vpop.f32.mrb[0].mxu0
        %v2162 = vadd.f32 0.0, %v2161
        %v2163 = vpop.f32.mrb[0].mxu0
        %v2164 = vadd.f32 0.0, %v2163
        %2165 = vdwg.mxu0
        %2166 = vmatprep.subr.mxu0 %v1702
        %2167 = vmatpush1.msra.mxu0 %v1700
        %2168 = vmatprep.subr.mxu0 0.0
        %2169 = vmatpush1.msra.mxu0 0.0
        %2170 = vmatprep.subr.mxu0 0.0
        %2171 = vmatpush1.msra.mxu0 0.0
        %2172 = vmatprep.subr.mxu0 0.0
        %2173 = vmatpush1.msra.mxu0 0.0
        %2174 = vmatprep.subr.mxu0 0.0
        %2175 = vmatpush1.msra.mxu0 0.0
        %2176 = vmatprep.subr.mxu0 0.0
        %2177 = vmatpush1.msra.mxu0 0.0
        %2178 = vmatprep.subr.mxu0 0.0
        %2179 = vmatpush1.msra.mxu0 0.0
        %2180 = vmatprep.subr.mxu0 0.0
        %2181 = vmatpush1.msra.mxu0 0.0
        %2182 = vmatprep.subr.mxu0 0.0
        %2183 = vmatpush1.msra.mxu0 0.0
        %2184 = vmatprep.subr.mxu0 0.0
        %2185 = vmatpush1.msra.mxu0 0.0
        %2186 = vmatprep.subr.mxu0 0.0
        %2187 = vmatpush1.msra.mxu0 0.0
        %2188 = vmatprep.subr.mxu0 0.0
        %2189 = vmatpush1.msra.mxu0 0.0
        %2190 = vmatprep.subr.mxu0 0.0
        %2191 = vmatpush1.msra.mxu0 0.0
        %2192 = vmatprep.subr.mxu0 0.0
        %2193 = vmatpush1.msra.mxu0 0.0
        %2194 = vmatprep.subr.mxu0 0.0
        %2195 = vmatpush1.msra.mxu0 0.0
        %2196 = vmatprep.subr.mxu0 0.0
        %2197 = vmatpush1.msra.mxu0 0.0
        %2198 = vmatprep.subr.mxu0 0.0
        %2199 = vmatpush1.msra.mxu0 0.0
        %2200 = vmatprep.subr.mxu0 0.0
        %2201 = vmatpush1.msra.mxu0 0.0
        %2202 = vmatprep.subr.mxu0 0.0
        %2203 = vmatpush1.msra.mxu0 0.0
        %2204 = vmatprep.subr.mxu0 0.0
        %2205 = vmatpush1.msra.mxu0 0.0
        %2206 = vmatprep.subr.mxu0 0.0
        %2207 = vmatpush1.msra.mxu0 0.0
        %2208 = vmatprep.subr.mxu0 0.0
        %2209 = vmatpush1.msra.mxu0 0.0
        %2210 = vmatprep.subr.mxu0 0.0
        %2211 = vmatpush1.msra.mxu0 0.0
        %2212 = vmatprep.subr.mxu0 0.0
        %2213 = vmatpush1.msra.mxu0 0.0
        %2214 = vmatprep.subr.mxu0 0.0
        %2215 = vmatpush1.msra.mxu0 0.0
        %2216 = vmatprep.subr.mxu0 0.0
        %2217 = vmatpush1.msra.mxu0 0.0
        %2218 = vmatprep.subr.mxu0 0.0
        %2219 = vmatpush1.msra.mxu0 0.0
        %2220 = vmatprep.subr.mxu0 0.0
        %2221 = vmatpush1.msra.mxu0 0.0
        %2222 = vmatprep.subr.mxu0 0.0
        %2223 = vmatpush1.msra.mxu0 0.0
        %2224 = vmatprep.subr.mxu0 0.0
        %2225 = vmatpush1.msra.mxu0 0.0
        %2226 = vmatprep.subr.mxu0 0.0
        %2227 = vmatpush1.msra.mxu0 0.0
        %2228 = vmatprep.subr.mxu0 0.0
        %2229 = vmatpush1.msra.mxu0 0.0
        %2230 = vmatprep.mubr.f32.mxu0 0.0
        %2231 = vmatmul.mubr.f32.gmra.mrb[0].mxu0 %v1674
        %v2232 = vpop.f32.mrb[0].mxu0
        %v2233 = vadd.f32 0.0, %v2232
        %v2234 = vpop.f32.mrb[0].mxu0
        %v2235 = vadd.f32 0.0, %v2234
        %2236 = vdwg.mxu0
        %2237 = vmatprep.subr.mxu0 %v1706
        %2238 = vmatpush1.msra.mxu0 %v1704
        %2239 = vmatprep.subr.mxu0 0.0
        %2240 = vmatpush1.msra.mxu0 0.0
        %2241 = vmatprep.subr.mxu0 0.0
        %2242 = vmatpush1.msra.mxu0 0.0
        %2243 = vmatprep.subr.mxu0 0.0
        %2244 = vmatpush1.msra.mxu0 0.0
        %2245 = vmatprep.subr.mxu0 0.0
        %2246 = vmatpush1.msra.mxu0 0.0
        %2247 = vmatprep.subr.mxu0 0.0
        %2248 = vmatpush1.msra.mxu0 0.0
        %2249 = vmatprep.subr.mxu0 0.0
        %2250 = vmatpush1.msra.mxu0 0.0
        %2251 = vmatprep.subr.mxu0 0.0
        %2252 = vmatpush1.msra.mxu0 0.0
        %2253 = vmatprep.subr.mxu0 0.0
        %2254 = vmatpush1.msra.mxu0 0.0
        %2255 = vmatprep.subr.mxu0 0.0
        %2256 = vmatpush1.msra.mxu0 0.0
        %2257 = vmatprep.subr.mxu0 0.0
        %2258 = vmatpush1.msra.mxu0 0.0
        %2259 = vmatprep.subr.mxu0 0.0
        %2260 = vmatpush1.msra.mxu0 0.0
        %2261 = vmatprep.subr.mxu0 0.0
        %2262 = vmatpush1.msra.mxu0 0.0
        %2263 = vmatprep.subr.mxu0 0.0
        %2264 = vmatpush1.msra.mxu0 0.0
        %2265 = vmatprep.subr.mxu0 0.0
        %2266 = vmatpush1.msra.mxu0 0.0
        %2267 = vmatprep.subr.mxu0 0.0
        %2268 = vmatpush1.msra.mxu0 0.0
        %2269 = vmatprep.subr.mxu0 0.0
        %2270 = vmatpush1.msra.mxu0 0.0
        %2271 = vmatprep.subr.mxu0 0.0
        %2272 = vmatpush1.msra.mxu0 0.0
        %2273 = vmatprep.subr.mxu0 0.0
        %2274 = vmatpush1.msra.mxu0 0.0
        %2275 = vmatprep.subr.mxu0 0.0
        %2276 = vmatpush1.msra.mxu0 0.0
        %2277 = vmatprep.subr.mxu0 0.0
        %2278 = vmatpush1.msra.mxu0 0.0
        %2279 = vmatprep.subr.mxu0 0.0
        %2280 = vmatpush1.msra.mxu0 0.0
        %2281 = vmatprep.subr.mxu0 0.0
        %2282 = vmatpush1.msra.mxu0 0.0
        %2283 = vmatprep.subr.mxu0 0.0
        %2284 = vmatpush1.msra.mxu0 0.0
        %2285 = vmatprep.subr.mxu0 0.0
        %2286 = vmatpush1.msra.mxu0 0.0
        %2287 = vmatprep.subr.mxu0 0.0
        %2288 = vmatpush1.msra.mxu0 0.0
        %2289 = vmatprep.subr.mxu0 0.0
        %2290 = vmatpush1.msra.mxu0 0.0
        %2291 = vmatprep.subr.mxu0 0.0
        %2292 = vmatpush1.msra.mxu0 0.0
        %2293 = vmatprep.subr.mxu0 0.0
        %2294 = vmatpush1.msra.mxu0 0.0
        %2295 = vmatprep.subr.mxu0 0.0
        %2296 = vmatpush1.msra.mxu0 0.0
        %2297 = vmatprep.subr.mxu0 0.0
        %2298 = vmatpush1.msra.mxu0 0.0
        %2299 = vmatprep.subr.mxu0 0.0
        %2300 = vmatpush1.msra.mxu0 0.0
        %2301 = vmatprep.mubr.f32.mxu0 0.0
        %2302 = vmatmul.mubr.f32.gmra.mrb[0].mxu0 %v1674
        %v2303 = vpop.f32.mrb[0].mxu0
        %v2304 = vadd.f32 0.0, %v2303
        %v2305 = vpop.f32.mrb[0].mxu0
        %v2306 = vadd.f32 0.0, %v2305
        %2307 = vdwg.mxu0
        %2308 = vmatprep.subr.mxu0 %v1710
        %2309 = vmatpush1.msra.mxu0 %v1708
        %2310 = vmatprep.subr.mxu0 0.0
        %2311 = vmatpush1.msra.mxu0 0.0
        %2312 = vmatprep.subr.mxu0 0.0
        %2313 = vmatpush1.msra.mxu0 0.0
        %2314 = vmatprep.subr.mxu0 0.0
        %2315 = vmatpush1.msra.mxu0 0.0
        %2316 = vmatprep.subr.mxu0 0.0
        %2317 = vmatpush1.msra.mxu0 0.0
        %2318 = vmatprep.subr.mxu0 0.0
        %2319 = vmatpush1.msra.mxu0 0.0
        %2320 = vmatprep.subr.mxu0 0.0
        %2321 = vmatpush1.msra.mxu0 0.0
        %2322 = vmatprep.subr.mxu0 0.0
        %2323 = vmatpush1.msra.mxu0 0.0
        %2324 = vmatprep.subr.mxu0 0.0
        %2325 = vmatpush1.msra.mxu0 0.0
        %2326 = vmatprep.subr.mxu0 0.0
        %2327 = vmatpush1.msra.mxu0 0.0
        %2328 = vmatprep.subr.mxu0 0.0
        %2329 = vmatpush1.msra.mxu0 0.0
        %2330 = vmatprep.subr.mxu0 0.0
        %2331 = vmatpush1.msra.mxu0 0.0
        %2332 = vmatprep.subr.mxu0 0.0
        %2333 = vmatpush1.msra.mxu0 0.0
        %2334 = vmatprep.subr.mxu0 0.0
        %2335 = vmatpush1.msra.mxu0 0.0
        %2336 = vmatprep.subr.mxu0 0.0
        %2337 = vmatpush1.msra.mxu0 0.0
        %2338 = vmatprep.subr.mxu0 0.0
        %2339 = vmatpush1.msra.mxu0 0.0
        %2340 = vmatprep.subr.mxu0 0.0
        %2341 = vmatpush1.msra.mxu0 0.0
        %2342 = vmatprep.subr.mxu0 0.0
        %2343 = vmatpush1.msra.mxu0 0.0
        %2344 = vmatprep.subr.mxu0 0.0
        %2345 = vmatpush1.msra.mxu0 0.0
        %2346 = vmatprep.subr.mxu0 0.0
        %2347 = vmatpush1.msra.mxu0 0.0
        %2348 = vmatprep.subr.mxu0 0.0
        %2349 = vmatpush1.msra.mxu0 0.0
        %2350 = vmatprep.subr.mxu0 0.0
        %2351 = vmatpush1.msra.mxu0 0.0
        %2352 = vmatprep.subr.mxu0 0.0
        %2353 = vmatpush1.msra.mxu0 0.0
        %2354 = vmatprep.subr.mxu0 0.0
        %2355 = vmatpush1.msra.mxu0 0.0
        %2356 = vmatprep.subr.mxu0 0.0
        %2357 = vmatpush1.msra.mxu0 0.0
        %2358 = vmatprep.subr.mxu0 0.0
        %2359 = vmatpush1.msra.mxu0 0.0
        %2360 = vmatprep.subr.mxu0 0.0
        %2361 = vmatpush1.msra.mxu0 0.0
        %2362 = vmatprep.subr.mxu0 0.0
        %2363 = vmatpush1.msra.mxu0 0.0
        %2364 = vmatprep.subr.mxu0 0.0
        %2365 = vmatpush1.msra.mxu0 0.0
        %2366 = vmatprep.subr.mxu0 0.0
        %2367 = vmatpush1.msra.mxu0 0.0
        %2368 = vmatprep.subr.mxu0 0.0
        %2369 = vmatpush1.msra.mxu0 0.0
        %2370 = vmatprep.subr.mxu0 0.0
        %2371 = vmatpush1.msra.mxu0 0.0
        %2372 = vmatprep.mubr.f32.mxu0 0.0
        %2373 = vmatmul.mubr.f32.gmra.mrb[0].mxu0 %v1674
        %v2374 = vpop.f32.mrb[0].mxu0
        %v2375 = vadd.f32 0.0, %v2374
        %v2376 = vpop.f32.mrb[0].mxu0
        %v2377 = vadd.f32 0.0, %v2376
        %2378 = vdwg.mxu0
        %2379 = vmatprep.subr.mxu0 %v1714
        %2380 = vmatpush1.msra.mxu0 %v1712
        %2381 = vmatprep.subr.mxu0 0.0
        %2382 = vmatpush1.msra.mxu0 0.0
        %2383 = vmatprep.subr.mxu0 0.0
        %2384 = vmatpush1.msra.mxu0 0.0
        %2385 = vmatprep.subr.mxu0 0.0
        %2386 = vmatpush1.msra.mxu0 0.0
        %2387 = vmatprep.subr.mxu0 0.0
        %2388 = vmatpush1.msra.mxu0 0.0
        %2389 = vmatprep.subr.mxu0 0.0
        %2390 = vmatpush1.msra.mxu0 0.0
        %2391 = vmatprep.subr.mxu0 0.0
        %2392 = vmatpush1.msra.mxu0 0.0
        %2393 = vmatprep.subr.mxu0 0.0
        %2394 = vmatpush1.msra.mxu0 0.0
        %2395 = vmatprep.subr.mxu0 0.0
        %2396 = vmatpush1.msra.mxu0 0.0
        %2397 = vmatprep.subr.mxu0 0.0
        %2398 = vmatpush1.msra.mxu0 0.0
        %2399 = vmatprep.subr.mxu0 0.0
        %2400 = vmatpush1.msra.mxu0 0.0
        %2401 = vmatprep.subr.mxu0 0.0
        %2402 = vmatpush1.msra.mxu0 0.0
        %2403 = vmatprep.subr.mxu0 0.0
        %2404 = vmatpush1.msra.mxu0 0.0
        %2405 = vmatprep.subr.mxu0 0.0
        %2406 = vmatpush1.msra.mxu0 0.0
        %2407 = vmatprep.subr.mxu0 0.0
        %2408 = vmatpush1.msra.mxu0 0.0
        %2409 = vmatprep.subr.mxu0 0.0
        %2410 = vmatpush1.msra.mxu0 0.0
        %2411 = vmatprep.subr.mxu0 0.0
        %2412 = vmatpush1.msra.mxu0 0.0
        %2413 = vmatprep.subr.mxu0 0.0
        %2414 = vmatpush1.msra.mxu0 0.0
        %2415 = vmatprep.subr.mxu0 0.0
        %2416 = vmatpush1.msra.mxu0 0.0
        %2417 = vmatprep.subr.mxu0 0.0
        %2418 = vmatpush1.msra.mxu0 0.0
        %2419 = vmatprep.subr.mxu0 0.0
        %2420 = vmatpush1.msra.mxu0 0.0
        %2421 = vmatprep.subr.mxu0 0.0
        %2422 = vmatpush1.msra.mxu0 0.0
        %2423 = vmatprep.subr.mxu0 0.0
        %2424 = vmatpush1.msra.mxu0 0.0
        %2425 = vmatprep.subr.mxu0 0.0
        %2426 = vmatpush1.msra.mxu0 0.0
        %2427 = vmatprep.subr.mxu0 0.0
        %2428 = vmatpush1.msra.mxu0 0.0
        %2429 = vmatprep.subr.mxu0 0.0
        %2430 = vmatpush1.msra.mxu0 0.0
        %2431 = vmatprep.subr.mxu0 0.0
        %2432 = vmatpush1.msra.mxu0 0.0
        %2433 = vmatprep.subr.mxu0 0.0
        %2434 = vmatpush1.msra.mxu0 0.0
        %2435 = vmatprep.subr.mxu0 0.0
        %2436 = vmatpush1.msra.mxu0 0.0
        %2437 = vmatprep.subr.mxu0 0.0
        %2438 = vmatpush1.msra.mxu0 0.0
        %2439 = vmatprep.subr.mxu0 0.0
        %2440 = vmatpush1.msra.mxu0 0.0
        %2441 = vmatprep.subr.mxu0 0.0
        %2442 = vmatpush1.msra.mxu0 0.0
        %2443 = vmatprep.mubr.f32.mxu0 0.0
        %2444 = vmatmul.mubr.f32.gmra.mrb[0].mxu0 %v1674
        %v2445 = vpop.f32.mrb[0].mxu0
        %v2446 = vadd.f32 0.0, %v2445
        %v2447 = vpop.f32.mrb[0].mxu0
        %v2448 = vadd.f32 0.0, %v2447
        %2449 = vdwg.mxu0
        %2450 = vmatprep.subr.mxu0 %v1718
        %2451 = vmatpush1.msra.mxu0 %v1716
        %2452 = vmatprep.subr.mxu0 0.0
        %2453 = vmatpush1.msra.mxu0 0.0
        %2454 = vmatprep.subr.mxu0 0.0
        %2455 = vmatpush1.msra.mxu0 0.0
        %2456 = vmatprep.subr.mxu0 0.0
        %2457 = vmatpush1.msra.mxu0 0.0
        %2458 = vmatprep.subr.mxu0 0.0
        %2459 = vmatpush1.msra.mxu0 0.0
        %2460 = vmatprep.subr.mxu0 0.0
        %2461 = vmatpush1.msra.mxu0 0.0
        %2462 = vmatprep.subr.mxu0 0.0
        %2463 = vmatpush1.msra.mxu0 0.0
        %2464 = vmatprep.subr.mxu0 0.0
        %2465 = vmatpush1.msra.mxu0 0.0
        %2466 = vmatprep.subr.mxu0 0.0
        %2467 = vmatpush1.msra.mxu0 0.0
        %2468 = vmatprep.subr.mxu0 0.0
        %2469 = vmatpush1.msra.mxu0 0.0
        %2470 = vmatprep.subr.mxu0 0.0
        %2471 = vmatpush1.msra.mxu0 0.0
        %2472 = vmatprep.subr.mxu0 0.0
        %2473 = vmatpush1.msra.mxu0 0.0
        %2474 = vmatprep.subr.mxu0 0.0
        %2475 = vmatpush1.msra.mxu0 0.0
        %2476 = vmatprep.subr.mxu0 0.0
        %2477 = vmatpush1.msra.mxu0 0.0
        %2478 = vmatprep.subr.mxu0 0.0
        %2479 = vmatpush1.msra.mxu0 0.0
        %2480 = vmatprep.subr.mxu0 0.0
        %2481 = vmatpush1.msra.mxu0 0.0
        %2482 = vmatprep.subr.mxu0 0.0
        %2483 = vmatpush1.msra.mxu0 0.0
        %2484 = vmatprep.subr.mxu0 0.0
        %2485 = vmatpush1.msra.mxu0 0.0
        %2486 = vmatprep.subr.mxu0 0.0
        %2487 = vmatpush1.msra.mxu0 0.0
        %2488 = vmatprep.subr.mxu0 0.0
        %2489 = vmatpush1.msra.mxu0 0.0
        %2490 = vmatprep.subr.mxu0 0.0
        %2491 = vmatpush1.msra.mxu0 0.0
        %2492 = vmatprep.subr.mxu0 0.0
        %2493 = vmatpush1.msra.mxu0 0.0
        %2494 = vmatprep.subr.mxu0 0.0
        %2495 = vmatpush1.msra.mxu0 0.0
        %2496 = vmatprep.subr.mxu0 0.0
        %2497 = vmatpush1.msra.mxu0 0.0
        %2498 = vmatprep.subr.mxu0 0.0
        %2499 = vmatpush1.msra.mxu0 0.0
        %2500 = vmatprep.subr.mxu0 0.0
        %2501 = vmatpush1.msra.mxu0 0.0
        %2502 = vmatprep.subr.mxu0 0.0
        %2503 = vmatpush1.msra.mxu0 0.0
        %2504 = vmatprep.subr.mxu0 0.0
        %2505 = vmatpush1.msra.mxu0 0.0
        %2506 = vmatprep.subr.mxu0 0.0
        %2507 = vmatpush1.msra.mxu0 0.0
        %2508 = vmatprep.subr.mxu0 0.0
        %2509 = vmatpush1.msra.mxu0 0.0
        %2510 = vmatprep.subr.mxu0 0.0
        %2511 = vmatpush1.msra.mxu0 0.0
        %2512 = vmatprep.subr.mxu0 0.0
        %2513 = vmatpush1.msra.mxu0 0.0
        %2514 = vmatprep.mubr.f32.mxu0 0.0
        %2515 = vmatmul.mubr.f32.gmra.mrb[0].mxu0 %v1674
        %v2516 = vpop.f32.mrb[0].mxu0
        %v2517 = vadd.f32 0.0, %v2516
        %v2518 = vpop.f32.mrb[0].mxu0
        %v2519 = vadd.f32 0.0, %v2518
        %2520 = vdwg.mxu0
        %2521 = vmatprep.subr.mxu0 %v1722
        %2522 = vmatpush1.msra.mxu0 %v1720
        %2523 = vmatprep.subr.mxu0 0.0
        %2524 = vmatpush1.msra.mxu0 0.0
        %2525 = vmatprep.subr.mxu0 0.0
        %2526 = vmatpush1.msra.mxu0 0.0
        %2527 = vmatprep.subr.mxu0 0.0
        %2528 = vmatpush1.msra.mxu0 0.0
        %2529 = vmatprep.subr.mxu0 0.0
        %2530 = vmatpush1.msra.mxu0 0.0
        %2531 = vmatprep.subr.mxu0 0.0
        %2532 = vmatpush1.msra.mxu0 0.0
        %2533 = vmatprep.subr.mxu0 0.0
        %2534 = vmatpush1.msra.mxu0 0.0
        %2535 = vmatprep.subr.mxu0 0.0
        %2536 = vmatpush1.msra.mxu0 0.0
        %2537 = vmatprep.subr.mxu0 0.0
        %2538 = vmatpush1.msra.mxu0 0.0
        %2539 = vmatprep.subr.mxu0 0.0
        %2540 = vmatpush1.msra.mxu0 0.0
        %2541 = vmatprep.subr.mxu0 0.0
        %2542 = vmatpush1.msra.mxu0 0.0
        %2543 = vmatprep.subr.mxu0 0.0
        %2544 = vmatpush1.msra.mxu0 0.0
        %2545 = vmatprep.subr.mxu0 0.0
        %2546 = vmatpush1.msra.mxu0 0.0
        %2547 = vmatprep.subr.mxu0 0.0
        %2548 = vmatpush1.msra.mxu0 0.0
        %2549 = vmatprep.subr.mxu0 0.0
        %2550 = vmatpush1.msra.mxu0 0.0
        %2551 = vmatprep.subr.mxu0 0.0
        %2552 = vmatpush1.msra.mxu0 0.0
        %2553 = vmatprep.subr.mxu0 0.0
        %2554 = vmatpush1.msra.mxu0 0.0
        %2555 = vmatprep.subr.mxu0 0.0
        %2556 = vmatpush1.msra.mxu0 0.0
        %2557 = vmatprep.subr.mxu0 0.0
        %2558 = vmatpush1.msra.mxu0 0.0
        %2559 = vmatprep.subr.mxu0 0.0
        %2560 = vmatpush1.msra.mxu0 0.0
        %2561 = vmatprep.subr.mxu0 0.0
        %2562 = vmatpush1.msra.mxu0 0.0
        %2563 = vmatprep.subr.mxu0 0.0
        %2564 = vmatpush1.msra.mxu0 0.0
        %2565 = vmatprep.subr.mxu0 0.0
        %2566 = vmatpush1.msra.mxu0 0.0
        %2567 = vmatprep.subr.mxu0 0.0
        %2568 = vmatpush1.msra.mxu0 0.0
        %2569 = vmatprep.subr.mxu0 0.0
        %2570 = vmatpush1.msra.mxu0 0.0
        %2571 = vmatprep.subr.mxu0 0.0
        %2572 = vmatpush1.msra.mxu0 0.0
        %2573 = vmatprep.subr.mxu0 0.0
        %2574 = vmatpush1.msra.mxu0 0.0
        %2575 = vmatprep.subr.mxu0 0.0
        %2576 = vmatpush1.msra.mxu0 0.0
        %2577 = vmatprep.subr.mxu0 0.0
        %2578 = vmatpush1.msra.mxu0 0.0
        %2579 = vmatprep.subr.mxu0 0.0
        %2580 = vmatpush1.msra.mxu0 0.0
        %2581 = vmatprep.subr.mxu0 0.0
        %2582 = vmatpush1.msra.mxu0 0.0
        %2583 = vmatprep.subr.mxu0 0.0
        %2584 = vmatpush1.msra.mxu0 0.0
        %2585 = vmatprep.mubr.f32.mxu0 0.0
        %2586 = vmatmul.mubr.f32.gmra.mrb[0].mxu0 %v1674
        %v2587 = vpop.f32.mrb[0].mxu0
        %v2588 = vadd.f32 0.0, %v2587
        %v2589 = vpop.f32.mrb[0].mxu0
        %v2590 = vadd.f32 0.0, %v2589
        %2591 = vdwg.mxu0
        %2592 = vmatprep.subr.mxu0 %v1726
        %2593 = vmatpush1.msra.mxu0 %v1724
        %2594 = vmatprep.subr.mxu0 0.0
        %2595 = vmatpush1.msra.mxu0 0.0
        %2596 = vmatprep.subr.mxu0 0.0
        %2597 = vmatpush1.msra.mxu0 0.0
        %2598 = vmatprep.subr.mxu0 0.0
        %2599 = vmatpush1.msra.mxu0 0.0
        %2600 = vmatprep.subr.mxu0 0.0
        %2601 = vmatpush1.msra.mxu0 0.0
        %2602 = vmatprep.subr.mxu0 0.0
        %2603 = vmatpush1.msra.mxu0 0.0
        %2604 = vmatprep.subr.mxu0 0.0
        %2605 = vmatpush1.msra.mxu0 0.0
        %2606 = vmatprep.subr.mxu0 0.0
        %2607 = vmatpush1.msra.mxu0 0.0
        %2608 = vmatprep.subr.mxu0 0.0
        %2609 = vmatpush1.msra.mxu0 0.0
        %2610 = vmatprep.subr.mxu0 0.0
        %2611 = vmatpush1.msra.mxu0 0.0
        %2612 = vmatprep.subr.mxu0 0.0
        %2613 = vmatpush1.msra.mxu0 0.0
        %2614 = vmatprep.subr.mxu0 0.0
        %2615 = vmatpush1.msra.mxu0 0.0
        %2616 = vmatprep.subr.mxu0 0.0
        %2617 = vmatpush1.msra.mxu0 0.0
        %2618 = vmatprep.subr.mxu0 0.0
        %2619 = vmatpush1.msra.mxu0 0.0
        %2620 = vmatprep.subr.mxu0 0.0
        %2621 = vmatpush1.msra.mxu0 0.0
        %2622 = vmatprep.subr.mxu0 0.0
        %2623 = vmatpush1.msra.mxu0 0.0
        %2624 = vmatprep.subr.mxu0 0.0
        %2625 = vmatpush1.msra.mxu0 0.0
        %2626 = vmatprep.subr.mxu0 0.0
        %2627 = vmatpush1.msra.mxu0 0.0
        %2628 = vmatprep.subr.mxu0 0.0
        %2629 = vmatpush1.msra.mxu0 0.0
        %2630 = vmatprep.subr.mxu0 0.0
        %2631 = vmatpush1.msra.mxu0 0.0
        %2632 = vmatprep.subr.mxu0 0.0
        %2633 = vmatpush1.msra.mxu0 0.0
        %2634 = vmatprep.subr.mxu0 0.0
        %2635 = vmatpush1.msra.mxu0 0.0
        %2636 = vmatprep.subr.mxu0 0.0
        %2637 = vmatpush1.msra.mxu0 0.0
        %2638 = vmatprep.subr.mxu0 0.0
        %2639 = vmatpush1.msra.mxu0 0.0
        %2640 = vmatprep.subr.mxu0 0.0
        %2641 = vmatpush1.msra.mxu0 0.0
        %2642 = vmatprep.subr.mxu0 0.0
        %2643 = vmatpush1.msra.mxu0 0.0
        %2644 = vmatprep.subr.mxu0 0.0
        %2645 = vmatpush1.msra.mxu0 0.0
        %2646 = vmatprep.subr.mxu0 0.0
        %2647 = vmatpush1.msra.mxu0 0.0
        %2648 = vmatprep.subr.mxu0 0.0
        %2649 = vmatpush1.msra.mxu0 0.0
        %2650 = vmatprep.subr.mxu0 0.0
        %2651 = vmatpush1.msra.mxu0 0.0
        %2652 = vmatprep.subr.mxu0 0.0
        %2653 = vmatpush1.msra.mxu0 0.0
        %2654 = vmatprep.subr.mxu0 0.0
        %2655 = vmatpush1.msra.mxu0 0.0
        %2656 = vmatprep.mubr.f32.mxu0 0.0
        %2657 = vmatmul.mubr.f32.gmra.mrb[0].mxu0 %v1674
        %v2658 = vpop.f32.mrb[0].mxu0
        %v2659 = vadd.f32 0.0, %v2658
        %v2660 = vpop.f32.mrb[0].mxu0
        %v2661 = vadd.f32 0.0, %v2660
        %2662 = vdwg.mxu0
        %2663 = vmatprep.subr.mxu0 %v1730
        %2664 = vmatpush1.msra.mxu0 %v1728
        %2665 = vmatprep.subr.mxu0 0.0
        %2666 = vmatpush1.msra.mxu0 0.0
        %2667 = vmatprep.subr.mxu0 0.0
        %2668 = vmatpush1.msra.mxu0 0.0
        %2669 = vmatprep.subr.mxu0 0.0
        %2670 = vmatpush1.msra.mxu0 0.0
        %2671 = vmatprep.subr.mxu0 0.0
        %2672 = vmatpush1.msra.mxu0 0.0
        %2673 = vmatprep.subr.mxu0 0.0
        %2674 = vmatpush1.msra.mxu0 0.0
        %2675 = vmatprep.subr.mxu0 0.0
        %2676 = vmatpush1.msra.mxu0 0.0
        %2677 = vmatprep.subr.mxu0 0.0
        %2678 = vmatpush1.msra.mxu0 0.0
        %2679 = vmatprep.subr.mxu0 0.0
        %2680 = vmatpush1.msra.mxu0 0.0
        %2681 = vmatprep.subr.mxu0 0.0
        %2682 = vmatpush1.msra.mxu0 0.0
        %2683 = vmatprep.subr.mxu0 0.0
        %2684 = vmatpush1.msra.mxu0 0.0
        %2685 = vmatprep.subr.mxu0 0.0
        %2686 = vmatpush1.msra.mxu0 0.0
        %2687 = vmatprep.subr.mxu0 0.0
        %2688 = vmatpush1.msra.mxu0 0.0
        %2689 = vmatprep.subr.mxu0 0.0
        %2690 = vmatpush1.msra.mxu0 0.0
        %2691 = vmatprep.subr.mxu0 0.0
        %2692 = vmatpush1.msra.mxu0 0.0
        %2693 = vmatprep.subr.mxu0 0.0
        %2694 = vmatpush1.msra.mxu0 0.0
        %2695 = vmatprep.subr.mxu0 0.0
        %2696 = vmatpush1.msra.mxu0 0.0
        %2697 = vmatprep.subr.mxu0 0.0
        %2698 = vmatpush1.msra.mxu0 0.0
        %2699 = vmatprep.subr.mxu0 0.0
        %2700 = vmatpush1.msra.mxu0 0.0
        %2701 = vmatprep.subr.mxu0 0.0
        %2702 = vmatpush1.msra.mxu0 0.0
        %2703 = vmatprep.subr.mxu0 0.0
        %2704 = vmatpush1.msra.mxu0 0.0
        %2705 = vmatprep.subr.mxu0 0.0
        %2706 = vmatpush1.msra.mxu0 0.0
        %2707 = vmatprep.subr.mxu0 0.0
        %2708 = vmatpush1.msra.mxu0 0.0
        %2709 = vmatprep.subr.mxu0 0.0
        %2710 = vmatpush1.msra.mxu0 0.0
        %2711 = vmatprep.subr.mxu0 0.0
        %2712 = vmatpush1.msra.mxu0 0.0
        %2713 = vmatprep.subr.mxu0 0.0
        %2714 = vmatpush1.msra.mxu0 0.0
        %2715 = vmatprep.subr.mxu0 0.0
        %2716 = vmatpush1.msra.mxu0 0.0
        %2717 = vmatprep.subr.mxu0 0.0
        %2718 = vmatpush1.msra.mxu0 0.0
        %2719 = vmatprep.subr.mxu0 0.0
        %2720 = vmatpush1.msra.mxu0 0.0
        %2721 = vmatprep.subr.mxu0 0.0
        %2722 = vmatpush1.msra.mxu0 0.0
        %2723 = vmatprep.subr.mxu0 0.0
        %2724 = vmatpush1.msra.mxu0 0.0
        %2725 = vmatprep.subr.mxu0 0.0
        %2726 = vmatpush1.msra.mxu0 0.0
        %2727 = vmatprep.mubr.f32.mxu0 0.0
        %2728 = vmatmul.mubr.f32.gmra.mrb[0].mxu0 %v1674
        %v2729 = vpop.f32.mrb[0].mxu0
        %v2730 = vadd.f32 0.0, %v2729
        %v2731 = vpop.f32.mrb[0].mxu0
        %v2732 = vadd.f32 0.0, %v2731
        %2733 = vdwg.mxu0
        %2734 = vmatprep.subr.mxu0 %v1734
        %2735 = vmatpush1.msra.mxu0 %v1732
        %2736 = vmatprep.subr.mxu0 0.0
        %2737 = vmatpush1.msra.mxu0 0.0
        %2738 = vmatprep.subr.mxu0 0.0
        %2739 = vmatpush1.msra.mxu0 0.0
        %2740 = vmatprep.subr.mxu0 0.0
        %2741 = vmatpush1.msra.mxu0 0.0
        %2742 = vmatprep.subr.mxu0 0.0
        %2743 = vmatpush1.msra.mxu0 0.0
        %2744 = vmatprep.subr.mxu0 0.0
        %2745 = vmatpush1.msra.mxu0 0.0
        %2746 = vmatprep.subr.mxu0 0.0
        %2747 = vmatpush1.msra.mxu0 0.0
        %2748 = vmatprep.subr.mxu0 0.0
        %2749 = vmatpush1.msra.mxu0 0.0
        %2750 = vmatprep.subr.mxu0 0.0
        %2751 = vmatpush1.msra.mxu0 0.0
        %2752 = vmatprep.subr.mxu0 0.0
        %2753 = vmatpush1.msra.mxu0 0.0
        %2754 = vmatprep.subr.mxu0 0.0
        %2755 = vmatpush1.msra.mxu0 0.0
        %2756 = vmatprep.subr.mxu0 0.0
        %2757 = vmatpush1.msra.mxu0 0.0
        %2758 = vmatprep.subr.mxu0 0.0
        %2759 = vmatpush1.msra.mxu0 0.0
        %2760 = vmatprep.subr.mxu0 0.0
        %2761 = vmatpush1.msra.mxu0 0.0
        %2762 = vmatprep.subr.mxu0 0.0
        %2763 = vmatpush1.msra.mxu0 0.0
        %2764 = vmatprep.subr.mxu0 0.0
        %2765 = vmatpush1.msra.mxu0 0.0
        %2766 = vmatprep.subr.mxu0 0.0
        %2767 = vmatpush1.msra.mxu0 0.0
        %2768 = vmatprep.subr.mxu0 0.0
        %2769 = vmatpush1.msra.mxu0 0.0
        %2770 = vmatprep.subr.mxu0 0.0
        %2771 = vmatpush1.msra.mxu0 0.0
        %2772 = vmatprep.subr.mxu0 0.0
        %2773 = vmatpush1.msra.mxu0 0.0
        %2774 = vmatprep.subr.mxu0 0.0
        %2775 = vmatpush1.msra.mxu0 0.0
        %2776 = vmatprep.subr.mxu0 0.0
        %2777 = vmatpush1.msra.mxu0 0.0
        %2778 = vmatprep.subr.mxu0 0.0
        %2779 = vmatpush1.msra.mxu0 0.0
        %2780 = vmatprep.subr.mxu0 0.0
        %2781 = vmatpush1.msra.mxu0 0.0
        %2782 = vmatprep.subr.mxu0 0.0
        %2783 = vmatpush1.msra.mxu0 0.0
        %2784 = vmatprep.subr.mxu0 0.0
        %2785 = vmatpush1.msra.mxu0 0.0
        %2786 = vmatprep.subr.mxu0 0.0
        %2787 = vmatpush1.msra.mxu0 0.0
        %2788 = vmatprep.subr.mxu0 0.0
        %2789 = vmatpush1.msra.mxu0 0.0
        %2790 = vmatprep.subr.mxu0 0.0
        %2791 = vmatpush1.msra.mxu0 0.0
        %2792 = vmatprep.subr.mxu0 0.0
        %2793 = vmatpush1.msra.mxu0 0.0
        %2794 = vmatprep.subr.mxu0 0.0
        %2795 = vmatpush1.msra.mxu0 0.0
        %2796 = vmatprep.subr.mxu0 0.0
        %2797 = vmatpush1.msra.mxu0 0.0
        %2798 = vmatprep.mubr.f32.mxu0 0.0
        %2799 = vmatmul.mubr.f32.gmra.mrb[0].mxu0 %v1674
        %v2800 = vpop.f32.mrb[0].mxu0
        %v2801 = vadd.f32 0.0, %v2800
        %v2802 = vpop.f32.mrb[0].mxu0
        %v2803 = vadd.f32 0.0, %v2802
        %2804 = vdwg.mxu0
        %2805 = vmatprep.subr.mxu0 %v1738
        %2806 = vmatpush1.msra.mxu0 %v1736
        %2807 = vmatprep.subr.mxu0 0.0
        %2808 = vmatpush1.msra.mxu0 0.0
        %2809 = vmatprep.subr.mxu0 0.0
        %2810 = vmatpush1.msra.mxu0 0.0
        %2811 = vmatprep.subr.mxu0 0.0
        %2812 = vmatpush1.msra.mxu0 0.0
        %2813 = vmatprep.subr.mxu0 0.0
        %2814 = vmatpush1.msra.mxu0 0.0
        %2815 = vmatprep.subr.mxu0 0.0
        %2816 = vmatpush1.msra.mxu0 0.0
        %2817 = vmatprep.subr.mxu0 0.0
        %2818 = vmatpush1.msra.mxu0 0.0
        %2819 = vmatprep.subr.mxu0 0.0
        %2820 = vmatpush1.msra.mxu0 0.0
        %2821 = vmatprep.subr.mxu0 0.0
        %2822 = vmatpush1.msra.mxu0 0.0
        %2823 = vmatprep.subr.mxu0 0.0
        %2824 = vmatpush1.msra.mxu0 0.0
        %2825 = vmatprep.subr.mxu0 0.0
        %2826 = vmatpush1.msra.mxu0 0.0
        %2827 = vmatprep.subr.mxu0 0.0
        %2828 = vmatpush1.msra.mxu0 0.0
        %2829 = vmatprep.subr.mxu0 0.0
        %2830 = vmatpush1.msra.mxu0 0.0
        %2831 = vmatprep.subr.mxu0 0.0
        %2832 = vmatpush1.msra.mxu0 0.0
        %2833 = vmatprep.subr.mxu0 0.0
        %2834 = vmatpush1.msra.mxu0 0.0
        %2835 = vmatprep.subr.mxu0 0.0
        %2836 = vmatpush1.msra.mxu0 0.0
        %2837 = vmatprep.subr.mxu0 0.0
        %2838 = vmatpush1.msra.mxu0 0.0
        %2839 = vmatprep.subr.mxu0 0.0
        %2840 = vmatpush1.msra.mxu0 0.0
        %2841 = vmatprep.subr.mxu0 0.0
        %2842 = vmatpush1.msra.mxu0 0.0
        %2843 = vmatprep.subr.mxu0 0.0
        %2844 = vmatpush1.msra.mxu0 0.0
        %2845 = vmatprep.subr.mxu0 0.0
        %2846 = vmatpush1.msra.mxu0 0.0
        %2847 = vmatprep.subr.mxu0 0.0
        %2848 = vmatpush1.msra.mxu0 0.0
        %2849 = vmatprep.subr.mxu0 0.0
        %2850 = vmatpush1.msra.mxu0 0.0
        %2851 = vmatprep.subr.mxu0 0.0
        %2852 = vmatpush1.msra.mxu0 0.0
        %2853 = vmatprep.subr.mxu0 0.0
        %2854 = vmatpush1.msra.mxu0 0.0
        %2855 = vmatprep.subr.mxu0 0.0
        %2856 = vmatpush1.msra.mxu0 0.0
        %2857 = vmatprep.subr.mxu0 0.0
        %2858 = vmatpush1.msra.mxu0 0.0
        %2859 = vmatprep.subr.mxu0 0.0
        %2860 = vmatpush1.msra.mxu0 0.0
        %2861 = vmatprep.subr.mxu0 0.0
        %2862 = vmatpush1.msra.mxu0 0.0
        %2863 = vmatprep.subr.mxu0 0.0
        %2864 = vmatpush1.msra.mxu0 0.0
        %2865 = vmatprep.subr.mxu0 0.0
        %2866 = vmatpush1.msra.mxu0 0.0
        %2867 = vmatprep.subr.mxu0 0.0
        %2868 = vmatpush1.msra.mxu0 0.0
        %2869 = vmatprep.mubr.f32.mxu0 0.0
        %2870 = vmatmul.mubr.f32.gmra.mrb[0].mxu0 %v1674
        %v2871 = vpop.f32.mrb[0].mxu0
        %v2872 = vadd.f32 0.0, %v2871
        %v2873 = vpop.f32.mrb[0].mxu0
        %v2874 = vadd.f32 0.0, %v2873
        %2875 = vdwg.mxu0
        %s2876 = sld [smem:[#allocation8]]
        %s2877 = sld [smem:[#allocation8 + $0x1]]
        %vm2878 = vcmp.lt.f32.partialorder %v1807, 0.0
        %vm2879 = vcmp.lt.f32.partialorder %v1809, 0.0
        %vm2880 = vcmp.lt.f32.partialorder %v1878, 0.0
        %vm2881 = vcmp.lt.f32.partialorder %v1880, 0.0
        %vm2882 = vcmp.lt.f32.partialorder %v1949, 0.0
        %vm2883 = vcmp.lt.f32.partialorder %v1951, 0.0
        %vm2884 = vcmp.lt.f32.partialorder %v2020, 0.0
        %vm2885 = vcmp.lt.f32.partialorder %v2022, 0.0
        %vm2886 = vcmp.lt.f32.partialorder %v2091, 0.0
        %vm2887 = vcmp.lt.f32.partialorder %v2093, 0.0
        %vm2888 = vcmp.lt.f32.partialorder %v2162, 0.0
        %vm2889 = vcmp.lt.f32.partialorder %v2164, 0.0
        %vm2890 = vcmp.lt.f32.partialorder %v2233, 0.0
        %vm2891 = vcmp.lt.f32.partialorder %v2235, 0.0
        %vm2892 = vcmp.lt.f32.partialorder %v2304, 0.0
        %vm2893 = vcmp.lt.f32.partialorder %v2306, 0.0
        %vm2894 = vcmp.lt.f32.partialorder %v2375, 0.0
        %vm2895 = vcmp.lt.f32.partialorder %v2377, 0.0
        %vm2896 = vcmp.lt.f32.partialorder %v2446, 0.0
        %vm2897 = vcmp.lt.f32.partialorder %v2448, 0.0
        %vm2898 = vcmp.lt.f32.partialorder %v2517, 0.0
        %vm2899 = vcmp.lt.f32.partialorder %v2519, 0.0
        %vm2900 = vcmp.lt.f32.partialorder %v2588, 0.0
        %vm2901 = vcmp.lt.f32.partialorder %v2590, 0.0
        %vm2902 = vcmp.lt.f32.partialorder %v2659, 0.0
        %vm2903 = vcmp.lt.f32.partialorder %v2661, 0.0
        %vm2904 = vcmp.lt.f32.partialorder %v2730, 0.0
        %vm2905 = vcmp.lt.f32.partialorder %v2732, 0.0
        %vm2906 = vcmp.lt.f32.partialorder %v2801, 0.0
        %vm2907 = vcmp.lt.f32.partialorder %v2803, 0.0
        %vm2908 = vcmp.lt.f32.partialorder %v2872, 0.0
        %vm2909 = vcmp.lt.f32.partialorder %v2874, 0.0
        %v2910 = vstv %s2876
        %v2911 = vstv %s2877
        %v2912 = vsel %vm2878, %v2910, %v2911
        %v2913 = vsel %vm2879, %v2910, %v2911
        %v2914 = vsel %vm2880, %v2910, %v2911
        %v2915 = vsel %vm2881, %v2910, %v2911
        %v2916 = vsel %vm2882, %v2910, %v2911
        %v2917 = vsel %vm2883, %v2910, %v2911
        %v2918 = vsel %vm2884, %v2910, %v2911
        %v2919 = vsel %vm2885, %v2910, %v2911
        %v2920 = vsel %vm2886, %v2910, %v2911
        %v2921 = vsel %vm2887, %v2910, %v2911
        %v2922 = vsel %vm2888, %v2910, %v2911
        %v2923 = vsel %vm2889, %v2910, %v2911
        %v2924 = vsel %vm2890, %v2910, %v2911
        %v2925 = vsel %vm2891, %v2910, %v2911
        %v2926 = vsel %vm2892, %v2910, %v2911
        %v2927 = vsel %vm2893, %v2910, %v2911
        %v2928 = vsel %vm2894, %v2910, %v2911
        %v2929 = vsel %vm2895, %v2910, %v2911
        %v2930 = vsel %vm2896, %v2910, %v2911
        %v2931 = vsel %vm2897, %v2910, %v2911
        %v2932 = vsel %vm2898, %v2910, %v2911
        %v2933 = vsel %vm2899, %v2910, %v2911
        %v2934 = vsel %vm2900, %v2910, %v2911
        %v2935 = vsel %vm2901, %v2910, %v2911
        %v2936 = vsel %vm2902, %v2910, %v2911
        %v2937 = vsel %vm2903, %v2910, %v2911
        %v2938 = vsel %vm2904, %v2910, %v2911
        %v2939 = vsel %vm2905, %v2910, %v2911
        %v2940 = vsel %vm2906, %v2910, %v2911
        %v2941 = vsel %vm2907, %v2910, %v2911
        %v2942 = vsel %vm2908, %v2910, %v2911
        %v2943 = vsel %vm2909, %v2910, %v2911
        %v2944 = vmul.f32 %v1807, %v2912
        %v2945 = vmul.f32 %v1809, %v2913
        %v2946 = vmul.f32 %v1878, %v2914
        %v2947 = vmul.f32 %v1880, %v2915
        %v2948 = vmul.f32 %v1949, %v2916
        %v2949 = vmul.f32 %v1951, %v2917
        %v2950 = vmul.f32 %v2020, %v2918
        %v2951 = vmul.f32 %v2022, %v2919
        %v2952 = vmul.f32 %v2091, %v2920
        %v2953 = vmul.f32 %v2093, %v2921
        %v2954 = vmul.f32 %v2162, %v2922
        %v2955 = vmul.f32 %v2164, %v2923
        %v2956 = vmul.f32 %v2233, %v2924
        %v2957 = vmul.f32 %v2235, %v2925
        %v2958 = vmul.f32 %v2304, %v2926
        %v2959 = vmul.f32 %v2306, %v2927
        %v2960 = vmul.f32 %v2375, %v2928
        %v2961 = vmul.f32 %v2377, %v2929
        %v2962 = vmul.f32 %v2446, %v2930
        %v2963 = vmul.f32 %v2448, %v2931
        %v2964 = vmul.f32 %v2517, %v2932
        %v2965 = vmul.f32 %v2519, %v2933
        %v2966 = vmul.f32 %v2588, %v2934
        %v2967 = vmul.f32 %v2590, %v2935
        %v2968 = vmul.f32 %v2659, %v2936
        %v2969 = vmul.f32 %v2661, %v2937
        %v2970 = vmul.f32 %v2730, %v2938
        %v2971 = vmul.f32 %v2732, %v2939
        %v2972 = vmul.f32 %v2801, %v2940
        %v2973 = vmul.f32 %v2803, %v2941
        %v2974 = vmul.f32 %v2872, %v2942
        %v2975 = vmul.f32 %v2874, %v2943
        %v2976 = vld [vmem:[%s5] sm:$0xff]
        %v2977 = vld [vmem:[%s6] sm:$0xff]
        %2979 = vset.pattern.permute.xlu0 0
        %2980 = vperm.xlu0 %2979, %v2977
        %v2981 = vpop.permute.xlu0 %2980
        %v2984 = vsel %vm1672, %v2976, 0
        %v2987 = vsel %vm369, %v2944, 0
        %v2990 = vsel %vm369, %v2945, 0
        %v2993 = vsel %vm369, %v2946, 0
        %v2996 = vsel %vm369, %v2947, 0
        %v2999 = vsel %vm369, %v2948, 0
        %v3002 = vsel %vm369, %v2949, 0
        %v3005 = vsel %vm369, %v2950, 0
        %v3008 = vsel %vm369, %v2951, 0
        %v3011 = vsel %vm369, %v2952, 0
        %v3014 = vsel %vm369, %v2953, 0
        %v3017 = vsel %vm369, %v2954, 0
        %v3020 = vsel %vm369, %v2955, 0
        %v3023 = vsel %vm369, %v2956, 0
        %v3026 = vsel %vm369, %v2957, 0
        %v3029 = vsel %vm369, %v2958, 0
        %v3032 = vsel %vm369, %v2959, 0
        %v3035 = vsel %vm369, %v2960, 0
        %v3038 = vsel %vm369, %v2961, 0
        %v3041 = vsel %vm369, %v2962, 0
        %v3044 = vsel %vm369, %v2963, 0
        %v3047 = vsel %vm369, %v2964, 0
        %v3050 = vsel %vm369, %v2965, 0
        %v3053 = vsel %vm369, %v2966, 0
        %v3056 = vsel %vm369, %v2967, 0
        %v3059 = vsel %vm369, %v2968, 0
        %v3062 = vsel %vm369, %v2969, 0
        %v3065 = vsel %vm369, %v2970, 0
        %v3068 = vsel %vm369, %v2971, 0
        %v3071 = vsel %vm369, %v2972, 0
        %v3074 = vsel %vm369, %v2973, 0
        %v3077 = vsel %vm369, %v2974, 0
        %v3080 = vsel %vm369, %v2975, 0
        %3082 = vmatprep.subr.mxu0 %v2990
        %3083 = vmatpush1.msra.mxu0 %v2987
        %3084 = vmatprep.subr.mxu0 0.0
        %3085 = vmatpush1.msra.mxu0 0.0
        %3086 = vmatprep.subr.mxu0 0.0
        %3087 = vmatpush1.msra.mxu0 0.0
        %3088 = vmatprep.subr.mxu0 0.0
        %3089 = vmatpush1.msra.mxu0 0.0
        %3090 = vmatprep.subr.mxu0 0.0
        %3091 = vmatpush1.msra.mxu0 0.0
        %3092 = vmatprep.subr.mxu0 0.0
        %3093 = vmatpush1.msra.mxu0 0.0
        %3094 = vmatprep.subr.mxu0 0.0
        %3095 = vmatpush1.msra.mxu0 0.0
        %3096 = vmatprep.subr.mxu0 0.0
        %3097 = vmatpush1.msra.mxu0 0.0
        %3098 = vmatprep.subr.mxu0 0.0
        %3099 = vmatpush1.msra.mxu0 0.0
        %3100 = vmatprep.subr.mxu0 0.0
        %3101 = vmatpush1.msra.mxu0 0.0
        %3102 = vmatprep.subr.mxu0 0.0
        %3103 = vmatpush1.msra.mxu0 0.0
        %3104 = vmatprep.subr.mxu0 0.0
        %3105 = vmatpush1.msra.mxu0 0.0
        %3106 = vmatprep.subr.mxu0 0.0
        %3107 = vmatpush1.msra.mxu0 0.0
        %3108 = vmatprep.subr.mxu0 0.0
        %3109 = vmatpush1.msra.mxu0 0.0
        %3110 = vmatprep.subr.mxu0 0.0
        %3111 = vmatpush1.msra.mxu0 0.0
        %3112 = vmatprep.subr.mxu0 0.0
        %3113 = vmatpush1.msra.mxu0 0.0
        %3114 = vmatprep.subr.mxu0 0.0
        %3115 = vmatpush1.msra.mxu0 0.0
        %3116 = vmatprep.subr.mxu0 0.0
        %3117 = vmatpush1.msra.mxu0 0.0
        %3118 = vmatprep.subr.mxu0 0.0
        %3119 = vmatpush1.msra.mxu0 0.0
        %3120 = vmatprep.subr.mxu0 0.0
        %3121 = vmatpush1.msra.mxu0 0.0
        %3122 = vmatprep.subr.mxu0 0.0
        %3123 = vmatpush1.msra.mxu0 0.0
        %3124 = vmatprep.subr.mxu0 0.0
        %3125 = vmatpush1.msra.mxu0 0.0
        %3126 = vmatprep.subr.mxu0 0.0
        %3127 = vmatpush1.msra.mxu0 0.0
        %3128 = vmatprep.subr.mxu0 0.0
        %3129 = vmatpush1.msra.mxu0 0.0
        %3130 = vmatprep.subr.mxu0 0.0
        %3131 = vmatpush1.msra.mxu0 0.0
        %3132 = vmatprep.subr.mxu0 0.0
        %3133 = vmatpush1.msra.mxu0 0.0
        %3134 = vmatprep.subr.mxu0 0.0
        %3135 = vmatpush1.msra.mxu0 0.0
        %3136 = vmatprep.subr.mxu0 0.0
        %3137 = vmatpush1.msra.mxu0 0.0
        %3138 = vmatprep.subr.mxu0 0.0
        %3139 = vmatpush1.msra.mxu0 0.0
        %3140 = vmatprep.subr.mxu0 0.0
        %3141 = vmatpush1.msra.mxu0 0.0
        %3142 = vmatprep.subr.mxu0 0.0
        %3143 = vmatpush1.msra.mxu0 0.0
        %3144 = vmatprep.subr.mxu0 0.0
        %3145 = vmatpush1.msra.mxu0 0.0
        %3146 = vmatprep.mubr.f32.mxu0 0.0
        %3147 = vmatmul.mubr.f32.gmra.mrb[0].mxu0 %v2984
        %v3148 = vpop.f32.mrb[0].mxu0
        %v3149 = vadd.f32 %v2981, %v3148
        %v3150 = vpop.f32.mrb[0].mxu0
        %v3151 = vadd.f32 %v2981, %v3150
        %3152 = vdwg.mxu0
        %3153 = vmatprep.subr.mxu0 %v2996
        %3154 = vmatpush1.msra.mxu0 %v2993
        %3155 = vmatprep.subr.mxu0 0.0
        %3156 = vmatpush1.msra.mxu0 0.0
        %3157 = vmatprep.subr.mxu0 0.0
        %3158 = vmatpush1.msra.mxu0 0.0
        %3159 = vmatprep.subr.mxu0 0.0
        %3160 = vmatpush1.msra.mxu0 0.0
        %3161 = vmatprep.subr.mxu0 0.0
        %3162 = vmatpush1.msra.mxu0 0.0
        %3163 = vmatprep.subr.mxu0 0.0
        %3164 = vmatpush1.msra.mxu0 0.0
        %3165 = vmatprep.subr.mxu0 0.0
        %3166 = vmatpush1.msra.mxu0 0.0
        %3167 = vmatprep.subr.mxu0 0.0
        %3168 = vmatpush1.msra.mxu0 0.0
        %3169 = vmatprep.subr.mxu0 0.0
        %3170 = vmatpush1.msra.mxu0 0.0
        %3171 = vmatprep.subr.mxu0 0.0
        %3172 = vmatpush1.msra.mxu0 0.0
        %3173 = vmatprep.subr.mxu0 0.0
        %3174 = vmatpush1.msra.mxu0 0.0
        %3175 = vmatprep.subr.mxu0 0.0
        %3176 = vmatpush1.msra.mxu0 0.0
        %3177 = vmatprep.subr.mxu0 0.0
        %3178 = vmatpush1.msra.mxu0 0.0
        %3179 = vmatprep.subr.mxu0 0.0
        %3180 = vmatpush1.msra.mxu0 0.0
        %3181 = vmatprep.subr.mxu0 0.0
        %3182 = vmatpush1.msra.mxu0 0.0
        %3183 = vmatprep.subr.mxu0 0.0
        %3184 = vmatpush1.msra.mxu0 0.0
        %3185 = vmatprep.subr.mxu0 0.0
        %3186 = vmatpush1.msra.mxu0 0.0
        %3187 = vmatprep.subr.mxu0 0.0
        %3188 = vmatpush1.msra.mxu0 0.0
        %3189 = vmatprep.subr.mxu0 0.0
        %3190 = vmatpush1.msra.mxu0 0.0
        %3191 = vmatprep.subr.mxu0 0.0
        %3192 = vmatpush1.msra.mxu0 0.0
        %3193 = vmatprep.subr.mxu0 0.0
        %3194 = vmatpush1.msra.mxu0 0.0
        %3195 = vmatprep.subr.mxu0 0.0
        %3196 = vmatpush1.msra.mxu0 0.0
        %3197 = vmatprep.subr.mxu0 0.0
        %3198 = vmatpush1.msra.mxu0 0.0
        %3199 = vmatprep.subr.mxu0 0.0
        %3200 = vmatpush1.msra.mxu0 0.0
        %3201 = vmatprep.subr.mxu0 0.0
        %3202 = vmatpush1.msra.mxu0 0.0
        %3203 = vmatprep.subr.mxu0 0.0
        %3204 = vmatpush1.msra.mxu0 0.0
        %3205 = vmatprep.subr.mxu0 0.0
        %3206 = vmatpush1.msra.mxu0 0.0
        %3207 = vmatprep.subr.mxu0 0.0
        %3208 = vmatpush1.msra.mxu0 0.0
        %3209 = vmatprep.subr.mxu0 0.0
        %3210 = vmatpush1.msra.mxu0 0.0
        %3211 = vmatprep.subr.mxu0 0.0
        %3212 = vmatpush1.msra.mxu0 0.0
        %3213 = vmatprep.subr.mxu0 0.0
        %3214 = vmatpush1.msra.mxu0 0.0
        %3215 = vmatprep.subr.mxu0 0.0
        %3216 = vmatpush1.msra.mxu0 0.0
        %3217 = vmatprep.mubr.f32.mxu0 0.0
        %3218 = vmatmul.mubr.f32.gmra.mrb[0].mxu0 %v2984
        %v3219 = vpop.f32.mrb[0].mxu0
        %v3220 = vadd.f32 %v2981, %v3219
        %v3221 = vpop.f32.mrb[0].mxu0
        %v3222 = vadd.f32 %v2981, %v3221
        %3223 = vdwg.mxu0
        %3224 = vmatprep.subr.mxu0 %v3002
        %3225 = vmatpush1.msra.mxu0 %v2999
        %3226 = vmatprep.subr.mxu0 0.0
        %3227 = vmatpush1.msra.mxu0 0.0
        %3228 = vmatprep.subr.mxu0 0.0
        %3229 = vmatpush1.msra.mxu0 0.0
        %3230 = vmatprep.subr.mxu0 0.0
        %3231 = vmatpush1.msra.mxu0 0.0
        %3232 = vmatprep.subr.mxu0 0.0
        %3233 = vmatpush1.msra.mxu0 0.0
        %3234 = vmatprep.subr.mxu0 0.0
        %3235 = vmatpush1.msra.mxu0 0.0
        %3236 = vmatprep.subr.mxu0 0.0
        %3237 = vmatpush1.msra.mxu0 0.0
        %3238 = vmatprep.subr.mxu0 0.0
        %3239 = vmatpush1.msra.mxu0 0.0
        %3240 = vmatprep.subr.mxu0 0.0
        %3241 = vmatpush1.msra.mxu0 0.0
        %3242 = vmatprep.subr.mxu0 0.0
        %3243 = vmatpush1.msra.mxu0 0.0
        %3244 = vmatprep.subr.mxu0 0.0
        %3245 = vmatpush1.msra.mxu0 0.0
        %3246 = vmatprep.subr.mxu0 0.0
        %3247 = vmatpush1.msra.mxu0 0.0
        %3248 = vmatprep.subr.mxu0 0.0
        %3249 = vmatpush1.msra.mxu0 0.0
        %3250 = vmatprep.subr.mxu0 0.0
        %3251 = vmatpush1.msra.mxu0 0.0
        %3252 = vmatprep.subr.mxu0 0.0
        %3253 = vmatpush1.msra.mxu0 0.0
        %3254 = vmatprep.subr.mxu0 0.0
        %3255 = vmatpush1.msra.mxu0 0.0
        %3256 = vmatprep.subr.mxu0 0.0
        %3257 = vmatpush1.msra.mxu0 0.0
        %3258 = vmatprep.subr.mxu0 0.0
        %3259 = vmatpush1.msra.mxu0 0.0
        %3260 = vmatprep.subr.mxu0 0.0
        %3261 = vmatpush1.msra.mxu0 0.0
        %3262 = vmatprep.subr.mxu0 0.0
        %3263 = vmatpush1.msra.mxu0 0.0
        %3264 = vmatprep.subr.mxu0 0.0
        %3265 = vmatpush1.msra.mxu0 0.0
        %3266 = vmatprep.subr.mxu0 0.0
        %3267 = vmatpush1.msra.mxu0 0.0
        %3268 = vmatprep.subr.mxu0 0.0
        %3269 = vmatpush1.msra.mxu0 0.0
        %3270 = vmatprep.subr.mxu0 0.0
        %3271 = vmatpush1.msra.mxu0 0.0
        %3272 = vmatprep.subr.mxu0 0.0
        %3273 = vmatpush1.msra.mxu0 0.0
        %3274 = vmatprep.subr.mxu0 0.0
        %3275 = vmatpush1.msra.mxu0 0.0
        %3276 = vmatprep.subr.mxu0 0.0
        %3277 = vmatpush1.msra.mxu0 0.0
        %3278 = vmatprep.subr.mxu0 0.0
        %3279 = vmatpush1.msra.mxu0 0.0
        %3280 = vmatprep.subr.mxu0 0.0
        %3281 = vmatpush1.msra.mxu0 0.0
        %3282 = vmatprep.subr.mxu0 0.0
        %3283 = vmatpush1.msra.mxu0 0.0
        %3284 = vmatprep.subr.mxu0 0.0
        %3285 = vmatpush1.msra.mxu0 0.0
        %3286 = vmatprep.subr.mxu0 0.0
        %3287 = vmatpush1.msra.mxu0 0.0
        %3288 = vmatprep.mubr.f32.mxu0 0.0
        %3289 = vmatmul.mubr.f32.gmra.mrb[0].mxu0 %v2984
        %v3290 = vpop.f32.mrb[0].mxu0
        %v3291 = vadd.f32 %v2981, %v3290
        %v3292 = vpop.f32.mrb[0].mxu0
        %v3293 = vadd.f32 %v2981, %v3292
        %3294 = vdwg.mxu0
        %3295 = vmatprep.subr.mxu0 %v3008
        %3296 = vmatpush1.msra.mxu0 %v3005
        %3297 = vmatprep.subr.mxu0 0.0
        %3298 = vmatpush1.msra.mxu0 0.0
        %3299 = vmatprep.subr.mxu0 0.0
        %3300 = vmatpush1.msra.mxu0 0.0
        %3301 = vmatprep.subr.mxu0 0.0
        %3302 = vmatpush1.msra.mxu0 0.0
        %3303 = vmatprep.subr.mxu0 0.0
        %3304 = vmatpush1.msra.mxu0 0.0
        %3305 = vmatprep.subr.mxu0 0.0
        %3306 = vmatpush1.msra.mxu0 0.0
        %3307 = vmatprep.subr.mxu0 0.0
        %3308 = vmatpush1.msra.mxu0 0.0
        %3309 = vmatprep.subr.mxu0 0.0
        %3310 = vmatpush1.msra.mxu0 0.0
        %3311 = vmatprep.subr.mxu0 0.0
        %3312 = vmatpush1.msra.mxu0 0.0
        %3313 = vmatprep.subr.mxu0 0.0
        %3314 = vmatpush1.msra.mxu0 0.0
        %3315 = vmatprep.subr.mxu0 0.0
        %3316 = vmatpush1.msra.mxu0 0.0
        %3317 = vmatprep.subr.mxu0 0.0
        %3318 = vmatpush1.msra.mxu0 0.0
        %3319 = vmatprep.subr.mxu0 0.0
        %3320 = vmatpush1.msra.mxu0 0.0
        %3321 = vmatprep.subr.mxu0 0.0
        %3322 = vmatpush1.msra.mxu0 0.0
        %3323 = vmatprep.subr.mxu0 0.0
        %3324 = vmatpush1.msra.mxu0 0.0
        %3325 = vmatprep.subr.mxu0 0.0
        %3326 = vmatpush1.msra.mxu0 0.0
        %3327 = vmatprep.subr.mxu0 0.0
        %3328 = vmatpush1.msra.mxu0 0.0
        %3329 = vmatprep.subr.mxu0 0.0
        %3330 = vmatpush1.msra.mxu0 0.0
        %3331 = vmatprep.subr.mxu0 0.0
        %3332 = vmatpush1.msra.mxu0 0.0
        %3333 = vmatprep.subr.mxu0 0.0
        %3334 = vmatpush1.msra.mxu0 0.0
        %3335 = vmatprep.subr.mxu0 0.0
        %3336 = vmatpush1.msra.mxu0 0.0
        %3337 = vmatprep.subr.mxu0 0.0
        %3338 = vmatpush1.msra.mxu0 0.0
        %3339 = vmatprep.subr.mxu0 0.0
        %3340 = vmatpush1.msra.mxu0 0.0
        %3341 = vmatprep.subr.mxu0 0.0
        %3342 = vmatpush1.msra.mxu0 0.0
        %3343 = vmatprep.subr.mxu0 0.0
        %3344 = vmatpush1.msra.mxu0 0.0
        %3345 = vmatprep.subr.mxu0 0.0
        %3346 = vmatpush1.msra.mxu0 0.0
        %3347 = vmatprep.subr.mxu0 0.0
        %3348 = vmatpush1.msra.mxu0 0.0
        %3349 = vmatprep.subr.mxu0 0.0
        %3350 = vmatpush1.msra.mxu0 0.0
        %3351 = vmatprep.subr.mxu0 0.0
        %3352 = vmatpush1.msra.mxu0 0.0
        %3353 = vmatprep.subr.mxu0 0.0
        %3354 = vmatpush1.msra.mxu0 0.0
        %3355 = vmatprep.subr.mxu0 0.0
        %3356 = vmatpush1.msra.mxu0 0.0
        %3357 = vmatprep.subr.mxu0 0.0
        %3358 = vmatpush1.msra.mxu0 0.0
        %3359 = vmatprep.mubr.f32.mxu0 0.0
        %3360 = vmatmul.mubr.f32.gmra.mrb[0].mxu0 %v2984
        %v3361 = vpop.f32.mrb[0].mxu0
        %v3362 = vadd.f32 %v2981, %v3361
        %v3363 = vpop.f32.mrb[0].mxu0
        %v3364 = vadd.f32 %v2981, %v3363
        %3365 = vdwg.mxu0
        %3366 = vmatprep.subr.mxu0 %v3014
        %3367 = vmatpush1.msra.mxu0 %v3011
        %3368 = vmatprep.subr.mxu0 0.0
        %3369 = vmatpush1.msra.mxu0 0.0
        %3370 = vmatprep.subr.mxu0 0.0
        %3371 = vmatpush1.msra.mxu0 0.0
        %3372 = vmatprep.subr.mxu0 0.0
        %3373 = vmatpush1.msra.mxu0 0.0
        %3374 = vmatprep.subr.mxu0 0.0
        %3375 = vmatpush1.msra.mxu0 0.0
        %3376 = vmatprep.subr.mxu0 0.0
        %3377 = vmatpush1.msra.mxu0 0.0
        %3378 = vmatprep.subr.mxu0 0.0
        %3379 = vmatpush1.msra.mxu0 0.0
        %3380 = vmatprep.subr.mxu0 0.0
        %3381 = vmatpush1.msra.mxu0 0.0
        %3382 = vmatprep.subr.mxu0 0.0
        %3383 = vmatpush1.msra.mxu0 0.0
        %3384 = vmatprep.subr.mxu0 0.0
        %3385 = vmatpush1.msra.mxu0 0.0
        %3386 = vmatprep.subr.mxu0 0.0
        %3387 = vmatpush1.msra.mxu0 0.0
        %3388 = vmatprep.subr.mxu0 0.0
        %3389 = vmatpush1.msra.mxu0 0.0
        %3390 = vmatprep.subr.mxu0 0.0
        %3391 = vmatpush1.msra.mxu0 0.0
        %3392 = vmatprep.subr.mxu0 0.0
        %3393 = vmatpush1.msra.mxu0 0.0
        %3394 = vmatprep.subr.mxu0 0.0
        %3395 = vmatpush1.msra.mxu0 0.0
        %3396 = vmatprep.subr.mxu0 0.0
        %3397 = vmatpush1.msra.mxu0 0.0
        %3398 = vmatprep.subr.mxu0 0.0
        %3399 = vmatpush1.msra.mxu0 0.0
        %3400 = vmatprep.subr.mxu0 0.0
        %3401 = vmatpush1.msra.mxu0 0.0
        %3402 = vmatprep.subr.mxu0 0.0
        %3403 = vmatpush1.msra.mxu0 0.0
        %3404 = vmatprep.subr.mxu0 0.0
        %3405 = vmatpush1.msra.mxu0 0.0
        %3406 = vmatprep.subr.mxu0 0.0
        %3407 = vmatpush1.msra.mxu0 0.0
        %3408 = vmatprep.subr.mxu0 0.0
        %3409 = vmatpush1.msra.mxu0 0.0
        %3410 = vmatprep.subr.mxu0 0.0
        %3411 = vmatpush1.msra.mxu0 0.0
        %3412 = vmatprep.subr.mxu0 0.0
        %3413 = vmatpush1.msra.mxu0 0.0
        %3414 = vmatprep.subr.mxu0 0.0
        %3415 = vmatpush1.msra.mxu0 0.0
        %3416 = vmatprep.subr.mxu0 0.0
        %3417 = vmatpush1.msra.mxu0 0.0
        %3418 = vmatprep.subr.mxu0 0.0
        %3419 = vmatpush1.msra.mxu0 0.0
        %3420 = vmatprep.subr.mxu0 0.0
        %3421 = vmatpush1.msra.mxu0 0.0
        %3422 = vmatprep.subr.mxu0 0.0
        %3423 = vmatpush1.msra.mxu0 0.0
        %3424 = vmatprep.subr.mxu0 0.0
        %3425 = vmatpush1.msra.mxu0 0.0
        %3426 = vmatprep.subr.mxu0 0.0
        %3427 = vmatpush1.msra.mxu0 0.0
        %3428 = vmatprep.subr.mxu0 0.0
        %3429 = vmatpush1.msra.mxu0 0.0
        %3430 = vmatprep.mubr.f32.mxu0 0.0
        %3431 = vmatmul.mubr.f32.gmra.mrb[0].mxu0 %v2984
        %v3432 = vpop.f32.mrb[0].mxu0
        %v3433 = vadd.f32 %v2981, %v3432
        %v3434 = vpop.f32.mrb[0].mxu0
        %v3435 = vadd.f32 %v2981, %v3434
        %3436 = vdwg.mxu0
        %3437 = vmatprep.subr.mxu0 %v3020
        %3438 = vmatpush1.msra.mxu0 %v3017
        %3439 = vmatprep.subr.mxu0 0.0
        %3440 = vmatpush1.msra.mxu0 0.0
        %3441 = vmatprep.subr.mxu0 0.0
        %3442 = vmatpush1.msra.mxu0 0.0
        %3443 = vmatprep.subr.mxu0 0.0
        %3444 = vmatpush1.msra.mxu0 0.0
        %3445 = vmatprep.subr.mxu0 0.0
        %3446 = vmatpush1.msra.mxu0 0.0
        %3447 = vmatprep.subr.mxu0 0.0
        %3448 = vmatpush1.msra.mxu0 0.0
        %3449 = vmatprep.subr.mxu0 0.0
        %3450 = vmatpush1.msra.mxu0 0.0
        %3451 = vmatprep.subr.mxu0 0.0
        %3452 = vmatpush1.msra.mxu0 0.0
        %3453 = vmatprep.subr.mxu0 0.0
        %3454 = vmatpush1.msra.mxu0 0.0
        %3455 = vmatprep.subr.mxu0 0.0
        %3456 = vmatpush1.msra.mxu0 0.0
        %3457 = vmatprep.subr.mxu0 0.0
        %3458 = vmatpush1.msra.mxu0 0.0
        %3459 = vmatprep.subr.mxu0 0.0
        %3460 = vmatpush1.msra.mxu0 0.0
        %3461 = vmatprep.subr.mxu0 0.0
        %3462 = vmatpush1.msra.mxu0 0.0
        %3463 = vmatprep.subr.mxu0 0.0
        %3464 = vmatpush1.msra.mxu0 0.0
        %3465 = vmatprep.subr.mxu0 0.0
        %3466 = vmatpush1.msra.mxu0 0.0
        %3467 = vmatprep.subr.mxu0 0.0
        %3468 = vmatpush1.msra.mxu0 0.0
        %3469 = vmatprep.subr.mxu0 0.0
        %3470 = vmatpush1.msra.mxu0 0.0
        %3471 = vmatprep.subr.mxu0 0.0
        %3472 = vmatpush1.msra.mxu0 0.0
        %3473 = vmatprep.subr.mxu0 0.0
        %3474 = vmatpush1.msra.mxu0 0.0
        %3475 = vmatprep.subr.mxu0 0.0
        %3476 = vmatpush1.msra.mxu0 0.0
        %3477 = vmatprep.subr.mxu0 0.0
        %3478 = vmatpush1.msra.mxu0 0.0
        %3479 = vmatprep.subr.mxu0 0.0
        %3480 = vmatpush1.msra.mxu0 0.0
        %3481 = vmatprep.subr.mxu0 0.0
        %3482 = vmatpush1.msra.mxu0 0.0
        %3483 = vmatprep.subr.mxu0 0.0
        %3484 = vmatpush1.msra.mxu0 0.0
        %3485 = vmatprep.subr.mxu0 0.0
        %3486 = vmatpush1.msra.mxu0 0.0
        %3487 = vmatprep.subr.mxu0 0.0
        %3488 = vmatpush1.msra.mxu0 0.0
        %3489 = vmatprep.subr.mxu0 0.0
        %3490 = vmatpush1.msra.mxu0 0.0
        %3491 = vmatprep.subr.mxu0 0.0
        %3492 = vmatpush1.msra.mxu0 0.0
        %3493 = vmatprep.subr.mxu0 0.0
        %3494 = vmatpush1.msra.mxu0 0.0
        %3495 = vmatprep.subr.mxu0 0.0
        %3496 = vmatpush1.msra.mxu0 0.0
        %3497 = vmatprep.subr.mxu0 0.0
        %3498 = vmatpush1.msra.mxu0 0.0
        %3499 = vmatprep.subr.mxu0 0.0
        %3500 = vmatpush1.msra.mxu0 0.0
        %3501 = vmatprep.mubr.f32.mxu0 0.0
        %3502 = vmatmul.mubr.f32.gmra.mrb[0].mxu0 %v2984
        %v3503 = vpop.f32.mrb[0].mxu0
        %v3504 = vadd.f32 %v2981, %v3503
        %v3505 = vpop.f32.mrb[0].mxu0
        %v3506 = vadd.f32 %v2981, %v3505
        %3507 = vdwg.mxu0
        %3508 = vmatprep.subr.mxu0 %v3026
        %3509 = vmatpush1.msra.mxu0 %v3023
        %3510 = vmatprep.subr.mxu0 0.0
        %3511 = vmatpush1.msra.mxu0 0.0
        %3512 = vmatprep.subr.mxu0 0.0
        %3513 = vmatpush1.msra.mxu0 0.0
        %3514 = vmatprep.subr.mxu0 0.0
        %3515 = vmatpush1.msra.mxu0 0.0
        %3516 = vmatprep.subr.mxu0 0.0
        %3517 = vmatpush1.msra.mxu0 0.0
        %3518 = vmatprep.subr.mxu0 0.0
        %3519 = vmatpush1.msra.mxu0 0.0
        %3520 = vmatprep.subr.mxu0 0.0
        %3521 = vmatpush1.msra.mxu0 0.0
        %3522 = vmatprep.subr.mxu0 0.0
        %3523 = vmatpush1.msra.mxu0 0.0
        %3524 = vmatprep.subr.mxu0 0.0
        %3525 = vmatpush1.msra.mxu0 0.0
        %3526 = vmatprep.subr.mxu0 0.0
        %3527 = vmatpush1.msra.mxu0 0.0
        %3528 = vmatprep.subr.mxu0 0.0
        %3529 = vmatpush1.msra.mxu0 0.0
        %3530 = vmatprep.subr.mxu0 0.0
        %3531 = vmatpush1.msra.mxu0 0.0
        %3532 = vmatprep.subr.mxu0 0.0
        %3533 = vmatpush1.msra.mxu0 0.0
        %3534 = vmatprep.subr.mxu0 0.0
        %3535 = vmatpush1.msra.mxu0 0.0
        %3536 = vmatprep.subr.mxu0 0.0
        %3537 = vmatpush1.msra.mxu0 0.0
        %3538 = vmatprep.subr.mxu0 0.0
        %3539 = vmatpush1.msra.mxu0 0.0
        %3540 = vmatprep.subr.mxu0 0.0
        %3541 = vmatpush1.msra.mxu0 0.0
        %3542 = vmatprep.subr.mxu0 0.0
        %3543 = vmatpush1.msra.mxu0 0.0
        %3544 = vmatprep.subr.mxu0 0.0
        %3545 = vmatpush1.msra.mxu0 0.0
        %3546 = vmatprep.subr.mxu0 0.0
        %3547 = vmatpush1.msra.mxu0 0.0
        %3548 = vmatprep.subr.mxu0 0.0
        %3549 = vmatpush1.msra.mxu0 0.0
        %3550 = vmatprep.subr.mxu0 0.0
        %3551 = vmatpush1.msra.mxu0 0.0
        %3552 = vmatprep.subr.mxu0 0.0
        %3553 = vmatpush1.msra.mxu0 0.0
        %3554 = vmatprep.subr.mxu0 0.0
        %3555 = vmatpush1.msra.mxu0 0.0
        %3556 = vmatprep.subr.mxu0 0.0
        %3557 = vmatpush1.msra.mxu0 0.0
        %3558 = vmatprep.subr.mxu0 0.0
        %3559 = vmatpush1.msra.mxu0 0.0
        %3560 = vmatprep.subr.mxu0 0.0
        %3561 = vmatpush1.msra.mxu0 0.0
        %3562 = vmatprep.subr.mxu0 0.0
        %3563 = vmatpush1.msra.mxu0 0.0
        %3564 = vmatprep.subr.mxu0 0.0
        %3565 = vmatpush1.msra.mxu0 0.0
        %3566 = vmatprep.subr.mxu0 0.0
        %3567 = vmatpush1.msra.mxu0 0.0
        %3568 = vmatprep.subr.mxu0 0.0
        %3569 = vmatpush1.msra.mxu0 0.0
        %3570 = vmatprep.subr.mxu0 0.0
        %3571 = vmatpush1.msra.mxu0 0.0
        %3572 = vmatprep.mubr.f32.mxu0 0.0
        %3573 = vmatmul.mubr.f32.gmra.mrb[0].mxu0 %v2984
        %v3574 = vpop.f32.mrb[0].mxu0
        %v3575 = vadd.f32 %v2981, %v3574
        %v3576 = vpop.f32.mrb[0].mxu0
        %v3577 = vadd.f32 %v2981, %v3576
        %3578 = vdwg.mxu0
        %3579 = vmatprep.subr.mxu0 %v3032
        %3580 = vmatpush1.msra.mxu0 %v3029
        %3581 = vmatprep.subr.mxu0 0.0
        %3582 = vmatpush1.msra.mxu0 0.0
        %3583 = vmatprep.subr.mxu0 0.0
        %3584 = vmatpush1.msra.mxu0 0.0
        %3585 = vmatprep.subr.mxu0 0.0
        %3586 = vmatpush1.msra.mxu0 0.0
        %3587 = vmatprep.subr.mxu0 0.0
        %3588 = vmatpush1.msra.mxu0 0.0
        %3589 = vmatprep.subr.mxu0 0.0
        %3590 = vmatpush1.msra.mxu0 0.0
        %3591 = vmatprep.subr.mxu0 0.0
        %3592 = vmatpush1.msra.mxu0 0.0
        %3593 = vmatprep.subr.mxu0 0.0
        %3594 = vmatpush1.msra.mxu0 0.0
        %3595 = vmatprep.subr.mxu0 0.0
        %3596 = vmatpush1.msra.mxu0 0.0
        %3597 = vmatprep.subr.mxu0 0.0
        %3598 = vmatpush1.msra.mxu0 0.0
        %3599 = vmatprep.subr.mxu0 0.0
        %3600 = vmatpush1.msra.mxu0 0.0
        %3601 = vmatprep.subr.mxu0 0.0
        %3602 = vmatpush1.msra.mxu0 0.0
        %3603 = vmatprep.subr.mxu0 0.0
        %3604 = vmatpush1.msra.mxu0 0.0
        %3605 = vmatprep.subr.mxu0 0.0
        %3606 = vmatpush1.msra.mxu0 0.0
        %3607 = vmatprep.subr.mxu0 0.0
        %3608 = vmatpush1.msra.mxu0 0.0
        %3609 = vmatprep.subr.mxu0 0.0
        %3610 = vmatpush1.msra.mxu0 0.0
        %3611 = vmatprep.subr.mxu0 0.0
        %3612 = vmatpush1.msra.mxu0 0.0
        %3613 = vmatprep.subr.mxu0 0.0
        %3614 = vmatpush1.msra.mxu0 0.0
        %3615 = vmatprep.subr.mxu0 0.0
        %3616 = vmatpush1.msra.mxu0 0.0
        %3617 = vmatprep.subr.mxu0 0.0
        %3618 = vmatpush1.msra.mxu0 0.0
        %3619 = vmatprep.subr.mxu0 0.0
        %3620 = vmatpush1.msra.mxu0 0.0
        %3621 = vmatprep.subr.mxu0 0.0
        %3622 = vmatpush1.msra.mxu0 0.0
        %3623 = vmatprep.subr.mxu0 0.0
        %3624 = vmatpush1.msra.mxu0 0.0
        %3625 = vmatprep.subr.mxu0 0.0
        %3626 = vmatpush1.msra.mxu0 0.0
        %3627 = vmatprep.subr.mxu0 0.0
        %3628 = vmatpush1.msra.mxu0 0.0
        %3629 = vmatprep.subr.mxu0 0.0
        %3630 = vmatpush1.msra.mxu0 0.0
        %3631 = vmatprep.subr.mxu0 0.0
        %3632 = vmatpush1.msra.mxu0 0.0
        %3633 = vmatprep.subr.mxu0 0.0
        %3634 = vmatpush1.msra.mxu0 0.0
        %3635 = vmatprep.subr.mxu0 0.0
        %3636 = vmatpush1.msra.mxu0 0.0
        %3637 = vmatprep.subr.mxu0 0.0
        %3638 = vmatpush1.msra.mxu0 0.0
        %3639 = vmatprep.subr.mxu0 0.0
        %3640 = vmatpush1.msra.mxu0 0.0
        %3641 = vmatprep.subr.mxu0 0.0
        %3642 = vmatpush1.msra.mxu0 0.0
        %3643 = vmatprep.mubr.f32.mxu0 0.0
        %3644 = vmatmul.mubr.f32.gmra.mrb[0].mxu0 %v2984
        %v3645 = vpop.f32.mrb[0].mxu0
        %v3646 = vadd.f32 %v2981, %v3645
        %v3647 = vpop.f32.mrb[0].mxu0
        %v3648 = vadd.f32 %v2981, %v3647
        %3649 = vdwg.mxu0
        %3650 = vmatprep.subr.mxu0 %v3038
        %3651 = vmatpush1.msra.mxu0 %v3035
        %3652 = vmatprep.subr.mxu0 0.0
        %3653 = vmatpush1.msra.mxu0 0.0
        %3654 = vmatprep.subr.mxu0 0.0
        %3655 = vmatpush1.msra.mxu0 0.0
        %3656 = vmatprep.subr.mxu0 0.0
        %3657 = vmatpush1.msra.mxu0 0.0
        %3658 = vmatprep.subr.mxu0 0.0
        %3659 = vmatpush1.msra.mxu0 0.0
        %3660 = vmatprep.subr.mxu0 0.0
        %3661 = vmatpush1.msra.mxu0 0.0
        %3662 = vmatprep.subr.mxu0 0.0
        %3663 = vmatpush1.msra.mxu0 0.0
        %3664 = vmatprep.subr.mxu0 0.0
        %3665 = vmatpush1.msra.mxu0 0.0
        %3666 = vmatprep.subr.mxu0 0.0
        %3667 = vmatpush1.msra.mxu0 0.0
        %3668 = vmatprep.subr.mxu0 0.0
        %3669 = vmatpush1.msra.mxu0 0.0
        %3670 = vmatprep.subr.mxu0 0.0
        %3671 = vmatpush1.msra.mxu0 0.0
        %3672 = vmatprep.subr.mxu0 0.0
        %3673 = vmatpush1.msra.mxu0 0.0
        %3674 = vmatprep.subr.mxu0 0.0
        %3675 = vmatpush1.msra.mxu0 0.0
        %3676 = vmatprep.subr.mxu0 0.0
        %3677 = vmatpush1.msra.mxu0 0.0
        %3678 = vmatprep.subr.mxu0 0.0
        %3679 = vmatpush1.msra.mxu0 0.0
        %3680 = vmatprep.subr.mxu0 0.0
        %3681 = vmatpush1.msra.mxu0 0.0
        %3682 = vmatprep.subr.mxu0 0.0
        %3683 = vmatpush1.msra.mxu0 0.0
        %3684 = vmatprep.subr.mxu0 0.0
        %3685 = vmatpush1.msra.mxu0 0.0
        %3686 = vmatprep.subr.mxu0 0.0
        %3687 = vmatpush1.msra.mxu0 0.0
        %3688 = vmatprep.subr.mxu0 0.0
        %3689 = vmatpush1.msra.mxu0 0.0
        %3690 = vmatprep.subr.mxu0 0.0
        %3691 = vmatpush1.msra.mxu0 0.0
        %3692 = vmatprep.subr.mxu0 0.0
        %3693 = vmatpush1.msra.mxu0 0.0
        %3694 = vmatprep.subr.mxu0 0.0
        %3695 = vmatpush1.msra.mxu0 0.0
        %3696 = vmatprep.subr.mxu0 0.0
        %3697 = vmatpush1.msra.mxu0 0.0
        %3698 = vmatprep.subr.mxu0 0.0
        %3699 = vmatpush1.msra.mxu0 0.0
        %3700 = vmatprep.subr.mxu0 0.0
        %3701 = vmatpush1.msra.mxu0 0.0
        %3702 = vmatprep.subr.mxu0 0.0
        %3703 = vmatpush1.msra.mxu0 0.0
        %3704 = vmatprep.subr.mxu0 0.0
        %3705 = vmatpush1.msra.mxu0 0.0
        %3706 = vmatprep.subr.mxu0 0.0
        %3707 = vmatpush1.msra.mxu0 0.0
        %3708 = vmatprep.subr.mxu0 0.0
        %3709 = vmatpush1.msra.mxu0 0.0
        %3710 = vmatprep.subr.mxu0 0.0
        %3711 = vmatpush1.msra.mxu0 0.0
        %3712 = vmatprep.subr.mxu0 0.0
        %3713 = vmatpush1.msra.mxu0 0.0
        %3714 = vmatprep.mubr.f32.mxu0 0.0
        %3715 = vmatmul.mubr.f32.gmra.mrb[0].mxu0 %v2984
        %v3716 = vpop.f32.mrb[0].mxu0
        %v3717 = vadd.f32 %v2981, %v3716
        %v3718 = vpop.f32.mrb[0].mxu0
        %v3719 = vadd.f32 %v2981, %v3718
        %3720 = vdwg.mxu0
        %3721 = vmatprep.subr.mxu0 %v3044
        %3722 = vmatpush1.msra.mxu0 %v3041
        %3723 = vmatprep.subr.mxu0 0.0
        %3724 = vmatpush1.msra.mxu0 0.0
        %3725 = vmatprep.subr.mxu0 0.0
        %3726 = vmatpush1.msra.mxu0 0.0
        %3727 = vmatprep.subr.mxu0 0.0
        %3728 = vmatpush1.msra.mxu0 0.0
        %3729 = vmatprep.subr.mxu0 0.0
        %3730 = vmatpush1.msra.mxu0 0.0
        %3731 = vmatprep.subr.mxu0 0.0
        %3732 = vmatpush1.msra.mxu0 0.0
        %3733 = vmatprep.subr.mxu0 0.0
        %3734 = vmatpush1.msra.mxu0 0.0
        %3735 = vmatprep.subr.mxu0 0.0
        %3736 = vmatpush1.msra.mxu0 0.0
        %3737 = vmatprep.subr.mxu0 0.0
        %3738 = vmatpush1.msra.mxu0 0.0
        %3739 = vmatprep.subr.mxu0 0.0
        %3740 = vmatpush1.msra.mxu0 0.0
        %3741 = vmatprep.subr.mxu0 0.0
        %3742 = vmatpush1.msra.mxu0 0.0
        %3743 = vmatprep.subr.mxu0 0.0
        %3744 = vmatpush1.msra.mxu0 0.0
        %3745 = vmatprep.subr.mxu0 0.0
        %3746 = vmatpush1.msra.mxu0 0.0
        %3747 = vmatprep.subr.mxu0 0.0
        %3748 = vmatpush1.msra.mxu0 0.0
        %3749 = vmatprep.subr.mxu0 0.0
        %3750 = vmatpush1.msra.mxu0 0.0
        %3751 = vmatprep.subr.mxu0 0.0
        %3752 = vmatpush1.msra.mxu0 0.0
        %3753 = vmatprep.subr.mxu0 0.0
        %3754 = vmatpush1.msra.mxu0 0.0
        %3755 = vmatprep.subr.mxu0 0.0
        %3756 = vmatpush1.msra.mxu0 0.0
        %3757 = vmatprep.subr.mxu0 0.0
        %3758 = vmatpush1.msra.mxu0 0.0
        %3759 = vmatprep.subr.mxu0 0.0
        %3760 = vmatpush1.msra.mxu0 0.0
        %3761 = vmatprep.subr.mxu0 0.0
        %3762 = vmatpush1.msra.mxu0 0.0
        %3763 = vmatprep.subr.mxu0 0.0
        %3764 = vmatpush1.msra.mxu0 0.0
        %3765 = vmatprep.subr.mxu0 0.0
        %3766 = vmatpush1.msra.mxu0 0.0
        %3767 = vmatprep.subr.mxu0 0.0
        %3768 = vmatpush1.msra.mxu0 0.0
        %3769 = vmatprep.subr.mxu0 0.0
        %3770 = vmatpush1.msra.mxu0 0.0
        %3771 = vmatprep.subr.mxu0 0.0
        %3772 = vmatpush1.msra.mxu0 0.0
        %3773 = vmatprep.subr.mxu0 0.0
        %3774 = vmatpush1.msra.mxu0 0.0
        %3775 = vmatprep.subr.mxu0 0.0
        %3776 = vmatpush1.msra.mxu0 0.0
        %3777 = vmatprep.subr.mxu0 0.0
        %3778 = vmatpush1.msra.mxu0 0.0
        %3779 = vmatprep.subr.mxu0 0.0
        %3780 = vmatpush1.msra.mxu0 0.0
        %3781 = vmatprep.subr.mxu0 0.0
        %3782 = vmatpush1.msra.mxu0 0.0
        %3783 = vmatprep.subr.mxu0 0.0
        %3784 = vmatpush1.msra.mxu0 0.0
        %3785 = vmatprep.mubr.f32.mxu0 0.0
        %3786 = vmatmul.mubr.f32.gmra.mrb[0].mxu0 %v2984
        %v3787 = vpop.f32.mrb[0].mxu0
        %v3788 = vadd.f32 %v2981, %v3787
        %v3789 = vpop.f32.mrb[0].mxu0
        %v3790 = vadd.f32 %v2981, %v3789
        %3791 = vdwg.mxu0
        %3792 = vmatprep.subr.mxu0 %v3050
        %3793 = vmatpush1.msra.mxu0 %v3047
        %3794 = vmatprep.subr.mxu0 0.0
        %3795 = vmatpush1.msra.mxu0 0.0
        %3796 = vmatprep.subr.mxu0 0.0
        %3797 = vmatpush1.msra.mxu0 0.0
        %3798 = vmatprep.subr.mxu0 0.0
        %3799 = vmatpush1.msra.mxu0 0.0
        %3800 = vmatprep.subr.mxu0 0.0
        %3801 = vmatpush1.msra.mxu0 0.0
        %3802 = vmatprep.subr.mxu0 0.0
        %3803 = vmatpush1.msra.mxu0 0.0
        %3804 = vmatprep.subr.mxu0 0.0
        %3805 = vmatpush1.msra.mxu0 0.0
        %3806 = vmatprep.subr.mxu0 0.0
        %3807 = vmatpush1.msra.mxu0 0.0
        %3808 = vmatprep.subr.mxu0 0.0
        %3809 = vmatpush1.msra.mxu0 0.0
        %3810 = vmatprep.subr.mxu0 0.0
        %3811 = vmatpush1.msra.mxu0 0.0
        %3812 = vmatprep.subr.mxu0 0.0
        %3813 = vmatpush1.msra.mxu0 0.0
        %3814 = vmatprep.subr.mxu0 0.0
        %3815 = vmatpush1.msra.mxu0 0.0
        %3816 = vmatprep.subr.mxu0 0.0
        %3817 = vmatpush1.msra.mxu0 0.0
        %3818 = vmatprep.subr.mxu0 0.0
        %3819 = vmatpush1.msra.mxu0 0.0
        %3820 = vmatprep.subr.mxu0 0.0
        %3821 = vmatpush1.msra.mxu0 0.0
        %3822 = vmatprep.subr.mxu0 0.0
        %3823 = vmatpush1.msra.mxu0 0.0
        %3824 = vmatprep.subr.mxu0 0.0
        %3825 = vmatpush1.msra.mxu0 0.0
        %3826 = vmatprep.subr.mxu0 0.0
        %3827 = vmatpush1.msra.mxu0 0.0
        %3828 = vmatprep.subr.mxu0 0.0
        %3829 = vmatpush1.msra.mxu0 0.0
        %3830 = vmatprep.subr.mxu0 0.0
        %3831 = vmatpush1.msra.mxu0 0.0
        %3832 = vmatprep.subr.mxu0 0.0
        %3833 = vmatpush1.msra.mxu0 0.0
        %3834 = vmatprep.subr.mxu0 0.0
        %3835 = vmatpush1.msra.mxu0 0.0
        %3836 = vmatprep.subr.mxu0 0.0
        %3837 = vmatpush1.msra.mxu0 0.0
        %3838 = vmatprep.subr.mxu0 0.0
        %3839 = vmatpush1.msra.mxu0 0.0
        %3840 = vmatprep.subr.mxu0 0.0
        %3841 = vmatpush1.msra.mxu0 0.0
        %3842 = vmatprep.subr.mxu0 0.0
        %3843 = vmatpush1.msra.mxu0 0.0
        %3844 = vmatprep.subr.mxu0 0.0
        %3845 = vmatpush1.msra.mxu0 0.0
        %3846 = vmatprep.subr.mxu0 0.0
        %3847 = vmatpush1.msra.mxu0 0.0
        %3848 = vmatprep.subr.mxu0 0.0
        %3849 = vmatpush1.msra.mxu0 0.0
        %3850 = vmatprep.subr.mxu0 0.0
        %3851 = vmatpush1.msra.mxu0 0.0
        %3852 = vmatprep.subr.mxu0 0.0
        %3853 = vmatpush1.msra.mxu0 0.0
        %3854 = vmatprep.subr.mxu0 0.0
        %3855 = vmatpush1.msra.mxu0 0.0
        %3856 = vmatprep.mubr.f32.mxu0 0.0
        %3857 = vmatmul.mubr.f32.gmra.mrb[0].mxu0 %v2984
        %v3858 = vpop.f32.mrb[0].mxu0
        %v3859 = vadd.f32 %v2981, %v3858
        %v3860 = vpop.f32.mrb[0].mxu0
        %v3861 = vadd.f32 %v2981, %v3860
        %3862 = vdwg.mxu0
        %3863 = vmatprep.subr.mxu0 %v3056
        %3864 = vmatpush1.msra.mxu0 %v3053
        %3865 = vmatprep.subr.mxu0 0.0
        %3866 = vmatpush1.msra.mxu0 0.0
        %3867 = vmatprep.subr.mxu0 0.0
        %3868 = vmatpush1.msra.mxu0 0.0
        %3869 = vmatprep.subr.mxu0 0.0
        %3870 = vmatpush1.msra.mxu0 0.0
        %3871 = vmatprep.subr.mxu0 0.0
        %3872 = vmatpush1.msra.mxu0 0.0
        %3873 = vmatprep.subr.mxu0 0.0
        %3874 = vmatpush1.msra.mxu0 0.0
        %3875 = vmatprep.subr.mxu0 0.0
        %3876 = vmatpush1.msra.mxu0 0.0
        %3877 = vmatprep.subr.mxu0 0.0
        %3878 = vmatpush1.msra.mxu0 0.0
        %3879 = vmatprep.subr.mxu0 0.0
        %3880 = vmatpush1.msra.mxu0 0.0
        %3881 = vmatprep.subr.mxu0 0.0
        %3882 = vmatpush1.msra.mxu0 0.0
        %3883 = vmatprep.subr.mxu0 0.0
        %3884 = vmatpush1.msra.mxu0 0.0
        %3885 = vmatprep.subr.mxu0 0.0
        %3886 = vmatpush1.msra.mxu0 0.0
        %3887 = vmatprep.subr.mxu0 0.0
        %3888 = vmatpush1.msra.mxu0 0.0
        %3889 = vmatprep.subr.mxu0 0.0
        %3890 = vmatpush1.msra.mxu0 0.0
        %3891 = vmatprep.subr.mxu0 0.0
        %3892 = vmatpush1.msra.mxu0 0.0
        %3893 = vmatprep.subr.mxu0 0.0
        %3894 = vmatpush1.msra.mxu0 0.0
        %3895 = vmatprep.subr.mxu0 0.0
        %3896 = vmatpush1.msra.mxu0 0.0
        %3897 = vmatprep.subr.mxu0 0.0
        %3898 = vmatpush1.msra.mxu0 0.0
        %3899 = vmatprep.subr.mxu0 0.0
        %3900 = vmatpush1.msra.mxu0 0.0
        %3901 = vmatprep.subr.mxu0 0.0
        %3902 = vmatpush1.msra.mxu0 0.0
        %3903 = vmatprep.subr.mxu0 0.0
        %3904 = vmatpush1.msra.mxu0 0.0
        %3905 = vmatprep.subr.mxu0 0.0
        %3906 = vmatpush1.msra.mxu0 0.0
        %3907 = vmatprep.subr.mxu0 0.0
        %3908 = vmatpush1.msra.mxu0 0.0
        %3909 = vmatprep.subr.mxu0 0.0
        %3910 = vmatpush1.msra.mxu0 0.0
        %3911 = vmatprep.subr.mxu0 0.0
        %3912 = vmatpush1.msra.mxu0 0.0
        %3913 = vmatprep.subr.mxu0 0.0
        %3914 = vmatpush1.msra.mxu0 0.0
        %3915 = vmatprep.subr.mxu0 0.0
        %3916 = vmatpush1.msra.mxu0 0.0
        %3917 = vmatprep.subr.mxu0 0.0
        %3918 = vmatpush1.msra.mxu0 0.0
        %3919 = vmatprep.subr.mxu0 0.0
        %3920 = vmatpush1.msra.mxu0 0.0
        %3921 = vmatprep.subr.mxu0 0.0
        %3922 = vmatpush1.msra.mxu0 0.0
        %3923 = vmatprep.subr.mxu0 0.0
        %3924 = vmatpush1.msra.mxu0 0.0
        %3925 = vmatprep.subr.mxu0 0.0
        %3926 = vmatpush1.msra.mxu0 0.0
        %3927 = vmatprep.mubr.f32.mxu0 0.0
        %3928 = vmatmul.mubr.f32.gmra.mrb[0].mxu0 %v2984
        %v3929 = vpop.f32.mrb[0].mxu0
        %v3930 = vadd.f32 %v2981, %v3929
        %v3931 = vpop.f32.mrb[0].mxu0
        %v3932 = vadd.f32 %v2981, %v3931
        %3933 = vdwg.mxu0
        %3934 = vmatprep.subr.mxu0 %v3062
        %3935 = vmatpush1.msra.mxu0 %v3059
        %3936 = vmatprep.subr.mxu0 0.0
        %3937 = vmatpush1.msra.mxu0 0.0
        %3938 = vmatprep.subr.mxu0 0.0
        %3939 = vmatpush1.msra.mxu0 0.0
        %3940 = vmatprep.subr.mxu0 0.0
        %3941 = vmatpush1.msra.mxu0 0.0
        %3942 = vmatprep.subr.mxu0 0.0
        %3943 = vmatpush1.msra.mxu0 0.0
        %3944 = vmatprep.subr.mxu0 0.0
        %3945 = vmatpush1.msra.mxu0 0.0
        %3946 = vmatprep.subr.mxu0 0.0
        %3947 = vmatpush1.msra.mxu0 0.0
        %3948 = vmatprep.subr.mxu0 0.0
        %3949 = vmatpush1.msra.mxu0 0.0
        %3950 = vmatprep.subr.mxu0 0.0
        %3951 = vmatpush1.msra.mxu0 0.0
        %3952 = vmatprep.subr.mxu0 0.0
        %3953 = vmatpush1.msra.mxu0 0.0
        %3954 = vmatprep.subr.mxu0 0.0
        %3955 = vmatpush1.msra.mxu0 0.0
        %3956 = vmatprep.subr.mxu0 0.0
        %3957 = vmatpush1.msra.mxu0 0.0
        %3958 = vmatprep.subr.mxu0 0.0
        %3959 = vmatpush1.msra.mxu0 0.0
        %3960 = vmatprep.subr.mxu0 0.0
        %3961 = vmatpush1.msra.mxu0 0.0
        %3962 = vmatprep.subr.mxu0 0.0
        %3963 = vmatpush1.msra.mxu0 0.0
        %3964 = vmatprep.subr.mxu0 0.0
        %3965 = vmatpush1.msra.mxu0 0.0
        %3966 = vmatprep.subr.mxu0 0.0
        %3967 = vmatpush1.msra.mxu0 0.0
        %3968 = vmatprep.subr.mxu0 0.0
        %3969 = vmatpush1.msra.mxu0 0.0
        %3970 = vmatprep.subr.mxu0 0.0
        %3971 = vmatpush1.msra.mxu0 0.0
        %3972 = vmatprep.subr.mxu0 0.0
        %3973 = vmatpush1.msra.mxu0 0.0
        %3974 = vmatprep.subr.mxu0 0.0
        %3975 = vmatpush1.msra.mxu0 0.0
        %3976 = vmatprep.subr.mxu0 0.0
        %3977 = vmatpush1.msra.mxu0 0.0
        %3978 = vmatprep.subr.mxu0 0.0
        %3979 = vmatpush1.msra.mxu0 0.0
        %3980 = vmatprep.subr.mxu0 0.0
        %3981 = vmatpush1.msra.mxu0 0.0
        %3982 = vmatprep.subr.mxu0 0.0
        %3983 = vmatpush1.msra.mxu0 0.0
        %3984 = vmatprep.subr.mxu0 0.0
        %3985 = vmatpush1.msra.mxu0 0.0
        %3986 = vmatprep.subr.mxu0 0.0
        %3987 = vmatpush1.msra.mxu0 0.0
        %3988 = vmatprep.subr.mxu0 0.0
        %3989 = vmatpush1.msra.mxu0 0.0
        %3990 = vmatprep.subr.mxu0 0.0
        %3991 = vmatpush1.msra.mxu0 0.0
        %3992 = vmatprep.subr.mxu0 0.0
        %3993 = vmatpush1.msra.mxu0 0.0
        %3994 = vmatprep.subr.mxu0 0.0
        %3995 = vmatpush1.msra.mxu0 0.0
        %3996 = vmatprep.subr.mxu0 0.0
        %3997 = vmatpush1.msra.mxu0 0.0
        %3998 = vmatprep.mubr.f32.mxu0 0.0
        %3999 = vmatmul.mubr.f32.gmra.mrb[0].mxu0 %v2984
        %v4000 = vpop.f32.mrb[0].mxu0
        %v4001 = vadd.f32 %v2981, %v4000
        %v4002 = vpop.f32.mrb[0].mxu0
        %v4003 = vadd.f32 %v2981, %v4002
        %4004 = vdwg.mxu0
        %4005 = vmatprep.subr.mxu0 %v3068
        %4006 = vmatpush1.msra.mxu0 %v3065
        %4007 = vmatprep.subr.mxu0 0.0
        %4008 = vmatpush1.msra.mxu0 0.0
        %4009 = vmatprep.subr.mxu0 0.0
        %4010 = vmatpush1.msra.mxu0 0.0
        %4011 = vmatprep.subr.mxu0 0.0
        %4012 = vmatpush1.msra.mxu0 0.0
        %4013 = vmatprep.subr.mxu0 0.0
        %4014 = vmatpush1.msra.mxu0 0.0
        %4015 = vmatprep.subr.mxu0 0.0
        %4016 = vmatpush1.msra.mxu0 0.0
        %4017 = vmatprep.subr.mxu0 0.0
        %4018 = vmatpush1.msra.mxu0 0.0
        %4019 = vmatprep.subr.mxu0 0.0
        %4020 = vmatpush1.msra.mxu0 0.0
        %4021 = vmatprep.subr.mxu0 0.0
        %4022 = vmatpush1.msra.mxu0 0.0
        %4023 = vmatprep.subr.mxu0 0.0
        %4024 = vmatpush1.msra.mxu0 0.0
        %4025 = vmatprep.subr.mxu0 0.0
        %4026 = vmatpush1.msra.mxu0 0.0
        %4027 = vmatprep.subr.mxu0 0.0
        %4028 = vmatpush1.msra.mxu0 0.0
        %4029 = vmatprep.subr.mxu0 0.0
        %4030 = vmatpush1.msra.mxu0 0.0
        %4031 = vmatprep.subr.mxu0 0.0
        %4032 = vmatpush1.msra.mxu0 0.0
        %4033 = vmatprep.subr.mxu0 0.0
        %4034 = vmatpush1.msra.mxu0 0.0
        %4035 = vmatprep.subr.mxu0 0.0
        %4036 = vmatpush1.msra.mxu0 0.0
        %4037 = vmatprep.subr.mxu0 0.0
        %4038 = vmatpush1.msra.mxu0 0.0
        %4039 = vmatprep.subr.mxu0 0.0
        %4040 = vmatpush1.msra.mxu0 0.0
        %4041 = vmatprep.subr.mxu0 0.0
        %4042 = vmatpush1.msra.mxu0 0.0
        %4043 = vmatprep.subr.mxu0 0.0
        %4044 = vmatpush1.msra.mxu0 0.0
        %4045 = vmatprep.subr.mxu0 0.0
        %4046 = vmatpush1.msra.mxu0 0.0
        %4047 = vmatprep.subr.mxu0 0.0
        %4048 = vmatpush1.msra.mxu0 0.0
        %4049 = vmatprep.subr.mxu0 0.0
        %4050 = vmatpush1.msra.mxu0 0.0
        %4051 = vmatprep.subr.mxu0 0.0
        %4052 = vmatpush1.msra.mxu0 0.0
        %4053 = vmatprep.subr.mxu0 0.0
        %4054 = vmatpush1.msra.mxu0 0.0
        %4055 = vmatprep.subr.mxu0 0.0
        %4056 = vmatpush1.msra.mxu0 0.0
        %4057 = vmatprep.subr.mxu0 0.0
        %4058 = vmatpush1.msra.mxu0 0.0
        %4059 = vmatprep.subr.mxu0 0.0
        %4060 = vmatpush1.msra.mxu0 0.0
        %4061 = vmatprep.subr.mxu0 0.0
        %4062 = vmatpush1.msra.mxu0 0.0
        %4063 = vmatprep.subr.mxu0 0.0
        %4064 = vmatpush1.msra.mxu0 0.0
        %4065 = vmatprep.subr.mxu0 0.0
        %4066 = vmatpush1.msra.mxu0 0.0
        %4067 = vmatprep.subr.mxu0 0.0
        %4068 = vmatpush1.msra.mxu0 0.0
        %4069 = vmatprep.mubr.f32.mxu0 0.0
        %4070 = vmatmul.mubr.f32.gmra.mrb[0].mxu0 %v2984
        %v4071 = vpop.f32.mrb[0].mxu0
        %v4072 = vadd.f32 %v2981, %v4071
        %v4073 = vpop.f32.mrb[0].mxu0
        %v4074 = vadd.f32 %v2981, %v4073
        %4075 = vdwg.mxu0
        %4076 = vmatprep.subr.mxu0 %v3074
        %4077 = vmatpush1.msra.mxu0 %v3071
        %4078 = vmatprep.subr.mxu0 0.0
        %4079 = vmatpush1.msra.mxu0 0.0
        %4080 = vmatprep.subr.mxu0 0.0
        %4081 = vmatpush1.msra.mxu0 0.0
        %4082 = vmatprep.subr.mxu0 0.0
        %4083 = vmatpush1.msra.mxu0 0.0
        %4084 = vmatprep.subr.mxu0 0.0
        %4085 = vmatpush1.msra.mxu0 0.0
        %4086 = vmatprep.subr.mxu0 0.0
        %4087 = vmatpush1.msra.mxu0 0.0
        %4088 = vmatprep.subr.mxu0 0.0
        %4089 = vmatpush1.msra.mxu0 0.0
        %4090 = vmatprep.subr.mxu0 0.0
        %4091 = vmatpush1.msra.mxu0 0.0
        %4092 = vmatprep.subr.mxu0 0.0
        %4093 = vmatpush1.msra.mxu0 0.0
        %4094 = vmatprep.subr.mxu0 0.0
        %4095 = vmatpush1.msra.mxu0 0.0
        %4096 = vmatprep.subr.mxu0 0.0
        %4097 = vmatpush1.msra.mxu0 0.0
        %4098 = vmatprep.subr.mxu0 0.0
        %4099 = vmatpush1.msra.mxu0 0.0
        %4100 = vmatprep.subr.mxu0 0.0
        %4101 = vmatpush1.msra.mxu0 0.0
        %4102 = vmatprep.subr.mxu0 0.0
        %4103 = vmatpush1.msra.mxu0 0.0
        %4104 = vmatprep.subr.mxu0 0.0
        %4105 = vmatpush1.msra.mxu0 0.0
        %4106 = vmatprep.subr.mxu0 0.0
        %4107 = vmatpush1.msra.mxu0 0.0
        %4108 = vmatprep.subr.mxu0 0.0
        %4109 = vmatpush1.msra.mxu0 0.0
        %4110 = vmatprep.subr.mxu0 0.0
        %4111 = vmatpush1.msra.mxu0 0.0
        %4112 = vmatprep.subr.mxu0 0.0
        %4113 = vmatpush1.msra.mxu0 0.0
        %4114 = vmatprep.subr.mxu0 0.0
        %4115 = vmatpush1.msra.mxu0 0.0
        %4116 = vmatprep.subr.mxu0 0.0
        %4117 = vmatpush1.msra.mxu0 0.0
        %4118 = vmatprep.subr.mxu0 0.0
        %4119 = vmatpush1.msra.mxu0 0.0
        %4120 = vmatprep.subr.mxu0 0.0
        %4121 = vmatpush1.msra.mxu0 0.0
        %4122 = vmatprep.subr.mxu0 0.0
        %4123 = vmatpush1.msra.mxu0 0.0
        %4124 = vmatprep.subr.mxu0 0.0
        %4125 = vmatpush1.msra.mxu0 0.0
        %4126 = vmatprep.subr.mxu0 0.0
        %4127 = vmatpush1.msra.mxu0 0.0
        %4128 = vmatprep.subr.mxu0 0.0
        %4129 = vmatpush1.msra.mxu0 0.0
        %4130 = vmatprep.subr.mxu0 0.0
        %4131 = vmatpush1.msra.mxu0 0.0
        %4132 = vmatprep.subr.mxu0 0.0
        %4133 = vmatpush1.msra.mxu0 0.0
        %4134 = vmatprep.subr.mxu0 0.0
        %4135 = vmatpush1.msra.mxu0 0.0
        %4136 = vmatprep.subr.mxu0 0.0
        %4137 = vmatpush1.msra.mxu0 0.0
        %4138 = vmatprep.subr.mxu0 0.0
        %4139 = vmatpush1.msra.mxu0 0.0
        %4140 = vmatprep.mubr.f32.mxu0 0.0
        %4141 = vmatmul.mubr.f32.gmra.mrb[0].mxu0 %v2984
        %v4142 = vpop.f32.mrb[0].mxu0
        %v4143 = vadd.f32 %v2981, %v4142
        %v4144 = vpop.f32.mrb[0].mxu0
        %v4145 = vadd.f32 %v2981, %v4144
        %4146 = vdwg.mxu0
        %4147 = vmatprep.subr.mxu0 %v3080
        %4148 = vmatpush1.msra.mxu0 %v3077
        %4149 = vmatprep.subr.mxu0 0.0
        %4150 = vmatpush1.msra.mxu0 0.0
        %4151 = vmatprep.subr.mxu0 0.0
        %4152 = vmatpush1.msra.mxu0 0.0
        %4153 = vmatprep.subr.mxu0 0.0
        %4154 = vmatpush1.msra.mxu0 0.0
        %4155 = vmatprep.subr.mxu0 0.0
        %4156 = vmatpush1.msra.mxu0 0.0
        %4157 = vmatprep.subr.mxu0 0.0
        %4158 = vmatpush1.msra.mxu0 0.0
        %4159 = vmatprep.subr.mxu0 0.0
        %4160 = vmatpush1.msra.mxu0 0.0
        %4161 = vmatprep.subr.mxu0 0.0
        %4162 = vmatpush1.msra.mxu0 0.0
        %4163 = vmatprep.subr.mxu0 0.0
        %4164 = vmatpush1.msra.mxu0 0.0
        %4165 = vmatprep.subr.mxu0 0.0
        %4166 = vmatpush1.msra.mxu0 0.0
        %4167 = vmatprep.subr.mxu0 0.0
        %4168 = vmatpush1.msra.mxu0 0.0
        %4169 = vmatprep.subr.mxu0 0.0
        %4170 = vmatpush1.msra.mxu0 0.0
        %4171 = vmatprep.subr.mxu0 0.0
        %4172 = vmatpush1.msra.mxu0 0.0
        %4173 = vmatprep.subr.mxu0 0.0
        %4174 = vmatpush1.msra.mxu0 0.0
        %4175 = vmatprep.subr.mxu0 0.0
        %4176 = vmatpush1.msra.mxu0 0.0
        %4177 = vmatprep.subr.mxu0 0.0
        %4178 = vmatpush1.msra.mxu0 0.0
        %4179 = vmatprep.subr.mxu0 0.0
        %4180 = vmatpush1.msra.mxu0 0.0
        %4181 = vmatprep.subr.mxu0 0.0
        %4182 = vmatpush1.msra.mxu0 0.0
        %4183 = vmatprep.subr.mxu0 0.0
        %4184 = vmatpush1.msra.mxu0 0.0
        %4185 = vmatprep.subr.mxu0 0.0
        %4186 = vmatpush1.msra.mxu0 0.0
        %4187 = vmatprep.subr.mxu0 0.0
        %4188 = vmatpush1.msra.mxu0 0.0
        %4189 = vmatprep.subr.mxu0 0.0
        %4190 = vmatpush1.msra.mxu0 0.0
        %4191 = vmatprep.subr.mxu0 0.0
        %4192 = vmatpush1.msra.mxu0 0.0
        %4193 = vmatprep.subr.mxu0 0.0
        %4194 = vmatpush1.msra.mxu0 0.0
        %4195 = vmatprep.subr.mxu0 0.0
        %4196 = vmatpush1.msra.mxu0 0.0
        %4197 = vmatprep.subr.mxu0 0.0
        %4198 = vmatpush1.msra.mxu0 0.0
        %4199 = vmatprep.subr.mxu0 0.0
        %4200 = vmatpush1.msra.mxu0 0.0
        %4201 = vmatprep.subr.mxu0 0.0
        %4202 = vmatpush1.msra.mxu0 0.0
        %4203 = vmatprep.subr.mxu0 0.0
        %4204 = vmatpush1.msra.mxu0 0.0
        %4205 = vmatprep.subr.mxu0 0.0
        %4206 = vmatpush1.msra.mxu0 0.0
        %4207 = vmatprep.subr.mxu0 0.0
        %4208 = vmatpush1.msra.mxu0 0.0
        %4209 = vmatprep.subr.mxu0 0.0
        %4210 = vmatpush1.msra.mxu0 0.0
        %4211 = vmatprep.mubr.f32.mxu0 0.0
        %4212 = vmatmul.mubr.f32.gmra.mrb[0].mxu0 %v2984
        %v4213 = vpop.f32.mrb[0].mxu0
        %v4214 = vadd.f32 %v2981, %v4213
        %v4215 = vpop.f32.mrb[0].mxu0
        %v4216 = vadd.f32 %v2981, %v4215
        %4217 = vdwg.mxu0
        %4218 = vst [vmem:[%s352] sm:$0xff] %v3149
        %4219 = vst [vmem:[%s352 + $0x8] sm:$0xff] %v3151
        %4220 = vst [vmem:[%s352 + $0x10] sm:$0xff] %v3220
        %4221 = vst [vmem:[%s352 + $0x18] sm:$0xff] %v3222
        %4222 = vst [vmem:[%s352 + $0x20] sm:$0xff] %v3291
        %4223 = vst [vmem:[%s352 + $0x28] sm:$0xff] %v3293
        %4224 = vst [vmem:[%s352 + $0x30] sm:$0xff] %v3362
        %4225 = vst [vmem:[%s352 + $0x38] sm:$0xff] %v3364
        %4226 = vst [vmem:[%s352 + $0x40] sm:$0xff] %v3433
        %4227 = vst [vmem:[%s352 + $0x48] sm:$0xff] %v3435
        %4228 = vst [vmem:[%s352 + $0x50] sm:$0xff] %v3504
        %4229 = vst [vmem:[%s352 + $0x58] sm:$0xff] %v3506
        %4230 = vst [vmem:[%s352 + $0x60] sm:$0xff] %v3575
        %4231 = vst [vmem:[%s352 + $0x68] sm:$0xff] %v3577
        %4232 = vst [vmem:[%s352 + $0x70] sm:$0xff] %v3646
        %4233 = vst [vmem:[%s352 + $0x78] sm:$0xff] %v3648
        %4234 = vst [vmem:[%s352 + $0x80] sm:$0xff] %v3717
        %4235 = vst [vmem:[%s352 + $0x88] sm:$0xff] %v3719
        %4236 = vst [vmem:[%s352 + $0x90] sm:$0xff] %v3788
        %4237 = vst [vmem:[%s352 + $0x98] sm:$0xff] %v3790
        %4238 = vst [vmem:[%s352 + $0xa0] sm:$0xff] %v3859
        %4239 = vst [vmem:[%s352 + $0xa8] sm:$0xff] %v3861
        %4240 = vst [vmem:[%s352 + $0xb0] sm:$0xff] %v3930
        %4241 = vst [vmem:[%s352 + $0xb8] sm:$0xff] %v3932
        %4242 = vst [vmem:[%s352 + $0xc0] sm:$0xff] %v4001
        %4243 = vst [vmem:[%s352 + $0xc8] sm:$0xff] %v4003
        %4244 = vst [vmem:[%s352 + $0xd0] sm:$0xff] %v4072
        %4245 = vst [vmem:[%s352 + $0xd8] sm:$0xff] %v4074
        %4246 = vst [vmem:[%s352 + $0xe0] sm:$0xff] %v4143
        %4247 = vst [vmem:[%s352 + $0xe8] sm:$0xff] %v4145
        %4248 = vst [vmem:[%s352 + $0xf0] sm:$0xff] %v4214
        %4249 = vst [vmem:[%s352 + $0xf8] sm:$0xff] %v4216
        %s4250 = sand.u32 %s208, 1
        %s4251 = scalar_lea.sflag [#allocation4], %s4250
        %s4252 = sand.u32 %s208, 1
        %s4253 = smul.addr %s4252, 256
        %s4254 = scalar_lea.vmem [#allocation9], %s4253
        // Predicated region
        $region65: #{tpu_custom_call.1} parent=51 // pred_check
          %p4255 = pneg %p218
        $region66: #{tpu_custom_call.1} parent=51 // pred_check_branch
          %4257 = sbr.rel (%p4255) target = $region68
        $region67: #{tpu_custom_call.1} parent=51 // pred_region
          %s4259 = ssub.s32 4096, 4096
          %4260 = vsyncadd %s4251, %s4259
          %s4261 = smul.addr %s27, 32
          %s4262 = smul.addr %s4261, 128
          %s4263 = scalar_lea.hbm %s8, %s4262
          %s4265 = sshll.u32 %s4254, 4
          %s4266 = int_to_ptr.vmem [resolvable:$true] %s4265
          %4268 = dma.vmem_to_hbm [thread:$0]  %s4266, 4096, %s4263, %s4251
        $region68: #{tpu_custom_call.1} parent=51 // pred_fallthru
          _
      $region52: #{tpu_custom_call.1} parent=5 // pred_fallthru
        _
      %p4269 = scmp.le.s32.totalorder 2, %s22
      // Predicated region
      $region69: #{tpu_custom_call.1} parent=5 // pred_check
        %p4270 = pneg %p4269
      $region70: #{tpu_custom_call.1} parent=5 // pred_check_branch
        %4272 = sbr.rel (%p4270) target = $region72
      $region71: #{tpu_custom_call.1} parent=5 // pred_region
        %s4273 = ssub.s32 %s22, 2
        // Predicated region
        $region73: #{tpu_custom_call.1} parent=71 // pred_check
          %p4274 = pneg %p224
        $region74: #{tpu_custom_call.1} parent=71 // pred_check_branch
          %4276 = sbr.rel (%p4274) target = $region76
        $region75: #{tpu_custom_call.1} parent=71 // pred_region
          %s4277 = sand.u32 %s209, 1
          %s4278 = scalar_lea.sflag [#allocation4], %s4277
          %s4279 = sand.u32 %s209, 1
          %s4280 = smul.addr %s4279, 256
          %s4281 = scalar_lea.vmem [#allocation9], %s4280
          %4282 = dma.done %s4278, 4096
        $region76: #{tpu_custom_call.1} parent=71 // pred_fallthru
          _
      $region72: #{tpu_custom_call.1} parent=5 // pred_fallthru
        _
    $region6: #{tpu_custom_call.1} parent=1 // loop_footer
      %s26 = sadd.s32 1, %s22
    $region7: #{tpu_custom_call.1} parent=1 // loop_footer_branch
      %21 = sbr.rel target = $region3
    $region8: #{tpu_custom_call.1} parent=1 // loop_exit
      _
    %4283 = vsyncpa [#allocation3], 1
    %s4284 = scalar_lea.sflag [#allocation3], 1
    %4285 = vsyncpa %s4284, 1
    %4286 = vsyncpa [#allocation7], 1
    %4287 = vsyncpa [#allocation4], 1
    %s4288 = scalar_lea.sflag [#allocation4], 1
    %4289 = vsyncpa %s4288, 1
    %4290 = vsyncpa [#allocation5], 1
    %s4291 = scalar_lea.sflag [#allocation5], 1
    %4292 = vsyncpa %s4291, 1

// kernel: tpu_custom_call.1
$region0: #{tpu_custom_call.1}
  #allocation0 [shape = 'u32[]', space=smem, size = 0x4, offset = 0x4, fixed_abs, tag = 'smem constant byte address 0x4 - core index']
  #allocation1 [shape = 'u32[144,128]{1,0:T(1,128)}', space=vmem, size = 0x12000, scoped, tag = 'internal scratch']
  %s0 = inlined_call_operand.hbm [shape: f32[2,4,4,256], index: 0, kind: input, shape index: {}]
  %s1 = inlined_call_operand.vmem [shape: f32[4,1,1], index: 1, kind: input, shape index: {}]
  %s2 = inlined_call_operand.vmem [shape: f32[4,1,1], index: 2, kind: input, shape index: {}]
  %s3 = inlined_call_operand.hbm [shape: f32[256,1024], index: 3, kind: input, shape index: {}]
  %s4 = inlined_call_operand.vmem [shape: f32[4,4], index: 4, kind: input, shape index: {}]
  %s5 = inlined_call_operand.vmem [shape: f32[8,4], index: 5, kind: input, shape index: {}]
  %s6 = inlined_call_operand.vmem [shape: f32[8,1], index: 6, kind: input, shape index: {}]
  %s7 = inlined_call_operand.vmem [shape: f32[2], index: 7, kind: input, shape index: {}]
  %s8 = inlined_call_operand.hbm [shape: f32[2,8,4096], index: 8, kind: output, shape index: {}]
  %s9 = sld [smem:[#allocation0]]
  $region77: #{tpu_custom_call.1} parent=0
    _
  %s11 = ssub.s32 1, %s9
  %s12 = scalar_select 0, %s11, %s9
  $region1: #{tpu_custom_call.1} parent=0
    #allocation2 [shape = 'u8[32768]{0}', space=vmem, size = 0x8000, scoped, tag = 'input window, operand 0']
    #allocation3 [shape = 's32[2]{0}', space=sflag, size = 0x8, scoped, tag = 'scoped memory for tpu_custom_call.1']
    #allocation4 [shape = 's32[2]{0}', space=sflag, size = 0x8, scoped, tag = 'scoped memory for tpu_custom_call.1']
    #allocation5 [shape = 's32[2]{0}', space=sflag, size = 0x8, scoped, tag = 'scoped memory for tpu_custom_call.1']
    #allocation6 [shape = 'u8[1048576]{0}', space=vmem, size = 0x100000, scoped, tag = 'input window, operand 3, single buffered']
    #allocation7 [shape = 's32[1]{0}', space=sflag, size = 0x4, scoped, tag = 'scoped memory for tpu_custom_call.1']
    #allocation8 [shape = 'u8[512]{0}', space=smem, size = 0x200, scoped, tag = 'input window, operand 7, single buffered']
    #allocation9 [shape = 'u8[262144]{0}', space=vmem, size = 0x40000, scoped, tag = 'output window, operand 0']
    %13 = vsyncpa [#allocation3], 0
    %s14 = scalar_lea.sflag [#allocation3], 1
    %15 = vsyncpa %s14, 0
    %16 = vsyncpa [#allocation7], 0
    %17 = vsyncpa [#allocation5], 0
    %18 = vsyncpa [#allocation4], 0
    %s19 = scalar_lea.sflag [#allocation4], 1
    %20 = vsyncpa %s19, 0
    loop: start=0, step=1, limit=4
    $region2: #{tpu_custom_call.1} parent=1 // loop_pre_header
      _
    $region3: #{tpu_custom_call.1} parent=1 // loop_header
      %s22 = sphi 0, %s26
      %p23 = scmp.ge.s32.totalorder %s22, 4
      %s32 = sphi 0, %s34
      %s35 = sphi 0, %s32
      %s36 = sphi 0, %s35
      %s52 = sphi 0, %s36
      %s56 = sphi 0, %s56
      %s58 = sphi 0, %s56
      %s59 = sphi 0, %s58
      %s73 = sphi 0, %s59
      %s77 = sphi 0, %s77
      %s79 = sphi 0, %s77
      %s80 = sphi 0, %s79
      %s94 = sphi 0, %s80
      %s98 = sphi 0, %s98
      %s100 = sphi 0, %s98
      %s101 = sphi 0, %s100
      %s115 = sphi 0, %s101
      %s119 = sphi 0, %s119
      %s121 = sphi 0, %s119
      %s122 = sphi 0, %s121
      %s136 = sphi 0, %s122
      %s140 = sphi 0, %s140
      %s142 = sphi 0, %s140
      %s143 = sphi 0, %s142
      %s157 = sphi 0, %s143
      %s161 = sphi 0, %s161
      %s163 = sphi 0, %s161
      %s164 = sphi 0, %s163
      %s178 = sphi 0, %s164
      %s182 = sphi 0, %s182
      %s184 = sphi 0, %s182
      %s185 = sphi 0, %s184
      %s199 = sphi 0, %s185
      %s205 = sphi 0, %s207
      %s208 = sphi 0, %s205
      %s209 = sphi 0, %s208
      %s225 = sphi 0, %s209
    $region4: #{tpu_custom_call.1} parent=1 // loop_header_branch
      %25 = sbr.rel (%p23) target = $region8
    $region5: #{tpu_custom_call.1} parent=1 // loop_body
      %s27 = ssub.s32 %s22, 1
      %s28 = ssub.s32 %s22, 2
      %s29 = sadd.s32 %s22, 1
      %s30 = ssub.s32 %s22, %s29
      %p31 = scmp.eq.s32.totalorder %s30, 0
      %s33 = sadd.s32 %s32, 1
      %s34 = scalar_select %p31, %s32, %s33
      %p37 = pneg %p31
      %p38 = scmp.eq.s32.totalorder %s22, 1
      %p39 = por %p37, %p38
      %p40 = scmp.ne.s32.totalorder %s32, %s35
      %p41 = scmp.eq.s32.totalorder %s22, 0
      %p42 = por %p40, %p41
      %p43 = scmp.ne.s32.totalorder %s32, %s35
      %p44 = scmp.eq.s32.totalorder %s27, 1
      %p45 = por %p43, %p44
      %p46 = scmp.ne.s32.totalorder %s35, %s36
      %p47 = scmp.eq.s32.totalorder %s27, 0
      %p48 = por %p46, %p47
      %p49 = scmp.ne.s32.totalorder %s35, %s36
      %p50 = scmp.eq.s32.totalorder %s28, 1
      %p51 = por %p49, %p50
      %p53 = scmp.ne.s32.totalorder %s36, %s52
      %p54 = scmp.eq.s32.totalorder %s28, 0
      %p55 = por %p53, %p54
      %s57 = sadd.s32 %s56, 1
      %p60 = scmp.eq.s32.totalorder %s22, 1
      %p61 = scmp.ne.s32.totalorder %s56, %s58
      %p62 = scmp.eq.s32.totalorder %s22, 0
      %p63 = por %p61, %p62
      %p64 = scmp.ne.s32.totalorder %s56, %s58
      %p65 = scmp.eq.s32.totalorder %s27, 1
      %p66 = por %p64, %p65
      %p67 = scmp.ne.s32.totalorder %s58, %s59
      %p68 = scmp.eq.s32.totalorder %s27, 0
      %p69 = por %p67, %p68
      %p70 = scmp.ne.s32.totalorder %s58, %s59
      %p71 = scmp.eq.s32.totalorder %s28, 1
      %p72 = por %p70, %p71
      %p74 = scmp.ne.s32.totalorder %s59, %s73
      %p75 = scmp.eq.s32.totalorder %s28, 0
      %p76 = por %p74, %p75
      %s78 = sadd.s32 %s77, 1
      %p81 = scmp.eq.s32.totalorder %s22, 1
      %p82 = scmp.ne.s32.totalorder %s77, %s79
      %p83 = scmp.eq.s32.totalorder %s22, 0
      %p84 = por %p82, %p83
      %p85 = scmp.ne.s32.totalorder %s77, %s79
      %p86 = scmp.eq.s32.totalorder %s27, 1
      %p87 = por %p85, %p86
      %p88 = scmp.ne.s32.totalorder %s79, %s80
      %p89 = scmp.eq.s32.totalorder %s27, 0
      %p90 = por %p88, %p89
      %p91 = scmp.ne.s32.totalorder %s79, %s80
      %p92 = scmp.eq.s32.totalorder %s28, 1
      %p93 = por %p91, %p92
      %p95 = scmp.ne.s32.totalorder %s80, %s94
      %p96 = scmp.eq.s32.totalorder %s28, 0
      %p97 = por %p95, %p96
      %s99 = sadd.s32 %s98, 1
      %p102 = scmp.eq.s32.totalorder %s22, 1
      %p103 = scmp.ne.s32.totalorder %s98, %s100
      %p104 = scmp.eq.s32.totalorder %s22, 0
      %p105 = por %p103, %p104
      %p106 = scmp.ne.s32.totalorder %s98, %s100
      %p107 = scmp.eq.s32.totalorder %s27, 1
      %p108 = por %p106, %p107
      %p109 = scmp.ne.s32.totalorder %s100, %s101
      %p110 = scmp.eq.s32.totalorder %s27, 0
      %p111 = por %p109, %p110
      %p112 = scmp.ne.s32.totalorder %s100, %s101
      %p113 = scmp.eq.s32.totalorder %s28, 1
      %p114 = por %p112, %p113
      %p116 = scmp.ne.s32.totalorder %s101, %s115
      %p117 = scmp.eq.s32.totalorder %s28, 0
      %p118 = por %p116, %p117
      %s120 = sadd.s32 %s119, 1
      %p123 = scmp.eq.s32.totalorder %s22, 1
      %p124 = scmp.ne.s32.totalorder %s119, %s121
      %p125 = scmp.eq.s32.totalorder %s22, 0
      %p126 = por %p124, %p125
      %p127 = scmp.ne.s32.totalorder %s119, %s121
      %p128 = scmp.eq.s32.totalorder %s27, 1
      %p129 = por %p127, %p128
      %p130 = scmp.ne.s32.totalorder %s121, %s122
      %p131 = scmp.eq.s32.totalorder %s27, 0
      %p132 = por %p130, %p131
      %p133 = scmp.ne.s32.totalorder %s121, %s122
      %p134 = scmp.eq.s32.totalorder %s28, 1
      %p135 = por %p133, %p134
      %p137 = scmp.ne.s32.totalorder %s122, %s136
      %p138 = scmp.eq.s32.totalorder %s28, 0
      %p139 = por %p137, %p138
      %s141 = sadd.s32 %s140, 1
      %p144 = scmp.eq.s32.totalorder %s22, 1
      %p145 = scmp.ne.s32.totalorder %s140, %s142
      %p146 = scmp.eq.s32.totalorder %s22, 0
      %p147 = por %p145, %p146
      %p148 = scmp.ne.s32.totalorder %s140, %s142
      %p149 = scmp.eq.s32.totalorder %s27, 1
      %p150 = por %p148, %p149
      %p151 = scmp.ne.s32.totalorder %s142, %s143
      %p152 = scmp.eq.s32.totalorder %s27, 0
      %p153 = por %p151, %p152
      %p154 = scmp.ne.s32.totalorder %s142, %s143
      %p155 = scmp.eq.s32.totalorder %s28, 1
      %p156 = por %p154, %p155
      %p158 = scmp.ne.s32.totalorder %s143, %s157
      %p159 = scmp.eq.s32.totalorder %s28, 0
      %p160 = por %p158, %p159
      %s162 = sadd.s32 %s161, 1
      %p165 = scmp.eq.s32.totalorder %s22, 1
      %p166 = scmp.ne.s32.totalorder %s161, %s163
      %p167 = scmp.eq.s32.totalorder %s22, 0
      %p168 = por %p166, %p167
      %p169 = scmp.ne.s32.totalorder %s161, %s163
      %p170 = scmp.eq.s32.totalorder %s27, 1
      %p171 = por %p169, %p170
      %p172 = scmp.ne.s32.totalorder %s163, %s164
      %p173 = scmp.eq.s32.totalorder %s27, 0
      %p174 = por %p172, %p173
      %p175 = scmp.ne.s32.totalorder %s163, %s164
      %p176 = scmp.eq.s32.totalorder %s28, 1
      %p177 = por %p175, %p176
      %p179 = scmp.ne.s32.totalorder %s164, %s178
      %p180 = scmp.eq.s32.totalorder %s28, 0
      %p181 = por %p179, %p180
      %s183 = sadd.s32 %s182, 1
      %p186 = scmp.eq.s32.totalorder %s22, 1
      %p187 = scmp.ne.s32.totalorder %s182, %s184
      %p188 = scmp.eq.s32.totalorder %s22, 0
      %p189 = por %p187, %p188
      %p190 = scmp.ne.s32.totalorder %s182, %s184
      %p191 = scmp.eq.s32.totalorder %s27, 1
      %p192 = por %p190, %p191
      %p193 = scmp.ne.s32.totalorder %s184, %s185
      %p194 = scmp.eq.s32.totalorder %s27, 0
      %p195 = por %p193, %p194
      %p196 = scmp.ne.s32.totalorder %s184, %s185
      %p197 = scmp.eq.s32.totalorder %s28, 1
      %p198 = por %p196, %p197
      %p200 = scmp.ne.s32.totalorder %s185, %s199
      %p201 = scmp.eq.s32.totalorder %s28, 0
      %p202 = por %p200, %p201
      %s203 = ssub.s32 %s22, %s29
      %p204 = scmp.eq.s32.totalorder %s203, 0
      %s206 = sadd.s32 %s205, 1
      %s207 = scalar_select %p204, %s205, %s206
      %p210 = pneg %p204
      %p211 = scmp.eq.s32.totalorder %s22, 1
      %p212 = por %p210, %p211
      %p213 = scmp.ne.s32.totalorder %s205, %s208
      %p214 = scmp.eq.s32.totalorder %s22, 0
      %p215 = por %p213, %p214
      %p216 = scmp.ne.s32.totalorder %s205, %s208
      %p217 = scmp.eq.s32.totalorder %s27, 1
      %p218 = por %p216, %p217
      %p219 = scmp.ne.s32.totalorder %s208, %s209
      %p220 = scmp.eq.s32.totalorder %s27, 0
      %p221 = por %p219, %p220
      %p222 = scmp.ne.s32.totalorder %s208, %s209
      %p223 = scmp.eq.s32.totalorder %s28, 1
      %p224 = por %p222, %p223
      %p226 = scmp.ne.s32.totalorder %s209, %s225
      %p227 = scmp.eq.s32.totalorder %s28, 0
      %p228 = por %p226, %p227
      %p229 = scmp.le.s32.totalorder 1, %s22
      %p230 = scmp.lt.s32.totalorder %s22, 3
      %p231 = pnand %p229, %p230
      %p232 = pneg %p231
      // Predicated region
      $region9: #{tpu_custom_call.1} parent=5 // pred_check
        _
      $region10: #{tpu_custom_call.1} parent=5 // pred_check_branch
        %234 = sbr.rel (%p231) target = $region12
      $region11: #{tpu_custom_call.1} parent=5 // pred_region
        %s235 = ssub.s32 %s22, 1
        // Predicated region
        $region13: #{tpu_custom_call.1} parent=11 // pred_check
          %p236 = pneg %p69
        $region14: #{tpu_custom_call.1} parent=11 // pred_check_branch
          %238 = sbr.rel (%p236) target = $region16
        $region15: #{tpu_custom_call.1} parent=11 // pred_region
          _
        $region16: #{tpu_custom_call.1} parent=11 // pred_fallthru
          _
        // Predicated region
        $region17: #{tpu_custom_call.1} parent=11 // pred_check
          %p239 = pneg %p90
        $region18: #{tpu_custom_call.1} parent=11 // pred_check_branch
          %241 = sbr.rel (%p239) target = $region20
        $region19: #{tpu_custom_call.1} parent=11 // pred_region
          _
        $region20: #{tpu_custom_call.1} parent=11 // pred_fallthru
          _
        // Predicated region
        $region21: #{tpu_custom_call.1} parent=11 // pred_check
          %p242 = pneg %p111
        $region22: #{tpu_custom_call.1} parent=11 // pred_check_branch
          %244 = sbr.rel (%p242) target = $region24
        $region23: #{tpu_custom_call.1} parent=11 // pred_region
          %s246 = ssub.s32 32768, 32768
          %247 = vsyncadd [#allocation7], %s246
          %s248 = sshll.u32 [#allocation6], 4
          %s249 = int_to_ptr.vmem [resolvable:$true] %s248
          %254 = dma.hbm_to_vmem [thread:$0]  %s3, 32768, %s249, [#allocation7], 1024, 1024, 64
        $region24: #{tpu_custom_call.1} parent=11 // pred_fallthru
          _
        // Predicated region
        $region25: #{tpu_custom_call.1} parent=11 // pred_check
          %p255 = pneg %p132
        $region26: #{tpu_custom_call.1} parent=11 // pred_check_branch
          %257 = sbr.rel (%p255) target = $region28
        $region27: #{tpu_custom_call.1} parent=11 // pred_region
          _
        $region28: #{tpu_custom_call.1} parent=11 // pred_fallthru
          _
        // Predicated region
        $region29: #{tpu_custom_call.1} parent=11 // pred_check
          %p258 = pneg %p153
        $region30: #{tpu_custom_call.1} parent=11 // pred_check_branch
          %260 = sbr.rel (%p258) target = $region32
        $region31: #{tpu_custom_call.1} parent=11 // pred_region
          _
        $region32: #{tpu_custom_call.1} parent=11 // pred_fallthru
          _
        // Predicated region
        $region33: #{tpu_custom_call.1} parent=11 // pred_check
          %p261 = pneg %p174
        $region34: #{tpu_custom_call.1} parent=11 // pred_check_branch
          %263 = sbr.rel (%p261) target = $region36
        $region35: #{tpu_custom_call.1} parent=11 // pred_region
          _
        $region36: #{tpu_custom_call.1} parent=11 // pred_fallthru
          _
        // Predicated region
        $region37: #{tpu_custom_call.1} parent=11 // pred_check
          %p264 = pneg %p195
        $region38: #{tpu_custom_call.1} parent=11 // pred_check_branch
          %266 = sbr.rel (%p264) target = $region40
        $region39: #{tpu_custom_call.1} parent=11 // pred_region
          %s268 = ssub.s32 16, 16
          %269 = vsyncadd [#allocation5], %s268
          %s271 = sshll.u32 %s7, 4
          %s272 = int_to_ptr.vmem [resolvable:$true] %s271
          %274 = dma.vmem_to_smem %s272, 16, [#allocation8], [#allocation5]
        $region40: #{tpu_custom_call.1} parent=11 // pred_fallthru
          _
      $region12: #{tpu_custom_call.1} parent=5 // pred_fallthru
        _
      %p275 = scmp.lt.s32.totalorder %s22, 2
      // Predicated region
      $region41: #{tpu_custom_call.1} parent=5 // pred_check
        %p276 = pneg %p275
      $region42: #{tpu_custom_call.1} parent=5 // pred_check_branch
        %278 = sbr.rel (%p276) target = $region44
      $region43: #{tpu_custom_call.1} parent=5 // pred_region
        // Predicated region
        $region45: #{tpu_custom_call.1} parent=43 // pred_check
          %p279 = pneg %p42
        $region46: #{tpu_custom_call.1} parent=43 // pred_check_branch
          %281 = sbr.rel (%p279) target = $region48
        $region47: #{tpu_custom_call.1} parent=43 // pred_region
          %s282 = sand.u32 %s32, 1
          %s283 = scalar_lea.sflag [#allocation3], %s282
          %s284 = sand.u32 %s32, 1
          %s285 = smul.addr %s284, 32
          %s286 = scalar_lea.vmem [#allocation2], %s285
          %s288 = ssub.s32 512, 512
          %289 = vsyncadd %s283, %s288
          %s290 = smul.addr %s22, 8
          %s291 = smul.addr %s290, 64
          %s292 = scalar_lea.hbm %s0, %s291
          %s293 = sshll.u32 %s286, 4
          %s294 = int_to_ptr.vmem [resolvable:$true] %s293
          %299 = dma.hbm_to_vmem [thread:$0]  %s292, 512, %s294, %s283, 128, 128, 8
        $region48: #{tpu_custom_call.1} parent=43 // pred_fallthru
          _
      $region44: #{tpu_custom_call.1} parent=5 // pred_fallthru
        _
      %p300 = scmp.le.s32.totalorder 1, %s22
      %p301 = scmp.lt.s32.totalorder %s22, 3
      %p302 = pnand %p300, %p301
      %p303 = pneg %p302
      // Predicated region
      $region49: #{tpu_custom_call.1} parent=5 // pred_check
        _
      $region50: #{tpu_custom_call.1} parent=5 // pred_check_branch
        %305 = sbr.rel (%p302) target = $region52
      $region51: #{tpu_custom_call.1} parent=5 // pred_region
        %s306 = ssub.s32 %s22, 1
        %s307 = sand.u32 %s35, 1
        %s308 = scalar_lea.sflag [#allocation3], %s307
        %s309 = sand.u32 %s35, 1
        %s310 = smul.addr %s309, 32
        %s311 = scalar_lea.vmem [#allocation2], %s310
        // Predicated region
        $region53: #{tpu_custom_call.1} parent=51 // pred_check
          %p312 = pneg %p48
        $region54: #{tpu_custom_call.1} parent=51 // pred_check_branch
          %314 = sbr.rel (%p312) target = $region56
        $region55: #{tpu_custom_call.1} parent=51 // pred_region
          %315 = dma.done %s308, 512
        $region56: #{tpu_custom_call.1} parent=51 // pred_fallthru
          _
        // Predicated region
        $region57: #{tpu_custom_call.1} parent=51 // pred_check
          %p316 = pneg %p111
        $region58: #{tpu_custom_call.1} parent=51 // pred_check_branch
          %318 = sbr.rel (%p316) target = $region60
        $region59: #{tpu_custom_call.1} parent=51 // pred_region
          %319 = dma.done [#allocation7], 32768
        $region60: #{tpu_custom_call.1} parent=51 // pred_fallthru
          _
        // Predicated region
        $region61: #{tpu_custom_call.1} parent=51 // pred_check
          %p320 = pneg %p195
        $region62: #{tpu_custom_call.1} parent=51 // pred_check_branch
          %322 = sbr.rel (%p320) target = $region64
        $region63: #{tpu_custom_call.1} parent=51 // pred_region
          %323 = dma.done [#allocation5], 16
        $region64: #{tpu_custom_call.1} parent=51 // pred_fallthru
          _
        %324 = sfence
        %s325 = sand.u32 %s35, 1
        %s326 = scalar_lea.sflag [#allocation3], %s325
        %s327 = sand.u32 %s35, 1
        %s328 = smul.addr %s327, 32
        %s329 = scalar_lea.vmem [#allocation2], %s328
        %p330 = pneg %p48
        %p331 = pneg %p45
        %p332 = pneg %p69
        %p333 = pneg %p66
        %p334 = pneg %p90
        %p335 = pneg %p87
        %p336 = pneg %p111
        %p337 = pneg %p108
        %p338 = pneg %p132
        %p339 = pneg %p129
        %p340 = pneg %p153
        %p341 = pneg %p150
        %p342 = pneg %p174
        %p343 = pneg %p171
        %p344 = pneg %p195
        %p345 = pneg %p192
        %p346 = pneg %p221
        %p347 = pneg %p218
        %s348 = sand.u32 %s208, 1
        %s349 = scalar_lea.sflag [#allocation4], %s348
        %s350 = sand.u32 %s208, 1
        %s351 = smul.addr %s350, 256
        %s352 = scalar_lea.vmem [#allocation9], %s351
        %v353 = vld [vmem:[%s311] sm:$0xff]
        %v354 = vld [vmem:[%s311 + $0x8] sm:$0xff]
        %v355 = vld [vmem:[%s311 + $0x10] sm:$0xff]
        %v356 = vld [vmem:[%s311 + $0x18] sm:$0xff]
        %v361 = vcombine.high %v353, %v353
        %v362 = vcombine.high %v354, %v354
        %v363 = vcombine.high %v355, %v355
        %v364 = vcombine.high %v356, %v356
        %vm369 = vcmask 1043456
        %v370 = vsel %vm369, %v353, 0.0
        %v371 = vsel %vm369, %v354, 0.0
        %v372 = vadd.f32 %v370, %v371
        %v373 = vsel %vm369, %v355, 0.0
        %v374 = vadd.f32 %v372, %v373
        %v375 = vsel %vm369, %v356, 0.0
        %v376 = vadd.f32 %v374, %v375
        %v377 = vsel %vm369, %v361, 0.0
        %v378 = vsel %vm369, %v362, 0.0
        %v379 = vadd.f32 %v377, %v378
        %v380 = vsel %vm369, %v363, 0.0
        %v381 = vadd.f32 %v379, %v380
        %v382 = vsel %vm369, %v364, 0.0
        %v383 = vadd.f32 %v381, %v382
        %v384 = vrcp.pop 4.0
        %v385 = vmul.f32 %v376, %v384
        %v386 = vmul.f32 %v383, %v384
        %v387 = vmul.f32 %v353, %v353
        %v388 = vmul.f32 %v354, %v354
        %v389 = vmul.f32 %v355, %v355
        %v390 = vmul.f32 %v356, %v356
        %v395 = vcombine.high %v387, %v387
        %v396 = vcombine.high %v388, %v388
        %v397 = vcombine.high %v389, %v389
        %v398 = vcombine.high %v390, %v390
        %v403 = vsel %vm369, %v387, 0.0
        %v404 = vsel %vm369, %v388, 0.0
        %v405 = vadd.f32 %v403, %v404
        %v406 = vsel %vm369, %v389, 0.0
        %v407 = vadd.f32 %v405, %v406
        %v408 = vsel %vm369, %v390, 0.0
        %v409 = vadd.f32 %v407, %v408
        %v410 = vsel %vm369, %v395, 0.0
        %v411 = vsel %vm369, %v396, 0.0
        %v412 = vadd.f32 %v410, %v411
        %v413 = vsel %vm369, %v397, 0.0
        %v414 = vadd.f32 %v412, %v413
        %v415 = vsel %vm369, %v398, 0.0
        %v416 = vadd.f32 %v414, %v415
        %v417 = vmul.f32 %v409, %v384
        %v418 = vmul.f32 %v416, %v384
        %v421 = vcombine.low %v385, %v386
        %v423 = vsub.f32 %v353, %v421
        %v424 = vsub.f32 %v354, %v421
        %v425 = vsub.f32 %v355, %v421
        %v426 = vsub.f32 %v356, %v421
        %v427 = vmul.f32 %v385, %v385
        %v428 = vmul.f32 %v386, %v386
        %v429 = vsub.f32 %v417, %v427
        %v430 = vsub.f32 %v418, %v428
        %v431 = vadd.f32 %v429, 1e-05
        %v432 = vadd.f32 %v430, 1e-05
        %v433 = vrsqrt.pop %v431
        %v434 = vrsqrt.pop %v432
        %v437 = vcombine.low %v433, %v434
        %v439 = vmul.f32 %v423, %v437
        %v440 = vmul.f32 %v424, %v437
        %v441 = vmul.f32 %v425, %v437
        %v442 = vmul.f32 %v426, %v437
        %v443 = vld [vmem:[%s1] sm:$0x1]
        %v444 = vld [vmem:[%s1 + $0x1] sm:$0x1]
        %v445 = vld [vmem:[%s1 + $0x2] sm:$0x1]
        %v446 = vld [vmem:[%s1 + $0x3] sm:$0x1]
        %v451 = vlaneseq
        %v452 = vshrl.u32 %v451, 7
        %v453 = vsub.s32 0, %v452
        %v454 = vrot.slane %v443, %v453
        %v455 = vlaneseq
        %v456 = vshrl.u32 %v455, 7
        %v457 = vsub.s32 0, %v456
        %v458 = vrot.slane %v444, %v457
        %v459 = vlaneseq
        %v460 = vshrl.u32 %v459, 7
        %v461 = vsub.s32 0, %v460
        %v462 = vrot.slane %v445, %v461
        %v463 = vlaneseq
        %v464 = vshrl.u32 %v463, 7
        %v465 = vsub.s32 0, %v464
        %v466 = vrot.slane %v446, %v465
        %467 = vset.pattern.permute.xlu0 0
        %468 = vperm.xlu0 %467, %v454
        %v469 = vpop.permute.xlu0 %468
        %471 = vset.pattern.permute.xlu0 0
        %472 = vperm.xlu0 %471, %v458
        %v473 = vpop.permute.xlu0 %472
        %475 = vset.pattern.permute.xlu0 0
        %476 = vperm.xlu0 %475, %v462
        %v477 = vpop.permute.xlu0 %476
        %479 = vset.pattern.permute.xlu0 0
        %480 = vperm.xlu0 %479, %v466
        %v481 = vpop.permute.xlu0 %480
        %v483 = vmul.f32 %v439, %v469
        %v484 = vmul.f32 %v440, %v473
        %v485 = vmul.f32 %v441, %v477
        %v486 = vmul.f32 %v442, %v481
        %v487 = vld [vmem:[%s2] sm:$0x1]
        %v488 = vld [vmem:[%s2 + $0x1] sm:$0x1]
        %v489 = vld [vmem:[%s2 + $0x2] sm:$0x1]
        %v490 = vld [vmem:[%s2 + $0x3] sm:$0x1]
        %v495 = vlaneseq
        %v496 = vshrl.u32 %v495, 7
        %v497 = vsub.s32 0, %v496
        %v498 = vrot.slane %v487, %v497
        %v499 = vlaneseq
        %v500 = vshrl.u32 %v499, 7
        %v501 = vsub.s32 0, %v500
        %v502 = vrot.slane %v488, %v501
        %v503 = vlaneseq
        %v504 = vshrl.u32 %v503, 7
        %v505 = vsub.s32 0, %v504
        %v506 = vrot.slane %v489, %v505
        %v507 = vlaneseq
        %v508 = vshrl.u32 %v507, 7
        %v509 = vsub.s32 0, %v508
        %v510 = vrot.slane %v490, %v509
        %511 = vset.pattern.permute.xlu0 0
        %512 = vperm.xlu0 %511, %v498
        %v513 = vpop.permute.xlu0 %512
        %515 = vset.pattern.permute.xlu0 0
        %516 = vperm.xlu0 %515, %v502
        %v517 = vpop.permute.xlu0 %516
        %519 = vset.pattern.permute.xlu0 0
        %520 = vperm.xlu0 %519, %v506
        %v521 = vpop.permute.xlu0 %520
        %523 = vset.pattern.permute.xlu0 0
        %524 = vperm.xlu0 %523, %v510
        %v525 = vpop.permute.xlu0 %524
        %v527 = vadd.f32 %v483, %v513
        %v528 = vadd.f32 %v484, %v517
        %v529 = vadd.f32 %v485, %v521
        %v530 = vadd.f32 %v486, %v525
        %v531 = vtanh.pop %v527
        %v532 = vtanh.pop %v528
        %v533 = vtanh.pop %v529
        %v534 = vtanh.pop %v530
        %v535 = vld [vmem:[#allocation6] sm:$0xff]
        %v536 = vld [vmem:[#allocation6 + $0x8] sm:$0xff]
        %v537 = vld [vmem:[#allocation6 + $0x10] sm:$0xff]
        %v538 = vld [vmem:[#allocation6 + $0x18] sm:$0xff]
        %v539 = vld [vmem:[#allocation6 + $0x20] sm:$0xff]
        %v540 = vld [vmem:[#allocation6 + $0x28] sm:$0xff]
        %v541 = vld [vmem:[#allocation6 + $0x30] sm:$0xff]
        %v542 = vld [vmem:[#allocation6 + $0x38] sm:$0xff]
        %v543 = vld [vmem:[#allocation6 + $0x40] sm:$0xff]
        %v544 = vld [vmem:[#allocation6 + $0x48] sm:$0xff]
        %v545 = vld [vmem:[#allocation6 + $0x50] sm:$0xff]
        %v546 = vld [vmem:[#allocation6 + $0x58] sm:$0xff]
        %v547 = vld [vmem:[#allocation6 + $0x60] sm:$0xff]
        %v548 = vld [vmem:[#allocation6 + $0x68] sm:$0xff]
        %v549 = vld [vmem:[#allocation6 + $0x70] sm:$0xff]
        %v550 = vld [vmem:[#allocation6 + $0x78] sm:$0xff]
        %v551 = vld [vmem:[#allocation6 + $0x80] sm:$0xff]
        %v552 = vld [vmem:[#allocation6 + $0x88] sm:$0xff]
        %v553 = vld [vmem:[#allocation6 + $0x90] sm:$0xff]
        %v554 = vld [vmem:[#allocation6 + $0x98] sm:$0xff]
        %v555 = vld [vmem:[#allocation6 + $0xa0] sm:$0xff]
        %v556 = vld [vmem:[#allocation6 + $0xa8] sm:$0xff]
        %v557 = vld [vmem:[#allocation6 + $0xb0] sm:$0xff]
        %v558 = vld [vmem:[#allocation6 + $0xb8] sm:$0xff]
        %v559 = vld [vmem:[#allocation6 + $0xc0] sm:$0xff]
        %v560 = vld [vmem:[#allocation6 + $0xc8] sm:$0xff]
        %v561 = vld [vmem:[#allocation6 + $0xd0] sm:$0xff]
        %v562 = vld [vmem:[#allocation6 + $0xd8] sm:$0xff]
        %v563 = vld [vmem:[#allocation6 + $0xe0] sm:$0xff]
        %v564 = vld [vmem:[#allocation6 + $0xe8] sm:$0xff]
        %v565 = vld [vmem:[#allocation6 + $0xf0] sm:$0xff]
        %v566 = vld [vmem:[#allocation6 + $0xf8] sm:$0xff]
        %v567 = vld [vmem:[#allocation6 + $0x100] sm:$0xff]
        %v568 = vld [vmem:[#allocation6 + $0x108] sm:$0xff]
        %v569 = vld [vmem:[#allocation6 + $0x110] sm:$0xff]
        %v570 = vld [vmem:[#allocation6 + $0x118] sm:$0xff]
        %v571 = vld [vmem:[#allocation6 + $0x120] sm:$0xff]
        %v572 = vld [vmem:[#allocation6 + $0x128] sm:$0xff]
        %v573 = vld [vmem:[#allocation6 + $0x130] sm:$0xff]
        %v574 = vld [vmem:[#allocation6 + $0x138] sm:$0xff]
        %v575 = vld [vmem:[#allocation6 + $0x140] sm:$0xff]
        %v576 = vld [vmem:[#allocation6 + $0x148] sm:$0xff]
        %v577 = vld [vmem:[#allocation6 + $0x150] sm:$0xff]
        %v578 = vld [vmem:[#allocation6 + $0x158] sm:$0xff]
        %v579 = vld [vmem:[#allocation6 + $0x160] sm:$0xff]
        %v580 = vld [vmem:[#allocation6 + $0x168] sm:$0xff]
        %v581 = vld [vmem:[#allocation6 + $0x170] sm:$0xff]
        %v582 = vld [vmem:[#allocation6 + $0x178] sm:$0xff]
        %v583 = vld [vmem:[#allocation6 + $0x180] sm:$0xff]
        %v584 = vld [vmem:[#allocation6 + $0x188] sm:$0xff]
        %v585 = vld [vmem:[#allocation6 + $0x190] sm:$0xff]
        %v586 = vld [vmem:[#allocation6 + $0x198] sm:$0xff]
        %v587 = vld [vmem:[#allocation6 + $0x1a0] sm:$0xff]
        %v588 = vld [vmem:[#allocation6 + $0x1a8] sm:$0xff]
        %v589 = vld [vmem:[#allocation6 + $0x1b0] sm:$0xff]
        %v590 = vld [vmem:[#allocation6 + $0x1b8] sm:$0xff]
        %v591 = vld [vmem:[#allocation6 + $0x1c0] sm:$0xff]
        %v592 = vld [vmem:[#allocation6 + $0x1c8] sm:$0xff]
        %v593 = vld [vmem:[#allocation6 + $0x1d0] sm:$0xff]
        %v594 = vld [vmem:[#allocation6 + $0x1d8] sm:$0xff]
        %v595 = vld [vmem:[#allocation6 + $0x1e0] sm:$0xff]
        %v596 = vld [vmem:[#allocation6 + $0x1e8] sm:$0xff]
        %v597 = vld [vmem:[#allocation6 + $0x1f0] sm:$0xff]
        %v598 = vld [vmem:[#allocation6 + $0x1f8] sm:$0xff]
        %v599 = vld [vmem:[#allocation6 + $0x200] sm:$0xff]
        %v600 = vld [vmem:[#allocation6 + $0x208] sm:$0xff]
        %v601 = vld [vmem:[#allocation6 + $0x210] sm:$0xff]
        %v602 = vld [vmem:[#allocation6 + $0x218] sm:$0xff]
        %v603 = vld [vmem:[#allocation6 + $0x220] sm:$0xff]
        %v604 = vld [vmem:[#allocation6 + $0x228] sm:$0xff]
        %v605 = vld [vmem:[#allocation6 + $0x230] sm:$0xff]
        %v606 = vld [vmem:[#allocation6 + $0x238] sm:$0xff]
        %v607 = vld [vmem:[#allocation6 + $0x240] sm:$0xff]
        %v608 = vld [vmem:[#allocation6 + $0x248] sm:$0xff]
        %v609 = vld [vmem:[#allocation6 + $0x250] sm:$0xff]
        %v610 = vld [vmem:[#allocation6 + $0x258] sm:$0xff]
        %v611 = vld [vmem:[#allocation6 + $0x260] sm:$0xff]
        %v612 = vld [vmem:[#allocation6 + $0x268] sm:$0xff]
        %v613 = vld [vmem:[#allocation6 + $0x270] sm:$0xff]
        %v614 = vld [vmem:[#allocation6 + $0x278] sm:$0xff]
        %v615 = vld [vmem:[#allocation6 + $0x280] sm:$0xff]
        %v616 = vld [vmem:[#allocation6 + $0x288] sm:$0xff]
        %v617 = vld [vmem:[#allocation6 + $0x290] sm:$0xff]
        %v618 = vld [vmem:[#allocation6 + $0x298] sm:$0xff]
        %v619 = vld [vmem:[#allocation6 + $0x2a0] sm:$0xff]
        %v620 = vld [vmem:[#allocation6 + $0x2a8] sm:$0xff]
        %v621 = vld [vmem:[#allocation6 + $0x2b0] sm:$0xff]
        %v622 = vld [vmem:[#allocation6 + $0x2b8] sm:$0xff]
        %v623 = vld [vmem:[#allocation6 + $0x2c0] sm:$0xff]
        %v624 = vld [vmem:[#allocation6 + $0x2c8] sm:$0xff]
        %v625 = vld [vmem:[#allocation6 + $0x2d0] sm:$0xff]
        %v626 = vld [vmem:[#allocation6 + $0x2d8] sm:$0xff]
        %v627 = vld [vmem:[#allocation6 + $0x2e0] sm:$0xff]
        %v628 = vld [vmem:[#allocation6 + $0x2e8] sm:$0xff]
        %v629 = vld [vmem:[#allocation6 + $0x2f0] sm:$0xff]
        %v630 = vld [vmem:[#allocation6 + $0x2f8] sm:$0xff]
        %v631 = vld [vmem:[#allocation6 + $0x300] sm:$0xff]
        %v632 = vld [vmem:[#allocation6 + $0x308] sm:$0xff]
        %v633 = vld [vmem:[#allocation6 + $0x310] sm:$0xff]
        %v634 = vld [vmem:[#allocation6 + $0x318] sm:$0xff]
        %v635 = vld [vmem:[#allocation6 + $0x320] sm:$0xff]
        %v636 = vld [vmem:[#allocation6 + $0x328] sm:$0xff]
        %v637 = vld [vmem:[#allocation6 + $0x330] sm:$0xff]
        %v638 = vld [vmem:[#allocation6 + $0x338] sm:$0xff]
        %v639 = vld [vmem:[#allocation6 + $0x340] sm:$0xff]
        %v640 = vld [vmem:[#allocation6 + $0x348] sm:$0xff]
        %v641 = vld [vmem:[#allocation6 + $0x350] sm:$0xff]
        %v642 = vld [vmem:[#allocation6 + $0x358] sm:$0xff]
        %v643 = vld [vmem:[#allocation6 + $0x360] sm:$0xff]
        %v644 = vld [vmem:[#allocation6 + $0x368] sm:$0xff]
        %v645 = vld [vmem:[#allocation6 + $0x370] sm:$0xff]
        %v646 = vld [vmem:[#allocation6 + $0x378] sm:$0xff]
        %v647 = vld [vmem:[#allocation6 + $0x380] sm:$0xff]
        %v648 = vld [vmem:[#allocation6 + $0x388] sm:$0xff]
        %v649 = vld [vmem:[#allocation6 + $0x390] sm:$0xff]
        %v650 = vld [vmem:[#allocation6 + $0x398] sm:$0xff]
        %v651 = vld [vmem:[#allocation6 + $0x3a0] sm:$0xff]
        %v652 = vld [vmem:[#allocation6 + $0x3a8] sm:$0xff]
        %v653 = vld [vmem:[#allocation6 + $0x3b0] sm:$0xff]
        %v654 = vld [vmem:[#allocation6 + $0x3b8] sm:$0xff]
        %v655 = vld [vmem:[#allocation6 + $0x3c0] sm:$0xff]
        %v656 = vld [vmem:[#allocation6 + $0x3c8] sm:$0xff]
        %v657 = vld [vmem:[#allocation6 + $0x3d0] sm:$0xff]
        %v658 = vld [vmem:[#allocation6 + $0x3d8] sm:$0xff]
        %v659 = vld [vmem:[#allocation6 + $0x3e0] sm:$0xff]
        %v660 = vld [vmem:[#allocation6 + $0x3e8] sm:$0xff]
        %v661 = vld [vmem:[#allocation6 + $0x3f0] sm:$0xff]
        %v662 = vld [vmem:[#allocation6 + $0x3f8] sm:$0xff]
        %v663 = vld [vmem:[#allocation6 + $0x400] sm:$0xff]
        %v664 = vld [vmem:[#allocation6 + $0x408] sm:$0xff]
        %v665 = vld [vmem:[#allocation6 + $0x410] sm:$0xff]
        %v666 = vld [vmem:[#allocation6 + $0x418] sm:$0xff]
        %v667 = vld [vmem:[#allocation6 + $0x420] sm:$0xff]
        %v668 = vld [vmem:[#allocation6 + $0x428] sm:$0xff]
        %v669 = vld [vmem:[#allocation6 + $0x430] sm:$0xff]
        %v670 = vld [vmem:[#allocation6 + $0x438] sm:$0xff]
        %v671 = vld [vmem:[#allocation6 + $0x440] sm:$0xff]
        %v672 = vld [vmem:[#allocation6 + $0x448] sm:$0xff]
        %v673 = vld [vmem:[#allocation6 + $0x450] sm:$0xff]
        %v674 = vld [vmem:[#allocation6 + $0x458] sm:$0xff]
        %v675 = vld [vmem:[#allocation6 + $0x460] sm:$0xff]
        %v676 = vld [vmem:[#allocation6 + $0x468] sm:$0xff]
        %v677 = vld [vmem:[#allocation6 + $0x470] sm:$0xff]
        %v678 = vld [vmem:[#allocation6 + $0x478] sm:$0xff]
        %v679 = vld [vmem:[#allocation6 + $0x480] sm:$0xff]
        %v680 = vld [vmem:[#allocation6 + $0x488] sm:$0xff]
        %v681 = vld [vmem:[#allocation6 + $0x490] sm:$0xff]
        %v682 = vld [vmem:[#allocation6 + $0x498] sm:$0xff]
        %v683 = vld [vmem:[#allocation6 + $0x4a0] sm:$0xff]
        %v684 = vld [vmem:[#allocation6 + $0x4a8] sm:$0xff]
        %v685 = vld [vmem:[#allocation6 + $0x4b0] sm:$0xff]
        %v686 = vld [vmem:[#allocation6 + $0x4b8] sm:$0xff]
        %v687 = vld [vmem:[#allocation6 + $0x4c0] sm:$0xff]
        %v688 = vld [vmem:[#allocation6 + $0x4c8] sm:$0xff]
        %v689 = vld [vmem:[#allocation6 + $0x4d0] sm:$0xff]
        %v690 = vld [vmem:[#allocation6 + $0x4d8] sm:$0xff]
        %v691 = vld [vmem:[#allocation6 + $0x4e0] sm:$0xff]
        %v692 = vld [vmem:[#allocation6 + $0x4e8] sm:$0xff]
        %v693 = vld [vmem:[#allocation6 + $0x4f0] sm:$0xff]
        %v694 = vld [vmem:[#allocation6 + $0x4f8] sm:$0xff]
        %v695 = vld [vmem:[#allocation6 + $0x500] sm:$0xff]
        %v696 = vld [vmem:[#allocation6 + $0x508] sm:$0xff]
        %v697 = vld [vmem:[#allocation6 + $0x510] sm:$0xff]
        %v698 = vld [vmem:[#allocation6 + $0x518] sm:$0xff]
        %v699 = vld [vmem:[#allocation6 + $0x520] sm:$0xff]
        %v700 = vld [vmem:[#allocation6 + $0x528] sm:$0xff]
        %v701 = vld [vmem:[#allocation6 + $0x530] sm:$0xff]
        %v702 = vld [vmem:[#allocation6 + $0x538] sm:$0xff]
        %v703 = vld [vmem:[#allocation6 + $0x540] sm:$0xff]
        %v704 = vld [vmem:[#allocation6 + $0x548] sm:$0xff]
        %v705 = vld [vmem:[#allocation6 + $0x550] sm:$0xff]
        %v706 = vld [vmem:[#allocation6 + $0x558] sm:$0xff]
        %v707 = vld [vmem:[#allocation6 + $0x560] sm:$0xff]
        %v708 = vld [vmem:[#allocation6 + $0x568] sm:$0xff]
        %v709 = vld [vmem:[#allocation6 + $0x570] sm:$0xff]
        %v710 = vld [vmem:[#allocation6 + $0x578] sm:$0xff]
        %v711 = vld [vmem:[#allocation6 + $0x580] sm:$0xff]
        %v712 = vld [vmem:[#allocation6 + $0x588] sm:$0xff]
        %v713 = vld [vmem:[#allocation6 + $0x590] sm:$0xff]
        %v714 = vld [vmem:[#allocation6 + $0x598] sm:$0xff]
        %v715 = vld [vmem:[#allocation6 + $0x5a0] sm:$0xff]
        %v716 = vld [vmem:[#allocation6 + $0x5a8] sm:$0xff]
        %v717 = vld [vmem:[#allocation6 + $0x5b0] sm:$0xff]
        %v718 = vld [vmem:[#allocation6 + $0x5b8] sm:$0xff]
        %v719 = vld [vmem:[#allocation6 + $0x5c0] sm:$0xff]
        %v720 = vld [vmem:[#allocation6 + $0x5c8] sm:$0xff]
        %v721 = vld [vmem:[#allocation6 + $0x5d0] sm:$0xff]
        %v722 = vld [vmem:[#allocation6 + $0x5d8] sm:$0xff]
        %v723 = vld [vmem:[#allocation6 + $0x5e0] sm:$0xff]
        %v724 = vld [vmem:[#allocation6 + $0x5e8] sm:$0xff]
        %v725 = vld [vmem:[#allocation6 + $0x5f0] sm:$0xff]
        %v726 = vld [vmem:[#allocation6 + $0x5f8] sm:$0xff]
        %v727 = vld [vmem:[#allocation6 + $0x600] sm:$0xff]
        %v728 = vld [vmem:[#allocation6 + $0x608] sm:$0xff]
        %v729 = vld [vmem:[#allocation6 + $0x610] sm:$0xff]
        %v730 = vld [vmem:[#allocation6 + $0x618] sm:$0xff]
        %v731 = vld [vmem:[#allocation6 + $0x620] sm:$0xff]
        %v732 = vld [vmem:[#allocation6 + $0x628] sm:$0xff]
        %v733 = vld [vmem:[#allocation6 + $0x630] sm:$0xff]
        %v734 = vld [vmem:[#allocation6 + $0x638] sm:$0xff]
        %v735 = vld [vmem:[#allocation6 + $0x640] sm:$0xff]
        %v736 = vld [vmem:[#allocation6 + $0x648] sm:$0xff]
        %v737 = vld [vmem:[#allocation6 + $0x650] sm:$0xff]
        %v738 = vld [vmem:[#allocation6 + $0x658] sm:$0xff]
        %v739 = vld [vmem:[#allocation6 + $0x660] sm:$0xff]
        %v740 = vld [vmem:[#allocation6 + $0x668] sm:$0xff]
        %v741 = vld [vmem:[#allocation6 + $0x670] sm:$0xff]
        %v742 = vld [vmem:[#allocation6 + $0x678] sm:$0xff]
        %v743 = vld [vmem:[#allocation6 + $0x680] sm:$0xff]
        %v744 = vld [vmem:[#allocation6 + $0x688] sm:$0xff]
        %v745 = vld [vmem:[#allocation6 + $0x690] sm:$0xff]
        %v746 = vld [vmem:[#allocation6 + $0x698] sm:$0xff]
        %v747 = vld [vmem:[#allocation6 + $0x6a0] sm:$0xff]
        %v748 = vld [vmem:[#allocation6 + $0x6a8] sm:$0xff]
        %v749 = vld [vmem:[#allocation6 + $0x6b0] sm:$0xff]
        %v750 = vld [vmem:[#allocation6 + $0x6b8] sm:$0xff]
        %v751 = vld [vmem:[#allocation6 + $0x6c0] sm:$0xff]
        %v752 = vld [vmem:[#allocation6 + $0x6c8] sm:$0xff]
        %v753 = vld [vmem:[#allocation6 + $0x6d0] sm:$0xff]
        %v754 = vld [vmem:[#allocation6 + $0x6d8] sm:$0xff]
        %v755 = vld [vmem:[#allocation6 + $0x6e0] sm:$0xff]
        %v756 = vld [vmem:[#allocation6 + $0x6e8] sm:$0xff]
        %v757 = vld [vmem:[#allocation6 + $0x6f0] sm:$0xff]
        %v758 = vld [vmem:[#allocation6 + $0x6f8] sm:$0xff]
        %v759 = vld [vmem:[#allocation6 + $0x700] sm:$0xff]
        %v760 = vld [vmem:[#allocation6 + $0x708] sm:$0xff]
        %v761 = vld [vmem:[#allocation6 + $0x710] sm:$0xff]
        %v762 = vld [vmem:[#allocation6 + $0x718] sm:$0xff]
        %v763 = vld [vmem:[#allocation6 + $0x720] sm:$0xff]
        %v764 = vld [vmem:[#allocation6 + $0x728] sm:$0xff]
        %v765 = vld [vmem:[#allocation6 + $0x730] sm:$0xff]
        %v766 = vld [vmem:[#allocation6 + $0x738] sm:$0xff]
        %v767 = vld [vmem:[#allocation6 + $0x740] sm:$0xff]
        %v768 = vld [vmem:[#allocation6 + $0x748] sm:$0xff]
        %v769 = vld [vmem:[#allocation6 + $0x750] sm:$0xff]
        %v770 = vld [vmem:[#allocation6 + $0x758] sm:$0xff]
        %v771 = vld [vmem:[#allocation6 + $0x760] sm:$0xff]
        %v772 = vld [vmem:[#allocation6 + $0x768] sm:$0xff]
        %v773 = vld [vmem:[#allocation6 + $0x770] sm:$0xff]
        %v774 = vld [vmem:[#allocation6 + $0x778] sm:$0xff]
        %v775 = vld [vmem:[#allocation6 + $0x780] sm:$0xff]
        %v776 = vld [vmem:[#allocation6 + $0x788] sm:$0xff]
        %v777 = vld [vmem:[#allocation6 + $0x790] sm:$0xff]
        %v778 = vld [vmem:[#allocation6 + $0x798] sm:$0xff]
        %v779 = vld [vmem:[#allocation6 + $0x7a0] sm:$0xff]
        %v780 = vld [vmem:[#allocation6 + $0x7a8] sm:$0xff]
        %v781 = vld [vmem:[#allocation6 + $0x7b0] sm:$0xff]
        %v782 = vld [vmem:[#allocation6 + $0x7b8] sm:$0xff]
        %v783 = vld [vmem:[#allocation6 + $0x7c0] sm:$0xff]
        %v784 = vld [vmem:[#allocation6 + $0x7c8] sm:$0xff]
        %v785 = vld [vmem:[#allocation6 + $0x7d0] sm:$0xff]
        %v786 = vld [vmem:[#allocation6 + $0x7d8] sm:$0xff]
        %v787 = vld [vmem:[#allocation6 + $0x7e0] sm:$0xff]
        %v788 = vld [vmem:[#allocation6 + $0x7e8] sm:$0xff]
        %v789 = vld [vmem:[#allocation6 + $0x7f0] sm:$0xff]
        %v790 = vld [vmem:[#allocation6 + $0x7f8] sm:$0xff]
        %v795 = vcombine.low %v531, %v532
        %v796 = vcombine.high %v531, %v532
        %v797 = vcombine.low %v533, %v534
        %v798 = vcombine.high %v533, %v534
        %803 = vmatprep.subr.mxu0 %v536
        %804 = vmatpush1.msra.mxu0 %v535
        %805 = vmatprep.subr.mxu0 %v544
        %806 = vmatpush1.msra.mxu0 %v543
        %807 = vmatprep.subr.mxu0 %v552
        %808 = vmatpush1.msra.mxu0 %v551
        %809 = vmatprep.subr.mxu0 %v560
        %810 = vmatpush1.msra.mxu0 %v559
        %811 = vmatprep.subr.mxu0 %v568
        %812 = vmatpush1.msra.mxu0 %v567
        %813 = vmatprep.subr.mxu0 %v576
        %814 = vmatpush1.msra.mxu0 %v575
        %815 = vmatprep.subr.mxu0 %v584
        %816 = vmatpush1.msra.mxu0 %v583
        %817 = vmatprep.subr.mxu0 %v592
        %818 = vmatpush1.msra.mxu0 %v591
        %819 = vmatprep.subr.mxu0 %v600
        %820 = vmatpush1.msra.mxu0 %v599
        %821 = vmatprep.subr.mxu0 %v608
        %822 = vmatpush1.msra.mxu0 %v607
        %823 = vmatprep.subr.mxu0 %v616
        %824 = vmatpush1.msra.mxu0 %v615
        %825 = vmatprep.subr.mxu0 %v624
        %826 = vmatpush1.msra.mxu0 %v623
        %827 = vmatprep.subr.mxu0 %v632
        %828 = vmatpush1.msra.mxu0 %v631
        %829 = vmatprep.subr.mxu0 %v640
        %830 = vmatpush1.msra.mxu0 %v639
        %831 = vmatprep.subr.mxu0 %v648
        %832 = vmatpush1.msra.mxu0 %v647
        %833 = vmatprep.subr.mxu0 %v656
        %834 = vmatpush1.msra.mxu0 %v655
        %835 = vmatprep.subr.mxu0 %v664
        %836 = vmatpush1.msra.mxu0 %v663
        %837 = vmatprep.subr.mxu0 %v672
        %838 = vmatpush1.msra.mxu0 %v671
        %839 = vmatprep.subr.mxu0 %v680
        %840 = vmatpush1.msra.mxu0 %v679
        %841 = vmatprep.subr.mxu0 %v688
        %842 = vmatpush1.msra.mxu0 %v687
        %843 = vmatprep.subr.mxu0 %v696
        %844 = vmatpush1.msra.mxu0 %v695
        %845 = vmatprep.subr.mxu0 %v704
        %846 = vmatpush1.msra.mxu0 %v703
        %847 = vmatprep.subr.mxu0 %v712
        %848 = vmatpush1.msra.mxu0 %v711
        %849 = vmatprep.subr.mxu0 %v720
        %850 = vmatpush1.msra.mxu0 %v719
        %851 = vmatprep.subr.mxu0 %v728
        %852 = vmatpush1.msra.mxu0 %v727
        %853 = vmatprep.subr.mxu0 %v736
        %854 = vmatpush1.msra.mxu0 %v735
        %855 = vmatprep.subr.mxu0 %v744
        %856 = vmatpush1.msra.mxu0 %v743
        %857 = vmatprep.subr.mxu0 %v752
        %858 = vmatpush1.msra.mxu0 %v751
        %859 = vmatprep.subr.mxu0 %v760
        %860 = vmatpush1.msra.mxu0 %v759
        %861 = vmatprep.subr.mxu0 %v768
        %862 = vmatpush1.msra.mxu0 %v767
        %863 = vmatprep.subr.mxu0 %v776
        %864 = vmatpush1.msra.mxu0 %v775
        %865 = vmatprep.subr.mxu0 %v784
        %866 = vmatpush1.msra.mxu0 %v783
        %867 = vmatprep.mubr.f32.mxu0 %v796
        %868 = vmatmul.mubr.f32.gmra.mrb[0].mxu0 %v795
        %v869 = vpop.f32.mrb[0].mxu0
        %v870 = vadd.f32 0.0, %v869
        %v871 = vpop.f32.mrb[0].mxu0
        %v872 = vadd.f32 0.0, %v871
        %873 = vmatprep.mubr.f32.mxu0 %v798
        %874 = vmatmul.mubr.f32.gmra.mrb[0].mxu0 %v797
        %v875 = vpop.f32.mrb[0].mxu0
        %v876 = vadd.f32 0.0, %v875
        %v877 = vpop.f32.mrb[0].mxu0
        %v878 = vadd.f32 0.0, %v877
        %879 = vdwg.mxu0
        %880 = vmatprep.subr.mxu0 %v538
        %881 = vmatpush1.msra.mxu0 %v537
        %882 = vmatprep.subr.mxu0 %v546
        %883 = vmatpush1.msra.mxu0 %v545
        %884 = vmatprep.subr.mxu0 %v554
        %885 = vmatpush1.msra.mxu0 %v553
        %886 = vmatprep.subr.mxu0 %v562
        %887 = vmatpush1.msra.mxu0 %v561
        %888 = vmatprep.subr.mxu0 %v570
        %889 = vmatpush1.msra.mxu0 %v569
        %890 = vmatprep.subr.mxu0 %v578
        %891 = vmatpush1.msra.mxu0 %v577
        %892 = vmatprep.subr.mxu0 %v586
        %893 = vmatpush1.msra.mxu0 %v585
        %894 = vmatprep.subr.mxu0 %v594
        %895 = vmatpush1.msra.mxu0 %v593
        %896 = vmatprep.subr.mxu0 %v602
        %897 = vmatpush1.msra.mxu0 %v601
        %898 = vmatprep.subr.mxu0 %v610
        %899 = vmatpush1.msra.mxu0 %v609
        %900 = vmatprep.subr.mxu0 %v618
        %901 = vmatpush1.msra.mxu0 %v617
        %902 = vmatprep.subr.mxu0 %v626
        %903 = vmatpush1.msra.mxu0 %v625
        %904 = vmatprep.subr.mxu0 %v634
        %905 = vmatpush1.msra.mxu0 %v633
        %906 = vmatprep.subr.mxu0 %v642
        %907 = vmatpush1.msra.mxu0 %v641
        %908 = vmatprep.subr.mxu0 %v650
        %909 = vmatpush1.msra.mxu0 %v649
        %910 = vmatprep.subr.mxu0 %v658
        %911 = vmatpush1.msra.mxu0 %v657
        %912 = vmatprep.subr.mxu0 %v666
        %913 = vmatpush1.msra.mxu0 %v665
        %914 = vmatprep.subr.mxu0 %v674
        %915 = vmatpush1.msra.mxu0 %v673
        %916 = vmatprep.subr.mxu0 %v682
        %917 = vmatpush1.msra.mxu0 %v681
        %918 = vmatprep.subr.mxu0 %v690
        %919 = vmatpush1.msra.mxu0 %v689
        %920 = vmatprep.subr.mxu0 %v698
        %921 = vmatpush1.msra.mxu0 %v697
        %922 = vmatprep.subr.mxu0 %v706
        %923 = vmatpush1.msra.mxu0 %v705
        %924 = vmatprep.subr.mxu0 %v714
        %925 = vmatpush1.msra.mxu0 %v713
        %926 = vmatprep.subr.mxu0 %v722
        %927 = vmatpush1.msra.mxu0 %v721
        %928 = vmatprep.subr.mxu0 %v730
        %929 = vmatpush1.msra.mxu0 %v729
        %930 = vmatprep.subr.mxu0 %v738
        %931 = vmatpush1.msra.mxu0 %v737
        %932 = vmatprep.subr.mxu0 %v746
        %933 = vmatpush1.msra.mxu0 %v745
        %934 = vmatprep.subr.mxu0 %v754
        %935 = vmatpush1.msra.mxu0 %v753
        %936 = vmatprep.subr.mxu0 %v762
        %937 = vmatpush1.msra.mxu0 %v761
        %938 = vmatprep.subr.mxu0 %v770
        %939 = vmatpush1.msra.mxu0 %v769
        %940 = vmatprep.subr.mxu0 %v778
        %941 = vmatpush1.msra.mxu0 %v777
        %942 = vmatprep.subr.mxu0 %v786
        %943 = vmatpush1.msra.mxu0 %v785
        %944 = vmatprep.mubr.f32.mxu0 %v796
        %945 = vmatmul.mubr.f32.gmra.mrb[0].mxu0 %v795
        %v946 = vpop.f32.mrb[0].mxu0
        %v947 = vadd.f32 0.0, %v946
        %v948 = vpop.f32.mrb[0].mxu0
        %v949 = vadd.f32 0.0, %v948
        %950 = vmatprep.mubr.f32.mxu0 %v798
        %951 = vmatmul.mubr.f32.gmra.mrb[0].mxu0 %v797
        %v952 = vpop.f32.mrb[0].mxu0
        %v953 = vadd.f32 0.0, %v952
        %v954 = vpop.f32.mrb[0].mxu0
        %v955 = vadd.f32 0.0, %v954
        %956 = vdwg.mxu0
        %957 = vmatprep.subr.mxu0 %v540
        %958 = vmatpush1.msra.mxu0 %v539
        %959 = vmatprep.subr.mxu0 %v548
        %960 = vmatpush1.msra.mxu0 %v547
        %961 = vmatprep.subr.mxu0 %v556
        %962 = vmatpush1.msra.mxu0 %v555
        %963 = vmatprep.subr.mxu0 %v564
        %964 = vmatpush1.msra.mxu0 %v563
        %965 = vmatprep.subr.mxu0 %v572
        %966 = vmatpush1.msra.mxu0 %v571
        %967 = vmatprep.subr.mxu0 %v580
        %968 = vmatpush1.msra.mxu0 %v579
        %969 = vmatprep.subr.mxu0 %v588
        %970 = vmatpush1.msra.mxu0 %v587
        %971 = vmatprep.subr.mxu0 %v596
        %972 = vmatpush1.msra.mxu0 %v595
        %973 = vmatprep.subr.mxu0 %v604
        %974 = vmatpush1.msra.mxu0 %v603
        %975 = vmatprep.subr.mxu0 %v612
        %976 = vmatpush1.msra.mxu0 %v611
        %977 = vmatprep.subr.mxu0 %v620
        %978 = vmatpush1.msra.mxu0 %v619
        %979 = vmatprep.subr.mxu0 %v628
        %980 = vmatpush1.msra.mxu0 %v627
        %981 = vmatprep.subr.mxu0 %v636
        %982 = vmatpush1.msra.mxu0 %v635
        %983 = vmatprep.subr.mxu0 %v644
        %984 = vmatpush1.msra.mxu0 %v643
        %985 = vmatprep.subr.mxu0 %v652
        %986 = vmatpush1.msra.mxu0 %v651
        %987 = vmatprep.subr.mxu0 %v660
        %988 = vmatpush1.msra.mxu0 %v659
        %989 = vmatprep.subr.mxu0 %v668
        %990 = vmatpush1.msra.mxu0 %v667
        %991 = vmatprep.subr.mxu0 %v676
        %992 = vmatpush1.msra.mxu0 %v675
        %993 = vmatprep.subr.mxu0 %v684
        %994 = vmatpush1.msra.mxu0 %v683
        %995 = vmatprep.subr.mxu0 %v692
        %996 = vmatpush1.msra.mxu0 %v691
        %997 = vmatprep.subr.mxu0 %v700
        %998 = vmatpush1.msra.mxu0 %v699
        %999 = vmatprep.subr.mxu0 %v708
        %1000 = vmatpush1.msra.mxu0 %v707
        %1001 = vmatprep.subr.mxu0 %v716
        %1002 = vmatpush1.msra.mxu0 %v715
        %1003 = vmatprep.subr.mxu0 %v724
        %1004 = vmatpush1.msra.mxu0 %v723
        %1005 = vmatprep.subr.mxu0 %v732
        %1006 = vmatpush1.msra.mxu0 %v731
        %1007 = vmatprep.subr.mxu0 %v740
        %1008 = vmatpush1.msra.mxu0 %v739
        %1009 = vmatprep.subr.mxu0 %v748
        %1010 = vmatpush1.msra.mxu0 %v747
        %1011 = vmatprep.subr.mxu0 %v756
        %1012 = vmatpush1.msra.mxu0 %v755
        %1013 = vmatprep.subr.mxu0 %v764
        %1014 = vmatpush1.msra.mxu0 %v763
        %1015 = vmatprep.subr.mxu0 %v772
        %1016 = vmatpush1.msra.mxu0 %v771
        %1017 = vmatprep.subr.mxu0 %v780
        %1018 = vmatpush1.msra.mxu0 %v779
        %1019 = vmatprep.subr.mxu0 %v788
        %1020 = vmatpush1.msra.mxu0 %v787
        %1021 = vmatprep.mubr.f32.mxu0 %v796
        %1022 = vmatmul.mubr.f32.gmra.mrb[0].mxu0 %v795
        %v1023 = vpop.f32.mrb[0].mxu0
        %v1024 = vadd.f32 0.0, %v1023
        %v1025 = vpop.f32.mrb[0].mxu0
        %v1026 = vadd.f32 0.0, %v1025
        %1027 = vmatprep.mubr.f32.mxu0 %v798
        %1028 = vmatmul.mubr.f32.gmra.mrb[0].mxu0 %v797
        %v1029 = vpop.f32.mrb[0].mxu0
        %v1030 = vadd.f32 0.0, %v1029
        %v1031 = vpop.f32.mrb[0].mxu0
        %v1032 = vadd.f32 0.0, %v1031
        %1033 = vdwg.mxu0
        %1034 = vmatprep.subr.mxu0 %v542
        %1035 = vmatpush1.msra.mxu0 %v541
        %1036 = vmatprep.subr.mxu0 %v550
        %1037 = vmatpush1.msra.mxu0 %v549
        %1038 = vmatprep.subr.mxu0 %v558
        %1039 = vmatpush1.msra.mxu0 %v557
        %1040 = vmatprep.subr.mxu0 %v566
        %1041 = vmatpush1.msra.mxu0 %v565
        %1042 = vmatprep.subr.mxu0 %v574
        %1043 = vmatpush1.msra.mxu0 %v573
        %1044 = vmatprep.subr.mxu0 %v582
        %1045 = vmatpush1.msra.mxu0 %v581
        %1046 = vmatprep.subr.mxu0 %v590
        %1047 = vmatpush1.msra.mxu0 %v589
        %1048 = vmatprep.subr.mxu0 %v598
        %1049 = vmatpush1.msra.mxu0 %v597
        %1050 = vmatprep.subr.mxu0 %v606
        %1051 = vmatpush1.msra.mxu0 %v605
        %1052 = vmatprep.subr.mxu0 %v614
        %1053 = vmatpush1.msra.mxu0 %v613
        %1054 = vmatprep.subr.mxu0 %v622
        %1055 = vmatpush1.msra.mxu0 %v621
        %1056 = vmatprep.subr.mxu0 %v630
        %1057 = vmatpush1.msra.mxu0 %v629
        %1058 = vmatprep.subr.mxu0 %v638
        %1059 = vmatpush1.msra.mxu0 %v637
        %1060 = vmatprep.subr.mxu0 %v646
        %1061 = vmatpush1.msra.mxu0 %v645
        %1062 = vmatprep.subr.mxu0 %v654
        %1063 = vmatpush1.msra.mxu0 %v653
        %1064 = vmatprep.subr.mxu0 %v662
        %1065 = vmatpush1.msra.mxu0 %v661
        %1066 = vmatprep.subr.mxu0 %v670
        %1067 = vmatpush1.msra.mxu0 %v669
        %1068 = vmatprep.subr.mxu0 %v678
        %1069 = vmatpush1.msra.mxu0 %v677
        %1070 = vmatprep.subr.mxu0 %v686
        %1071 = vmatpush1.msra.mxu0 %v685
        %1072 = vmatprep.subr.mxu0 %v694
        %1073 = vmatpush1.msra.mxu0 %v693
        %1074 = vmatprep.subr.mxu0 %v702
        %1075 = vmatpush1.msra.mxu0 %v701
        %1076 = vmatprep.subr.mxu0 %v710
        %1077 = vmatpush1.msra.mxu0 %v709
        %1078 = vmatprep.subr.mxu0 %v718
        %1079 = vmatpush1.msra.mxu0 %v717
        %1080 = vmatprep.subr.mxu0 %v726
        %1081 = vmatpush1.msra.mxu0 %v725
        %1082 = vmatprep.subr.mxu0 %v734
        %1083 = vmatpush1.msra.mxu0 %v733
        %1084 = vmatprep.subr.mxu0 %v742
        %1085 = vmatpush1.msra.mxu0 %v741
        %1086 = vmatprep.subr.mxu0 %v750
        %1087 = vmatpush1.msra.mxu0 %v749
        %1088 = vmatprep.subr.mxu0 %v758
        %1089 = vmatpush1.msra.mxu0 %v757
        %1090 = vmatprep.subr.mxu0 %v766
        %1091 = vmatpush1.msra.mxu0 %v765
        %1092 = vmatprep.subr.mxu0 %v774
        %1093 = vmatpush1.msra.mxu0 %v773
        %1094 = vmatprep.subr.mxu0 %v782
        %1095 = vmatpush1.msra.mxu0 %v781
        %1096 = vmatprep.subr.mxu0 %v790
        %1097 = vmatpush1.msra.mxu0 %v789
        %1098 = vmatprep.mubr.f32.mxu0 %v796
        %1099 = vmatmul.mubr.f32.gmra.mrb[0].mxu0 %v795
        %v1100 = vpop.f32.mrb[0].mxu0
        %v1101 = vadd.f32 0.0, %v1100
        %v1102 = vpop.f32.mrb[0].mxu0
        %v1103 = vadd.f32 0.0, %v1102
        %1104 = vmatprep.mubr.f32.mxu0 %v798
        %1105 = vmatmul.mubr.f32.gmra.mrb[0].mxu0 %v797
        %v1106 = vpop.f32.mrb[0].mxu0
        %v1107 = vadd.f32 0.0, %v1106
        %v1108 = vpop.f32.mrb[0].mxu0
        %v1109 = vadd.f32 0.0, %v1108
        %1110 = vdwg.mxu0
        %v1127 = vcombine.low %v870, %v872
        %v1128 = vcombine.high %v870, %v872
        %v1129 = vcombine.low %v947, %v949
        %v1130 = vcombine.high %v947, %v949
        %v1131 = vcombine.low %v1024, %v1026
        %v1132 = vcombine.high %v1024, %v1026
        %v1133 = vcombine.low %v1101, %v1103
        %v1134 = vcombine.high %v1101, %v1103
        %v1136 = vunpack.c.l.s4 1966171168
        %v1137 = vunpack.c.0.s8 %v1136
        %v1138 = vlaneseq
        %v1139 = vshrl.u32 %v1138, 7
        %v1140 = vsub.s32 %v1137, %v1139
        %v1141 = vrot.slane %v1127, %v1140
        %v1143 = vunpack.c.l.s4 1966171168
        %v1144 = vunpack.c.0.s8 %v1143
        %v1145 = vlaneseq
        %v1146 = vshrl.u32 %v1145, 7
        %v1147 = vsub.s32 %v1144, %v1146
        %v1148 = vrot.slane %v1128, %v1147
        %v1150 = vunpack.c.l.s4 1966171168
        %v1151 = vunpack.c.0.s8 %v1150
        %v1152 = vlaneseq
        %v1153 = vshrl.u32 %v1152, 7
        %v1154 = vsub.s32 %v1151, %v1153
        %v1155 = vrot.slane %v1129, %v1154
        %v1157 = vunpack.c.l.s4 1966171168
        %v1158 = vunpack.c.0.s8 %v1157
        %v1159 = vlaneseq
        %v1160 = vshrl.u32 %v1159, 7
        %v1161 = vsub.s32 %v1158, %v1160
        %v1162 = vrot.slane %v1130, %v1161
        %v1164 = vunpack.c.l.s4 1966171168
        %v1165 = vunpack.c.0.s8 %v1164
        %v1166 = vlaneseq
        %v1167 = vshrl.u32 %v1166, 7
        %v1168 = vsub.s32 %v1165, %v1167
        %v1169 = vrot.slane %v1131, %v1168
        %v1171 = vunpack.c.l.s4 1966171168
        %v1172 = vunpack.c.0.s8 %v1171
        %v1173 = vlaneseq
        %v1174 = vshrl.u32 %v1173, 7
        %v1175 = vsub.s32 %v1172, %v1174
        %v1176 = vrot.slane %v1132, %v1175
        %v1178 = vunpack.c.l.s4 1966171168
        %v1179 = vunpack.c.0.s8 %v1178
        %v1180 = vlaneseq
        %v1181 = vshrl.u32 %v1180, 7
        %v1182 = vsub.s32 %v1179, %v1181
        %v1183 = vrot.slane %v1133, %v1182
        %v1185 = vunpack.c.l.s4 1966171168
        %v1186 = vunpack.c.0.s8 %v1185
        %v1187 = vlaneseq
        %v1188 = vshrl.u32 %v1187, 7
        %v1189 = vsub.s32 %v1186, %v1188
        %v1190 = vrot.slane %v1134, %v1189
        %v1191 = vcombine.low %v1141, %v1155
        %v1192 = vcombine.high %v1141, %v1155
        %v1193 = vcombine.low %v1148, %v1162
        %v1194 = vcombine.high %v1148, %v1162
        %v1195 = vcombine.low %v1169, %v1183
        %v1196 = vcombine.high %v1169, %v1183
        %v1197 = vcombine.low %v1176, %v1190
        %v1198 = vcombine.high %v1176, %v1190
        %v1200 = vunpack.c.l.s4 1966171168
        %v1201 = vunpack.c.0.s8 %v1200
        %v1202 = vlaneseq
        %v1203 = vshrl.u32 %v1202, 7
        %v1204 = vsub.s32 %v1201, %v1203
        %v1205 = vrot.slane %v1191, %v1204
        %v1207 = vunpack.c.l.s4 1966171168
        %v1208 = vunpack.c.0.s8 %v1207
        %v1209 = vlaneseq
        %v1210 = vshrl.u32 %v1209, 7
        %v1211 = vsub.s32 %v1208, %v1210
        %v1212 = vrot.slane %v1193, %v1211
        %v1214 = vunpack.c.l.s4 1966171168
        %v1215 = vunpack.c.0.s8 %v1214
        %v1216 = vlaneseq
        %v1217 = vshrl.u32 %v1216, 7
        %v1218 = vsub.s32 %v1215, %v1217
        %v1219 = vrot.slane %v1192, %v1218
        %v1221 = vunpack.c.l.s4 1966171168
        %v1222 = vunpack.c.0.s8 %v1221
        %v1223 = vlaneseq
        %v1224 = vshrl.u32 %v1223, 7
        %v1225 = vsub.s32 %v1222, %v1224
        %v1226 = vrot.slane %v1194, %v1225
        %v1228 = vunpack.c.l.s4 1966171168
        %v1229 = vunpack.c.0.s8 %v1228
        %v1230 = vlaneseq
        %v1231 = vshrl.u32 %v1230, 7
        %v1232 = vsub.s32 %v1229, %v1231
        %v1233 = vrot.slane %v1195, %v1232
        %v1235 = vunpack.c.l.s4 1966171168
        %v1236 = vunpack.c.0.s8 %v1235
        %v1237 = vlaneseq
        %v1238 = vshrl.u32 %v1237, 7
        %v1239 = vsub.s32 %v1236, %v1238
        %v1240 = vrot.slane %v1197, %v1239
        %v1242 = vunpack.c.l.s4 1966171168
        %v1243 = vunpack.c.0.s8 %v1242
        %v1244 = vlaneseq
        %v1245 = vshrl.u32 %v1244, 7
        %v1246 = vsub.s32 %v1243, %v1245
        %v1247 = vrot.slane %v1196, %v1246
        %v1249 = vunpack.c.l.s4 1966171168
        %v1250 = vunpack.c.0.s8 %v1249
        %v1251 = vlaneseq
        %v1252 = vshrl.u32 %v1251, 7
        %v1253 = vsub.s32 %v1250, %v1252
        %v1254 = vrot.slane %v1198, %v1253
        %v1255 = vcombine.low %v1205, %v1233
        %v1256 = vcombine.high %v1205, %v1233
        %v1257 = vcombine.low %v1212, %v1240
        %v1258 = vcombine.high %v1212, %v1240
        %v1259 = vcombine.low %v1219, %v1247
        %v1260 = vcombine.high %v1219, %v1247
        %v1261 = vcombine.low %v1226, %v1254
        %v1262 = vcombine.high %v1226, %v1254
        %v1263 = vcombine.low %v876, %v878
        %v1264 = vcombine.high %v876, %v878
        %v1265 = vcombine.low %v953, %v955
        %v1266 = vcombine.high %v953, %v955
        %v1267 = vcombine.low %v1030, %v1032
        %v1268 = vcombine.high %v1030, %v1032
        %v1269 = vcombine.low %v1107, %v1109
        %v1270 = vcombine.high %v1107, %v1109
        %v1272 = vunpack.c.l.s4 1966171168
        %v1273 = vunpack.c.0.s8 %v1272
        %v1274 = vlaneseq
        %v1275 = vshrl.u32 %v1274, 7
        %v1276 = vsub.s32 %v1273, %v1275
        %v1277 = vrot.slane %v1263, %v1276
        %v1279 = vunpack.c.l.s4 1966171168
        %v1280 = vunpack.c.0.s8 %v1279
        %v1281 = vlaneseq
        %v1282 = vshrl.u32 %v1281, 7
        %v1283 = vsub.s32 %v1280, %v1282
        %v1284 = vrot.slane %v1264, %v1283
        %v1286 = vunpack.c.l.s4 1966171168
        %v1287 = vunpack.c.0.s8 %v1286
        %v1288 = vlaneseq
        %v1289 = vshrl.u32 %v1288, 7
        %v1290 = vsub.s32 %v1287, %v1289
        %v1291 = vrot.slane %v1265, %v1290
        %v1293 = vunpack.c.l.s4 1966171168
        %v1294 = vunpack.c.0.s8 %v1293
        %v1295 = vlaneseq
        %v1296 = vshrl.u32 %v1295, 7
        %v1297 = vsub.s32 %v1294, %v1296
        %v1298 = vrot.slane %v1266, %v1297
        %v1300 = vunpack.c.l.s4 1966171168
        %v1301 = vunpack.c.0.s8 %v1300
        %v1302 = vlaneseq
        %v1303 = vshrl.u32 %v1302, 7
        %v1304 = vsub.s32 %v1301, %v1303
        %v1305 = vrot.slane %v1267, %v1304
        %v1307 = vunpack.c.l.s4 1966171168
        %v1308 = vunpack.c.0.s8 %v1307
        %v1309 = vlaneseq
        %v1310 = vshrl.u32 %v1309, 7
        %v1311 = vsub.s32 %v1308, %v1310
        %v1312 = vrot.slane %v1268, %v1311
        %v1314 = vunpack.c.l.s4 1966171168
        %v1315 = vunpack.c.0.s8 %v1314
        %v1316 = vlaneseq
        %v1317 = vshrl.u32 %v1316, 7
        %v1318 = vsub.s32 %v1315, %v1317
        %v1319 = vrot.slane %v1269, %v1318
        %v1321 = vunpack.c.l.s4 1966171168
        %v1322 = vunpack.c.0.s8 %v1321
        %v1323 = vlaneseq
        %v1324 = vshrl.u32 %v1323, 7
        %v1325 = vsub.s32 %v1322, %v1324
        %v1326 = vrot.slane %v1270, %v1325
        %v1327 = vcombine.low %v1277, %v1291
        %v1328 = vcombine.high %v1277, %v1291
        %v1329 = vcombine.low %v1284, %v1298
        %v1330 = vcombine.high %v1284, %v1298
        %v1331 = vcombine.low %v1305, %v1319
        %v1332 = vcombine.high %v1305, %v1319
        %v1333 = vcombine.low %v1312, %v1326
        %v1334 = vcombine.high %v1312, %v1326
        %v1336 = vunpack.c.l.s4 1966171168
        %v1337 = vunpack.c.0.s8 %v1336
        %v1338 = vlaneseq
        %v1339 = vshrl.u32 %v1338, 7
        %v1340 = vsub.s32 %v1337, %v1339
        %v1341 = vrot.slane %v1327, %v1340
        %v1343 = vunpack.c.l.s4 1966171168
        %v1344 = vunpack.c.0.s8 %v1343
        %v1345 = vlaneseq
        %v1346 = vshrl.u32 %v1345, 7
        %v1347 = vsub.s32 %v1344, %v1346
        %v1348 = vrot.slane %v1329, %v1347
        %v1350 = vunpack.c.l.s4 1966171168
        %v1351 = vunpack.c.0.s8 %v1350
        %v1352 = vlaneseq
        %v1353 = vshrl.u32 %v1352, 7
        %v1354 = vsub.s32 %v1351, %v1353
        %v1355 = vrot.slane %v1328, %v1354
        %v1357 = vunpack.c.l.s4 1966171168
        %v1358 = vunpack.c.0.s8 %v1357
        %v1359 = vlaneseq
        %v1360 = vshrl.u32 %v1359, 7
        %v1361 = vsub.s32 %v1358, %v1360
        %v1362 = vrot.slane %v1330, %v1361
        %v1364 = vunpack.c.l.s4 1966171168
        %v1365 = vunpack.c.0.s8 %v1364
        %v1366 = vlaneseq
        %v1367 = vshrl.u32 %v1366, 7
        %v1368 = vsub.s32 %v1365, %v1367
        %v1369 = vrot.slane %v1331, %v1368
        %v1371 = vunpack.c.l.s4 1966171168
        %v1372 = vunpack.c.0.s8 %v1371
        %v1373 = vlaneseq
        %v1374 = vshrl.u32 %v1373, 7
        %v1375 = vsub.s32 %v1372, %v1374
        %v1376 = vrot.slane %v1333, %v1375
        %v1378 = vunpack.c.l.s4 1966171168
        %v1379 = vunpack.c.0.s8 %v1378
        %v1380 = vlaneseq
        %v1381 = vshrl.u32 %v1380, 7
        %v1382 = vsub.s32 %v1379, %v1381
        %v1383 = vrot.slane %v1332, %v1382
        %v1385 = vunpack.c.l.s4 1966171168
        %v1386 = vunpack.c.0.s8 %v1385
        %v1387 = vlaneseq
        %v1388 = vshrl.u32 %v1387, 7
        %v1389 = vsub.s32 %v1386, %v1388
        %v1390 = vrot.slane %v1334, %v1389
        %v1391 = vcombine.low %v1341, %v1369
        %v1392 = vcombine.high %v1341, %v1369
        %v1393 = vcombine.low %v1348, %v1376
        %v1394 = vcombine.high %v1348, %v1376
        %v1395 = vcombine.low %v1355, %v1383
        %v1396 = vcombine.high %v1355, %v1383
        %v1397 = vcombine.low %v1362, %v1390
        %v1398 = vcombine.high %v1362, %v1390
        %v1399 = vld [vmem:[%s4] sm:$0xf]
        %v1400 = vcombine.low %v1255, %v1257
        %v1401 = vcombine.high %v1255, %v1257
        %v1402 = vcombine.low %v1391, %v1393
        %v1403 = vcombine.high %v1391, %v1393
        %v1405 = vunpack.c.l.s4 1966171168
        %v1406 = vunpack.c.0.s8 %v1405
        %v1407 = vlaneseq
        %v1408 = vshrl.u32 %v1407, 7
        %v1409 = vsub.s32 %v1406, %v1408
        %v1410 = vrot.slane %v1400, %v1409
        %v1412 = vunpack.c.l.s4 1966171168
        %v1413 = vunpack.c.0.s8 %v1412
        %v1414 = vlaneseq
        %v1415 = vshrl.u32 %v1414, 7
        %v1416 = vsub.s32 %v1413, %v1415
        %v1417 = vrot.slane %v1401, %v1416
        %v1419 = vunpack.c.l.s4 1966171168
        %v1420 = vunpack.c.0.s8 %v1419
        %v1421 = vlaneseq
        %v1422 = vshrl.u32 %v1421, 7
        %v1423 = vsub.s32 %v1420, %v1422
        %v1424 = vrot.slane %v1402, %v1423
        %v1426 = vunpack.c.l.s4 1966171168
        %v1427 = vunpack.c.0.s8 %v1426
        %v1428 = vlaneseq
        %v1429 = vshrl.u32 %v1428, 7
        %v1430 = vsub.s32 %v1427, %v1429
        %v1431 = vrot.slane %v1403, %v1430
        %v1432 = vcombine.low %v1410, %v1424
        %v1433 = vcombine.high %v1410, %v1424
        %v1434 = vcombine.low %v1417, %v1431
        %v1435 = vcombine.high %v1417, %v1431
        %v1437 = vunpack.c.l.s4 1966171168
        %v1438 = vunpack.c.0.s8 %v1437
        %v1439 = vlaneseq
        %v1440 = vshrl.u32 %v1439, 7
        %v1441 = vsub.s32 %v1438, %v1440
        %v1442 = vrot.slane %v1432, %v1441
        %v1444 = vunpack.c.l.s4 1966171168
        %v1445 = vunpack.c.0.s8 %v1444
        %v1446 = vlaneseq
        %v1447 = vshrl.u32 %v1446, 7
        %v1448 = vsub.s32 %v1445, %v1447
        %v1449 = vrot.slane %v1434, %v1448
        %v1451 = vunpack.c.l.s4 1966171168
        %v1452 = vunpack.c.0.s8 %v1451
        %v1453 = vlaneseq
        %v1454 = vshrl.u32 %v1453, 7
        %v1455 = vsub.s32 %v1452, %v1454
        %v1456 = vrot.slane %v1433, %v1455
        %v1458 = vunpack.c.l.s4 1966171168
        %v1459 = vunpack.c.0.s8 %v1458
        %v1460 = vlaneseq
        %v1461 = vshrl.u32 %v1460, 7
        %v1462 = vsub.s32 %v1459, %v1461
        %v1463 = vrot.slane %v1435, %v1462
        %v1464 = vcombine.high %v1442, %v1442
        %v1465 = vcombine.high %v1449, %v1449
        %v1466 = vcombine.high %v1456, %v1456
        %v1467 = vcombine.high %v1463, %v1463
        %v1468 = vcombine.low %v1259, %v1261
        %v1469 = vcombine.high %v1259, %v1261
        %v1470 = vcombine.low %v1395, %v1397
        %v1471 = vcombine.high %v1395, %v1397
        %v1473 = vunpack.c.l.s4 1966171168
        %v1474 = vunpack.c.0.s8 %v1473
        %v1475 = vlaneseq
        %v1476 = vshrl.u32 %v1475, 7
        %v1477 = vsub.s32 %v1474, %v1476
        %v1478 = vrot.slane %v1468, %v1477
        %v1480 = vunpack.c.l.s4 1966171168
        %v1481 = vunpack.c.0.s8 %v1480
        %v1482 = vlaneseq
        %v1483 = vshrl.u32 %v1482, 7
        %v1484 = vsub.s32 %v1481, %v1483
        %v1485 = vrot.slane %v1469, %v1484
        %v1487 = vunpack.c.l.s4 1966171168
        %v1488 = vunpack.c.0.s8 %v1487
        %v1489 = vlaneseq
        %v1490 = vshrl.u32 %v1489, 7
        %v1491 = vsub.s32 %v1488, %v1490
        %v1492 = vrot.slane %v1470, %v1491
        %v1494 = vunpack.c.l.s4 1966171168
        %v1495 = vunpack.c.0.s8 %v1494
        %v1496 = vlaneseq
        %v1497 = vshrl.u32 %v1496, 7
        %v1498 = vsub.s32 %v1495, %v1497
        %v1499 = vrot.slane %v1471, %v1498
        %v1500 = vcombine.low %v1478, %v1492
        %v1501 = vcombine.high %v1478, %v1492
        %v1502 = vcombine.low %v1485, %v1499
        %v1503 = vcombine.high %v1485, %v1499
        %v1505 = vunpack.c.l.s4 1966171168
        %v1506 = vunpack.c.0.s8 %v1505
        %v1507 = vlaneseq
        %v1508 = vshrl.u32 %v1507, 7
        %v1509 = vsub.s32 %v1506, %v1508
        %v1510 = vrot.slane %v1500, %v1509
        %v1512 = vunpack.c.l.s4 1966171168
        %v1513 = vunpack.c.0.s8 %v1512
        %v1514 = vlaneseq
        %v1515 = vshrl.u32 %v1514, 7
        %v1516 = vsub.s32 %v1513, %v1515
        %v1517 = vrot.slane %v1502, %v1516
        %v1519 = vunpack.c.l.s4 1966171168
        %v1520 = vunpack.c.0.s8 %v1519
        %v1521 = vlaneseq
        %v1522 = vshrl.u32 %v1521, 7
        %v1523 = vsub.s32 %v1520, %v1522
        %v1524 = vrot.slane %v1501, %v1523
        %v1526 = vunpack.c.l.s4 1966171168
        %v1527 = vunpack.c.0.s8 %v1526
        %v1528 = vlaneseq
        %v1529 = vshrl.u32 %v1528, 7
        %v1530 = vsub.s32 %v1527, %v1529
        %v1531 = vrot.slane %v1503, %v1530
        %v1532 = vcombine.high %v1510, %v1510
        %v1533 = vcombine.high %v1517, %v1517
        %v1534 = vcombine.high %v1524, %v1524
        %v1535 = vcombine.high %v1531, %v1531
        %v1536 = vcombine.low %v1256, %v1258
        %v1537 = vcombine.high %v1256, %v1258
        %v1538 = vcombine.low %v1392, %v1394
        %v1539 = vcombine.high %v1392, %v1394
        %v1541 = vunpack.c.l.s4 1966171168
        %v1542 = vunpack.c.0.s8 %v1541
        %v1543 = vlaneseq
        %v1544 = vshrl.u32 %v1543, 7
        %v1545 = vsub.s32 %v1542, %v1544
        %v1546 = vrot.slane %v1536, %v1545
        %v1548 = vunpack.c.l.s4 1966171168
        %v1549 = vunpack.c.0.s8 %v1548
        %v1550 = vlaneseq
        %v1551 = vshrl.u32 %v1550, 7
        %v1552 = vsub.s32 %v1549, %v1551
        %v1553 = vrot.slane %v1537, %v1552
        %v1555 = vunpack.c.l.s4 1966171168
        %v1556 = vunpack.c.0.s8 %v1555
        %v1557 = vlaneseq
        %v1558 = vshrl.u32 %v1557, 7
        %v1559 = vsub.s32 %v1556, %v1558
        %v1560 = vrot.slane %v1538, %v1559
        %v1562 = vunpack.c.l.s4 1966171168
        %v1563 = vunpack.c.0.s8 %v1562
        %v1564 = vlaneseq
        %v1565 = vshrl.u32 %v1564, 7
        %v1566 = vsub.s32 %v1563, %v1565
        %v1567 = vrot.slane %v1539, %v1566
        %v1568 = vcombine.low %v1546, %v1560
        %v1569 = vcombine.high %v1546, %v1560
        %v1570 = vcombine.low %v1553, %v1567
        %v1571 = vcombine.high %v1553, %v1567
        %v1573 = vunpack.c.l.s4 1966171168
        %v1574 = vunpack.c.0.s8 %v1573
        %v1575 = vlaneseq
        %v1576 = vshrl.u32 %v1575, 7
        %v1577 = vsub.s32 %v1574, %v1576
        %v1578 = vrot.slane %v1568, %v1577
        %v1580 = vunpack.c.l.s4 1966171168
        %v1581 = vunpack.c.0.s8 %v1580
        %v1582 = vlaneseq
        %v1583 = vshrl.u32 %v1582, 7
        %v1584 = vsub.s32 %v1581, %v1583
        %v1585 = vrot.slane %v1570, %v1584
        %v1587 = vunpack.c.l.s4 1966171168
        %v1588 = vunpack.c.0.s8 %v1587
        %v1589 = vlaneseq
        %v1590 = vshrl.u32 %v1589, 7
        %v1591 = vsub.s32 %v1588, %v1590
        %v1592 = vrot.slane %v1569, %v1591
        %v1594 = vunpack.c.l.s4 1966171168
        %v1595 = vunpack.c.0.s8 %v1594
        %v1596 = vlaneseq
        %v1597 = vshrl.u32 %v1596, 7
        %v1598 = vsub.s32 %v1595, %v1597
        %v1599 = vrot.slane %v1571, %v1598
        %v1600 = vcombine.high %v1578, %v1578
        %v1601 = vcombine.high %v1585, %v1585
        %v1602 = vcombine.high %v1592, %v1592
        %v1603 = vcombine.high %v1599, %v1599
        %v1604 = vcombine.low %v1260, %v1262
        %v1605 = vcombine.high %v1260, %v1262
        %v1606 = vcombine.low %v1396, %v1398
        %v1607 = vcombine.high %v1396, %v1398
        %v1609 = vunpack.c.l.s4 1966171168
        %v1610 = vunpack.c.0.s8 %v1609
        %v1611 = vlaneseq
        %v1612 = vshrl.u32 %v1611, 7
        %v1613 = vsub.s32 %v1610, %v1612
        %v1614 = vrot.slane %v1604, %v1613
        %v1616 = vunpack.c.l.s4 1966171168
        %v1617 = vunpack.c.0.s8 %v1616
        %v1618 = vlaneseq
        %v1619 = vshrl.u32 %v1618, 7
        %v1620 = vsub.s32 %v1617, %v1619
        %v1621 = vrot.slane %v1605, %v1620
        %v1623 = vunpack.c.l.s4 1966171168
        %v1624 = vunpack.c.0.s8 %v1623
        %v1625 = vlaneseq
        %v1626 = vshrl.u32 %v1625, 7
        %v1627 = vsub.s32 %v1624, %v1626
        %v1628 = vrot.slane %v1606, %v1627
        %v1630 = vunpack.c.l.s4 1966171168
        %v1631 = vunpack.c.0.s8 %v1630
        %v1632 = vlaneseq
        %v1633 = vshrl.u32 %v1632, 7
        %v1634 = vsub.s32 %v1631, %v1633
        %v1635 = vrot.slane %v1607, %v1634
        %v1636 = vcombine.low %v1614, %v1628
        %v1637 = vcombine.high %v1614, %v1628
        %v1638 = vcombine.low %v1621, %v1635
        %v1639 = vcombine.high %v1621, %v1635
        %v1641 = vunpack.c.l.s4 1966171168
        %v1642 = vunpack.c.0.s8 %v1641
        %v1643 = vlaneseq
        %v1644 = vshrl.u32 %v1643, 7
        %v1645 = vsub.s32 %v1642, %v1644
        %v1646 = vrot.slane %v1636, %v1645
        %v1648 = vunpack.c.l.s4 1966171168
        %v1649 = vunpack.c.0.s8 %v1648
        %v1650 = vlaneseq
        %v1651 = vshrl.u32 %v1650, 7
        %v1652 = vsub.s32 %v1649, %v1651
        %v1653 = vrot.slane %v1638, %v1652
        %v1655 = vunpack.c.l.s4 1966171168
        %v1656 = vunpack.c.0.s8 %v1655
        %v1657 = vlaneseq
        %v1658 = vshrl.u32 %v1657, 7
        %v1659 = vsub.s32 %v1656, %v1658
        %v1660 = vrot.slane %v1637, %v1659
        %v1662 = vunpack.c.l.s4 1966171168
        %v1663 = vunpack.c.0.s8 %v1662
        %v1664 = vlaneseq
        %v1665 = vshrl.u32 %v1664, 7
        %v1666 = vsub.s32 %v1663, %v1665
        %v1667 = vrot.slane %v1639, %v1666
        %v1668 = vcombine.high %v1646, %v1646
        %v1669 = vcombine.high %v1653, %v1653
        %v1670 = vcombine.high %v1660, %v1660
        %v1671 = vcombine.high %v1667, %v1667
        %vm1672 = vcmask 31744
        %v1674 = vsel %vm1672, %v1399, 0
        %v1676 = vsel %vm369, %v1442, 0
        %v1678 = vsel %vm369, %v1456, 0
        %v1680 = vsel %vm369, %v1464, 0
        %v1682 = vsel %vm369, %v1466, 0
        %v1684 = vsel %vm369, %v1449, 0
        %v1686 = vsel %vm369, %v1463, 0
        %v1688 = vsel %vm369, %v1465, 0
        %v1690 = vsel %vm369, %v1467, 0
        %v1692 = vsel %vm369, %v1510, 0
        %v1694 = vsel %vm369, %v1524, 0
        %v1696 = vsel %vm369, %v1532, 0
        %v1698 = vsel %vm369, %v1534, 0
        %v1700 = vsel %vm369, %v1517, 0
        %v1702 = vsel %vm369, %v1531, 0
        %v1704 = vsel %vm369, %v1533, 0
        %v1706 = vsel %vm369, %v1535, 0
        %v1708 = vsel %vm369, %v1578, 0
        %v1710 = vsel %vm369, %v1592, 0
        %v1712 = vsel %vm369, %v1600, 0
        %v1714 = vsel %vm369, %v1602, 0
        %v1716 = vsel %vm369, %v1585, 0
        %v1718 = vsel %vm369, %v1599, 0
        %v1720 = vsel %vm369, %v1601, 0
        %v1722 = vsel %vm369, %v1603, 0
        %v1724 = vsel %vm369, %v1646, 0
        %v1726 = vsel %vm369, %v1660, 0
        %v1728 = vsel %vm369, %v1668, 0
        %v1730 = vsel %vm369, %v1670, 0
        %v1732 = vsel %vm369, %v1653, 0
        %v1734 = vsel %vm369, %v1667, 0
        %v1736 = vsel %vm369, %v1669, 0
        %v1738 = vsel %vm369, %v1671, 0
        %1740 = vmatprep.subr.mxu0 %v1678
        %1741 = vmatpush1.msra.mxu0 %v1676
        %1742 = vmatprep.subr.mxu0 0.0
        %1743 = vmatpush1.msra.mxu0 0.0
        %1744 = vmatprep.subr.mxu0 0.0
        %1745 = vmatpush1.msra.mxu0 0.0
        %1746 = vmatprep.subr.mxu0 0.0
        %1747 = vmatpush1.msra.mxu0 0.0
        %1748 = vmatprep.subr.mxu0 0.0
        %1749 = vmatpush1.msra.mxu0 0.0
        %1750 = vmatprep.subr.mxu0 0.0
        %1751 = vmatpush1.msra.mxu0 0.0
        %1752 = vmatprep.subr.mxu0 0.0
        %1753 = vmatpush1.msra.mxu0 0.0
        %1754 = vmatprep.subr.mxu0 0.0
        %1755 = vmatpush1.msra.mxu0 0.0
        %1756 = vmatprep.subr.mxu0 0.0
        %1757 = vmatpush1.msra.mxu0 0.0
        %1758 = vmatprep.subr.mxu0 0.0
        %1759 = vmatpush1.msra.mxu0 0.0
        %1760 = vmatprep.subr.mxu0 0.0
        %1761 = vmatpush1.msra.mxu0 0.0
        %1762 = vmatprep.subr.mxu0 0.0
        %1763 = vmatpush1.msra.mxu0 0.0
        %1764 = vmatprep.subr.mxu0 0.0
        %1765 = vmatpush1.msra.mxu0 0.0
        %1766 = vmatprep.subr.mxu0 0.0
        %1767 = vmatpush1.msra.mxu0 0.0
        %1768 = vmatprep.subr.mxu0 0.0
        %1769 = vmatpush1.msra.mxu0 0.0
        %1770 = vmatprep.subr.mxu0 0.0
        %1771 = vmatpush1.msra.mxu0 0.0
        %1772 = vmatprep.subr.mxu0 0.0
        %1773 = vmatpush1.msra.mxu0 0.0
        %1774 = vmatprep.subr.mxu0 0.0
        %1775 = vmatpush1.msra.mxu0 0.0
        %1776 = vmatprep.subr.mxu0 0.0
        %1777 = vmatpush1.msra.mxu0 0.0
        %1778 = vmatprep.subr.mxu0 0.0
        %1779 = vmatpush1.msra.mxu0 0.0
        %1780 = vmatprep.subr.mxu0 0.0
        %1781 = vmatpush1.msra.mxu0 0.0
        %1782 = vmatprep.subr.mxu0 0.0
        %1783 = vmatpush1.msra.mxu0 0.0
        %1784 = vmatprep.subr.mxu0 0.0
        %1785 = vmatpush1.msra.mxu0 0.0
        %1786 = vmatprep.subr.mxu0 0.0
        %1787 = vmatpush1.msra.mxu0 0.0
        %1788 = vmatprep.subr.mxu0 0.0
        %1789 = vmatpush1.msra.mxu0 0.0
        %1790 = vmatprep.subr.mxu0 0.0
        %1791 = vmatpush1.msra.mxu0 0.0
        %1792 = vmatprep.subr.mxu0 0.0
        %1793 = vmatpush1.msra.mxu0 0.0
        %1794 = vmatprep.subr.mxu0 0.0
        %1795 = vmatpush1.msra.mxu0 0.0
        %1796 = vmatprep.subr.mxu0 0.0
        %1797 = vmatpush1.msra.mxu0 0.0
        %1798 = vmatprep.subr.mxu0 0.0
        %1799 = vmatpush1.msra.mxu0 0.0
        %1800 = vmatprep.subr.mxu0 0.0
        %1801 = vmatpush1.msra.mxu0 0.0
        %1802 = vmatprep.subr.mxu0 0.0
        %1803 = vmatpush1.msra.mxu0 0.0
        %1804 = vmatprep.mubr.f32.mxu0 0.0
        %1805 = vmatmul.mubr.f32.gmra.mrb[0].mxu0 %v1674
        %v1806 = vpop.f32.mrb[0].mxu0
        %v1807 = vadd.f32 0.0, %v1806
        %v1808 = vpop.f32.mrb[0].mxu0
        %v1809 = vadd.f32 0.0, %v1808
        %1810 = vdwg.mxu0
        %1811 = vmatprep.subr.mxu0 %v1682
        %1812 = vmatpush1.msra.mxu0 %v1680
        %1813 = vmatprep.subr.mxu0 0.0
        %1814 = vmatpush1.msra.mxu0 0.0
        %1815 = vmatprep.subr.mxu0 0.0
        %1816 = vmatpush1.msra.mxu0 0.0
        %1817 = vmatprep.subr.mxu0 0.0
        %1818 = vmatpush1.msra.mxu0 0.0
        %1819 = vmatprep.subr.mxu0 0.0
        %1820 = vmatpush1.msra.mxu0 0.0
        %1821 = vmatprep.subr.mxu0 0.0
        %1822 = vmatpush1.msra.mxu0 0.0
        %1823 = vmatprep.subr.mxu0 0.0
        %1824 = vmatpush1.msra.mxu0 0.0
        %1825 = vmatprep.subr.mxu0 0.0
        %1826 = vmatpush1.msra.mxu0 0.0
        %1827 = vmatprep.subr.mxu0 0.0
        %1828 = vmatpush1.msra.mxu0 0.0
        %1829 = vmatprep.subr.mxu0 0.0
        %1830 = vmatpush1.msra.mxu0 0.0
        %1831 = vmatprep.subr.mxu0 0.0
        %1832 = vmatpush1.msra.mxu0 0.0
        %1833 = vmatprep.subr.mxu0 0.0
        %1834 = vmatpush1.msra.mxu0 0.0
        %1835 = vmatprep.subr.mxu0 0.0
        %1836 = vmatpush1.msra.mxu0 0.0
        %1837 = vmatprep.subr.mxu0 0.0
        %1838 = vmatpush1.msra.mxu0 0.0
        %1839 = vmatprep.subr.mxu0 0.0
        %1840 = vmatpush1.msra.mxu0 0.0
        %1841 = vmatprep.subr.mxu0 0.0
        %1842 = vmatpush1.msra.mxu0 0.0
        %1843 = vmatprep.subr.mxu0 0.0
        %1844 = vmatpush1.msra.mxu0 0.0
        %1845 = vmatprep.subr.mxu0 0.0
        %1846 = vmatpush1.msra.mxu0 0.0
        %1847 = vmatprep.subr.mxu0 0.0
        %1848 = vmatpush1.msra.mxu0 0.0
        %1849 = vmatprep.subr.mxu0 0.0
        %1850 = vmatpush1.msra.mxu0 0.0
        %1851 = vmatprep.subr.mxu0 0.0
        %1852 = vmatpush1.msra.mxu0 0.0
        %1853 = vmatprep.subr.mxu0 0.0
        %1854 = vmatpush1.msra.mxu0 0.0
        %1855 = vmatprep.subr.mxu0 0.0
        %1856 = vmatpush1.msra.mxu0 0.0
        %1857 = vmatprep.subr.mxu0 0.0
        %1858 = vmatpush1.msra.mxu0 0.0
        %1859 = vmatprep.subr.mxu0 0.0
        %1860 = vmatpush1.msra.mxu0 0.0
        %1861 = vmatprep.subr.mxu0 0.0
        %1862 = vmatpush1.msra.mxu0 0.0
        %1863 = vmatprep.subr.mxu0 0.0
        %1864 = vmatpush1.msra.mxu0 0.0
        %1865 = vmatprep.subr.mxu0 0.0
        %1866 = vmatpush1.msra.mxu0 0.0
        %1867 = vmatprep.subr.mxu0 0.0
        %1868 = vmatpush1.msra.mxu0 0.0
        %1869 = vmatprep.subr.mxu0 0.0
        %1870 = vmatpush1.msra.mxu0 0.0
        %1871 = vmatprep.subr.mxu0 0.0
        %1872 = vmatpush1.msra.mxu0 0.0
        %1873 = vmatprep.subr.mxu0 0.0
        %1874 = vmatpush1.msra.mxu0 0.0
        %1875 = vmatprep.mubr.f32.mxu0 0.0
        %1876 = vmatmul.mubr.f32.gmra.mrb[0].mxu0 %v1674
        %v1877 = vpop.f32.mrb[0].mxu0
        %v1878 = vadd.f32 0.0, %v1877
        %v1879 = vpop.f32.mrb[0].mxu0
        %v1880 = vadd.f32 0.0, %v1879
        %1881 = vdwg.mxu0
        %1882 = vmatprep.subr.mxu0 %v1686
        %1883 = vmatpush1.msra.mxu0 %v1684
        %1884 = vmatprep.subr.mxu0 0.0
        %1885 = vmatpush1.msra.mxu0 0.0
        %1886 = vmatprep.subr.mxu0 0.0
        %1887 = vmatpush1.msra.mxu0 0.0
        %1888 = vmatprep.subr.mxu0 0.0
        %1889 = vmatpush1.msra.mxu0 0.0
        %1890 = vmatprep.subr.mxu0 0.0
        %1891 = vmatpush1.msra.mxu0 0.0
        %1892 = vmatprep.subr.mxu0 0.0
        %1893 = vmatpush1.msra.mxu0 0.0
        %1894 = vmatprep.subr.mxu0 0.0
        %1895 = vmatpush1.msra.mxu0 0.0
        %1896 = vmatprep.subr.mxu0 0.0
        %1897 = vmatpush1.msra.mxu0 0.0
        %1898 = vmatprep.subr.mxu0 0.0
        %1899 = vmatpush1.msra.mxu0 0.0
        %1900 = vmatprep.subr.mxu0 0.0
        %1901 = vmatpush1.msra.mxu0 0.0
        %1902 = vmatprep.subr.mxu0 0.0
        %1903 = vmatpush1.msra.mxu0 0.0
        %1904 = vmatprep.subr.mxu0 0.0
        %1905 = vmatpush1.msra.mxu0 0.0
        %1906 = vmatprep.subr.mxu0 0.0
        %1907 = vmatpush1.msra.mxu0 0.0
        %1908 = vmatprep.subr.mxu0 0.0
        %1909 = vmatpush1.msra.mxu0 0.0
        %1910 = vmatprep.subr.mxu0 0.0
        %1911 = vmatpush1.msra.mxu0 0.0
        %1912 = vmatprep.subr.mxu0 0.0
        %1913 = vmatpush1.msra.mxu0 0.0
        %1914 = vmatprep.subr.mxu0 0.0
        %1915 = vmatpush1.msra.mxu0 0.0
        %1916 = vmatprep.subr.mxu0 0.0
        %1917 = vmatpush1.msra.mxu0 0.0
        %1918 = vmatprep.subr.mxu0 0.0
        %1919 = vmatpush1.msra.mxu0 0.0
        %1920 = vmatprep.subr.mxu0 0.0
        %1921 = vmatpush1.msra.mxu0 0.0
        %1922 = vmatprep.subr.mxu0 0.0
        %1923 = vmatpush1.msra.mxu0 0.0
        %1924 = vmatprep.subr.mxu0 0.0
        %1925 = vmatpush1.msra.mxu0 0.0
        %1926 = vmatprep.subr.mxu0 0.0
        %1927 = vmatpush1.msra.mxu0 0.0
        %1928 = vmatprep.subr.mxu0 0.0
        %1929 = vmatpush1.msra.mxu0 0.0
        %1930 = vmatprep.subr.mxu0 0.0
        %1931 = vmatpush1.msra.mxu0 0.0
        %1932 = vmatprep.subr.mxu0 0.0
        %1933 = vmatpush1.msra.mxu0 0.0
        %1934 = vmatprep.subr.mxu0 0.0
        %1935 = vmatpush1.msra.mxu0 0.0
        %1936 = vmatprep.subr.mxu0 0.0
        %1937 = vmatpush1.msra.mxu0 0.0
        %1938 = vmatprep.subr.mxu0 0.0
        %1939 = vmatpush1.msra.mxu0 0.0
        %1940 = vmatprep.subr.mxu0 0.0
        %1941 = vmatpush1.msra.mxu0 0.0
        %1942 = vmatprep.subr.mxu0 0.0
        %1943 = vmatpush1.msra.mxu0 0.0
        %1944 = vmatprep.subr.mxu0 0.0
        %1945 = vmatpush1.msra.mxu0 0.0
        %1946 = vmatprep.mubr.f32.mxu0 0.0
        %1947 = vmatmul.mubr.f32.gmra.mrb[0].mxu0 %v1674
        %v1948 = vpop.f32.mrb[0].mxu0
        %v1949 = vadd.f32 0.0, %v1948
        %v1950 = vpop.f32.mrb[0].mxu0
        %v1951 = vadd.f32 0.0, %v1950
        %1952 = vdwg.mxu0
        %1953 = vmatprep.subr.mxu0 %v1690
        %1954 = vmatpush1.msra.mxu0 %v1688
        %1955 = vmatprep.subr.mxu0 0.0
        %1956 = vmatpush1.msra.mxu0 0.0
        %1957 = vmatprep.subr.mxu0 0.0
        %1958 = vmatpush1.msra.mxu0 0.0
        %1959 = vmatprep.subr.mxu0 0.0
        %1960 = vmatpush1.msra.mxu0 0.0
        %1961 = vmatprep.subr.mxu0 0.0
        %1962 = vmatpush1.msra.mxu0 0.0
        %1963 = vmatprep.subr.mxu0 0.0
        %1964 = vmatpush1.msra.mxu0 0.0
        %1965 = vmatprep.subr.mxu0 0.0
        %1966 = vmatpush1.msra.mxu0 0.0
        %1967 = vmatprep.subr.mxu0 0.0
        %1968 = vmatpush1.msra.mxu0 0.0
        %1969 = vmatprep.subr.mxu0 0.0
        %1970 = vmatpush1.msra.mxu0 0.0
        %1971 = vmatprep.subr.mxu0 0.0
        %1972 = vmatpush1.msra.mxu0 0.0
        %1973 = vmatprep.subr.mxu0 0.0
        %1974 = vmatpush1.msra.mxu0 0.0
        %1975 = vmatprep.subr.mxu0 0.0
        %1976 = vmatpush1.msra.mxu0 0.0
        %1977 = vmatprep.subr.mxu0 0.0
        %1978 = vmatpush1.msra.mxu0 0.0
        %1979 = vmatprep.subr.mxu0 0.0
        %1980 = vmatpush1.msra.mxu0 0.0
        %1981 = vmatprep.subr.mxu0 0.0
        %1982 = vmatpush1.msra.mxu0 0.0
        %1983 = vmatprep.subr.mxu0 0.0
        %1984 = vmatpush1.msra.mxu0 0.0
        %1985 = vmatprep.subr.mxu0 0.0
        %1986 = vmatpush1.msra.mxu0 0.0
        %1987 = vmatprep.subr.mxu0 0.0
        %1988 = vmatpush1.msra.mxu0 0.0
        %1989 = vmatprep.subr.mxu0 0.0
        %1990 = vmatpush1.msra.mxu0 0.0
        %1991 = vmatprep.subr.mxu0 0.0
        %1992 = vmatpush1.msra.mxu0 0.0
        %1993 = vmatprep.subr.mxu0 0.0
        %1994 = vmatpush1.msra.mxu0 0.0
        %1995 = vmatprep.subr.mxu0 0.0
        %1996 = vmatpush1.msra.mxu0 0.0
        %1997 = vmatprep.subr.mxu0 0.0
        %1998 = vmatpush1.msra.mxu0 0.0
        %1999 = vmatprep.subr.mxu0 0.0
        %2000 = vmatpush1.msra.mxu0 0.0
        %2001 = vmatprep.subr.mxu0 0.0
        %2002 = vmatpush1.msra.mxu0 0.0
        %2003 = vmatprep.subr.mxu0 0.0
        %2004 = vmatpush1.msra.mxu0 0.0
        %2005 = vmatprep.subr.mxu0 0.0
        %2006 = vmatpush1.msra.mxu0 0.0
        %2007 = vmatprep.subr.mxu0 0.0
        %2008 = vmatpush1.msra.mxu0 0.0
        %2009 = vmatprep.subr.mxu0 0.0
        %2010 = vmatpush1.msra.mxu0 0.0
        %2011 = vmatprep.subr.mxu0 0.0
        %2012 = vmatpush1.msra.mxu0 0.0
        %2013 = vmatprep.subr.mxu0 0.0
        %2014 = vmatpush1.msra.mxu0 0.0
        %2015 = vmatprep.subr.mxu0 0.0
        %2016 = vmatpush1.msra.mxu0 0.0
        %2017 = vmatprep.mubr.f32.mxu0 0.0
        %2018 = vmatmul.mubr.f32.gmra.mrb[0].mxu0 %v1674
        %v2019 = vpop.f32.mrb[0].mxu0
        %v2020 = vadd.f32 0.0, %v2019
        %v2021 = vpop.f32.mrb[0].mxu0
        %v2022 = vadd.f32 0.0, %v2021
        %2023 = vdwg.mxu0
        %2024 = vmatprep.subr.mxu0 %v1694
        %2025 = vmatpush1.msra.mxu0 %v1692
        %2026 = vmatprep.subr.mxu0 0.0
        %2027 = vmatpush1.msra.mxu0 0.0
        %2028 = vmatprep.subr.mxu0 0.0
        %2029 = vmatpush1.msra.mxu0 0.0
        %2030 = vmatprep.subr.mxu0 0.0
        %2031 = vmatpush1.msra.mxu0 0.0
        %2032 = vmatprep.subr.mxu0 0.0
        %2033 = vmatpush1.msra.mxu0 0.0
        %2034 = vmatprep.subr.mxu0 0.0
        %2035 = vmatpush1.msra.mxu0 0.0
        %2036 = vmatprep.subr.mxu0 0.0
        %2037 = vmatpush1.msra.mxu0 0.0
        %2038 = vmatprep.subr.mxu0 0.0
        %2039 = vmatpush1.msra.mxu0 0.0
        %2040 = vmatprep.subr.mxu0 0.0
        %2041 = vmatpush1.msra.mxu0 0.0
        %2042 = vmatprep.subr.mxu0 0.0
        %2043 = vmatpush1.msra.mxu0 0.0
        %2044 = vmatprep.subr.mxu0 0.0
        %2045 = vmatpush1.msra.mxu0 0.0
        %2046 = vmatprep.subr.mxu0 0.0
        %2047 = vmatpush1.msra.mxu0 0.0
        %2048 = vmatprep.subr.mxu0 0.0
        %2049 = vmatpush1.msra.mxu0 0.0
        %2050 = vmatprep.subr.mxu0 0.0
        %2051 = vmatpush1.msra.mxu0 0.0
        %2052 = vmatprep.subr.mxu0 0.0
        %2053 = vmatpush1.msra.mxu0 0.0
        %2054 = vmatprep.subr.mxu0 0.0
        %2055 = vmatpush1.msra.mxu0 0.0
        %2056 = vmatprep.subr.mxu0 0.0
        %2057 = vmatpush1.msra.mxu0 0.0
        %2058 = vmatprep.subr.mxu0 0.0
        %2059 = vmatpush1.msra.mxu0 0.0
        %2060 = vmatprep.subr.mxu0 0.0
        %2061 = vmatpush1.msra.mxu0 0.0
        %2062 = vmatprep.subr.mxu0 0.0
        %2063 = vmatpush1.msra.mxu0 0.0
        %2064 = vmatprep.subr.mxu0 0.0
        %2065 = vmatpush1.msra.mxu0 0.0
        %2066 = vmatprep.subr.mxu0 0.0
        %2067 = vmatpush1.msra.mxu0 0.0
        %2068 = vmatprep.subr.mxu0 0.0
        %2069 = vmatpush1.msra.mxu0 0.0
        %2070 = vmatprep.subr.mxu0 0.0
        %2071 = vmatpush1.msra.mxu0 0.0
        %2072 = vmatprep.subr.mxu0 0.0
        %2073 = vmatpush1.msra.mxu0 0.0
        %2074 = vmatprep.subr.mxu0 0.0
        %2075 = vmatpush1.msra.mxu0 0.0
        %2076 = vmatprep.subr.mxu0 0.0
        %2077 = vmatpush1.msra.mxu0 0.0
        %2078 = vmatprep.subr.mxu0 0.0
        %2079 = vmatpush1.msra.mxu0 0.0
        %2080 = vmatprep.subr.mxu0 0.0
        %2081 = vmatpush1.msra.mxu0 0.0
        %2082 = vmatprep.subr.mxu0 0.0
        %2083 = vmatpush1.msra.mxu0 0.0
        %2084 = vmatprep.subr.mxu0 0.0
        %2085 = vmatpush1.msra.mxu0 0.0
        %2086 = vmatprep.subr.mxu0 0.0
        %2087 = vmatpush1.msra.mxu0 0.0
        %2088 = vmatprep.mubr.f32.mxu0 0.0
        %2089 = vmatmul.mubr.f32.gmra.mrb[0].mxu0 %v1674
        %v2090 = vpop.f32.mrb[0].mxu0
        %v2091 = vadd.f32 0.0, %v2090
        %v2092 = vpop.f32.mrb[0].mxu0
        %v2093 = vadd.f32 0.0, %v2092
        %2094 = vdwg.mxu0
        %2095 = vmatprep.subr.mxu0 %v1698
        %2096 = vmatpush1.msra.mxu0 %v1696
        %2097 = vmatprep.subr.mxu0 0.0
        %2098 = vmatpush1.msra.mxu0 0.0
        %2099 = vmatprep.subr.mxu0 0.0
        %2100 = vmatpush1.msra.mxu0 0.0
        %2101 = vmatprep.subr.mxu0 0.0
        %2102 = vmatpush1.msra.mxu0 0.0
        %2103 = vmatprep.subr.mxu0 0.0
        %2104 = vmatpush1.msra.mxu0 0.0
        %2105 = vmatprep.subr.mxu0 0.0
        %2106 = vmatpush1.msra.mxu0 0.0
        %2107 = vmatprep.subr.mxu0 0.0
        %2108 = vmatpush1.msra.mxu0 0.0
        %2109 = vmatprep.subr.mxu0 0.0
        %2110 = vmatpush1.msra.mxu0 0.0
        %2111 = vmatprep.subr.mxu0 0.0
        %2112 = vmatpush1.msra.mxu0 0.0
        %2113 = vmatprep.subr.mxu0 0.0
        %2114 = vmatpush1.msra.mxu0 0.0
        %2115 = vmatprep.subr.mxu0 0.0
        %2116 = vmatpush1.msra.mxu0 0.0
        %2117 = vmatprep.subr.mxu0 0.0
        %2118 = vmatpush1.msra.mxu0 0.0
        %2119 = vmatprep.subr.mxu0 0.0
        %2120 = vmatpush1.msra.mxu0 0.0
        %2121 = vmatprep.subr.mxu0 0.0
        %2122 = vmatpush1.msra.mxu0 0.0
        %2123 = vmatprep.subr.mxu0 0.0
        %2124 = vmatpush1.msra.mxu0 0.0
        %2125 = vmatprep.subr.mxu0 0.0
        %2126 = vmatpush1.msra.mxu0 0.0
        %2127 = vmatprep.subr.mxu0 0.0
        %2128 = vmatpush1.msra.mxu0 0.0
        %2129 = vmatprep.subr.mxu0 0.0
        %2130 = vmatpush1.msra.mxu0 0.0
        %2131 = vmatprep.subr.mxu0 0.0
        %2132 = vmatpush1.msra.mxu0 0.0
        %2133 = vmatprep.subr.mxu0 0.0
        %2134 = vmatpush1.msra.mxu0 0.0
        %2135 = vmatprep.subr.mxu0 0.0
        %2136 = vmatpush1.msra.mxu0 0.0
        %2137 = vmatprep.subr.mxu0 0.0
        %2138 = vmatpush1.msra.mxu0 0.0
        %2139 = vmatprep.subr.mxu0 0.0
        %2140 = vmatpush1.msra.mxu0 0.0
        %2141 = vmatprep.subr.mxu0 0.0
        %2142 = vmatpush1.msra.mxu0 0.0
        %2143 = vmatprep.subr.mxu0 0.0
        %2144 = vmatpush1.msra.mxu0 0.0
        %2145 = vmatprep.subr.mxu0 0.0
        %2146 = vmatpush1.msra.mxu0 0.0
        %2147 = vmatprep.subr.mxu0 0.0
        %2148 = vmatpush1.msra.mxu0 0.0
        %2149 = vmatprep.subr.mxu0 0.0
        %2150 = vmatpush1.msra.mxu0 0.0
        %2151 = vmatprep.subr.mxu0 0.0
        %2152 = vmatpush1.msra.mxu0 0.0
        %2153 = vmatprep.subr.mxu0 0.0
        %2154 = vmatpush1.msra.mxu0 0.0
        %2155 = vmatprep.subr.mxu0 0.0
        %2156 = vmatpush1.msra.mxu0 0.0
        %2157 = vmatprep.subr.mxu0 0.0
        %2158 = vmatpush1.msra.mxu0 0.0
        %2159 = vmatprep.mubr.f32.mxu0 0.0
        %2160 = vmatmul.mubr.f32.gmra.mrb[0].mxu0 %v1674
        %v2161 = vpop.f32.mrb[0].mxu0
        %v2162 = vadd.f32 0.0, %v2161
        %v2163 = vpop.f32.mrb[0].mxu0
        %v2164 = vadd.f32 0.0, %v2163
        %2165 = vdwg.mxu0
        %2166 = vmatprep.subr.mxu0 %v1702
        %2167 = vmatpush1.msra.mxu0 %v1700
        %2168 = vmatprep.subr.mxu0 0.0
        %2169 = vmatpush1.msra.mxu0 0.0
        %2170 = vmatprep.subr.mxu0 0.0
        %2171 = vmatpush1.msra.mxu0 0.0
        %2172 = vmatprep.subr.mxu0 0.0
        %2173 = vmatpush1.msra.mxu0 0.0
        %2174 = vmatprep.subr.mxu0 0.0
        %2175 = vmatpush1.msra.mxu0 0.0
        %2176 = vmatprep.subr.mxu0 0.0
        %2177 = vmatpush1.msra.mxu0 0.0
        %2178 = vmatprep.subr.mxu0 0.0
        %2179 = vmatpush1.msra.mxu0 0.0
        %2180 = vmatprep.subr.mxu0 0.0
        %2181 = vmatpush1.msra.mxu0 0.0
        %2182 = vmatprep.subr.mxu0 0.0
        %2183 = vmatpush1.msra.mxu0 0.0
        %2184 = vmatprep.subr.mxu0 0.0
        %2185 = vmatpush1.msra.mxu0 0.0
        %2186 = vmatprep.subr.mxu0 0.0
        %2187 = vmatpush1.msra.mxu0 0.0
        %2188 = vmatprep.subr.mxu0 0.0
        %2189 = vmatpush1.msra.mxu0 0.0
        %2190 = vmatprep.subr.mxu0 0.0
        %2191 = vmatpush1.msra.mxu0 0.0
        %2192 = vmatprep.subr.mxu0 0.0
        %2193 = vmatpush1.msra.mxu0 0.0
        %2194 = vmatprep.subr.mxu0 0.0
        %2195 = vmatpush1.msra.mxu0 0.0
        %2196 = vmatprep.subr.mxu0 0.0
        %2197 = vmatpush1.msra.mxu0 0.0
        %2198 = vmatprep.subr.mxu0 0.0
        %2199 = vmatpush1.msra.mxu0 0.0
        %2200 = vmatprep.subr.mxu0 0.0
        %2201 = vmatpush1.msra.mxu0 0.0
        %2202 = vmatprep.subr.mxu0 0.0
        %2203 = vmatpush1.msra.mxu0 0.0
        %2204 = vmatprep.subr.mxu0 0.0
        %2205 = vmatpush1.msra.mxu0 0.0
        %2206 = vmatprep.subr.mxu0 0.0
        %2207 = vmatpush1.msra.mxu0 0.0
        %2208 = vmatprep.subr.mxu0 0.0
        %2209 = vmatpush1.msra.mxu0 0.0
        %2210 = vmatprep.subr.mxu0 0.0
        %2211 = vmatpush1.msra.mxu0 0.0
        %2212 = vmatprep.subr.mxu0 0.0
        %2213 = vmatpush1.msra.mxu0 0.0
        %2214 = vmatprep.subr.mxu0 0.0
        %2215 = vmatpush1.msra.mxu0 0.0
        %2216 = vmatprep.subr.mxu0 0.0
        %2217 = vmatpush1.msra.mxu0 0.0
        %2218 = vmatprep.subr.mxu0 0.0
        %2219 = vmatpush1.msra.mxu0 0.0
        %2220 = vmatprep.subr.mxu0 0.0
        %2221 = vmatpush1.msra.mxu0 0.0
        %2222 = vmatprep.subr.mxu0 0.0
        %2223 = vmatpush1.msra.mxu0 0.0
        %2224 = vmatprep.subr.mxu0 0.0
        %2225 = vmatpush1.msra.mxu0 0.0
        %2226 = vmatprep.subr.mxu0 0.0
        %2227 = vmatpush1.msra.mxu0 0.0
        %2228 = vmatprep.subr.mxu0 0.0
        %2229 = vmatpush1.msra.mxu0 0.0
        %2230 = vmatprep.mubr.f32.mxu0 0.0
        %2231 = vmatmul.mubr.f32.gmra.mrb[0].mxu0 %v1674
        %v2232 = vpop.f32.mrb[0].mxu0
        %v2233 = vadd.f32 0.0, %v2232
        %v2234 = vpop.f32.mrb[0].mxu0
        %v2235 = vadd.f32 0.0, %v2234
        %2236 = vdwg.mxu0
        %2237 = vmatprep.subr.mxu0 %v1706
        %2238 = vmatpush1.msra.mxu0 %v1704
        %2239 = vmatprep.subr.mxu0 0.0
        %2240 = vmatpush1.msra.mxu0 0.0
        %2241 = vmatprep.subr.mxu0 0.0
        %2242 = vmatpush1.msra.mxu0 0.0
        %2243 = vmatprep.subr.mxu0 0.0
        %2244 = vmatpush1.msra.mxu0 0.0
        %2245 = vmatprep.subr.mxu0 0.0
        %2246 = vmatpush1.msra.mxu0 0.0
        %2247 = vmatprep.subr.mxu0 0.0
        %2248 = vmatpush1.msra.mxu0 0.0
        %2249 = vmatprep.subr.mxu0 0.0
        %2250 = vmatpush1.msra.mxu0 0.0
        %2251 = vmatprep.subr.mxu0 0.0
        %2252 = vmatpush1.msra.mxu0 0.0
        %2253 = vmatprep.subr.mxu0 0.0
        %2254 = vmatpush1.msra.mxu0 0.0
        %2255 = vmatprep.subr.mxu0 0.0
        %2256 = vmatpush1.msra.mxu0 0.0
        %2257 = vmatprep.subr.mxu0 0.0
        %2258 = vmatpush1.msra.mxu0 0.0
        %2259 = vmatprep.subr.mxu0 0.0
        %2260 = vmatpush1.msra.mxu0 0.0
        %2261 = vmatprep.subr.mxu0 0.0
        %2262 = vmatpush1.msra.mxu0 0.0
        %2263 = vmatprep.subr.mxu0 0.0
        %2264 = vmatpush1.msra.mxu0 0.0
        %2265 = vmatprep.subr.mxu0 0.0
        %2266 = vmatpush1.msra.mxu0 0.0
        %2267 = vmatprep.subr.mxu0 0.0
        %2268 = vmatpush1.msra.mxu0 0.0
        %2269 = vmatprep.subr.mxu0 0.0
        %2270 = vmatpush1.msra.mxu0 0.0
        %2271 = vmatprep.subr.mxu0 0.0
        %2272 = vmatpush1.msra.mxu0 0.0
        %2273 = vmatprep.subr.mxu0 0.0
        %2274 = vmatpush1.msra.mxu0 0.0
        %2275 = vmatprep.subr.mxu0 0.0
        %2276 = vmatpush1.msra.mxu0 0.0
        %2277 = vmatprep.subr.mxu0 0.0
        %2278 = vmatpush1.msra.mxu0 0.0
        %2279 = vmatprep.subr.mxu0 0.0
        %2280 = vmatpush1.msra.mxu0 0.0
        %2281 = vmatprep.subr.mxu0 0.0
        %2282 = vmatpush1.msra.mxu0 0.0
        %2283 = vmatprep.subr.mxu0 0.0
        %2284 = vmatpush1.msra.mxu0 0.0
        %2285 = vmatprep.subr.mxu0 0.0
        %2286 = vmatpush1.msra.mxu0 0.0
        %2287 = vmatprep.subr.mxu0 0.0
        %2288 = vmatpush1.msra.mxu0 0.0
        %2289 = vmatprep.subr.mxu0 0.0
        %2290 = vmatpush1.msra.mxu0 0.0
        %2291 = vmatprep.subr.mxu0 0.0
        %2292 = vmatpush1.msra.mxu0 0.0
        %2293 = vmatprep.subr.mxu0 0.0
        %2294 = vmatpush1.msra.mxu0 0.0
        %2295 = vmatprep.subr.mxu0 0.0
        %2296 = vmatpush1.msra.mxu0 0.0
        %2297 = vmatprep.subr.mxu0 0.0
        %2298 = vmatpush1.msra.mxu0 0.0
        %2299 = vmatprep.subr.mxu0 0.0
        %2300 = vmatpush1.msra.mxu0 0.0
        %2301 = vmatprep.mubr.f32.mxu0 0.0
        %2302 = vmatmul.mubr.f32.gmra.mrb[0].mxu0 %v1674
        %v2303 = vpop.f32.mrb[0].mxu0
        %v2304 = vadd.f32 0.0, %v2303
        %v2305 = vpop.f32.mrb[0].mxu0
        %v2306 = vadd.f32 0.0, %v2305
        %2307 = vdwg.mxu0
        %2308 = vmatprep.subr.mxu0 %v1710
        %2309 = vmatpush1.msra.mxu0 %v1708
        %2310 = vmatprep.subr.mxu0 0.0
        %2311 = vmatpush1.msra.mxu0 0.0
        %2312 = vmatprep.subr.mxu0 0.0
        %2313 = vmatpush1.msra.mxu0 0.0
        %2314 = vmatprep.subr.mxu0 0.0
        %2315 = vmatpush1.msra.mxu0 0.0
        %2316 = vmatprep.subr.mxu0 0.0
        %2317 = vmatpush1.msra.mxu0 0.0
        %2318 = vmatprep.subr.mxu0 0.0
        %2319 = vmatpush1.msra.mxu0 0.0
        %2320 = vmatprep.subr.mxu0 0.0
        %2321 = vmatpush1.msra.mxu0 0.0
        %2322 = vmatprep.subr.mxu0 0.0
        %2323 = vmatpush1.msra.mxu0 0.0
        %2324 = vmatprep.subr.mxu0 0.0
        %2325 = vmatpush1.msra.mxu0 0.0
        %2326 = vmatprep.subr.mxu0 0.0
        %2327 = vmatpush1.msra.mxu0 0.0
        %2328 = vmatprep.subr.mxu0 0.0
        %2329 = vmatpush1.msra.mxu0 0.0
        %2330 = vmatprep.subr.mxu0 0.0
        %2331 = vmatpush1.msra.mxu0 0.0
        %2332 = vmatprep.subr.mxu0 0.0
        %2333 = vmatpush1.msra.mxu0 0.0
        %2334 = vmatprep.subr.mxu0 0.0
        %2335 = vmatpush1.msra.mxu0 0.0
        %2336 = vmatprep.subr.mxu0 0.0
        %2337 = vmatpush1.msra.mxu0 0.0
        %2338 = vmatprep.subr.mxu0 0.0
        %2339 = vmatpush1.msra.mxu0 0.0
        %2340 = vmatprep.subr.mxu0 0.0
        %2341 = vmatpush1.msra.mxu0 0.0
        %2342 = vmatprep.subr.mxu0 0.0
        %2343 = vmatpush1.msra.mxu0 0.0
        %2344 = vmatprep.subr.mxu0 0.0
        %2345 = vmatpush1.msra.mxu0 0.0
        %2346 = vmatprep.subr.mxu0 0.0
        %2347 = vmatpush1.msra.mxu0 0.0
        %2348 = vmatprep.subr.mxu0 0.0
        %2349 = vmatpush1.msra.mxu0 0.0
        %2350 = vmatprep.subr.mxu0 0.0
        %2351 = vmatpush1.msra.mxu0 0.0
        %2352 = vmatprep.subr.mxu0 0.0
        %2353 = vmatpush1.msra.mxu0 0.0
        %2354 = vmatprep.subr.mxu0 0.0
        %2355 = vmatpush1.msra.mxu0 0.0
        %2356 = vmatprep.subr.mxu0 0.0
        %2357 = vmatpush1.msra.mxu0 0.0
        %2358 = vmatprep.subr.mxu0 0.0
        %2359 = vmatpush1.msra.mxu0 0.0
        %2360 = vmatprep.subr.mxu0 0.0
        %2361 = vmatpush1.msra.mxu0 0.0
        %2362 = vmatprep.subr.mxu0 0.0
        %2363 = vmatpush1.msra.mxu0 0.0
        %2364 = vmatprep.subr.mxu0 0.0
        %2365 = vmatpush1.msra.mxu0 0.0
        %2366 = vmatprep.subr.mxu0 0.0
        %2367 = vmatpush1.msra.mxu0 0.0
        %2368 = vmatprep.subr.mxu0 0.0
        %2369 = vmatpush1.msra.mxu0 0.0
        %2370 = vmatprep.subr.mxu0 0.0
        %2371 = vmatpush1.msra.mxu0 0.0
        %2372 = vmatprep.mubr.f32.mxu0 0.0
        %2373 = vmatmul.mubr.f32.gmra.mrb[0].mxu0 %v1674
        %v2374 = vpop.f32.mrb[0].mxu0
        %v2375 = vadd.f32 0.0, %v2374
        %v2376 = vpop.f32.mrb[0].mxu0
        %v2377 = vadd.f32 0.0, %v2376
        %2378 = vdwg.mxu0
        %2379 = vmatprep.subr.mxu0 %v1714
        %2380 = vmatpush1.msra.mxu0 %v1712
        %2381 = vmatprep.subr.mxu0 0.0
        %2382 = vmatpush1.msra.mxu0 0.0
        %2383 = vmatprep.subr.mxu0 0.0
        %2384 = vmatpush1.msra.mxu0 0.0
        %2385 = vmatprep.subr.mxu0 0.0
        %2386 = vmatpush1.msra.mxu0 0.0
        %2387 = vmatprep.subr.mxu0 0.0
        %2388 = vmatpush1.msra.mxu0 0.0
        %2389 = vmatprep.subr.mxu0 0.0
        %2390 = vmatpush1.msra.mxu0 0.0
        %2391 = vmatprep.subr.mxu0 0.0
        %2392 = vmatpush1.msra.mxu0 0.0
        %2393 = vmatprep.subr.mxu0 0.0
        %2394 = vmatpush1.msra.mxu0 0.0
        %2395 = vmatprep.subr.mxu0 0.0
        %2396 = vmatpush1.msra.mxu0 0.0
        %2397 = vmatprep.subr.mxu0 0.0
        %2398 = vmatpush1.msra.mxu0 0.0
        %2399 = vmatprep.subr.mxu0 0.0
        %2400 = vmatpush1.msra.mxu0 0.0
        %2401 = vmatprep.subr.mxu0 0.0
        %2402 = vmatpush1.msra.mxu0 0.0
        %2403 = vmatprep.subr.mxu0 0.0
        %2404 = vmatpush1.msra.mxu0 0.0
        %2405 = vmatprep.subr.mxu0 0.0
        %2406 = vmatpush1.msra.mxu0 0.0
        %2407 = vmatprep.subr.mxu0 0.0
        %2408 = vmatpush1.msra.mxu0 0.0
        %2409 = vmatprep.subr.mxu0 0.0
        %2410 = vmatpush1.msra.mxu0 0.0
        %2411 = vmatprep.subr.mxu0 0.0
        %2412 = vmatpush1.msra.mxu0 0.0
        %2413 = vmatprep.subr.mxu0 0.0
        %2414 = vmatpush1.msra.mxu0 0.0
        %2415 = vmatprep.subr.mxu0 0.0
        %2416 = vmatpush1.msra.mxu0 0.0
        %2417 = vmatprep.subr.mxu0 0.0
        %2418 = vmatpush1.msra.mxu0 0.0
        %2419 = vmatprep.subr.mxu0 0.0
        %2420 = vmatpush1.msra.mxu0 0.0
        %2421 = vmatprep.subr.mxu0 0.0
        %2422 = vmatpush1.msra.mxu0 0.0
        %2423 = vmatprep.subr.mxu0 0.0
        %2424 = vmatpush1.msra.mxu0 0.0
        %2425 = vmatprep.subr.mxu0 0.0
        %2426 = vmatpush1.msra.mxu0 0.0
        %2427 = vmatprep.subr.mxu0 0.0
        %2428 = vmatpush1.msra.mxu0 0.0
        %2429 = vmatprep.subr.mxu0 0.0
        %2430 = vmatpush1.msra.mxu0 0.0
        %2431 = vmatprep.subr.mxu0 0.0
        %2432 = vmatpush1.msra.mxu0 0.0
        %2433 = vmatprep.subr.mxu0 0.0
        %2434 = vmatpush1.msra.mxu0 0.0
        %2435 = vmatprep.subr.mxu0 0.0
        %2436 = vmatpush1.msra.mxu0 0.0
        %2437 = vmatprep.subr.mxu0 0.0
        %2438 = vmatpush1.msra.mxu0 0.0
        %2439 = vmatprep.subr.mxu0 0.0
        %2440 = vmatpush1.msra.mxu0 0.0
        %2441 = vmatprep.subr.mxu0 0.0
        %2442 = vmatpush1.msra.mxu0 0.0
        %2443 = vmatprep.mubr.f32.mxu0 0.0
        %2444 = vmatmul.mubr.f32.gmra.mrb[0].mxu0 %v1674
        %v2445 = vpop.f32.mrb[0].mxu0
        %v2446 = vadd.f32 0.0, %v2445
        %v2447 = vpop.f32.mrb[0].mxu0
        %v2448 = vadd.f32 0.0, %v2447
        %2449 = vdwg.mxu0
        %2450 = vmatprep.subr.mxu0 %v1718
        %2451 = vmatpush1.msra.mxu0 %v1716
        %2452 = vmatprep.subr.mxu0 0.0
        %2453 = vmatpush1.msra.mxu0 0.0
        %2454 = vmatprep.subr.mxu0 0.0
        %2455 = vmatpush1.msra.mxu0 0.0
        %2456 = vmatprep.subr.mxu0 0.0
        %2457 = vmatpush1.msra.mxu0 0.0
        %2458 = vmatprep.subr.mxu0 0.0
        %2459 = vmatpush1.msra.mxu0 0.0
        %2460 = vmatprep.subr.mxu0 0.0
        %2461 = vmatpush1.msra.mxu0 0.0
        %2462 = vmatprep.subr.mxu0 0.0
        %2463 = vmatpush1.msra.mxu0 0.0
        %2464 = vmatprep.subr.mxu0 0.0
        %2465 = vmatpush1.msra.mxu0 0.0
        %2466 = vmatprep.subr.mxu0 0.0
        %2467 = vmatpush1.msra.mxu0 0.0
        %2468 = vmatprep.subr.mxu0 0.0
        %2469 = vmatpush1.msra.mxu0 0.0
        %2470 = vmatprep.subr.mxu0 0.0
        %2471 = vmatpush1.msra.mxu0 0.0
        %2472 = vmatprep.subr.mxu0 0.0
        %2473 = vmatpush1.msra.mxu0 0.0
        %2474 = vmatprep.subr.mxu0 0.0
        %2475 = vmatpush1.msra.mxu0 0.0
        %2476 = vmatprep.subr.mxu0 0.0
        %2477 = vmatpush1.msra.mxu0 0.0
        %2478 = vmatprep.subr.mxu0 0.0
        %2479 = vmatpush1.msra.mxu0 0.0
        %2480 = vmatprep.subr.mxu0 0.0
        %2481 = vmatpush1.msra.mxu0 0.0
        %2482 = vmatprep.subr.mxu0 0.0
        %2483 = vmatpush1.msra.mxu0 0.0
        %2484 = vmatprep.subr.mxu0 0.0
        %2485 = vmatpush1.msra.mxu0 0.0
        %2486 = vmatprep.subr.mxu0 0.0
        %2487 = vmatpush1.msra.mxu0 0.0
        %2488 = vmatprep.subr.mxu0 0.0
        %2489 = vmatpush1.msra.mxu0 0.0
        %2490 = vmatprep.subr.mxu0 0.0
        %2491 = vmatpush1.msra.mxu0 0.0
        %2492 = vmatprep.subr.mxu0 0.0
        %2493 = vmatpush1.msra.mxu0 0.0
        %2494 = vmatprep.subr.mxu0 0.0
        %2495 = vmatpush1.msra.mxu0 0.0
        %2496 = vmatprep.subr.mxu0 0.0
        %2497 = vmatpush1.msra.mxu0 0.0
        %2498 = vmatprep.subr.mxu0 0.0
        %2499 = vmatpush1.msra.mxu0 0.0
        %2500 = vmatprep.subr.mxu0 0.0
        %2501 = vmatpush1.msra.mxu0 0.0
        %2502 = vmatprep.subr.mxu0 0.0
        %2503 = vmatpush1.msra.mxu0 0.0
        %2504 = vmatprep.subr.mxu0 0.0
        %2505 = vmatpush1.msra.mxu0 0.0
        %2506 = vmatprep.subr.mxu0 0.0
        %2507 = vmatpush1.msra.mxu0 0.0
        %2508 = vmatprep.subr.mxu0 0.0
        %2509 = vmatpush1.msra.mxu0 0.0
        %2510 = vmatprep.subr.mxu0 0.0
        %2511 = vmatpush1.msra.mxu0 0.0
        %2512 = vmatprep.subr.mxu0 0.0
        %2513 = vmatpush1.msra.mxu0 0.0
        %2514 = vmatprep.mubr.f32.mxu0 0.0
        %2515 = vmatmul.mubr.f32.gmra.mrb[0].mxu0 %v1674
        %v2516 = vpop.f32.mrb[0].mxu0
        %v2517 = vadd.f32 0.0, %v2516
        %v2518 = vpop.f32.mrb[0].mxu0
        %v2519 = vadd.f32 0.0, %v2518
        %2520 = vdwg.mxu0
        %2521 = vmatprep.subr.mxu0 %v1722
        %2522 = vmatpush1.msra.mxu0 %v1720
        %2523 = vmatprep.subr.mxu0 0.0
        %2524 = vmatpush1.msra.mxu0 0.0
        %2525 = vmatprep.subr.mxu0 0.0
        %2526 = vmatpush1.msra.mxu0 0.0
        %2527 = vmatprep.subr.mxu0 0.0
        %2528 = vmatpush1.msra.mxu0 0.0
        %2529 = vmatprep.subr.mxu0 0.0
        %2530 = vmatpush1.msra.mxu0 0.0
        %2531 = vmatprep.subr.mxu0 0.0
        %2532 = vmatpush1.msra.mxu0 0.0
        %2533 = vmatprep.subr.mxu0 0.0
        %2534 = vmatpush1.msra.mxu0 0.0
        %2535 = vmatprep.subr.mxu0 0.0
        %2536 = vmatpush1.msra.mxu0 0.0
        %2537 = vmatprep.subr.mxu0 0.0
        %2538 = vmatpush1.msra.mxu0 0.0
        %2539 = vmatprep.subr.mxu0 0.0
        %2540 = vmatpush1.msra.mxu0 0.0
        %2541 = vmatprep.subr.mxu0 0.0
        %2542 = vmatpush1.msra.mxu0 0.0
        %2543 = vmatprep.subr.mxu0 0.0
        %2544 = vmatpush1.msra.mxu0 0.0
        %2545 = vmatprep.subr.mxu0 0.0
        %2546 = vmatpush1.msra.mxu0 0.0
        %2547 = vmatprep.subr.mxu0 0.0
        %2548 = vmatpush1.msra.mxu0 0.0
        %2549 = vmatprep.subr.mxu0 0.0
        %2550 = vmatpush1.msra.mxu0 0.0
        %2551 = vmatprep.subr.mxu0 0.0
        %2552 = vmatpush1.msra.mxu0 0.0
        %2553 = vmatprep.subr.mxu0 0.0
        %2554 = vmatpush1.msra.mxu0 0.0
        %2555 = vmatprep.subr.mxu0 0.0
        %2556 = vmatpush1.msra.mxu0 0.0
        %2557 = vmatprep.subr.mxu0 0.0
        %2558 = vmatpush1.msra.mxu0 0.0
        %2559 = vmatprep.subr.mxu0 0.0
        %2560 = vmatpush1.msra.mxu0 0.0
        %2561 = vmatprep.subr.mxu0 0.0
        %2562 = vmatpush1.msra.mxu0 0.0
        %2563 = vmatprep.subr.mxu0 0.0
        %2564 = vmatpush1.msra.mxu0 0.0
        %2565 = vmatprep.subr.mxu0 0.0
        %2566 = vmatpush1.msra.mxu0 0.0
        %2567 = vmatprep.subr.mxu0 0.0
        %2568 = vmatpush1.msra.mxu0 0.0
        %2569 = vmatprep.subr.mxu0 0.0
        %2570 = vmatpush1.msra.mxu0 0.0
        %2571 = vmatprep.subr.mxu0 0.0
        %2572 = vmatpush1.msra.mxu0 0.0
        %2573 = vmatprep.subr.mxu0 0.0
        %2574 = vmatpush1.msra.mxu0 0.0
        %2575 = vmatprep.subr.mxu0 0.0
        %2576 = vmatpush1.msra.mxu0 0.0
        %2577 = vmatprep.subr.mxu0 0.0
        %2578 = vmatpush1.msra.mxu0 0.0
        %2579 = vmatprep.subr.mxu0 0.0
        %2580 = vmatpush1.msra.mxu0 0.0
        %2581 = vmatprep.subr.mxu0 0.0
        %2582 = vmatpush1.msra.mxu0 0.0
        %2583 = vmatprep.subr.mxu0 0.0
        %2584 = vmatpush1.msra.mxu0 0.0
        %2585 = vmatprep.mubr.f32.mxu0 0.0
        %2586 = vmatmul.mubr.f32.gmra.mrb[0].mxu0 %v1674
        %v2587 = vpop.f32.mrb[0].mxu0
        %v2588 = vadd.f32 0.0, %v2587
        %v2589 = vpop.f32.mrb[0].mxu0
        %v2590 = vadd.f32 0.0, %v2589
        %2591 = vdwg.mxu0
        %2592 = vmatprep.subr.mxu0 %v1726
        %2593 = vmatpush1.msra.mxu0 %v1724
        %2594 = vmatprep.subr.mxu0 0.0
        %2595 = vmatpush1.msra.mxu0 0.0
        %2596 = vmatprep.subr.mxu0 0.0
        %2597 = vmatpush1.msra.mxu0 0.0
        %2598 = vmatprep.subr.mxu0 0.0
        %2599 = vmatpush1.msra.mxu0 0.0
        %2600 = vmatprep.subr.mxu0 0.0
        %2601 = vmatpush1.msra.mxu0 0.0
        %2602 = vmatprep.subr.mxu0 0.0
        %2603 = vmatpush1.msra.mxu0 0.0
        %2604 = vmatprep.subr.mxu0 0.0
        %2605 = vmatpush1.msra.mxu0 0.0
        %2606 = vmatprep.subr.mxu0 0.0
        %2607 = vmatpush1.msra.mxu0 0.0
        %2608 = vmatprep.subr.mxu0 0.0
        %2609 = vmatpush1.msra.mxu0 0.0
        %2610 = vmatprep.subr.mxu0 0.0
        %2611 = vmatpush1.msra.mxu0 0.0
        %2612 = vmatprep.subr.mxu0 0.0
        %2613 = vmatpush1.msra.mxu0 0.0
        %2614 = vmatprep.subr.mxu0 0.0
        %2615 = vmatpush1.msra.mxu0 0.0
        %2616 = vmatprep.subr.mxu0 0.0
        %2617 = vmatpush1.msra.mxu0 0.0
        %2618 = vmatprep.subr.mxu0 0.0
        %2619 = vmatpush1.msra.mxu0 0.0
        %2620 = vmatprep.subr.mxu0 0.0
        %2621 = vmatpush1.msra.mxu0 0.0
        %2622 = vmatprep.subr.mxu0 0.0
        %2623 = vmatpush1.msra.mxu0 0.0
        %2624 = vmatprep.subr.mxu0 0.0
        %2625 = vmatpush1.msra.mxu0 0.0
        %2626 = vmatprep.subr.mxu0 0.0
        %2627 = vmatpush1.msra.mxu0 0.0
        %2628 = vmatprep.subr.mxu0 0.0
        %2629 = vmatpush1.msra.mxu0 0.0
        %2630 = vmatprep.subr.mxu0 0.0
        %2631 = vmatpush1.msra.mxu0 0.0
        %2632 = vmatprep.subr.mxu0 0.0
        %2633 = vmatpush1.msra.mxu0 0.0
        %2634 = vmatprep.subr.mxu0 0.0
        %2635 = vmatpush1.msra.mxu0 0.0
        %2636 = vmatprep.subr.mxu0 0.0
        %2637 = vmatpush1.msra.mxu0 0.0
        %2638 = vmatprep.subr.mxu0 0.0
        %2639 = vmatpush1.msra.mxu0 0.0
        %2640 = vmatprep.subr.mxu0 0.0
        %2641 = vmatpush1.msra.mxu0 0.0
        %2642 = vmatprep.subr.mxu0 0.0
        %2643 = vmatpush1.msra.mxu0 0.0
        %2644 = vmatprep.subr.mxu0 0.0
        %2645 = vmatpush1.msra.mxu0 0.0
        %2646 = vmatprep.subr.mxu0 0.0
        %2647 = vmatpush1.msra.mxu0 0.0
        %2648 = vmatprep.subr.mxu0 0.0
        %2649 = vmatpush1.msra.mxu0 0.0
        %2650 = vmatprep.subr.mxu0 0.0
        %2651 = vmatpush1.msra.mxu0 0.0
        %2652 = vmatprep.subr.mxu0 0.0
        %2653 = vmatpush1.msra.mxu0 0.0
        %2654 = vmatprep.subr.mxu0 0.0
        %2655 = vmatpush1.msra.mxu0 0.0
        %2656 = vmatprep.mubr.f32.mxu0 0.0
        %2657 = vmatmul.mubr.f32.gmra.mrb[0].mxu0 %v1674
        %v2658 = vpop.f32.mrb[0].mxu0
        %v2659 = vadd.f32 0.0, %v2658
        %v2660 = vpop.f32.mrb[0].mxu0
        %v2661 = vadd.f32 0.0, %v2660
        %2662 = vdwg.mxu0
        %2663 = vmatprep.subr.mxu0 %v1730
        %2664 = vmatpush1.msra.mxu0 %v1728
        %2665 = vmatprep.subr.mxu0 0.0
        %2666 = vmatpush1.msra.mxu0 0.0
        %2667 = vmatprep.subr.mxu0 0.0
        %2668 = vmatpush1.msra.mxu0 0.0
        %2669 = vmatprep.subr.mxu0 0.0
        %2670 = vmatpush1.msra.mxu0 0.0
        %2671 = vmatprep.subr.mxu0 0.0
        %2672 = vmatpush1.msra.mxu0 0.0
        %2673 = vmatprep.subr.mxu0 0.0
        %2674 = vmatpush1.msra.mxu0 0.0
        %2675 = vmatprep.subr.mxu0 0.0
        %2676 = vmatpush1.msra.mxu0 0.0
        %2677 = vmatprep.subr.mxu0 0.0
        %2678 = vmatpush1.msra.mxu0 0.0
        %2679 = vmatprep.subr.mxu0 0.0
        %2680 = vmatpush1.msra.mxu0 0.0
        %2681 = vmatprep.subr.mxu0 0.0
        %2682 = vmatpush1.msra.mxu0 0.0
        %2683 = vmatprep.subr.mxu0 0.0
        %2684 = vmatpush1.msra.mxu0 0.0
        %2685 = vmatprep.subr.mxu0 0.0
        %2686 = vmatpush1.msra.mxu0 0.0
        %2687 = vmatprep.subr.mxu0 0.0
        %2688 = vmatpush1.msra.mxu0 0.0
        %2689 = vmatprep.subr.mxu0 0.0
        %2690 = vmatpush1.msra.mxu0 0.0
        %2691 = vmatprep.subr.mxu0 0.0
        %2692 = vmatpush1.msra.mxu0 0.0
        %2693 = vmatprep.subr.mxu0 0.0
        %2694 = vmatpush1.msra.mxu0 0.0
        %2695 = vmatprep.subr.mxu0 0.0
        %2696 = vmatpush1.msra.mxu0 0.0
        %2697 = vmatprep.subr.mxu0 0.0
        %2698 = vmatpush1.msra.mxu0 0.0
        %2699 = vmatprep.subr.mxu0 0.0
        %2700 = vmatpush1.msra.mxu0 0.0
        %2701 = vmatprep.subr.mxu0 0.0
        %2702 = vmatpush1.msra.mxu0 0.0
        %2703 = vmatprep.subr.mxu0 0.0
        %2704 = vmatpush1.msra.mxu0 0.0
        %2705 = vmatprep.subr.mxu0 0.0
        %2706 = vmatpush1.msra.mxu0 0.0
        %2707 = vmatprep.subr.mxu0 0.0
        %2708 = vmatpush1.msra.mxu0 0.0
        %2709 = vmatprep.subr.mxu0 0.0
        %2710 = vmatpush1.msra.mxu0 0.0
        %2711 = vmatprep.subr.mxu0 0.0
        %2712 = vmatpush1.msra.mxu0 0.0
        %2713 = vmatprep.subr.mxu0 0.0
        %2714 = vmatpush1.msra.mxu0 0.0
        %2715 = vmatprep.subr.mxu0 0.0
        %2716 = vmatpush1.msra.mxu0 0.0
        %2717 = vmatprep.subr.mxu0 0.0
        %2718 = vmatpush1.msra.mxu0 0.0
        %2719 = vmatprep.subr.mxu0 0.0
        %2720 = vmatpush1.msra.mxu0 0.0
        %2721 = vmatprep.subr.mxu0 0.0
        %2722 = vmatpush1.msra.mxu0 0.0
        %2723 = vmatprep.subr.mxu0 0.0
        %2724 = vmatpush1.msra.mxu0 0.0
        %2725 = vmatprep.subr.mxu0 0.0
        %2726 = vmatpush1.msra.mxu0 0.0
        %2727 = vmatprep.mubr.f32.mxu0 0.0
        %2728 = vmatmul.mubr.f32.gmra.mrb[0].mxu0 %v1674
        %v2729 = vpop.f32.mrb[0].mxu0
        %v2730 = vadd.f32 0.0, %v2729
        %v2731 = vpop.f32.mrb[0].mxu0
        %v2732 = vadd.f32 0.0, %v2731
        %2733 = vdwg.mxu0
        %2734 = vmatprep.subr.mxu0 %v1734
        %2735 = vmatpush1.msra.mxu0 %v1732
        %2736 = vmatprep.subr.mxu0 0.0
        %2737 = vmatpush1.msra.mxu0 0.0
        %2738 = vmatprep.subr.mxu0 0.0
        %2739 = vmatpush1.msra.mxu0 0.0
        %2740 = vmatprep.subr.mxu0 0.0
        %2741 = vmatpush1.msra.mxu0 0.0
        %2742 = vmatprep.subr.mxu0 0.0
        %2743 = vmatpush1.msra.mxu0 0.0
        %2744 = vmatprep.subr.mxu0 0.0
        %2745 = vmatpush1.msra.mxu0 0.0
        %2746 = vmatprep.subr.mxu0 0.0
        %2747 = vmatpush1.msra.mxu0 0.0
        %2748 = vmatprep.subr.mxu0 0.0
        %2749 = vmatpush1.msra.mxu0 0.0
        %2750 = vmatprep.subr.mxu0 0.0
        %2751 = vmatpush1.msra.mxu0 0.0
        %2752 = vmatprep.subr.mxu0 0.0
        %2753 = vmatpush1.msra.mxu0 0.0
        %2754 = vmatprep.subr.mxu0 0.0
        %2755 = vmatpush1.msra.mxu0 0.0
        %2756 = vmatprep.subr.mxu0 0.0
        %2757 = vmatpush1.msra.mxu0 0.0
        %2758 = vmatprep.subr.mxu0 0.0
        %2759 = vmatpush1.msra.mxu0 0.0
        %2760 = vmatprep.subr.mxu0 0.0
        %2761 = vmatpush1.msra.mxu0 0.0
        %2762 = vmatprep.subr.mxu0 0.0
        %2763 = vmatpush1.msra.mxu0 0.0
        %2764 = vmatprep.subr.mxu0 0.0
        %2765 = vmatpush1.msra.mxu0 0.0
        %2766 = vmatprep.subr.mxu0 0.0
        %2767 = vmatpush1.msra.mxu0 0.0
        %2768 = vmatprep.subr.mxu0 0.0
        %2769 = vmatpush1.msra.mxu0 0.0
        %2770 = vmatprep.subr.mxu0 0.0
        %2771 = vmatpush1.msra.mxu0 0.0
        %2772 = vmatprep.subr.mxu0 0.0
        %2773 = vmatpush1.msra.mxu0 0.0
        %2774 = vmatprep.subr.mxu0 0.0
        %2775 = vmatpush1.msra.mxu0 0.0
        %2776 = vmatprep.subr.mxu0 0.0
        %2777 = vmatpush1.msra.mxu0 0.0
        %2778 = vmatprep.subr.mxu0 0.0
        %2779 = vmatpush1.msra.mxu0 0.0
        %2780 = vmatprep.subr.mxu0 0.0
        %2781 = vmatpush1.msra.mxu0 0.0
        %2782 = vmatprep.subr.mxu0 0.0
        %2783 = vmatpush1.msra.mxu0 0.0
        %2784 = vmatprep.subr.mxu0 0.0
        %2785 = vmatpush1.msra.mxu0 0.0
        %2786 = vmatprep.subr.mxu0 0.0
        %2787 = vmatpush1.msra.mxu0 0.0
        %2788 = vmatprep.subr.mxu0 0.0
        %2789 = vmatpush1.msra.mxu0 0.0
        %2790 = vmatprep.subr.mxu0 0.0
        %2791 = vmatpush1.msra.mxu0 0.0
        %2792 = vmatprep.subr.mxu0 0.0
        %2793 = vmatpush1.msra.mxu0 0.0
        %2794 = vmatprep.subr.mxu0 0.0
        %2795 = vmatpush1.msra.mxu0 0.0
        %2796 = vmatprep.subr.mxu0 0.0
        %2797 = vmatpush1.msra.mxu0 0.0
        %2798 = vmatprep.mubr.f32.mxu0 0.0
        %2799 = vmatmul.mubr.f32.gmra.mrb[0].mxu0 %v1674
        %v2800 = vpop.f32.mrb[0].mxu0
        %v2801 = vadd.f32 0.0, %v2800
        %v2802 = vpop.f32.mrb[0].mxu0
        %v2803 = vadd.f32 0.0, %v2802
        %2804 = vdwg.mxu0
        %2805 = vmatprep.subr.mxu0 %v1738
        %2806 = vmatpush1.msra.mxu0 %v1736
        %2807 = vmatprep.subr.mxu0 0.0
        %2808 = vmatpush1.msra.mxu0 0.0
        %2809 = vmatprep.subr.mxu0 0.0
        %2810 = vmatpush1.msra.mxu0 0.0
        %2811 = vmatprep.subr.mxu0 0.0
        %2812 = vmatpush1.msra.mxu0 0.0
        %2813 = vmatprep.subr.mxu0 0.0
        %2814 = vmatpush1.msra.mxu0 0.0
        %2815 = vmatprep.subr.mxu0 0.0
        %2816 = vmatpush1.msra.mxu0 0.0
        %2817 = vmatprep.subr.mxu0 0.0
        %2818 = vmatpush1.msra.mxu0 0.0
        %2819 = vmatprep.subr.mxu0 0.0
        %2820 = vmatpush1.msra.mxu0 0.0
        %2821 = vmatprep.subr.mxu0 0.0
        %2822 = vmatpush1.msra.mxu0 0.0
        %2823 = vmatprep.subr.mxu0 0.0
        %2824 = vmatpush1.msra.mxu0 0.0
        %2825 = vmatprep.subr.mxu0 0.0
        %2826 = vmatpush1.msra.mxu0 0.0
        %2827 = vmatprep.subr.mxu0 0.0
        %2828 = vmatpush1.msra.mxu0 0.0
        %2829 = vmatprep.subr.mxu0 0.0
        %2830 = vmatpush1.msra.mxu0 0.0
        %2831 = vmatprep.subr.mxu0 0.0
        %2832 = vmatpush1.msra.mxu0 0.0
        %2833 = vmatprep.subr.mxu0 0.0
        %2834 = vmatpush1.msra.mxu0 0.0
        %2835 = vmatprep.subr.mxu0 0.0
        %2836 = vmatpush1.msra.mxu0 0.0
        %2837 = vmatprep.subr.mxu0 0.0
        %2838 = vmatpush1.msra.mxu0 0.0
        %2839 = vmatprep.subr.mxu0 0.0
        %2840 = vmatpush1.msra.mxu0 0.0
        %2841 = vmatprep.subr.mxu0 0.0
        %2842 = vmatpush1.msra.mxu0 0.0
        %2843 = vmatprep.subr.mxu0 0.0
        %2844 = vmatpush1.msra.mxu0 0.0
        %2845 = vmatprep.subr.mxu0 0.0
        %2846 = vmatpush1.msra.mxu0 0.0
        %2847 = vmatprep.subr.mxu0 0.0
        %2848 = vmatpush1.msra.mxu0 0.0
        %2849 = vmatprep.subr.mxu0 0.0
        %2850 = vmatpush1.msra.mxu0 0.0
        %2851 = vmatprep.subr.mxu0 0.0
        %2852 = vmatpush1.msra.mxu0 0.0
        %2853 = vmatprep.subr.mxu0 0.0
        %2854 = vmatpush1.msra.mxu0 0.0
        %2855 = vmatprep.subr.mxu0 0.0
        %2856 = vmatpush1.msra.mxu0 0.0
        %2857 = vmatprep.subr.mxu0 0.0
        %2858 = vmatpush1.msra.mxu0 0.0
        %2859 = vmatprep.subr.mxu0 0.0
        %2860 = vmatpush1.msra.mxu0 0.0
        %2861 = vmatprep.subr.mxu0 0.0
        %2862 = vmatpush1.msra.mxu0 0.0
        %2863 = vmatprep.subr.mxu0 0.0
        %2864 = vmatpush1.msra.mxu0 0.0
        %2865 = vmatprep.subr.mxu0 0.0
        %2866 = vmatpush1.msra.mxu0 0.0
        %2867 = vmatprep.subr.mxu0 0.0
        %2868 = vmatpush1.msra.mxu0 0.0
        %2869 = vmatprep.mubr.f32.mxu0 0.0
        %2870 = vmatmul.mubr.f32.gmra.mrb[0].mxu0 %v1674
        %v2871 = vpop.f32.mrb[0].mxu0
        %v2872 = vadd.f32 0.0, %v2871
        %v2873 = vpop.f32.mrb[0].mxu0
        %v2874 = vadd.f32 0.0, %v2873
        %2875 = vdwg.mxu0
        %s2876 = sld [smem:[#allocation8]]
        %s2877 = sld [smem:[#allocation8 + $0x1]]
        %vm2878 = vcmp.lt.f32.partialorder %v1807, 0.0
        %vm2879 = vcmp.lt.f32.partialorder %v1809, 0.0
        %vm2880 = vcmp.lt.f32.partialorder %v1878, 0.0
        %vm2881 = vcmp.lt.f32.partialorder %v1880, 0.0
        %vm2882 = vcmp.lt.f32.partialorder %v1949, 0.0
        %vm2883 = vcmp.lt.f32.partialorder %v1951, 0.0
        %vm2884 = vcmp.lt.f32.partialorder %v2020, 0.0
        %vm2885 = vcmp.lt.f32.partialorder %v2022, 0.0
        %vm2886 = vcmp.lt.f32.partialorder %v2091, 0.0
        %vm2887 = vcmp.lt.f32.partialorder %v2093, 0.0
        %vm2888 = vcmp.lt.f32.partialorder %v2162, 0.0
        %vm2889 = vcmp.lt.f32.partialorder %v2164, 0.0
        %vm2890 = vcmp.lt.f32.partialorder %v2233, 0.0
        %vm2891 = vcmp.lt.f32.partialorder %v2235, 0.0
        %vm2892 = vcmp.lt.f32.partialorder %v2304, 0.0
        %vm2893 = vcmp.lt.f32.partialorder %v2306, 0.0
        %vm2894 = vcmp.lt.f32.partialorder %v2375, 0.0
        %vm2895 = vcmp.lt.f32.partialorder %v2377, 0.0
        %vm2896 = vcmp.lt.f32.partialorder %v2446, 0.0
        %vm2897 = vcmp.lt.f32.partialorder %v2448, 0.0
        %vm2898 = vcmp.lt.f32.partialorder %v2517, 0.0
        %vm2899 = vcmp.lt.f32.partialorder %v2519, 0.0
        %vm2900 = vcmp.lt.f32.partialorder %v2588, 0.0
        %vm2901 = vcmp.lt.f32.partialorder %v2590, 0.0
        %vm2902 = vcmp.lt.f32.partialorder %v2659, 0.0
        %vm2903 = vcmp.lt.f32.partialorder %v2661, 0.0
        %vm2904 = vcmp.lt.f32.partialorder %v2730, 0.0
        %vm2905 = vcmp.lt.f32.partialorder %v2732, 0.0
        %vm2906 = vcmp.lt.f32.partialorder %v2801, 0.0
        %vm2907 = vcmp.lt.f32.partialorder %v2803, 0.0
        %vm2908 = vcmp.lt.f32.partialorder %v2872, 0.0
        %vm2909 = vcmp.lt.f32.partialorder %v2874, 0.0
        %v2910 = vstv %s2876
        %v2911 = vstv %s2877
        %v2912 = vsel %vm2878, %v2910, %v2911
        %v2913 = vsel %vm2879, %v2910, %v2911
        %v2914 = vsel %vm2880, %v2910, %v2911
        %v2915 = vsel %vm2881, %v2910, %v2911
        %v2916 = vsel %vm2882, %v2910, %v2911
        %v2917 = vsel %vm2883, %v2910, %v2911
        %v2918 = vsel %vm2884, %v2910, %v2911
        %v2919 = vsel %vm2885, %v2910, %v2911
        %v2920 = vsel %vm2886, %v2910, %v2911
        %v2921 = vsel %vm2887, %v2910, %v2911
        %v2922 = vsel %vm2888, %v2910, %v2911
        %v2923 = vsel %vm2889, %v2910, %v2911
        %v2924 = vsel %vm2890, %v2910, %v2911
        %v2925 = vsel %vm2891, %v2910, %v2911
        %v2926 = vsel %vm2892, %v2910, %v2911
        %v2927 = vsel %vm2893, %v2910, %v2911
        %v2928 = vsel %vm2894, %v2910, %v2911
        %v2929 = vsel %vm2895, %v2910, %v2911
        %v2930 = vsel %vm2896, %v2910, %v2911
        %v2931 = vsel %vm2897, %v2910, %v2911
        %v2932 = vsel %vm2898, %v2910, %v2911
        %v2933 = vsel %vm2899, %v2910, %v2911
        %v2934 = vsel %vm2900, %v2910, %v2911
        %v2935 = vsel %vm2901, %v2910, %v2911
        %v2936 = vsel %vm2902, %v2910, %v2911
        %v2937 = vsel %vm2903, %v2910, %v2911
        %v2938 = vsel %vm2904, %v2910, %v2911
        %v2939 = vsel %vm2905, %v2910, %v2911
        %v2940 = vsel %vm2906, %v2910, %v2911
        %v2941 = vsel %vm2907, %v2910, %v2911
        %v2942 = vsel %vm2908, %v2910, %v2911
        %v2943 = vsel %vm2909, %v2910, %v2911
        %v2944 = vmul.f32 %v1807, %v2912
        %v2945 = vmul.f32 %v1809, %v2913
        %v2946 = vmul.f32 %v1878, %v2914
        %v2947 = vmul.f32 %v1880, %v2915
        %v2948 = vmul.f32 %v1949, %v2916
        %v2949 = vmul.f32 %v1951, %v2917
        %v2950 = vmul.f32 %v2020, %v2918
        %v2951 = vmul.f32 %v2022, %v2919
        %v2952 = vmul.f32 %v2091, %v2920
        %v2953 = vmul.f32 %v2093, %v2921
        %v2954 = vmul.f32 %v2162, %v2922
        %v2955 = vmul.f32 %v2164, %v2923
        %v2956 = vmul.f32 %v2233, %v2924
        %v2957 = vmul.f32 %v2235, %v2925
        %v2958 = vmul.f32 %v2304, %v2926
        %v2959 = vmul.f32 %v2306, %v2927
        %v2960 = vmul.f32 %v2375, %v2928
        %v2961 = vmul.f32 %v2377, %v2929
        %v2962 = vmul.f32 %v2446, %v2930
        %v2963 = vmul.f32 %v2448, %v2931
        %v2964 = vmul.f32 %v2517, %v2932
        %v2965 = vmul.f32 %v2519, %v2933
        %v2966 = vmul.f32 %v2588, %v2934
        %v2967 = vmul.f32 %v2590, %v2935
        %v2968 = vmul.f32 %v2659, %v2936
        %v2969 = vmul.f32 %v2661, %v2937
        %v2970 = vmul.f32 %v2730, %v2938
        %v2971 = vmul.f32 %v2732, %v2939
        %v2972 = vmul.f32 %v2801, %v2940
        %v2973 = vmul.f32 %v2803, %v2941
        %v2974 = vmul.f32 %v2872, %v2942
        %v2975 = vmul.f32 %v2874, %v2943
        %v2976 = vld [vmem:[%s5] sm:$0xff]
        %v2977 = vld [vmem:[%s6] sm:$0xff]
        %2979 = vset.pattern.permute.xlu0 0
        %2980 = vperm.xlu0 %2979, %v2977
        %v2981 = vpop.permute.xlu0 %2980
        %v2984 = vsel %vm1672, %v2976, 0
        %v2987 = vsel %vm369, %v2944, 0
        %v2990 = vsel %vm369, %v2945, 0
        %v2993 = vsel %vm369, %v2946, 0
        %v2996 = vsel %vm369, %v2947, 0
        %v2999 = vsel %vm369, %v2948, 0
        %v3002 = vsel %vm369, %v2949, 0
        %v3005 = vsel %vm369, %v2950, 0
        %v3008 = vsel %vm369, %v2951, 0
        %v3011 = vsel %vm369, %v2952, 0
        %v3014 = vsel %vm369, %v2953, 0
        %v3017 = vsel %vm369, %v2954, 0
        %v3020 = vsel %vm369, %v2955, 0
        %v3023 = vsel %vm369, %v2956, 0
        %v3026 = vsel %vm369, %v2957, 0
        %v3029 = vsel %vm369, %v2958, 0
        %v3032 = vsel %vm369, %v2959, 0
        %v3035 = vsel %vm369, %v2960, 0
        %v3038 = vsel %vm369, %v2961, 0
        %v3041 = vsel %vm369, %v2962, 0
        %v3044 = vsel %vm369, %v2963, 0
        %v3047 = vsel %vm369, %v2964, 0
        %v3050 = vsel %vm369, %v2965, 0
        %v3053 = vsel %vm369, %v2966, 0
        %v3056 = vsel %vm369, %v2967, 0
        %v3059 = vsel %vm369, %v2968, 0
        %v3062 = vsel %vm369, %v2969, 0
        %v3065 = vsel %vm369, %v2970, 0
        %v3068 = vsel %vm369, %v2971, 0
        %v3071 = vsel %vm369, %v2972, 0
        %v3074 = vsel %vm369, %v2973, 0
        %v3077 = vsel %vm369, %v2974, 0
        %v3080 = vsel %vm369, %v2975, 0
        %3082 = vmatprep.subr.mxu0 %v2990
        %3083 = vmatpush1.msra.mxu0 %v2987
        %3084 = vmatprep.subr.mxu0 0.0
        %3085 = vmatpush1.msra.mxu0 0.0
        %3086 = vmatprep.subr.mxu0 0.0
        %3087 = vmatpush1.msra.mxu0 0.0
        %3088 = vmatprep.subr.mxu0 0.0
        %3089 = vmatpush1.msra.mxu0 0.0
        %3090 = vmatprep.subr.mxu0 0.0
        %3091 = vmatpush1.msra.mxu0 0.0
        %3092 = vmatprep.subr.mxu0 0.0
        %3093 = vmatpush1.msra.mxu0 0.0
        %3094 = vmatprep.subr.mxu0 0.0
        %3095 = vmatpush1.msra.mxu0 0.0
        %3096 = vmatprep.subr.mxu0 0.0
        %3097 = vmatpush1.msra.mxu0 0.0
        %3098 = vmatprep.subr.mxu0 0.0
        %3099 = vmatpush1.msra.mxu0 0.0
        %3100 = vmatprep.subr.mxu0 0.0
        %3101 = vmatpush1.msra.mxu0 0.0
        %3102 = vmatprep.subr.mxu0 0.0
        %3103 = vmatpush1.msra.mxu0 0.0
        %3104 = vmatprep.subr.mxu0 0.0
        %3105 = vmatpush1.msra.mxu0 0.0
        %3106 = vmatprep.subr.mxu0 0.0
        %3107 = vmatpush1.msra.mxu0 0.0
        %3108 = vmatprep.subr.mxu0 0.0
        %3109 = vmatpush1.msra.mxu0 0.0
        %3110 = vmatprep.subr.mxu0 0.0
        %3111 = vmatpush1.msra.mxu0 0.0
        %3112 = vmatprep.subr.mxu0 0.0
        %3113 = vmatpush1.msra.mxu0 0.0
        %3114 = vmatprep.subr.mxu0 0.0
        %3115 = vmatpush1.msra.mxu0 0.0
        %3116 = vmatprep.subr.mxu0 0.0
        %3117 = vmatpush1.msra.mxu0 0.0
        %3118 = vmatprep.subr.mxu0 0.0
        %3119 = vmatpush1.msra.mxu0 0.0
        %3120 = vmatprep.subr.mxu0 0.0
        %3121 = vmatpush1.msra.mxu0 0.0
        %3122 = vmatprep.subr.mxu0 0.0
        %3123 = vmatpush1.msra.mxu0 0.0
        %3124 = vmatprep.subr.mxu0 0.0
        %3125 = vmatpush1.msra.mxu0 0.0
        %3126 = vmatprep.subr.mxu0 0.0
        %3127 = vmatpush1.msra.mxu0 0.0
        %3128 = vmatprep.subr.mxu0 0.0
        %3129 = vmatpush1.msra.mxu0 0.0
        %3130 = vmatprep.subr.mxu0 0.0
        %3131 = vmatpush1.msra.mxu0 0.0
        %3132 = vmatprep.subr.mxu0 0.0
        %3133 = vmatpush1.msra.mxu0 0.0
        %3134 = vmatprep.subr.mxu0 0.0
        %3135 = vmatpush1.msra.mxu0 0.0
        %3136 = vmatprep.subr.mxu0 0.0
        %3137 = vmatpush1.msra.mxu0 0.0
        %3138 = vmatprep.subr.mxu0 0.0
        %3139 = vmatpush1.msra.mxu0 0.0
        %3140 = vmatprep.subr.mxu0 0.0
        %3141 = vmatpush1.msra.mxu0 0.0
        %3142 = vmatprep.subr.mxu0 0.0
        %3143 = vmatpush1.msra.mxu0 0.0
        %3144 = vmatprep.subr.mxu0 0.0
        %3145 = vmatpush1.msra.mxu0 0.0
        %3146 = vmatprep.mubr.f32.mxu0 0.0
        %3147 = vmatmul.mubr.f32.gmra.mrb[0].mxu0 %v2984
        %v3148 = vpop.f32.mrb[0].mxu0
        %v3149 = vadd.f32 %v2981, %v3148
        %v3150 = vpop.f32.mrb[0].mxu0
        %v3151 = vadd.f32 %v2981, %v3150
        %3152 = vdwg.mxu0
        %3153 = vmatprep.subr.mxu0 %v2996
        %3154 = vmatpush1.msra.mxu0 %v2993
        %3155 = vmatprep.subr.mxu0 0.0
        %3156 = vmatpush1.msra.mxu0 0.0
        %3157 = vmatprep.subr.mxu0 0.0
        %3158 = vmatpush1.msra.mxu0 0.0
        %3159 = vmatprep.subr.mxu0 0.0
        %3160 = vmatpush1.msra.mxu0 0.0
        %3161 = vmatprep.subr.mxu0 0.0
        %3162 = vmatpush1.msra.mxu0 0.0
        %3163 = vmatprep.subr.mxu0 0.0
        %3164 = vmatpush1.msra.mxu0 0.0
        %3165 = vmatprep.subr.mxu0 0.0
        %3166 = vmatpush1.msra.mxu0 0.0
        %3167 = vmatprep.subr.mxu0 0.0
        %3168 = vmatpush1.msra.mxu0 0.0
        %3169 = vmatprep.subr.mxu0 0.0
        %3170 = vmatpush1.msra.mxu0 0.0
        %3171 = vmatprep.subr.mxu0 0.0
        %3172 = vmatpush1.msra.mxu0 0.0
        %3173 = vmatprep.subr.mxu0 0.0
        %3174 = vmatpush1.msra.mxu0 0.0
        %3175 = vmatprep.subr.mxu0 0.0
        %3176 = vmatpush1.msra.mxu0 0.0
        %3177 = vmatprep.subr.mxu0 0.0
        %3178 = vmatpush1.msra.mxu0 0.0
        %3179 = vmatprep.subr.mxu0 0.0
        %3180 = vmatpush1.msra.mxu0 0.0
        %3181 = vmatprep.subr.mxu0 0.0
        %3182 = vmatpush1.msra.mxu0 0.0
        %3183 = vmatprep.subr.mxu0 0.0
        %3184 = vmatpush1.msra.mxu0 0.0
        %3185 = vmatprep.subr.mxu0 0.0
        %3186 = vmatpush1.msra.mxu0 0.0
        %3187 = vmatprep.subr.mxu0 0.0
        %3188 = vmatpush1.msra.mxu0 0.0
        %3189 = vmatprep.subr.mxu0 0.0
        %3190 = vmatpush1.msra.mxu0 0.0
        %3191 = vmatprep.subr.mxu0 0.0
        %3192 = vmatpush1.msra.mxu0 0.0
        %3193 = vmatprep.subr.mxu0 0.0
        %3194 = vmatpush1.msra.mxu0 0.0
        %3195 = vmatprep.subr.mxu0 0.0
        %3196 = vmatpush1.msra.mxu0 0.0
        %3197 = vmatprep.subr.mxu0 0.0
        %3198 = vmatpush1.msra.mxu0 0.0
        %3199 = vmatprep.subr.mxu0 0.0
        %3200 = vmatpush1.msra.mxu0 0.0
        %3201 = vmatprep.subr.mxu0 0.0
        %3202 = vmatpush1.msra.mxu0 0.0
        %3203 = vmatprep.subr.mxu0 0.0
        %3204 = vmatpush1.msra.mxu0 0.0
        %3205 = vmatprep.subr.mxu0 0.0
        %3206 = vmatpush1.msra.mxu0 0.0
        %3207 = vmatprep.subr.mxu0 0.0
        %3208 = vmatpush1.msra.mxu0 0.0
        %3209 = vmatprep.subr.mxu0 0.0
        %3210 = vmatpush1.msra.mxu0 0.0
        %3211 = vmatprep.subr.mxu0 0.0
        %3212 = vmatpush1.msra.mxu0 0.0
        %3213 = vmatprep.subr.mxu0 0.0
        %3214 = vmatpush1.msra.mxu0 0.0
        %3215 = vmatprep.subr.mxu0 0.0
        %3216 = vmatpush1.msra.mxu0 0.0
        %3217 = vmatprep.mubr.f32.mxu0 0.0
        %3218 = vmatmul.mubr.f32.gmra.mrb[0].mxu0 %v2984
        %v3219 = vpop.f32.mrb[0].mxu0
        %v3220 = vadd.f32 %v2981, %v3219
        %v3221 = vpop.f32.mrb[0].mxu0
        %v3222 = vadd.f32 %v2981, %v3221
        %3223 = vdwg.mxu0
        %3224 = vmatprep.subr.mxu0 %v3002
        %3225 = vmatpush1.msra.mxu0 %v2999
        %3226 = vmatprep.subr.mxu0 0.0
        %3227 = vmatpush1.msra.mxu0 0.0
        %3228 = vmatprep.subr.mxu0 0.0
        %3229 = vmatpush1.msra.mxu0 0.0
        %3230 = vmatprep.subr.mxu0 0.0
        %3231 = vmatpush1.msra.mxu0 0.0
        %3232 = vmatprep.subr.mxu0 0.0
        %3233 = vmatpush1.msra.mxu0 0.0
        %3234 = vmatprep.subr.mxu0 0.0
        %3235 = vmatpush1.msra.mxu0 0.0
        %3236 = vmatprep.subr.mxu0 0.0
        %3237 = vmatpush1.msra.mxu0 0.0
        %3238 = vmatprep.subr.mxu0 0.0
        %3239 = vmatpush1.msra.mxu0 0.0
        %3240 = vmatprep.subr.mxu0 0.0
        %3241 = vmatpush1.msra.mxu0 0.0
        %3242 = vmatprep.subr.mxu0 0.0
        %3243 = vmatpush1.msra.mxu0 0.0
        %3244 = vmatprep.subr.mxu0 0.0
        %3245 = vmatpush1.msra.mxu0 0.0
        %3246 = vmatprep.subr.mxu0 0.0
        %3247 = vmatpush1.msra.mxu0 0.0
        %3248 = vmatprep.subr.mxu0 0.0
        %3249 = vmatpush1.msra.mxu0 0.0
        %3250 = vmatprep.subr.mxu0 0.0
        %3251 = vmatpush1.msra.mxu0 0.0
        %3252 = vmatprep.subr.mxu0 0.0
        %3253 = vmatpush1.msra.mxu0 0.0
        %3254 = vmatprep.subr.mxu0 0.0
        %3255 = vmatpush1.msra.mxu0 0.0
        %3256 = vmatprep.subr.mxu0 0.0
        %3257 = vmatpush1.msra.mxu0 0.0
        %3258 = vmatprep.subr.mxu0 0.0
        %3259 = vmatpush1.msra.mxu0 0.0
        %3260 = vmatprep.subr.mxu0 0.0
        %3261 = vmatpush1.msra.mxu0 0.0
        %3262 = vmatprep.subr.mxu0 0.0
        %3263 = vmatpush1.msra.mxu0 0.0
        %3264 = vmatprep.subr.mxu0 0.0
        %3265 = vmatpush1.msra.mxu0 0.0
        %3266 = vmatprep.subr.mxu0 0.0
        %3267 = vmatpush1.msra.mxu0 0.0
        %3268 = vmatprep.subr.mxu0 0.0
        %3269 = vmatpush1.msra.mxu0 0.0
        %3270 = vmatprep.subr.mxu0 0.0
        %3271 = vmatpush1.msra.mxu0 0.0
        %3272 = vmatprep.subr.mxu0 0.0
        %3273 = vmatpush1.msra.mxu0 0.0
        %3274 = vmatprep.subr.mxu0 0.0
        %3275 = vmatpush1.msra.mxu0 0.0
        %3276 = vmatprep.subr.mxu0 0.0
        %3277 = vmatpush1.msra.mxu0 0.0
        %3278 = vmatprep.subr.mxu0 0.0
        %3279 = vmatpush1.msra.mxu0 0.0
        %3280 = vmatprep.subr.mxu0 0.0
        %3281 = vmatpush1.msra.mxu0 0.0
        %3282 = vmatprep.subr.mxu0 0.0
        %3283 = vmatpush1.msra.mxu0 0.0
        %3284 = vmatprep.subr.mxu0 0.0
        %3285 = vmatpush1.msra.mxu0 0.0
        %3286 = vmatprep.subr.mxu0 0.0
        %3287 = vmatpush1.msra.mxu0 0.0
        %3288 = vmatprep.mubr.f32.mxu0 0.0
        %3289 = vmatmul.mubr.f32.gmra.mrb[0].mxu0 %v2984
        %v3290 = vpop.f32.mrb[0].mxu0
        %v3291 = vadd.f32 %v2981, %v3290
        %v3292 = vpop.f32.mrb[0].mxu0
        %v3293 = vadd.f32 %v2981, %v3292
        %3294 = vdwg.mxu0
        %3295 = vmatprep.subr.mxu0 %v3008
        %3296 = vmatpush1.msra.mxu0 %v3005
        %3297 = vmatprep.subr.mxu0 0.0
        %3298 = vmatpush1.msra.mxu0 0.0
        %3299 = vmatprep.subr.mxu0 0.0
        %3300 = vmatpush1.msra.mxu0 0.0
        %3301 = vmatprep.subr.mxu0 0.0
        %3302 = vmatpush1.msra.mxu0 0.0
        %3303 = vmatprep.subr.mxu0 0.0
        %3304 = vmatpush1.msra.mxu0 0.0
        %3305 = vmatprep.subr.mxu0 0.0
        %3306 = vmatpush1.msra.mxu0 0.0
        %3307 = vmatprep.subr.mxu0 0.0
        %3308 = vmatpush1.msra.mxu0 0.0
        %3309 = vmatprep.subr.mxu0 0.0
        %3310 = vmatpush1.msra.mxu0 0.0
        %3311 = vmatprep.subr.mxu0 0.0
        %3312 = vmatpush1.msra.mxu0 0.0
        %3313 = vmatprep.subr.mxu0 0.0
        %3314 = vmatpush1.msra.mxu0 0.0
        %3315 = vmatprep.subr.mxu0 0.0
        %3316 = vmatpush1.msra.mxu0 0.0
        %3317 = vmatprep.subr.mxu0 0.0
        %3318 = vmatpush1.msra.mxu0 0.0
        %3319 = vmatprep.subr.mxu0 0.0
        %3320 = vmatpush1.msra.mxu0 0.0
        %3321 = vmatprep.subr.mxu0 0.0
        %3322 = vmatpush1.msra.mxu0 0.0
        %3323 = vmatprep.subr.mxu0 0.0
        %3324 = vmatpush1.msra.mxu0 0.0
        %3325 = vmatprep.subr.mxu0 0.0
        %3326 = vmatpush1.msra.mxu0 0.0
        %3327 = vmatprep.subr.mxu0 0.0
        %3328 = vmatpush1.msra.mxu0 0.0
        %3329 = vmatprep.subr.mxu0 0.0
        %3330 = vmatpush1.msra.mxu0 0.0
        %3331 = vmatprep.subr.mxu0 0.0
        %3332 = vmatpush1.msra.mxu0 0.0
        %3333 = vmatprep.subr.mxu0 0.0
        %3334 = vmatpush1.msra.mxu0 0.0
        %3335 = vmatprep.subr.mxu0 0.0
        %3336 = vmatpush1.msra.mxu0 0.0
        %3337 = vmatprep.subr.mxu0 0.0
        %3338 = vmatpush1.msra.mxu0 0.0
        %3339 = vmatprep.subr.mxu0 0.0
        %3340 = vmatpush1.msra.mxu0 0.0
        %3341 = vmatprep.subr.mxu0 0.0
        %3342 = vmatpush1.msra.mxu0 0.0
        %3343 = vmatprep.subr.mxu0 0.0
        %3344 = vmatpush1.msra.mxu0 0.0
        %3345 = vmatprep.subr.mxu0 0.0
        %3346 = vmatpush1.msra.mxu0 0.0
        %3347 = vmatprep.subr.mxu0 0.0
        %3348 = vmatpush1.msra.mxu0 0.0
        %3349 = vmatprep.subr.mxu0 0.0
        %3350 = vmatpush1.msra.mxu0 0.0
        %3351 = vmatprep.subr.mxu0 0.0
        %3352 = vmatpush1.msra.mxu0 0.0
        %3353 = vmatprep.subr.mxu0 0.0
        %3354 = vmatpush1.msra.mxu0 0.0
        %3355 = vmatprep.subr.mxu0 0.0
        %3356 = vmatpush1.msra.mxu0 0.0
        %3357 = vmatprep.subr.mxu0 0.0
        %3358 = vmatpush1.msra.mxu0 0.0
        %3359 = vmatprep.mubr.f32.mxu0 0.0
        %3360 = vmatmul.mubr.f32.gmra.mrb[0].mxu0 %v2984
        %v3361 = vpop.f32.mrb[0].mxu0
        %v3362 = vadd.f32 %v2981, %v3361
        %v3363 = vpop.f32.mrb[0].mxu0
        %v3364 = vadd.f32 %v2981, %v3363
        %3365 = vdwg.mxu0
        %3366 = vmatprep.subr.mxu0 %v3014
        %3367 = vmatpush1.msra.mxu0 %v3011
        %3368 = vmatprep.subr.mxu0 0.0
        %3369 = vmatpush1.msra.mxu0 0.0
        %3370 = vmatprep.subr.mxu0 0.0
        %3371 = vmatpush1.msra.mxu0 0.0
        %3372 = vmatprep.subr.mxu0 0.0
        %3373 = vmatpush1.msra.mxu0 0.0
        %3374 = vmatprep.subr.mxu0 0.0
        %3375 = vmatpush1.msra.mxu0 0.0
        %3376 = vmatprep.subr.mxu0 0.0
        %3377 = vmatpush1.msra.mxu0 0.0
        %3378 = vmatprep.subr.mxu0 0.0
        %3379 = vmatpush1.msra.mxu0 0.0
        %3380 = vmatprep.subr.mxu0 0.0
        %3381 = vmatpush1.msra.mxu0 0.0
        %3382 = vmatprep.subr.mxu0 0.0
        %3383 = vmatpush1.msra.mxu0 0.0
        %3384 = vmatprep.subr.mxu0 0.0
        %3385 = vmatpush1.msra.mxu0 0.0
        %3386 = vmatprep.subr.mxu0 0.0
        %3387 = vmatpush1.msra.mxu0 0.0
        %3388 = vmatprep.subr.mxu0 0.0
        %3389 = vmatpush1.msra.mxu0 0.0
        %3390 = vmatprep.subr.mxu0 0.0
        %3391 = vmatpush1.msra.mxu0 0.0
        %3392 = vmatprep.subr.mxu0 0.0
        %3393 = vmatpush1.msra.mxu0 0.0
        %3394 = vmatprep.subr.mxu0 0.0
        %3395 = vmatpush1.msra.mxu0 0.0
        %3396 = vmatprep.subr.mxu0 0.0
        %3397 = vmatpush1.msra.mxu0 0.0
        %3398 = vmatprep.subr.mxu0 0.0
        %3399 = vmatpush1.msra.mxu0 0.0
        %3400 = vmatprep.subr.mxu0 0.0
        %3401 = vmatpush1.msra.mxu0 0.0
        %3402 = vmatprep.subr.mxu0 0.0
        %3403 = vmatpush1.msra.mxu0 0.0
        %3404 = vmatprep.subr.mxu0 0.0
        %3405 = vmatpush1.msra.mxu0 0.0
        %3406 = vmatprep.subr.mxu0 0.0
        %3407 = vmatpush1.msra.mxu0 0.0
        %3408 = vmatprep.subr.mxu0 0.0
        %3409 = vmatpush1.msra.mxu0 0.0
        %3410 = vmatprep.subr.mxu0 0.0
        %3411 = vmatpush1.msra.mxu0 0.0
        %3412 = vmatprep.subr.mxu0 0.0
        %3413 = vmatpush1.msra.mxu0 0.0
        %3414 = vmatprep.subr.mxu0 0.0
        %3415 = vmatpush1.msra.mxu0 0.0
        %3416 = vmatprep.subr.mxu0 0.0
        %3417 = vmatpush1.msra.mxu0 0.0
        %3418 = vmatprep.subr.mxu0 0.0
        %3419 = vmatpush1.msra.mxu0 0.0
        %3420 = vmatprep.subr.mxu0 0.0
        %3421 = vmatpush1.msra.mxu0 0.0
        %3422 = vmatprep.subr.mxu0 0.0
        %3423 = vmatpush1.msra.mxu0 0.0
        %3424 = vmatprep.subr.mxu0 0.0
        %3425 = vmatpush1.msra.mxu0 0.0
        %3426 = vmatprep.subr.mxu0 0.0
        %3427 = vmatpush1.msra.mxu0 0.0
        %3428 = vmatprep.subr.mxu0 0.0
        %3429 = vmatpush1.msra.mxu0 0.0
        %3430 = vmatprep.mubr.f32.mxu0 0.0
        %3431 = vmatmul.mubr.f32.gmra.mrb[0].mxu0 %v2984
        %v3432 = vpop.f32.mrb[0].mxu0
        %v3433 = vadd.f32 %v2981, %v3432
        %v3434 = vpop.f32.mrb[0].mxu0
        %v3435 = vadd.f32 %v2981, %v3434
        %3436 = vdwg.mxu0
        %3437 = vmatprep.subr.mxu0 %v3020
        %3438 = vmatpush1.msra.mxu0 %v3017
        %3439 = vmatprep.subr.mxu0 0.0
        %3440 = vmatpush1.msra.mxu0 0.0
        %3441 = vmatprep.subr.mxu0 0.0
        %3442 = vmatpush1.msra.mxu0 0.0
        %3443 = vmatprep.subr.mxu0 0.0
        %3444 = vmatpush1.msra.mxu0 0.0
        %3445 = vmatprep.subr.mxu0 0.0
        %3446 = vmatpush1.msra.mxu0 0.0
        %3447 = vmatprep.subr.mxu0 0.0
        %3448 = vmatpush1.msra.mxu0 0.0
        %3449 = vmatprep.subr.mxu0 0.0
        %3450 = vmatpush1.msra.mxu0 0.0
        %3451 = vmatprep.subr.mxu0 0.0
        %3452 = vmatpush1.msra.mxu0 0.0
        %3453 = vmatprep.subr.mxu0 0.0
        %3454 = vmatpush1.msra.mxu0 0.0
        %3455 = vmatprep.subr.mxu0 0.0
        %3456 = vmatpush1.msra.mxu0 0.0
        %3457 = vmatprep.subr.mxu0 0.0
        %3458 = vmatpush1.msra.mxu0 0.0
        %3459 = vmatprep.subr.mxu0 0.0
        %3460 = vmatpush1.msra.mxu0 0.0
        %3461 = vmatprep.subr.mxu0 0.0
        %3462 = vmatpush1.msra.mxu0 0.0
        %3463 = vmatprep.subr.mxu0 0.0
        %3464 = vmatpush1.msra.mxu0 0.0
        %3465 = vmatprep.subr.mxu0 0.0
        %3466 = vmatpush1.msra.mxu0 0.0
        %3467 = vmatprep.subr.mxu0 0.0
        %3468 = vmatpush1.msra.mxu0 0.0
        %3469 = vmatprep.subr.mxu0 0.0
        %3470 = vmatpush1.msra.mxu0 0.0
        %3471 = vmatprep.subr.mxu0 0.0
        %3472 = vmatpush1.msra.mxu0 0.0
        %3473 = vmatprep.subr.mxu0 0.0
        %3474 = vmatpush1.msra.mxu0 0.0
        %3475 = vmatprep.subr.mxu0 0.0
        %3476 = vmatpush1.msra.mxu0 0.0
        %3477 = vmatprep.subr.mxu0 0.0
        %3478 = vmatpush1.msra.mxu0 0.0
        %3479 = vmatprep.subr.mxu0 0.0
        %3480 = vmatpush1.msra.mxu0 0.0
        %3481 = vmatprep.subr.mxu0 0.0
        %3482 = vmatpush1.msra.mxu0 0.0
        %3483 = vmatprep.subr.mxu0 0.0
        %3484 = vmatpush1.msra.mxu0 0.0
        %3485 = vmatprep.subr.mxu0 0.0
        %3486 = vmatpush1.msra.mxu0 0.0
        %3487 = vmatprep.subr.mxu0 0.0
        %3488 = vmatpush1.msra.mxu0 0.0
        %3489 = vmatprep.subr.mxu0 0.0
        %3490 = vmatpush1.msra.mxu0 0.0
        %3491 = vmatprep.subr.mxu0 0.0
        %3492 = vmatpush1.msra.mxu0 0.0
        %3493 = vmatprep.subr.mxu0 0.0
        %3494 = vmatpush1.msra.mxu0 0.0
        %3495 = vmatprep.subr.mxu0 0.0
        %3496 = vmatpush1.msra.mxu0 0.0
        %3497 = vmatprep.subr.mxu0 0.0
        %3498 = vmatpush1.msra.mxu0 0.0
        %3499 = vmatprep.subr.mxu0 0.0
        %3500 = vmatpush1.msra.mxu0 0.0
        %3501 = vmatprep.mubr.f32.mxu0 0.0
        %3502 = vmatmul.mubr.f32.gmra.mrb[0].mxu0 %v2984
        %v3503 = vpop.f32.mrb[0].mxu0
        %v3504 = vadd.f32 %v2981, %v3503
        %v3505 = vpop.f32.mrb[0].mxu0
        %v3506 = vadd.f32 %v2981, %v3505
        %3507 = vdwg.mxu0
        %3508 = vmatprep.subr.mxu0 %v3026
        %3509 = vmatpush1.msra.mxu0 %v3023
        %3510 = vmatprep.subr.mxu0 0.0
        %3511 = vmatpush1.msra.mxu0 0.0
        %3512 = vmatprep.subr.mxu0 0.0
        %3513 = vmatpush1.msra.mxu0 0.0
        %3514 = vmatprep.subr.mxu0 0.0
        %3515 = vmatpush1.msra.mxu0 0.0
        %3516 = vmatprep.subr.mxu0 0.0
        %3517 = vmatpush1.msra.mxu0 0.0
        %3518 = vmatprep.subr.mxu0 0.0
        %3519 = vmatpush1.msra.mxu0 0.0
        %3520 = vmatprep.subr.mxu0 0.0
        %3521 = vmatpush1.msra.mxu0 0.0
        %3522 = vmatprep.subr.mxu0 0.0
        %3523 = vmatpush1.msra.mxu0 0.0
        %3524 = vmatprep.subr.mxu0 0.0
        %3525 = vmatpush1.msra.mxu0 0.0
        %3526 = vmatprep.subr.mxu0 0.0
        %3527 = vmatpush1.msra.mxu0 0.0
        %3528 = vmatprep.subr.mxu0 0.0
        %3529 = vmatpush1.msra.mxu0 0.0
        %3530 = vmatprep.subr.mxu0 0.0
        %3531 = vmatpush1.msra.mxu0 0.0
        %3532 = vmatprep.subr.mxu0 0.0
        %3533 = vmatpush1.msra.mxu0 0.0
        %3534 = vmatprep.subr.mxu0 0.0
        %3535 = vmatpush1.msra.mxu0 0.0
        %3536 = vmatprep.subr.mxu0 0.0
        %3537 = vmatpush1.msra.mxu0 0.0
        %3538 = vmatprep.subr.mxu0 0.0
        %3539 = vmatpush1.msra.mxu0 0.0
        %3540 = vmatprep.subr.mxu0 0.0
        %3541 = vmatpush1.msra.mxu0 0.0
        %3542 = vmatprep.subr.mxu0 0.0
        %3543 = vmatpush1.msra.mxu0 0.0
        %3544 = vmatprep.subr.mxu0 0.0
        %3545 = vmatpush1.msra.mxu0 0.0
        %3546 = vmatprep.subr.mxu0 0.0
        %3547 = vmatpush1.msra.mxu0 0.0
        %3548 = vmatprep.subr.mxu0 0.0
        %3549 = vmatpush1.msra.mxu0 0.0
        %3550 = vmatprep.subr.mxu0 0.0
        %3551 = vmatpush1.msra.mxu0 0.0
        %3552 = vmatprep.subr.mxu0 0.0
        %3553 = vmatpush1.msra.mxu0 0.0
        %3554 = vmatprep.subr.mxu0 0.0
        %3555 = vmatpush1.msra.mxu0 0.0
        %3556 = vmatprep.subr.mxu0 0.0
        %3557 = vmatpush1.msra.mxu0 0.0
        %3558 = vmatprep.subr.mxu0 0.0
        %3559 = vmatpush1.msra.mxu0 0.0
        %3560 = vmatprep.subr.mxu0 0.0
        %3561 = vmatpush1.msra.mxu0 0.0
        %3562 = vmatprep.subr.mxu0 0.0
        %3563 = vmatpush1.msra.mxu0 0.0
        %3564 = vmatprep.subr.mxu0 0.0
        %3565 = vmatpush1.msra.mxu0 0.0
        %3566 = vmatprep.subr.mxu0 0.0
        %3567 = vmatpush1.msra.mxu0 0.0
        %3568 = vmatprep.subr.mxu0 0.0
        %3569 = vmatpush1.msra.mxu0 0.0
        %3570 = vmatprep.subr.mxu0 0.0
        %3571 = vmatpush1.msra.mxu0 0.0
        %3572 = vmatprep.mubr.f32.mxu0 0.0
        %3573 = vmatmul.mubr.f32.gmra.mrb[0].mxu0 %v2984
        %v3574 = vpop.f32.mrb[0].mxu0
        %v3575 = vadd.f32 %v2981, %v3574
        %v3576 = vpop.f32.mrb[0].mxu0
        %v3577 = vadd.f32 %v2981, %v3576
        %3578 = vdwg.mxu0
        %3579 = vmatprep.subr.mxu0 %v3032
        %3580 = vmatpush1.msra.mxu0 %v3029
        %3581 = vmatprep.subr.mxu0 0.0
        %3582 = vmatpush1.msra.mxu0 0.0
        %3583 = vmatprep.subr.mxu0 0.0
        %3584 = vmatpush1.msra.mxu0 0.0
        %3585 = vmatprep.subr.mxu0 0.0
        %3586 = vmatpush1.msra.mxu0 0.0
        %3587 = vmatprep.subr.mxu0 0.0
        %3588 = vmatpush1.msra.mxu0 0.0
        %3589 = vmatprep.subr.mxu0 0.0
        %3590 = vmatpush1.msra.mxu0 0.0
        %3591 = vmatprep.subr.mxu0 0.0
        %3592 = vmatpush1.msra.mxu0 0.0
        %3593 = vmatprep.subr.mxu0 0.0
        %3594 = vmatpush1.msra.mxu0 0.0
        %3595 = vmatprep.subr.mxu0 0.0
        %3596 = vmatpush1.msra.mxu0 0.0
        %3597 = vmatprep.subr.mxu0 0.0
        %3598 = vmatpush1.msra.mxu0 0.0
        %3599 = vmatprep.subr.mxu0 0.0
        %3600 = vmatpush1.msra.mxu0 0.0
        %3601 = vmatprep.subr.mxu0 0.0
        %3602 = vmatpush1.msra.mxu0 0.0
        %3603 = vmatprep.subr.mxu0 0.0
        %3604 = vmatpush1.msra.mxu0 0.0
        %3605 = vmatprep.subr.mxu0 0.0
        %3606 = vmatpush1.msra.mxu0 0.0
        %3607 = vmatprep.subr.mxu0 0.0
        %3608 = vmatpush1.msra.mxu0 0.0
        %3609 = vmatprep.subr.mxu0 0.0
        %3610 = vmatpush1.msra.mxu0 0.0
        %3611 = vmatprep.subr.mxu0 0.0
        %3612 = vmatpush1.msra.mxu0 0.0
        %3613 = vmatprep.subr.mxu0 0.0
        %3614 = vmatpush1.msra.mxu0 0.0
        %3615 = vmatprep.subr.mxu0 0.0
        %3616 = vmatpush1.msra.mxu0 0.0
        %3617 = vmatprep.subr.mxu0 0.0
        %3618 = vmatpush1.msra.mxu0 0.0
        %3619 = vmatprep.subr.mxu0 0.0
        %3620 = vmatpush1.msra.mxu0 0.0
        %3621 = vmatprep.subr.mxu0 0.0
        %3622 = vmatpush1.msra.mxu0 0.0
        %3623 = vmatprep.subr.mxu0 0.0
        %3624 = vmatpush1.msra.mxu0 0.0
        %3625 = vmatprep.subr.mxu0 0.0
        %3626 = vmatpush1.msra.mxu0 0.0
        %3627 = vmatprep.subr.mxu0 0.0
        %3628 = vmatpush1.msra.mxu0 0.0
        %3629 = vmatprep.subr.mxu0 0.0
        %3630 = vmatpush1.msra.mxu0 0.0
        %3631 = vmatprep.subr.mxu0 0.0
        %3632 = vmatpush1.msra.mxu0 0.0
        %3633 = vmatprep.subr.mxu0 0.0
        %3634 = vmatpush1.msra.mxu0 0.0
        %3635 = vmatprep.subr.mxu0 0.0
        %3636 = vmatpush1.msra.mxu0 0.0
        %3637 = vmatprep.subr.mxu0 0.0
        %3638 = vmatpush1.msra.mxu0 0.0
        %3639 = vmatprep.subr.mxu0 0.0
        %3640 = vmatpush1.msra.mxu0 0.0
        %3641 = vmatprep.subr.mxu0 0.0
        %3642 = vmatpush1.msra.mxu0 0.0
        %3643 = vmatprep.mubr.f32.mxu0 0.0
        %3644 = vmatmul.mubr.f32.gmra.mrb[0].mxu0 %v2984
        %v3645 = vpop.f32.mrb[0].mxu0
        %v3646 = vadd.f32 %v2981, %v3645
        %v3647 = vpop.f32.mrb[0].mxu0
        %v3648 = vadd.f32 %v2981, %v3647
        %3649 = vdwg.mxu0
        %3650 = vmatprep.subr.mxu0 %v3038
        %3651 = vmatpush1.msra.mxu0 %v3035
        %3652 = vmatprep.subr.mxu0 0.0
        %3653 = vmatpush1.msra.mxu0 0.0
        %3654 = vmatprep.subr.mxu0 0.0
        %3655 = vmatpush1.msra.mxu0 0.0
        %3656 = vmatprep.subr.mxu0 0.0
        %3657 = vmatpush1.msra.mxu0 0.0
        %3658 = vmatprep.subr.mxu0 0.0
        %3659 = vmatpush1.msra.mxu0 0.0
        %3660 = vmatprep.subr.mxu0 0.0
        %3661 = vmatpush1.msra.mxu0 0.0
        %3662 = vmatprep.subr.mxu0 0.0
        %3663 = vmatpush1.msra.mxu0 0.0
        %3664 = vmatprep.subr.mxu0 0.0
        %3665 = vmatpush1.msra.mxu0 0.0
        %3666 = vmatprep.subr.mxu0 0.0
        %3667 = vmatpush1.msra.mxu0 0.0
        %3668 = vmatprep.subr.mxu0 0.0
        %3669 = vmatpush1.msra.mxu0 0.0
        %3670 = vmatprep.subr.mxu0 0.0
        %3671 = vmatpush1.msra.mxu0 0.0
        %3672 = vmatprep.subr.mxu0 0.0
        %3673 = vmatpush1.msra.mxu0 0.0
        %3674 = vmatprep.subr.mxu0 0.0
        %3675 = vmatpush1.msra.mxu0 0.0
        %3676 = vmatprep.subr.mxu0 0.0
        %3677 = vmatpush1.msra.mxu0 0.0
        %3678 = vmatprep.subr.mxu0 0.0
        %3679 = vmatpush1.msra.mxu0 0.0
        %3680 = vmatprep.subr.mxu0 0.0
        %3681 = vmatpush1.msra.mxu0 0.0
        %3682 = vmatprep.subr.mxu0 0.0
        %3683 = vmatpush1.msra.mxu0 0.0
        %3684 = vmatprep.subr.mxu0 0.0
        %3685 = vmatpush1.msra.mxu0 0.0
        %3686 = vmatprep.subr.mxu0 0.0
        %3687 = vmatpush1.msra.mxu0 0.0
        %3688 = vmatprep.subr.mxu0 0.0
        %3689 = vmatpush1.msra.mxu0 0.0
        %3690 = vmatprep.subr.mxu0 0.0
        %3691 = vmatpush1.msra.mxu0 0.0
        %3692 = vmatprep.subr.mxu0 0.0
        %3693 = vmatpush1.msra.mxu0 0.0
        %3694 = vmatprep.subr.mxu0 0.0
        %3695 = vmatpush1.msra.mxu0 0.0
        %3696 = vmatprep.subr.mxu0 0.0
        %3697 = vmatpush1.msra.mxu0 0.0
        %3698 = vmatprep.subr.mxu0 0.0
        %3699 = vmatpush1.msra.mxu0 0.0
        %3700 = vmatprep.subr.mxu0 0.0
        %3701 = vmatpush1.msra.mxu0 0.0
        %3702 = vmatprep.subr.mxu0 0.0
        %3703 = vmatpush1.msra.mxu0 0.0
        %3704 = vmatprep.subr.mxu0 0.0
        %3705 = vmatpush1.msra.mxu0 0.0
        %3706 = vmatprep.subr.mxu0 0.0
        %3707 = vmatpush1.msra.mxu0 0.0
        %3708 = vmatprep.subr.mxu0 0.0
        %3709 = vmatpush1.msra.mxu0 0.0
        %3710 = vmatprep.subr.mxu0 0.0
        %3711 = vmatpush1.msra.mxu0 0.0
        %3712 = vmatprep.subr.mxu0 0.0
        %3713 = vmatpush1.msra.mxu0 0.0
        %3714 = vmatprep.mubr.f32.mxu0 0.0
        %3715 = vmatmul.mubr.f32.gmra.mrb[0].mxu0 %v2984
        %v3716 = vpop.f32.mrb[0].mxu0
        %v3717 = vadd.f32 %v2981, %v3716
        %v3718 = vpop.f32.mrb[0].mxu0
        %v3719 = vadd.f32 %v2981, %v3718
        %3720 = vdwg.mxu0
        %3721 = vmatprep.subr.mxu0 %v3044
        %3722 = vmatpush1.msra.mxu0 %v3041
        %3723 = vmatprep.subr.mxu0 0.0
        %3724 = vmatpush1.msra.mxu0 0.0
        %3725 = vmatprep.subr.mxu0 0.0
        %3726 = vmatpush1.msra.mxu0 0.0
        %3727 = vmatprep.subr.mxu0 0.0
        %3728 = vmatpush1.msra.mxu0 0.0
        %3729 = vmatprep.subr.mxu0 0.0
        %3730 = vmatpush1.msra.mxu0 0.0
        %3731 = vmatprep.subr.mxu0 0.0
        %3732 = vmatpush1.msra.mxu0 0.0
        %3733 = vmatprep.subr.mxu0 0.0
        %3734 = vmatpush1.msra.mxu0 0.0
        %3735 = vmatprep.subr.mxu0 0.0
        %3736 = vmatpush1.msra.mxu0 0.0
        %3737 = vmatprep.subr.mxu0 0.0
        %3738 = vmatpush1.msra.mxu0 0.0
        %3739 = vmatprep.subr.mxu0 0.0
        %3740 = vmatpush1.msra.mxu0 0.0
        %3741 = vmatprep.subr.mxu0 0.0
        %3742 = vmatpush1.msra.mxu0 0.0
        %3743 = vmatprep.subr.mxu0 0.0
        %3744 = vmatpush1.msra.mxu0 0.0
        %3745 = vmatprep.subr.mxu0 0.0
        %3746 = vmatpush1.msra.mxu0 0.0
        %3747 = vmatprep.subr.mxu0 0.0
        %3748 = vmatpush1.msra.mxu0 0.0
        %3749 = vmatprep.subr.mxu0 0.0
        %3750 = vmatpush1.msra.mxu0 0.0
        %3751 = vmatprep.subr.mxu0 0.0
        %3752 = vmatpush1.msra.mxu0 0.0
        %3753 = vmatprep.subr.mxu0 0.0
        %3754 = vmatpush1.msra.mxu0 0.0
        %3755 = vmatprep.subr.mxu0 0.0
        %3756 = vmatpush1.msra.mxu0 0.0
        %3757 = vmatprep.subr.mxu0 0.0
        %3758 = vmatpush1.msra.mxu0 0.0
        %3759 = vmatprep.subr.mxu0 0.0
        %3760 = vmatpush1.msra.mxu0 0.0
        %3761 = vmatprep.subr.mxu0 0.0
        %3762 = vmatpush1.msra.mxu0 0.0
        %3763 = vmatprep.subr.mxu0 0.0
        %3764 = vmatpush1.msra.mxu0 0.0
        %3765 = vmatprep.subr.mxu0 0.0
        %3766 = vmatpush1.msra.mxu0 0.0
        %3767 = vmatprep.subr.mxu0 0.0
        %3768 = vmatpush1.msra.mxu0 0.0
        %3769 = vmatprep.subr.mxu0 0.0
        %3770 = vmatpush1.msra.mxu0 0.0
        %3771 = vmatprep.subr.mxu0 0.0
        %3772 = vmatpush1.msra.mxu0 0.0
        %3773 = vmatprep.subr.mxu0 0.0
        %3774 = vmatpush1.msra.mxu0 0.0
        %3775 = vmatprep.subr.mxu0 0.0
        %3776 = vmatpush1.msra.mxu0 0.0
        %3777 = vmatprep.subr.mxu0 0.0
        %3778 = vmatpush1.msra.mxu0 0.0
        %3779 = vmatprep.subr.mxu0 0.0
        %3780 = vmatpush1.msra.mxu0 0.0
        %3781 = vmatprep.subr.mxu0 0.0
        %3782 = vmatpush1.msra.mxu0 0.0
        %3783 = vmatprep.subr.mxu0 0.0
        %3784 = vmatpush1.msra.mxu0 0.0
        %3785 = vmatprep.mubr.f32.mxu0 0.0
        %3786 = vmatmul.mubr.f32.gmra.mrb[0].mxu0 %v2984
        %v3787 = vpop.f32.mrb[0].mxu0
        %v3788 = vadd.f32 %v2981, %v3787
        %v3789 = vpop.f32.mrb[0].mxu0
        %v3790 = vadd.f32 %v2981, %v3789
        %3791 = vdwg.mxu0
        %3792 = vmatprep.subr.mxu0 %v3050
        %3793 = vmatpush1.msra.mxu0 %v3047
        %3794 = vmatprep.subr.mxu0 0.0
        %3795 = vmatpush1.msra.mxu0 0.0
        %3796 = vmatprep.subr.mxu0 0.0
        %3797 = vmatpush1.msra.mxu0 0.0
        %3798 = vmatprep.subr.mxu0 0.0
        %3799 = vmatpush1.msra.mxu0 0.0
        %3800 = vmatprep.subr.mxu0 0.0
        %3801 = vmatpush1.msra.mxu0 0.0
        %3802 = vmatprep.subr.mxu0 0.0
        %3803 = vmatpush1.msra.mxu0 0.0
        %3804 = vmatprep.subr.mxu0 0.0
        %3805 = vmatpush1.msra.mxu0 0.0
        %3806 = vmatprep.subr.mxu0 0.0
        %3807 = vmatpush1.msra.mxu0 0.0
        %3808 = vmatprep.subr.mxu0 0.0
        %3809 = vmatpush1.msra.mxu0 0.0
        %3810 = vmatprep.subr.mxu0 0.0
        %3811 = vmatpush1.msra.mxu0 0.0
        %3812 = vmatprep.subr.mxu0 0.0
        %3813 = vmatpush1.msra.mxu0 0.0
        %3814 = vmatprep.subr.mxu0 0.0
        %3815 = vmatpush1.msra.mxu0 0.0
        %3816 = vmatprep.subr.mxu0 0.0
        %3817 = vmatpush1.msra.mxu0 0.0
        %3818 = vmatprep.subr.mxu0 0.0
        %3819 = vmatpush1.msra.mxu0 0.0
        %3820 = vmatprep.subr.mxu0 0.0
        %3821 = vmatpush1.msra.mxu0 0.0
        %3822 = vmatprep.subr.mxu0 0.0
        %3823 = vmatpush1.msra.mxu0 0.0
        %3824 = vmatprep.subr.mxu0 0.0
        %3825 = vmatpush1.msra.mxu0 0.0
        %3826 = vmatprep.subr.mxu0 0.0
        %3827 = vmatpush1.msra.mxu0 0.0
        %3828 = vmatprep.subr.mxu0 0.0
        %3829 = vmatpush1.msra.mxu0 0.0
        %3830 = vmatprep.subr.mxu0 0.0
        %3831 = vmatpush1.msra.mxu0 0.0
        %3832 = vmatprep.subr.mxu0 0.0
        %3833 = vmatpush1.msra.mxu0 0.0
        %3834 = vmatprep.subr.mxu0 0.0
        %3835 = vmatpush1.msra.mxu0 0.0
        %3836 = vmatprep.subr.mxu0 0.0
        %3837 = vmatpush1.msra.mxu0 0.0
        %3838 = vmatprep.subr.mxu0 0.0
        %3839 = vmatpush1.msra.mxu0 0.0
        %3840 = vmatprep.subr.mxu0 0.0
        %3841 = vmatpush1.msra.mxu0 0.0
        %3842 = vmatprep.subr.mxu0 0.0
        %3843 = vmatpush1.msra.mxu0 0.0
        %3844 = vmatprep.subr.mxu0 0.0
        %3845 = vmatpush1.msra.mxu0 0.0
        %3846 = vmatprep.subr.mxu0 0.0
        %3847 = vmatpush1.msra.mxu0 0.0
        %3848 = vmatprep.subr.mxu0 0.0
        %3849 = vmatpush1.msra.mxu0 0.0
        %3850 = vmatprep.subr.mxu0 0.0
        %3851 = vmatpush1.msra.mxu0 0.0
        %3852 = vmatprep.subr.mxu0 0.0
        %3853 = vmatpush1.msra.mxu0 0.0
        %3854 = vmatprep.subr.mxu0 0.0
        %3855 = vmatpush1.msra.mxu0 0.0
        %3856 = vmatprep.mubr.f32.mxu0 0.0
        %3857 = vmatmul.mubr.f32.gmra.mrb[0].mxu0 %v2984
        %v3858 = vpop.f32.mrb[0].mxu0
        %v3859 = vadd.f32 %v2981, %v3858
        %v3860 = vpop.f32.mrb[0].mxu0
        %v3861 = vadd.f32 %v2981, %v3860
        %3862 = vdwg.mxu0
        %3863 = vmatprep.subr.mxu0 %v3056
        %3864 = vmatpush1.msra.mxu0 %v3053
        %3865 = vmatprep.subr.mxu0 0.0
        %3866 = vmatpush1.msra.mxu0 0.0
        %3867 = vmatprep.subr.mxu0 0.0
        %3868 = vmatpush1.msra.mxu0 0.0
        %3869 = vmatprep.subr.mxu0 0.0
        %3870 = vmatpush1.msra.mxu0 0.0
        %3871 = vmatprep.subr.mxu0 0.0
        %3872 = vmatpush1.msra.mxu0 0.0
        %3873 = vmatprep.subr.mxu0 0.0
        %3874 = vmatpush1.msra.mxu0 0.0
        %3875 = vmatprep.subr.mxu0 0.0
        %3876 = vmatpush1.msra.mxu0 0.0
        %3877 = vmatprep.subr.mxu0 0.0
        %3878 = vmatpush1.msra.mxu0 0.0
        %3879 = vmatprep.subr.mxu0 0.0
        %3880 = vmatpush1.msra.mxu0 0.0
        %3881 = vmatprep.subr.mxu0 0.0
        %3882 = vmatpush1.msra.mxu0 0.0
        %3883 = vmatprep.subr.mxu0 0.0
        %3884 = vmatpush1.msra.mxu0 0.0
        %3885 = vmatprep.subr.mxu0 0.0
        %3886 = vmatpush1.msra.mxu0 0.0
        %3887 = vmatprep.subr.mxu0 0.0
        %3888 = vmatpush1.msra.mxu0 0.0
        %3889 = vmatprep.subr.mxu0 0.0
        %3890 = vmatpush1.msra.mxu0 0.0
        %3891 = vmatprep.subr.mxu0 0.0
        %3892 = vmatpush1.msra.mxu0 0.0
        %3893 = vmatprep.subr.mxu0 0.0
        %3894 = vmatpush1.msra.mxu0 0.0
        %3895 = vmatprep.subr.mxu0 0.0
        %3896 = vmatpush1.msra.mxu0 0.0
        %3897 = vmatprep.subr.mxu0 0.0
        %3898 = vmatpush1.msra.mxu0 0.0
        %3899 = vmatprep.subr.mxu0 0.0
        %3900 = vmatpush1.msra.mxu0 0.0
        %3901 = vmatprep.subr.mxu0 0.0
        %3902 = vmatpush1.msra.mxu0 0.0
        %3903 = vmatprep.subr.mxu0 0.0
        %3904 = vmatpush1.msra.mxu0 0.0
        %3905 = vmatprep.subr.mxu0 0.0
        %3906 = vmatpush1.msra.mxu0 0.0
        %3907 = vmatprep.subr.mxu0 0.0
        %3908 = vmatpush1.msra.mxu0 0.0
        %3909 = vmatprep.subr.mxu0 0.0
        %3910 = vmatpush1.msra.mxu0 0.0
        %3911 = vmatprep.subr.mxu0 0.0
        %3912 = vmatpush1.msra.mxu0 0.0
        %3913 = vmatprep.subr.mxu0 0.0
        %3914 = vmatpush1.msra.mxu0 0.0
        %3915 = vmatprep.subr.mxu0 0.0
        %3916 = vmatpush1.msra.mxu0 0.0
        %3917 = vmatprep.subr.mxu0 0.0
        %3918 = vmatpush1.msra.mxu0 0.0
        %3919 = vmatprep.subr.mxu0 0.0
        %3920 = vmatpush1.msra.mxu0 0.0
        %3921 = vmatprep.subr.mxu0 0.0
        %3922 = vmatpush1.msra.mxu0 0.0
        %3923 = vmatprep.subr.mxu0 0.0
        %3924 = vmatpush1.msra.mxu0 0.0
        %3925 = vmatprep.subr.mxu0 0.0
        %3926 = vmatpush1.msra.mxu0 0.0
        %3927 = vmatprep.mubr.f32.mxu0 0.0
        %3928 = vmatmul.mubr.f32.gmra.mrb[0].mxu0 %v2984
        %v3929 = vpop.f32.mrb[0].mxu0
        %v3930 = vadd.f32 %v2981, %v3929
        %v3931 = vpop.f32.mrb[0].mxu0
        %v3932 = vadd.f32 %v2981, %v3931
        %3933 = vdwg.mxu0
        %3934 = vmatprep.subr.mxu0 %v3062
        %3935 = vmatpush1.msra.mxu0 %v3059
        %3936 = vmatprep.subr.mxu0 0.0
        %3937 = vmatpush1.msra.mxu0 0.0
        %3938 = vmatprep.subr.mxu0 0.0
        %3939 = vmatpush1.msra.mxu0 0.0
        %3940 = vmatprep.subr.mxu0 0.0
        %3941 = vmatpush1.msra.mxu0 0.0
        %3942 = vmatprep.subr.mxu0 0.0
        %3943 = vmatpush1.msra.mxu0 0.0
        %3944 = vmatprep.subr.mxu0 0.0
        %3945 = vmatpush1.msra.mxu0 0.0
        %3946 = vmatprep.subr.mxu0 0.0
        %3947 = vmatpush1.msra.mxu0 0.0
        %3948 = vmatprep.subr.mxu0 0.0
        %3949 = vmatpush1.msra.mxu0 0.0
        %3950 = vmatprep.subr.mxu0 0.0
        %3951 = vmatpush1.msra.mxu0 0.0
        %3952 = vmatprep.subr.mxu0 0.0
        %3953 = vmatpush1.msra.mxu0 0.0
        %3954 = vmatprep.subr.mxu0 0.0
        %3955 = vmatpush1.msra.mxu0 0.0
        %3956 = vmatprep.subr.mxu0 0.0
        %3957 = vmatpush1.msra.mxu0 0.0
        %3958 = vmatprep.subr.mxu0 0.0
        %3959 = vmatpush1.msra.mxu0 0.0
        %3960 = vmatprep.subr.mxu0 0.0
        %3961 = vmatpush1.msra.mxu0 0.0
        %3962 = vmatprep.subr.mxu0 0.0
        %3963 = vmatpush1.msra.mxu0 0.0
        %3964 = vmatprep.subr.mxu0 0.0
        %3965 = vmatpush1.msra.mxu0 0.0
        %3966 = vmatprep.subr.mxu0 0.0
        %3967 = vmatpush1.msra.mxu0 0.0
        %3968 = vmatprep.subr.mxu0 0.0
        %3969 = vmatpush1.msra.mxu0 0.0
        %3970 = vmatprep.subr.mxu0 0.0
        %3971 = vmatpush1.msra.mxu0 0.0
        %3972 = vmatprep.subr.mxu0 0.0
        %3973 = vmatpush1.msra.mxu0 0.0
        %3974 = vmatprep.subr.mxu0 0.0
        %3975 = vmatpush1.msra.mxu0 0.0
        %3976 = vmatprep.subr.mxu0 0.0
        %3977 = vmatpush1.msra.mxu0 0.0
        %3978 = vmatprep.subr.mxu0 0.0
        %3979 = vmatpush1.msra.mxu0 0.0
        %3980 = vmatprep.subr.mxu0 0.0
        %3981 = vmatpush1.msra.mxu0 0.0
        %3982 = vmatprep.subr.mxu0 0.0
        %3983 = vmatpush1.msra.mxu0 0.0
        %3984 = vmatprep.subr.mxu0 0.0
        %3985 = vmatpush1.msra.mxu0 0.0
        %3986 = vmatprep.subr.mxu0 0.0
        %3987 = vmatpush1.msra.mxu0 0.0
        %3988 = vmatprep.subr.mxu0 0.0
        %3989 = vmatpush1.msra.mxu0 0.0
        %3990 = vmatprep.subr.mxu0 0.0
        %3991 = vmatpush1.msra.mxu0 0.0
        %3992 = vmatprep.subr.mxu0 0.0
        %3993 = vmatpush1.msra.mxu0 0.0
        %3994 = vmatprep.subr.mxu0 0.0
        %3995 = vmatpush1.msra.mxu0 0.0
        %3996 = vmatprep.subr.mxu0 0.0
        %3997 = vmatpush1.msra.mxu0 0.0
        %3998 = vmatprep.mubr.f32.mxu0 0.0
        %3999 = vmatmul.mubr.f32.gmra.mrb[0].mxu0 %v2984
        %v4000 = vpop.f32.mrb[0].mxu0
        %v4001 = vadd.f32 %v2981, %v4000
        %v4002 = vpop.f32.mrb[0].mxu0
        %v4003 = vadd.f32 %v2981, %v4002
        %4004 = vdwg.mxu0
        %4005 = vmatprep.subr.mxu0 %v3068
        %4006 = vmatpush1.msra.mxu0 %v3065
        %4007 = vmatprep.subr.mxu0 0.0
        %4008 = vmatpush1.msra.mxu0 0.0
        %4009 = vmatprep.subr.mxu0 0.0
        %4010 = vmatpush1.msra.mxu0 0.0
        %4011 = vmatprep.subr.mxu0 0.0
        %4012 = vmatpush1.msra.mxu0 0.0
        %4013 = vmatprep.subr.mxu0 0.0
        %4014 = vmatpush1.msra.mxu0 0.0
        %4015 = vmatprep.subr.mxu0 0.0
        %4016 = vmatpush1.msra.mxu0 0.0
        %4017 = vmatprep.subr.mxu0 0.0
        %4018 = vmatpush1.msra.mxu0 0.0
        %4019 = vmatprep.subr.mxu0 0.0
        %4020 = vmatpush1.msra.mxu0 0.0
        %4021 = vmatprep.subr.mxu0 0.0
        %4022 = vmatpush1.msra.mxu0 0.0
        %4023 = vmatprep.subr.mxu0 0.0
        %4024 = vmatpush1.msra.mxu0 0.0
        %4025 = vmatprep.subr.mxu0 0.0
        %4026 = vmatpush1.msra.mxu0 0.0
        %4027 = vmatprep.subr.mxu0 0.0
        %4028 = vmatpush1.msra.mxu0 0.0
        %4029 = vmatprep.subr.mxu0 0.0
        %4030 = vmatpush1.msra.mxu0 0.0
        %4031 = vmatprep.subr.mxu0 0.0
        %4032 = vmatpush1.msra.mxu0 0.0
        %4033 = vmatprep.subr.mxu0 0.0
        %4034 = vmatpush1.msra.mxu0 0.0
        %4035 = vmatprep.subr.mxu0 0.0
        %4036 = vmatpush1.msra.mxu0 0.0
        %4037 = vmatprep.subr.mxu0 0.0
        %4038 = vmatpush1.msra.mxu0 0.0
        %4039 = vmatprep.subr.mxu0 0.0
        %4040 = vmatpush1.msra.mxu0 0.0
        %4041 = vmatprep.subr.mxu0 0.0
        %4042 = vmatpush1.msra.mxu0 0.0
        %4043 = vmatprep.subr.mxu0 0.0
        %4044 = vmatpush1.msra.mxu0 0.0
        %4045 = vmatprep.subr.mxu0 0.0
        %4046 = vmatpush1.msra.mxu0 0.0
        %4047 = vmatprep.subr.mxu0 0.0
        %4048 = vmatpush1.msra.mxu0 0.0
        %4049 = vmatprep.subr.mxu0 0.0
        %4050 = vmatpush1.msra.mxu0 0.0
        %4051 = vmatprep.subr.mxu0 0.0
        %4052 = vmatpush1.msra.mxu0 0.0
        %4053 = vmatprep.subr.mxu0 0.0
        %4054 = vmatpush1.msra.mxu0 0.0
        %4055 = vmatprep.subr.mxu0 0.0
        %4056 = vmatpush1.msra.mxu0 0.0
        %4057 = vmatprep.subr.mxu0 0.0
        %4058 = vmatpush1.msra.mxu0 0.0
        %4059 = vmatprep.subr.mxu0 0.0
        %4060 = vmatpush1.msra.mxu0 0.0
        %4061 = vmatprep.subr.mxu0 0.0
        %4062 = vmatpush1.msra.mxu0 0.0
        %4063 = vmatprep.subr.mxu0 0.0
        %4064 = vmatpush1.msra.mxu0 0.0
        %4065 = vmatprep.subr.mxu0 0.0
        %4066 = vmatpush1.msra.mxu0 0.0
        %4067 = vmatprep.subr.mxu0 0.0
        %4068 = vmatpush1.msra.mxu0 0.0
        %4069 = vmatprep.mubr.f32.mxu0 0.0
        %4070 = vmatmul.mubr.f32.gmra.mrb[0].mxu0 %v2984
        %v4071 = vpop.f32.mrb[0].mxu0
        %v4072 = vadd.f32 %v2981, %v4071
        %v4073 = vpop.f32.mrb[0].mxu0
        %v4074 = vadd.f32 %v2981, %v4073
        %4075 = vdwg.mxu0
        %4076 = vmatprep.subr.mxu0 %v3074
        %4077 = vmatpush1.msra.mxu0 %v3071
        %4078 = vmatprep.subr.mxu0 0.0
        %4079 = vmatpush1.msra.mxu0 0.0
        %4080 = vmatprep.subr.mxu0 0.0
        %4081 = vmatpush1.msra.mxu0 0.0
        %4082 = vmatprep.subr.mxu0 0.0
        %4083 = vmatpush1.msra.mxu0 0.0
        %4084 = vmatprep.subr.mxu0 0.0
        %4085 = vmatpush1.msra.mxu0 0.0
        %4086 = vmatprep.subr.mxu0 0.0
        %4087 = vmatpush1.msra.mxu0 0.0
        %4088 = vmatprep.subr.mxu0 0.0
        %4089 = vmatpush1.msra.mxu0 0.0
        %4090 = vmatprep.subr.mxu0 0.0
        %4091 = vmatpush1.msra.mxu0 0.0
        %4092 = vmatprep.subr.mxu0 0.0
        %4093 = vmatpush1.msra.mxu0 0.0
        %4094 = vmatprep.subr.mxu0 0.0
        %4095 = vmatpush1.msra.mxu0 0.0
        %4096 = vmatprep.subr.mxu0 0.0
        %4097 = vmatpush1.msra.mxu0 0.0
        %4098 = vmatprep.subr.mxu0 0.0
        %4099 = vmatpush1.msra.mxu0 0.0
        %4100 = vmatprep.subr.mxu0 0.0
        %4101 = vmatpush1.msra.mxu0 0.0
        %4102 = vmatprep.subr.mxu0 0.0
        %4103 = vmatpush1.msra.mxu0 0.0
        %4104 = vmatprep.subr.mxu0 0.0
        %4105 = vmatpush1.msra.mxu0 0.0
        %4106 = vmatprep.subr.mxu0 0.0
        %4107 = vmatpush1.msra.mxu0 0.0
        %4108 = vmatprep.subr.mxu0 0.0
        %4109 = vmatpush1.msra.mxu0 0.0
        %4110 = vmatprep.subr.mxu0 0.0
        %4111 = vmatpush1.msra.mxu0 0.0
        %4112 = vmatprep.subr.mxu0 0.0
        %4113 = vmatpush1.msra.mxu0 0.0
        %4114 = vmatprep.subr.mxu0 0.0
        %4115 = vmatpush1.msra.mxu0 0.0
        %4116 = vmatprep.subr.mxu0 0.0
        %4117 = vmatpush1.msra.mxu0 0.0
        %4118 = vmatprep.subr.mxu0 0.0
        %4119 = vmatpush1.msra.mxu0 0.0
        %4120 = vmatprep.subr.mxu0 0.0
        %4121 = vmatpush1.msra.mxu0 0.0
        %4122 = vmatprep.subr.mxu0 0.0
        %4123 = vmatpush1.msra.mxu0 0.0
        %4124 = vmatprep.subr.mxu0 0.0
        %4125 = vmatpush1.msra.mxu0 0.0
        %4126 = vmatprep.subr.mxu0 0.0
        %4127 = vmatpush1.msra.mxu0 0.0
        %4128 = vmatprep.subr.mxu0 0.0
        %4129 = vmatpush1.msra.mxu0 0.0
        %4130 = vmatprep.subr.mxu0 0.0
        %4131 = vmatpush1.msra.mxu0 0.0
        %4132 = vmatprep.subr.mxu0 0.0
        %4133 = vmatpush1.msra.mxu0 0.0
        %4134 = vmatprep.subr.mxu0 0.0
        %4135 = vmatpush1.msra.mxu0 0.0
        %4136 = vmatprep.subr.mxu0 0.0
        %4137 = vmatpush1.msra.mxu0 0.0
        %4138 = vmatprep.subr.mxu0 0.0
        %4139 = vmatpush1.msra.mxu0 0.0
        %4140 = vmatprep.mubr.f32.mxu0 0.0
        %4141 = vmatmul.mubr.f32.gmra.mrb[0].mxu0 %v2984
        %v4142 = vpop.f32.mrb[0].mxu0
        %v4143 = vadd.f32 %v2981, %v4142
        %v4144 = vpop.f32.mrb[0].mxu0
        %v4145 = vadd.f32 %v2981, %v4144
        %4146 = vdwg.mxu0
        %4147 = vmatprep.subr.mxu0 %v3080
        %4148 = vmatpush1.msra.mxu0 %v3077
        %4149 = vmatprep.subr.mxu0 0.0
        %4150 = vmatpush1.msra.mxu0 0.0
        %4151 = vmatprep.subr.mxu0 0.0
        %4152 = vmatpush1.msra.mxu0 0.0
        %4153 = vmatprep.subr.mxu0 0.0
        %4154 = vmatpush1.msra.mxu0 0.0
        %4155 = vmatprep.subr.mxu0 0.0
        %4156 = vmatpush1.msra.mxu0 0.0
        %4157 = vmatprep.subr.mxu0 0.0
        %4158 = vmatpush1.msra.mxu0 0.0
        %4159 = vmatprep.subr.mxu0 0.0
        %4160 = vmatpush1.msra.mxu0 0.0
        %4161 = vmatprep.subr.mxu0 0.0
        %4162 = vmatpush1.msra.mxu0 0.0
        %4163 = vmatprep.subr.mxu0 0.0
        %4164 = vmatpush1.msra.mxu0 0.0
        %4165 = vmatprep.subr.mxu0 0.0
        %4166 = vmatpush1.msra.mxu0 0.0
        %4167 = vmatprep.subr.mxu0 0.0
        %4168 = vmatpush1.msra.mxu0 0.0
        %4169 = vmatprep.subr.mxu0 0.0
        %4170 = vmatpush1.msra.mxu0 0.0
        %4171 = vmatprep.subr.mxu0 0.0
        %4172 = vmatpush1.msra.mxu0 0.0
        %4173 = vmatprep.subr.mxu0 0.0
        %4174 = vmatpush1.msra.mxu0 0.0
        %4175 = vmatprep.subr.mxu0 0.0
        %4176 = vmatpush1.msra.mxu0 0.0
        %4177 = vmatprep.subr.mxu0 0.0
        %4178 = vmatpush1.msra.mxu0 0.0
        %4179 = vmatprep.subr.mxu0 0.0
        %4180 = vmatpush1.msra.mxu0 0.0
        %4181 = vmatprep.subr.mxu0 0.0
        %4182 = vmatpush1.msra.mxu0 0.0
        %4183 = vmatprep.subr.mxu0 0.0
        %4184 = vmatpush1.msra.mxu0 0.0
        %4185 = vmatprep.subr.mxu0 0.0
        %4186 = vmatpush1.msra.mxu0 0.0
        %4187 = vmatprep.subr.mxu0 0.0
        %4188 = vmatpush1.msra.mxu0 0.0
        %4189 = vmatprep.subr.mxu0 0.0
        %4190 = vmatpush1.msra.mxu0 0.0
        %4191 = vmatprep.subr.mxu0 0.0
        %4192 = vmatpush1.msra.mxu0 0.0
        %4193 = vmatprep.subr.mxu0 0.0
        %4194 = vmatpush1.msra.mxu0 0.0
        %4195 = vmatprep.subr.mxu0 0.0
        %4196 = vmatpush1.msra.mxu0 0.0
        %4197 = vmatprep.subr.mxu0 0.0
        %4198 = vmatpush1.msra.mxu0 0.0
        %4199 = vmatprep.subr.mxu0 0.0
        %4200 = vmatpush1.msra.mxu0 0.0
        %4201 = vmatprep.subr.mxu0 0.0
        %4202 = vmatpush1.msra.mxu0 0.0
        %4203 = vmatprep.subr.mxu0 0.0
        %4204 = vmatpush1.msra.mxu0 0.0
        %4205 = vmatprep.subr.mxu0 0.0
        %4206 = vmatpush1.msra.mxu0 0.0
        %4207 = vmatprep.subr.mxu0 0.0
        %4208 = vmatpush1.msra.mxu0 0.0
        %4209 = vmatprep.subr.mxu0 0.0
        %4210 = vmatpush1.msra.mxu0 0.0
        %4211 = vmatprep.mubr.f32.mxu0 0.0
        %4212 = vmatmul.mubr.f32.gmra.mrb[0].mxu0 %v2984
        %v4213 = vpop.f32.mrb[0].mxu0
        %v4214 = vadd.f32 %v2981, %v4213
        %v4215 = vpop.f32.mrb[0].mxu0
        %v4216 = vadd.f32 %v2981, %v4215
        %4217 = vdwg.mxu0
        %4218 = vst [vmem:[%s352] sm:$0xff] %v3149
        %4219 = vst [vmem:[%s352 + $0x8] sm:$0xff] %v3151
        %4220 = vst [vmem:[%s352 + $0x10] sm:$0xff] %v3220
        %4221 = vst [vmem:[%s352 + $0x18] sm:$0xff] %v3222
        %4222 = vst [vmem:[%s352 + $0x20] sm:$0xff] %v3291
        %4223 = vst [vmem:[%s352 + $0x28] sm:$0xff] %v3293
        %4224 = vst [vmem:[%s352 + $0x30] sm:$0xff] %v3362
        %4225 = vst [vmem:[%s352 + $0x38] sm:$0xff] %v3364
        %4226 = vst [vmem:[%s352 + $0x40] sm:$0xff] %v3433
        %4227 = vst [vmem:[%s352 + $0x48] sm:$0xff] %v3435
        %4228 = vst [vmem:[%s352 + $0x50] sm:$0xff] %v3504
        %4229 = vst [vmem:[%s352 + $0x58] sm:$0xff] %v3506
        %4230 = vst [vmem:[%s352 + $0x60] sm:$0xff] %v3575
        %4231 = vst [vmem:[%s352 + $0x68] sm:$0xff] %v3577
        %4232 = vst [vmem:[%s352 + $0x70] sm:$0xff] %v3646
        %4233 = vst [vmem:[%s352 + $0x78] sm:$0xff] %v3648
        %4234 = vst [vmem:[%s352 + $0x80] sm:$0xff] %v3717
        %4235 = vst [vmem:[%s352 + $0x88] sm:$0xff] %v3719
        %4236 = vst [vmem:[%s352 + $0x90] sm:$0xff] %v3788
        %4237 = vst [vmem:[%s352 + $0x98] sm:$0xff] %v3790
        %4238 = vst [vmem:[%s352 + $0xa0] sm:$0xff] %v3859
        %4239 = vst [vmem:[%s352 + $0xa8] sm:$0xff] %v3861
        %4240 = vst [vmem:[%s352 + $0xb0] sm:$0xff] %v3930
        %4241 = vst [vmem:[%s352 + $0xb8] sm:$0xff] %v3932
        %4242 = vst [vmem:[%s352 + $0xc0] sm:$0xff] %v4001
        %4243 = vst [vmem:[%s352 + $0xc8] sm:$0xff] %v4003
        %4244 = vst [vmem:[%s352 + $0xd0] sm:$0xff] %v4072
        %4245 = vst [vmem:[%s352 + $0xd8] sm:$0xff] %v4074
        %4246 = vst [vmem:[%s352 + $0xe0] sm:$0xff] %v4143
        %4247 = vst [vmem:[%s352 + $0xe8] sm:$0xff] %v4145
        %4248 = vst [vmem:[%s352 + $0xf0] sm:$0xff] %v4214
        %4249 = vst [vmem:[%s352 + $0xf8] sm:$0xff] %v4216
        %s4250 = sand.u32 %s208, 1
        %s4251 = scalar_lea.sflag [#allocation4], %s4250
        %s4252 = sand.u32 %s208, 1
        %s4253 = smul.addr %s4252, 256
        %s4254 = scalar_lea.vmem [#allocation9], %s4253
        // Predicated region
        $region65: #{tpu_custom_call.1} parent=51 // pred_check
          %p4255 = pneg %p218
        $region66: #{tpu_custom_call.1} parent=51 // pred_check_branch
          %4257 = sbr.rel (%p4255) target = $region68
        $region67: #{tpu_custom_call.1} parent=51 // pred_region
          %s4259 = ssub.s32 4096, 4096
          %4260 = vsyncadd %s4251, %s4259
          %s4261 = smul.addr %s27, 32
          %s4262 = smul.addr %s4261, 128
          %s4263 = scalar_lea.hbm %s8, %s4262
          %s4265 = sshll.u32 %s4254, 4
          %s4266 = int_to_ptr.vmem [resolvable:$true] %s4265
          %4268 = dma.vmem_to_hbm [thread:$0]  %s4266, 4096, %s4263, %s4251
        $region68: #{tpu_custom_call.1} parent=51 // pred_fallthru
          _
      $region52: #{tpu_custom_call.1} parent=5 // pred_fallthru
        _
      %p4269 = scmp.le.s32.totalorder 2, %s22
      // Predicated region
      $region69: #{tpu_custom_call.1} parent=5 // pred_check
        %p4270 = pneg %p4269
      $region70: #{tpu_custom_call.1} parent=5 // pred_check_branch
        %4272 = sbr.rel (%p4270) target = $region72
      $region71: #{tpu_custom_call.1} parent=5 // pred_region
        %s4273 = ssub.s32 %s22, 2
        // Predicated region
        $region73: #{tpu_custom_call.1} parent=71 // pred_check
          %p4274 = pneg %p224
        $region74: #{tpu_custom_call.1} parent=71 // pred_check_branch
          %4276 = sbr.rel (%p4274) target = $region76
        $region75: #{tpu_custom_call.1} parent=71 // pred_region
          %s4277 = sand.u32 %s209, 1
          %s4278 = scalar_lea.sflag [#allocation4], %s4277
          %s4279 = sand.u32 %s209, 1
          %s4280 = smul.addr %s4279, 256
          %s4281 = scalar_lea.vmem [#allocation9], %s4280
          %4282 = dma.done %s4278, 4096
        $region76: #{tpu_custom_call.1} parent=71 // pred_fallthru
          _
      $region72: #{tpu_custom_call.1} parent=5 // pred_fallthru
        _
    $region6: #{tpu_custom_call.1} parent=1 // loop_footer
      %s26 = sadd.s32 1, %s22
    $region7: #{tpu_custom_call.1} parent=1 // loop_footer_branch
      %21 = sbr.rel target = $region3
    $region8: #{tpu_custom_call.1} parent=1 // loop_exit
      _
    %4283 = vsyncpa [#allocation3], 1
    %s4284 = scalar_lea.sflag [#allocation3], 1
    %4285 = vsyncpa %s4284, 1
    %4286 = vsyncpa [#allocation7], 1
    %4287 = vsyncpa [#allocation4], 1
    %s4288 = scalar_lea.sflag [#allocation4], 1
    %4289 = vsyncpa %s4288, 1
    %4290 = vsyncpa [#allocation5], 1
    %s4291 = scalar_lea.sflag [#allocation5], 1
    %4292 = vsyncpa %s4291, 1

</llo_original>
